<compile_context>
chip_gen: v7x
topology: tpu7x:2x2x1
jax: 0.10.0
libtpu: 0.0.40
codegen_flags: <defaults>
</compile_context>

<pallas_src>
import functools

import jax
import jax.numpy as jnp
from jax.experimental import pallas as pl
from jax.experimental.pallas import tpu as pltpu


def _rcab_kernel(xpad_ref, xres_ref, mask_ref,
                 w1_ref, b1_ref, w2t_ref, b2_ref,
                 wdt_ref, bd_ref, wut_ref, bu_ref,
                 o_ref, *, H, W, C, He, We, bn):
    HW = H * W
    M1 = bn * He * We          # extended conv1 output rows (incl. border ring)
    M2 = bn * HW               # true output pixels in this block

    xpad = xpad_ref[...]                                   # (bn, H+4, We+2, C) f32

    # ---- conv1 (3x3 SAME, bias, ReLU) as a single im2col matmul, K = 9*C ----
    taps1 = [xpad[:, dy:dy + He, dx:dx + We, :].reshape(M1, C)
             for dy in range(3) for dx in range(3)]
    p1 = jnp.concatenate(taps1, axis=1).astype(jnp.bfloat16)          # (M1, 9C)
    h1 = jnp.dot(p1, w1_ref[...], preferred_element_type=jnp.float32)
    # ReLU + zero the 1-pixel border ring -> h1 becomes the zero-padded conv1
    # output that conv2 needs (no VMEM scratch round-trip).
    h1 = jnp.maximum(h1 + b1_ref[...], 0.0) * mask_ref[...]
    h1 = h1.reshape(bn, He, We, C)

    # ---- conv2 (3x3 SAME, bias), computed transposed -> channel-major h2 ----
    taps2 = [h1[:, dy:dy + H, dx:dx + W, :].reshape(M2, C)
             for dy in range(3) for dx in range(3)]
    p2 = jnp.concatenate(taps2, axis=1).astype(jnp.bfloat16)          # (M2, 9C)
    h2t = jax.lax.dot_general(                                        # (C, M2)
        w2t_ref[...], p2, (((1,), (1,)), ((), ())),
        preferred_element_type=jnp.float32) + b2_ref[...]

    # ---- CALayer + gating + residual, per image (lane-dense (C, H*W) tiles) --
    for n in range(bn):
        h2n = h2t[:, n * HW:(n + 1) * HW]                             # (C, HW)
        y = jnp.mean(h2n, axis=1, keepdims=True)                      # (C, 1)
        z = jnp.maximum(
            jnp.dot(wdt_ref[...], y, preferred_element_type=jnp.float32)
            + bd_ref[...], 0.0)                                       # (C//r, 1)
        s = jax.nn.sigmoid(
            jnp.dot(wut_ref[...], z, preferred_element_type=jnp.float32)
            + bu_ref[...])                                            # (C, 1)
        o_ref[n] = (h2n * s + xres_ref[n]).astype(o_ref.dtype)        # (C, HW)


def rcab_forward(x_nchw, params, images_per_block=None):
    """x_nchw: (N, C, H, W) float32; params in HWIO / (in, out) layouts."""
    w1, b1, w2, b2, wd, bd, wu, bu = params
    x_nchw = x_nchw.astype(jnp.float32)
    N, C, H, W = x_nchw.shape
    mid = wd.shape[1]
    HW = H * W
    He = H + 2                                 # extended conv1 rows
    We = ((W + 2 + 7) // 8) * 8                # extended cols, rounded to 8 so
                                               # in-kernel reshapes stay trivial

    # batch images folded into each grid step (amortize per-step overhead)
    if images_per_block is None:
        images_per_block = max(1, 512 // HW)
    bn = max(1, min(N, images_per_block))
    while N % bn:
        bn -= 1

    # --- layout prep (plain JAX, outside the kernel) ---
    x_nhwc = jnp.transpose(x_nchw, (0, 2, 3, 1))
    xpad = jnp.pad(x_nhwc, ((0, 0), (2, 2), (2, We - W), (0, 0)))   # (N,H+4,We+2,C)
    x_chw = x_nchw.reshape(N, C, HW)                                # residual, NCHW-flat

    # border-ring mask for the extended conv1 domain
    hh = jnp.arange(He)[:, None]
    ww = jnp.arange(We)[None, :]
    ring = ((hh >= 1) & (hh <= H) & (ww >= 1) & (ww <= W))
    mask = jnp.tile(ring.reshape(He * We), (bn,)).astype(jnp.float32)
    mask = mask.reshape(bn * He * We, 1)

    # weights pre-flattened / pre-transposed for the im2col matmuls (bf16 MXU)
    w1f = w1.reshape(9 * C, C).astype(jnp.bfloat16)                 # (9C, C)
    w2t = w2.reshape(9 * C, C).T.astype(jnp.bfloat16)               # (C, 9C)
    b1r = b1.reshape(1, C).astype(jnp.float32)
    b2c = b2.reshape(C, 1).astype(jnp.float32)
    wdt = wd.T.astype(jnp.float32)                                  # (mid, C)
    bdc = bd.reshape(mid, 1).astype(jnp.float32)
    wut = wu.T.astype(jnp.float32)                                  # (C, mid)
    buc = bu.reshape(C, 1).astype(jnp.float32)

    kernel = functools.partial(_rcab_kernel, H=H, W=W, C=C, He=He, We=We, bn=bn)
    out = pl.pallas_call(
        kernel,
        out_shape=jax.ShapeDtypeStruct((N, C, HW), jnp.float32),
        grid_spec=pltpu.PrefetchScalarGridSpec(
            num_scalar_prefetch=0,
            grid=(N // bn,),
            in_specs=[
                pl.BlockSpec((bn, H + 4, We + 2, C), lambda i: (i, 0, 0, 0)),
                pl.BlockSpec((bn, C, HW), lambda i: (i, 0, 0)),
                pl.BlockSpec((bn * He * We, 1), lambda i: (0, 0)),
                pl.BlockSpec((9 * C, C), lambda i: (0, 0)),
                pl.BlockSpec((1, C), lambda i: (0, 0)),
                pl.BlockSpec((C, 9 * C), lambda i: (0, 0)),
                pl.BlockSpec((C, 1), lambda i: (0, 0)),
                pl.BlockSpec((mid, C), lambda i: (0, 0)),
                pl.BlockSpec((mid, 1), lambda i: (0, 0)),
                pl.BlockSpec((C, mid), lambda i: (0, 0)),
                pl.BlockSpec((C, 1), lambda i: (0, 0)),
            ],
            out_specs=pl.BlockSpec((bn, C, HW), lambda i: (i, 0, 0)),
        ),
        compiler_params=pltpu.CompilerParams(
            dimension_semantics=("parallel",)),     # v7x: shard batch over 2 TCs
    )(xpad, x_chw, mask, w1f, b1r, w2t, b2c, wdt, bdc, wut, buc)
    return out.reshape(N, C, H, W)                  # already NCHW


def rcab_reference(x_nchw, params):
    """Pure-JAX f32 reference (NHWC convs) for validation."""
    w1, b1, w2, b2, wd, bd, wu, bu = params
    x = jnp.transpose(x_nchw, (0, 2, 3, 1)).astype(jnp.float32)
    conv = lambda a, w: jax.lax.conv_general_dilated(
        a, w, (1, 1), "SAME", dimension_numbers=("NHWC", "HWIO", "NHWC"))
    h1 = jax.nn.relu(conv(x, w1) + b1)
    h2 = conv(h1, w2) + b2
    y = jnp.mean(h2, axis=(1, 2), keepdims=True)
    z = jax.nn.relu(jnp.einsum("nijc,cm->nijm", y, wd) + bd)
    s = jax.nn.sigmoid(jnp.einsum("nijm,mc->nijc", z, wu) + bu)
    out = h2 * s + x
    return jnp.transpose(out, (0, 3, 1, 2))


def make_params(key, n_feat, reduction):
    mid = n_feat // reduction
    ks = jax.random.split(key, 8)
    scale = 0.1
    w1 = scale * jax.random.normal(ks[0], (3, 3, n_feat, n_feat), jnp.float32)
    b1 = scale * jax.random.normal(ks[1], (1, n_feat), jnp.float32)
    w2 = scale * jax.random.normal(ks[2], (3, 3, n_feat, n_feat), jnp.float32)
    b2 = scale * jax.random.normal(ks[3], (1, n_feat), jnp.float32)
    wd = scale * jax.random.normal(ks[4], (n_feat, mid), jnp.float32)
    bd = scale * jax.random.normal(ks[5], (1, mid), jnp.float32)
    wu = scale * jax.random.normal(ks[6], (mid, n_feat), jnp.float32)
    bu = scale * jax.random.normal(ks[7], (1, n_feat), jnp.float32)
    return (w1, b1, w2, b2, wd, bd, wu, bu)


if __name__ == "__main__":
    N, C, H, W = 4, 16, 16, 16         # n_feat=16
    reduction = 4                      # channel // reduction = 4

    key = jax.random.PRNGKey(0)
    kx, kp = jax.random.split(key)
    x = jax.random.normal(kx, (N, C, H, W), jnp.float32)   # NCHW, PyTorch-style
    params = make_params(kp, C, reduction)

    out = jax.block_until_ready(rcab_forward(x, params))
    ref = jax.block_until_ready(rcab_reference(x, params))

    assert out.shape == (N, C, H, W)
    # tolerance loosened because the two conv matmuls use bf16 MXU inputs
    # (f32 accumulation); everything else is f32.
    assert jnp.allclose(out, ref, atol=1e-1, rtol=5e-2), (
        float(jnp.max(jnp.abs(out - ref))))

    print("KERNEL_OK")
</pallas_src>

<mosaic_0001>
module attributes {stable_mosaic.version = 11 : i64} {
  func.func @_rcab_kernel(%arg0: i32, %arg1: memref<2x20x26x16xf32, #tpu.memory_space<vmem>>, %arg2: memref<2x16x256xf32, #tpu.memory_space<vmem>>, %arg3: memref<864x1xf32, #tpu.memory_space<vmem>>, %arg4: memref<144x16xbf16, #tpu.memory_space<vmem>>, %arg5: memref<1x16xf32, #tpu.memory_space<vmem>>, %arg6: memref<16x144xbf16, #tpu.memory_space<vmem>>, %arg7: memref<16x1xf32, #tpu.memory_space<vmem>>, %arg8: memref<4x16xf32, #tpu.memory_space<vmem>>, %arg9: memref<4x1xf32, #tpu.memory_space<vmem>>, %arg10: memref<16x4xf32, #tpu.memory_space<vmem>>, %arg11: memref<16x1xf32, #tpu.memory_space<vmem>>, %arg12: memref<2x16x256xf32, #tpu.memory_space<vmem>>) attributes {dimension_semantics = [#tpu.dimension_semantics<parallel>], iteration_bounds = array<i64: 2>, scalar_prefetch = 0 : i64, scratch_operands = 0 : i64, tpu.core_type = #tpu.core_type<tc>, window_params = [{transform_indices = @transform_0, window_bounds = array<i64: 2, 20, 26, 16>}, {transform_indices = @transform_1, window_bounds = array<i64: 2, 16, 256>}, {pipeline_mode = #tpu.pipeline_mode<synchronous>, transform_indices = @transform_2, window_bounds = array<i64: 864, 1>}, {pipeline_mode = #tpu.pipeline_mode<synchronous>, transform_indices = @transform_3, window_bounds = array<i64: 144, 16>}, {pipeline_mode = #tpu.pipeline_mode<synchronous>, transform_indices = @transform_4, window_bounds = array<i64: 1, 16>}, {pipeline_mode = #tpu.pipeline_mode<synchronous>, transform_indices = @transform_5, window_bounds = array<i64: 16, 144>}, {pipeline_mode = #tpu.pipeline_mode<synchronous>, transform_indices = @transform_6, window_bounds = array<i64: 16, 1>}, {pipeline_mode = #tpu.pipeline_mode<synchronous>, transform_indices = @transform_7, window_bounds = array<i64: 4, 16>}, {pipeline_mode = #tpu.pipeline_mode<synchronous>, transform_indices = @transform_8, window_bounds = array<i64: 4, 1>}, {pipeline_mode = #tpu.pipeline_mode<synchronous>, transform_indices = @transform_9, window_bounds = array<i64: 16, 4>}, {pipeline_mode = #tpu.pipeline_mode<synchronous>, transform_indices = @transform_10, window_bounds = array<i64: 16, 1>}, {transform_indices = @transform_11, window_bounds = array<i64: 2, 16, 256>}]} {
    %c0 = arith.constant 0 : index
    %c0_0 = arith.constant 0 : index
    %c0_1 = arith.constant 0 : index
    %c0_2 = arith.constant 0 : index
    %0 = vector.load %arg1[%c0, %c0_0, %c0_1, %c0_2] : memref<2x20x26x16xf32, #tpu.memory_space<vmem>>, vector<2x20x26x16xf32>
    %1 = vector.extract_strided_slice %0 {offsets = [0, 0, 0, 0], sizes = [2, 18, 24, 16], strides = [1, 1, 1, 1]} : vector<2x20x26x16xf32> to vector<2x18x24x16xf32>
    %2 = vector.shape_cast %1 : vector<2x18x24x16xf32> to vector<864x16xf32>
    %3 = vector.extract_strided_slice %0 {offsets = [0, 0, 1, 0], sizes = [2, 18, 24, 16], strides = [1, 1, 1, 1]} : vector<2x20x26x16xf32> to vector<2x18x24x16xf32>
    %4 = vector.shape_cast %3 : vector<2x18x24x16xf32> to vector<864x16xf32>
    %5 = vector.extract_strided_slice %0 {offsets = [0, 0, 2, 0], sizes = [2, 18, 24, 16], strides = [1, 1, 1, 1]} : vector<2x20x26x16xf32> to vector<2x18x24x16xf32>
    %6 = vector.shape_cast %5 : vector<2x18x24x16xf32> to vector<864x16xf32>
    %7 = vector.extract_strided_slice %0 {offsets = [0, 1, 0, 0], sizes = [2, 18, 24, 16], strides = [1, 1, 1, 1]} : vector<2x20x26x16xf32> to vector<2x18x24x16xf32>
    %8 = vector.shape_cast %7 : vector<2x18x24x16xf32> to vector<864x16xf32>
    %9 = vector.extract_strided_slice %0 {offsets = [0, 1, 1, 0], sizes = [2, 18, 24, 16], strides = [1, 1, 1, 1]} : vector<2x20x26x16xf32> to vector<2x18x24x16xf32>
    %10 = vector.shape_cast %9 : vector<2x18x24x16xf32> to vector<864x16xf32>
    %11 = vector.extract_strided_slice %0 {offsets = [0, 1, 2, 0], sizes = [2, 18, 24, 16], strides = [1, 1, 1, 1]} : vector<2x20x26x16xf32> to vector<2x18x24x16xf32>
    %12 = vector.shape_cast %11 : vector<2x18x24x16xf32> to vector<864x16xf32>
    %13 = vector.extract_strided_slice %0 {offsets = [0, 2, 0, 0], sizes = [2, 18, 24, 16], strides = [1, 1, 1, 1]} : vector<2x20x26x16xf32> to vector<2x18x24x16xf32>
    %14 = vector.shape_cast %13 : vector<2x18x24x16xf32> to vector<864x16xf32>
    %15 = vector.extract_strided_slice %0 {offsets = [0, 2, 1, 0], sizes = [2, 18, 24, 16], strides = [1, 1, 1, 1]} : vector<2x20x26x16xf32> to vector<2x18x24x16xf32>
    %16 = vector.shape_cast %15 : vector<2x18x24x16xf32> to vector<864x16xf32>
    %17 = vector.extract_strided_slice %0 {offsets = [0, 2, 2, 0], sizes = [2, 18, 24, 16], strides = [1, 1, 1, 1]} : vector<2x20x26x16xf32> to vector<2x18x24x16xf32>
    %18 = vector.shape_cast %17 : vector<2x18x24x16xf32> to vector<864x16xf32>
    %19 = tpu.concatenate %2, %4, %6, %8, %10, %12, %14, %16, %18 in 1 : vector<864x16xf32>, vector<864x16xf32>, vector<864x16xf32>, vector<864x16xf32>, vector<864x16xf32>, vector<864x16xf32>, vector<864x16xf32>, vector<864x16xf32>, vector<864x16xf32> -> vector<864x144xf32>
    %20 = arith.truncf %19 : vector<864x144xf32> to vector<864x144xbf16>
    %c0_3 = arith.constant 0 : index
    %c0_4 = arith.constant 0 : index
    %21 = vector.load %arg4[%c0_3, %c0_4] : memref<144x16xbf16, #tpu.memory_space<vmem>>, vector<144x16xbf16>
    %cst = arith.constant dense<0.000000e+00> : vector<864x16xf32>
    %22 = tpu.matmul %20, %21, %cst {dimension_numbers = #tpu.dot_dimension_numbers<[1], [0], [0], [1], [0, 0, 1, 1], [], []>} : vector<864x144xbf16>, vector<144x16xbf16>, vector<864x16xf32> -> vector<864x16xf32>
    %c0_5 = arith.constant 0 : index
    %c0_6 = arith.constant 0 : index
    %23 = vector.load %arg5[%c0_5, %c0_6] : memref<1x16xf32, #tpu.memory_space<vmem>>, vector<1x16xf32>
    %24 = vector.broadcast %23 : vector<1x16xf32> to vector<864x16xf32>
    %25 = arith.addf %22, %24 : vector<864x16xf32>
    %cst_7 = arith.constant 0.000000e+00 : f32
    %26 = vector.broadcast %cst_7 : f32 to vector<864x16xf32>
    %27 = arith.maximumf %25, %26 : vector<864x16xf32>
    %c0_8 = arith.constant 0 : index
    %c0_9 = arith.constant 0 : index
    %28 = vector.load %arg3[%c0_8, %c0_9] : memref<864x1xf32, #tpu.memory_space<vmem>>, vector<864x1xf32>
    %29 = vector.broadcast %28 : vector<864x1xf32> to vector<864x16xf32>
    %30 = arith.mulf %27, %29 : vector<864x16xf32>
    %31 = vector.shape_cast %30 : vector<864x16xf32> to vector<2x18x24x16xf32>
    %32 = vector.extract_strided_slice %31 {offsets = [0, 0, 0, 0], sizes = [2, 16, 16, 16], strides = [1, 1, 1, 1]} : vector<2x18x24x16xf32> to vector<2x16x16x16xf32>
    %33 = vector.shape_cast %32 : vector<2x16x16x16xf32> to vector<512x16xf32>
    %34 = vector.extract_strided_slice %31 {offsets = [0, 0, 1, 0], sizes = [2, 16, 16, 16], strides = [1, 1, 1, 1]} : vector<2x18x24x16xf32> to vector<2x16x16x16xf32>
    %35 = vector.shape_cast %34 : vector<2x16x16x16xf32> to vector<512x16xf32>
    %36 = vector.extract_strided_slice %31 {offsets = [0, 0, 2, 0], sizes = [2, 16, 16, 16], strides = [1, 1, 1, 1]} : vector<2x18x24x16xf32> to vector<2x16x16x16xf32>
    %37 = vector.shape_cast %36 : vector<2x16x16x16xf32> to vector<512x16xf32>
    %38 = vector.extract_strided_slice %31 {offsets = [0, 1, 0, 0], sizes = [2, 16, 16, 16], strides = [1, 1, 1, 1]} : vector<2x18x24x16xf32> to vector<2x16x16x16xf32>
    %39 = vector.shape_cast %38 : vector<2x16x16x16xf32> to vector<512x16xf32>
    %40 = vector.extract_strided_slice %31 {offsets = [0, 1, 1, 0], sizes = [2, 16, 16, 16], strides = [1, 1, 1, 1]} : vector<2x18x24x16xf32> to vector<2x16x16x16xf32>
    %41 = vector.shape_cast %40 : vector<2x16x16x16xf32> to vector<512x16xf32>
    %42 = vector.extract_strided_slice %31 {offsets = [0, 1, 2, 0], sizes = [2, 16, 16, 16], strides = [1, 1, 1, 1]} : vector<2x18x24x16xf32> to vector<2x16x16x16xf32>
    %43 = vector.shape_cast %42 : vector<2x16x16x16xf32> to vector<512x16xf32>
    %44 = vector.extract_strided_slice %31 {offsets = [0, 2, 0, 0], sizes = [2, 16, 16, 16], strides = [1, 1, 1, 1]} : vector<2x18x24x16xf32> to vector<2x16x16x16xf32>
    %45 = vector.shape_cast %44 : vector<2x16x16x16xf32> to vector<512x16xf32>
    %46 = vector.extract_strided_slice %31 {offsets = [0, 2, 1, 0], sizes = [2, 16, 16, 16], strides = [1, 1, 1, 1]} : vector<2x18x24x16xf32> to vector<2x16x16x16xf32>
    %47 = vector.shape_cast %46 : vector<2x16x16x16xf32> to vector<512x16xf32>
    %48 = vector.extract_strided_slice %31 {offsets = [0, 2, 2, 0], sizes = [2, 16, 16, 16], strides = [1, 1, 1, 1]} : vector<2x18x24x16xf32> to vector<2x16x16x16xf32>
    %49 = vector.shape_cast %48 : vector<2x16x16x16xf32> to vector<512x16xf32>
    %50 = tpu.concatenate %33, %35, %37, %39, %41, %43, %45, %47, %49 in 1 : vector<512x16xf32>, vector<512x16xf32>, vector<512x16xf32>, vector<512x16xf32>, vector<512x16xf32>, vector<512x16xf32>, vector<512x16xf32>, vector<512x16xf32>, vector<512x16xf32> -> vector<512x144xf32>
    %51 = arith.truncf %50 : vector<512x144xf32> to vector<512x144xbf16>
    %c0_10 = arith.constant 0 : index
    %c0_11 = arith.constant 0 : index
    %52 = vector.load %arg6[%c0_10, %c0_11] : memref<16x144xbf16, #tpu.memory_space<vmem>>, vector<16x144xbf16>
    %cst_12 = arith.constant dense<0.000000e+00> : vector<16x512xf32>
    %53 = tpu.matmul %52, %51, %cst_12 {dimension_numbers = #tpu.dot_dimension_numbers<[1], [1], [0], [0], [0, 0, 1, 0], [], []>} : vector<16x144xbf16>, vector<512x144xbf16>, vector<16x512xf32> -> vector<16x512xf32>
    %c0_13 = arith.constant 0 : index
    %c0_14 = arith.constant 0 : index
    %54 = vector.load %arg7[%c0_13, %c0_14] : memref<16x1xf32, #tpu.memory_space<vmem>>, vector<16x1xf32>
    %55 = vector.broadcast %54 : vector<16x1xf32> to vector<16x512xf32>
    %56 = arith.addf %53, %55 : vector<16x512xf32>
    %57 = vector.extract_strided_slice %56 {offsets = [0, 0], sizes = [16, 256], strides = [1, 1]} : vector<16x512xf32> to vector<16x256xf32>
    %cst_15 = arith.constant dense<0.000000e+00> : vector<16xf32>
    %58 = vector.multi_reduction <add>, %57, %cst_15 [1] : vector<16x256xf32> to vector<16xf32>
    %59 = vector.shape_cast %58 : vector<16xf32> to vector<16x1xf32>
    %cst_16 = arith.constant 2.560000e+02 : f32
    %60 = vector.broadcast %cst_16 : f32 to vector<16x1xf32>
    %61 = arith.divf %59, %60 : vector<16x1xf32>
    %c0_17 = arith.constant 0 : index
    %c0_18 = arith.constant 0 : index
    %62 = vector.load %arg8[%c0_17, %c0_18] : memref<4x16xf32, #tpu.memory_space<vmem>>, vector<4x16xf32>
    %cst_19 = arith.constant dense<0.000000e+00> : vector<4x1xf32>
    %63 = tpu.matmul %62, %61, %cst_19 {dimension_numbers = #tpu.dot_dimension_numbers<[1], [0], [0], [1], [0, 0, 1, 1], [], []>} : vector<4x16xf32>, vector<16x1xf32>, vector<4x1xf32> -> vector<4x1xf32>
    %c0_20 = arith.constant 0 : index
    %c0_21 = arith.constant 0 : index
    %64 = vector.load %arg9[%c0_20, %c0_21] : memref<4x1xf32, #tpu.memory_space<vmem>>, vector<4x1xf32>
    %65 = arith.addf %63, %64 : vector<4x1xf32>
    %cst_22 = arith.constant 0.000000e+00 : f32
    %66 = vector.broadcast %cst_22 : f32 to vector<4x1xf32>
    %67 = arith.maximumf %65, %66 : vector<4x1xf32>
    %c0_23 = arith.constant 0 : index
    %c0_24 = arith.constant 0 : index
    %68 = vector.load %arg10[%c0_23, %c0_24] : memref<16x4xf32, #tpu.memory_space<vmem>>, vector<16x4xf32>
    %cst_25 = arith.constant dense<0.000000e+00> : vector<16x1xf32>
    %69 = tpu.matmul %68, %67, %cst_25 {dimension_numbers = #tpu.dot_dimension_numbers<[1], [0], [0], [1], [0, 0, 1, 1], [], []>} : vector<16x4xf32>, vector<4x1xf32>, vector<16x1xf32> -> vector<16x1xf32>
    %c0_26 = arith.constant 0 : index
    %c0_27 = arith.constant 0 : index
    %70 = vector.load %arg11[%c0_26, %c0_27] : memref<16x1xf32, #tpu.memory_space<vmem>>, vector<16x1xf32>
    %71 = arith.addf %69, %70 : vector<16x1xf32>
    %72 = arith.negf %71 : vector<16x1xf32>
    %73 = math.exp %72 : vector<16x1xf32>
    %cst_28 = arith.constant 1.000000e+00 : f32
    %74 = vector.broadcast %cst_28 : f32 to vector<16x1xf32>
    %75 = arith.addf %74, %73 : vector<16x1xf32>
    %76 = arith.divf %74, %75 : vector<16x1xf32>
    %77 = vector.broadcast %76 : vector<16x1xf32> to vector<16x256xf32>
    %78 = arith.mulf %57, %77 : vector<16x256xf32>
    %c0_29 = arith.constant 0 : index
    %c0_30 = arith.constant 0 : index
    %c0_31 = arith.constant 0 : index
    %79 = vector.load %arg2[%c0_29, %c0_30, %c0_31] : memref<2x16x256xf32, #tpu.memory_space<vmem>>, vector<1x16x256xf32>
    %80 = vector.shape_cast %79 : vector<1x16x256xf32> to vector<16x256xf32>
    %81 = arith.addf %78, %80 : vector<16x256xf32>
    %c0_32 = arith.constant 0 : index
    %c0_33 = arith.constant 0 : index
    %c0_34 = arith.constant 0 : index
    %82 = vector.load %arg12[%c0_32, %c0_33, %c0_34] : memref<2x16x256xf32, #tpu.memory_space<vmem>>, vector<1x16x256xf32>
    %83 = vector.shape_cast %82 : vector<1x16x256xf32> to vector<16x256xf32>
    %84 = vector.shape_cast %81 : vector<16x256xf32> to vector<1x16x256xf32>
    tpu.vector_store %arg12[%c0_32, %c0_33, %c0_34], %84 {strides = array<i32>} : memref<2x16x256xf32, #tpu.memory_space<vmem>>, vector<1x16x256xf32>,
    %85 = vector.extract_strided_slice %56 {offsets = [0, 256], sizes = [16, 256], strides = [1, 1]} : vector<16x512xf32> to vector<16x256xf32>
    %cst_35 = arith.constant dense<0.000000e+00> : vector<16xf32>
    %86 = vector.multi_reduction <add>, %85, %cst_35 [1] : vector<16x256xf32> to vector<16xf32>
    %87 = vector.shape_cast %86 : vector<16xf32> to vector<16x1xf32>
    %cst_36 = arith.constant 2.560000e+02 : f32
    %88 = vector.broadcast %cst_36 : f32 to vector<16x1xf32>
    %89 = arith.divf %87, %88 : vector<16x1xf32>
    %c0_37 = arith.constant 0 : index
    %c0_38 = arith.constant 0 : index
    %90 = vector.load %arg8[%c0_37, %c0_38] : memref<4x16xf32, #tpu.memory_space<vmem>>, vector<4x16xf32>
    %cst_39 = arith.constant dense<0.000000e+00> : vector<4x1xf32>
    %91 = tpu.matmul %90, %89, %cst_39 {dimension_numbers = #tpu.dot_dimension_numbers<[1], [0], [0], [1], [0, 0, 1, 1], [], []>} : vector<4x16xf32>, vector<16x1xf32>, vector<4x1xf32> -> vector<4x1xf32>
    %c0_40 = arith.constant 0 : index
    %c0_41 = arith.constant 0 : index
    %92 = vector.load %arg9[%c0_40, %c0_41] : memref<4x1xf32, #tpu.memory_space<vmem>>, vector<4x1xf32>
    %93 = arith.addf %91, %92 : vector<4x1xf32>
    %cst_42 = arith.constant 0.000000e+00 : f32
    %94 = vector.broadcast %cst_42 : f32 to vector<4x1xf32>
    %95 = arith.maximumf %93, %94 : vector<4x1xf32>
    %c0_43 = arith.constant 0 : index
    %c0_44 = arith.constant 0 : index
    %96 = vector.load %arg10[%c0_43, %c0_44] : memref<16x4xf32, #tpu.memory_space<vmem>>, vector<16x4xf32>
    %cst_45 = arith.constant dense<0.000000e+00> : vector<16x1xf32>
    %97 = tpu.matmul %96, %95, %cst_45 {dimension_numbers = #tpu.dot_dimension_numbers<[1], [0], [0], [1], [0, 0, 1, 1], [], []>} : vector<16x4xf32>, vector<4x1xf32>, vector<16x1xf32> -> vector<16x1xf32>
    %c0_46 = arith.constant 0 : index
    %c0_47 = arith.constant 0 : index
    %98 = vector.load %arg11[%c0_46, %c0_47] : memref<16x1xf32, #tpu.memory_space<vmem>>, vector<16x1xf32>
    %99 = arith.addf %97, %98 : vector<16x1xf32>
    %100 = arith.negf %99 : vector<16x1xf32>
    %101 = math.exp %100 : vector<16x1xf32>
    %cst_48 = arith.constant 1.000000e+00 : f32
    %102 = vector.broadcast %cst_48 : f32 to vector<16x1xf32>
    %103 = arith.addf %102, %101 : vector<16x1xf32>
    %104 = arith.divf %102, %103 : vector<16x1xf32>
    %105 = vector.broadcast %104 : vector<16x1xf32> to vector<16x256xf32>
    %106 = arith.mulf %85, %105 : vector<16x256xf32>
    %c1 = arith.constant 1 : index
    %c0_49 = arith.constant 0 : index
    %c0_50 = arith.constant 0 : index
    %107 = vector.load %arg2[%c1, %c0_49, %c0_50] : memref<2x16x256xf32, #tpu.memory_space<vmem>>, vector<1x16x256xf32>
    %108 = vector.shape_cast %107 : vector<1x16x256xf32> to vector<16x256xf32>
    %109 = arith.addf %106, %108 : vector<16x256xf32>
    %c1_51 = arith.constant 1 : index
    %c0_52 = arith.constant 0 : index
    %c0_53 = arith.constant 0 : index
    %110 = vector.load %arg12[%c1_51, %c0_52, %c0_53] : memref<2x16x256xf32, #tpu.memory_space<vmem>>, vector<1x16x256xf32>
    %111 = vector.shape_cast %110 : vector<1x16x256xf32> to vector<16x256xf32>
    %112 = vector.shape_cast %109 : vector<16x256xf32> to vector<1x16x256xf32>
    tpu.vector_store %arg12[%c1_51, %c0_52, %c0_53], %112 {strides = array<i32>} : memref<2x16x256xf32, #tpu.memory_space<vmem>>, vector<1x16x256xf32>,
    return
  }
  func.func @transform_0(%arg0: i32) -> (i32, i32, i32, i32) {
    %c0_i32 = arith.constant 0 : i32
    %c0_i32_0 = arith.constant 0 : i32
    %c0_i32_1 = arith.constant 0 : i32
    %c0_i32_2 = arith.constant 0 : i32
    return %arg0, %c0_i32, %c0_i32_0, %c0_i32_1 : i32, i32, i32, i32
  }
  func.func @transform_1(%arg0: i32) -> (i32, i32, i32) {
    %c0_i32 = arith.constant 0 : i32
    %c0_i32_0 = arith.constant 0 : i32
    %c0_i32_1 = arith.constant 0 : i32
    return %arg0, %c0_i32, %c0_i32_0 : i32, i32, i32
  }
  func.func @transform_2(%arg0: i32) -> (i32, i32) {
    %c0_i32 = arith.constant 0 : i32
    %c0_i32_0 = arith.constant 0 : i32
    %c0_i32_1 = arith.constant 0 : i32
    return %c0_i32, %c0_i32_0 : i32, i32
  }
  func.func @transform_3(%arg0: i32) -> (i32, i32) {
    %c0_i32 = arith.constant 0 : i32
    %c0_i32_0 = arith.constant 0 : i32
    %c0_i32_1 = arith.constant 0 : i32
    return %c0_i32, %c0_i32_0 : i32, i32
  }
  func.func @transform_4(%arg0: i32) -> (i32, i32) {
    %c0_i32 = arith.constant 0 : i32
    %c0_i32_0 = arith.constant 0 : i32
    %c0_i32_1 = arith.constant 0 : i32
    return %c0_i32, %c0_i32_0 : i32, i32
  }
  func.func @transform_5(%arg0: i32) -> (i32, i32) {
    %c0_i32 = arith.constant 0 : i32
    %c0_i32_0 = arith.constant 0 : i32
    %c0_i32_1 = arith.constant 0 : i32
    return %c0_i32, %c0_i32_0 : i32, i32
  }
  func.func @transform_6(%arg0: i32) -> (i32, i32) {
    %c0_i32 = arith.constant 0 : i32
    %c0_i32_0 = arith.constant 0 : i32
    %c0_i32_1 = arith.constant 0 : i32
    return %c0_i32, %c0_i32_0 : i32, i32
  }
  func.func @transform_7(%arg0: i32) -> (i32, i32) {
    %c0_i32 = arith.constant 0 : i32
    %c0_i32_0 = arith.constant 0 : i32
    %c0_i32_1 = arith.constant 0 : i32
    return %c0_i32, %c0_i32_0 : i32, i32
  }
  func.func @transform_8(%arg0: i32) -> (i32, i32) {
    %c0_i32 = arith.constant 0 : i32
    %c0_i32_0 = arith.constant 0 : i32
    %c0_i32_1 = arith.constant 0 : i32
    return %c0_i32, %c0_i32_0 : i32, i32
  }
  func.func @transform_9(%arg0: i32) -> (i32, i32) {
    %c0_i32 = arith.constant 0 : i32
    %c0_i32_0 = arith.constant 0 : i32
    %c0_i32_1 = arith.constant 0 : i32
    return %c0_i32, %c0_i32_0 : i32, i32
  }
  func.func @transform_10(%arg0: i32) -> (i32, i32) {
    %c0_i32 = arith.constant 0 : i32
    %c0_i32_0 = arith.constant 0 : i32
    %c0_i32_1 = arith.constant 0 : i32
    return %c0_i32, %c0_i32_0 : i32, i32
  }
  func.func @transform_11(%arg0: i32) -> (i32, i32, i32) {
    %c0_i32 = arith.constant 0 : i32
    %c0_i32_0 = arith.constant 0 : i32
    %c0_i32_1 = arith.constant 0 : i32
    return %arg0, %c0_i32, %c0_i32_0 : i32, i32, i32
  }
}

</mosaic_0001>

<llo_original>
// kernel: tpu_custom_call.1
$region0: #{tpu_custom_call.1}
  #allocation0 [shape = 'u32[]', space=smem, size = 0x4, offset = 0x4, fixed_abs, tag = 'smem constant byte address 0x4 - core index']
  #allocation1 [shape = 'u32[144,128]{1,0:T(1,128)}', space=vmem, size = 0x12000, scoped, tag = 'internal scratch']
  %s0 = inlined_call_operand.vmem [shape: f32[4,20,26,16], index: 0, kind: input, shape index: {}]
  %s1 = inlined_call_operand.vmem [shape: f32[4,16,256], index: 1, kind: input, shape index: {}]
  %s2 = inlined_call_operand.vmem [shape: f32[864,1], index: 2, kind: input, shape index: {}]
  %s3 = inlined_call_operand.vmem [shape: bf16[144,16], index: 3, kind: input, shape index: {}]
  %s4 = inlined_call_operand.vmem [shape: f32[1,16], index: 4, kind: input, shape index: {}]
  %s5 = inlined_call_operand.vmem [shape: bf16[16,144], index: 5, kind: input, shape index: {}]
  %s6 = inlined_call_operand.vmem [shape: f32[16,1], index: 6, kind: input, shape index: {}]
  %s7 = inlined_call_operand.vmem [shape: f32[4,16], index: 7, kind: input, shape index: {}]
  %s8 = inlined_call_operand.vmem [shape: f32[4,1], index: 8, kind: input, shape index: {}]
  %s9 = inlined_call_operand.vmem [shape: f32[16,4], index: 9, kind: input, shape index: {}]
  %s10 = inlined_call_operand.vmem [shape: f32[16,1], index: 10, kind: input, shape index: {}]
  %s11 = inlined_call_operand.hbm [shape: f32[4,16,256], index: 11, kind: output, shape index: {}]
  %s12 = sld [smem:[#allocation0]]
  $region77: #{tpu_custom_call.1} parent=0
    _
  %s14 = ssub.s32 1, %s12
  %s15 = scalar_select 0, %s14, %s12
  $region1: #{tpu_custom_call.1} parent=0
    #allocation2 [shape = 'u8[65536]{0}', space=vmem, size = 0x10000, scoped, tag = 'output window, operand 0']
    #allocation3 [shape = 's32[2]{0}', space=sflag, size = 0x8, scoped, tag = 'scoped memory for tpu_custom_call.1']
    %16 = vsyncpa [#allocation3], 0
    %s17 = scalar_lea.sflag [#allocation3], 1
    %18 = vsyncpa %s17, 0
    loop: start=0, step=1, limit=4
    $region2: #{tpu_custom_call.1} parent=1 // loop_pre_header
      _
    $region3: #{tpu_custom_call.1} parent=1 // loop_header
      %s20 = sphi 0, %s24
      %p21 = scmp.ge.s32.totalorder %s20, 4
      %s30 = sphi 0, %s32
      %s33 = sphi 0, %s30
      %s34 = sphi 0, %s33
      %s50 = sphi 0, %s34
      %s56 = sphi 0, %s58
      %s59 = sphi 0, %s56
      %s60 = sphi 0, %s59
      %s76 = sphi 0, %s60
      %s80 = sphi 0, %s80
      %s82 = sphi 0, %s80
      %s83 = sphi 0, %s82
      %s97 = sphi 0, %s83
      %s101 = sphi 0, %s101
      %s103 = sphi 0, %s101
      %s104 = sphi 0, %s103
      %s118 = sphi 0, %s104
      %s122 = sphi 0, %s122
      %s124 = sphi 0, %s122
      %s125 = sphi 0, %s124
      %s139 = sphi 0, %s125
      %s143 = sphi 0, %s143
      %s145 = sphi 0, %s143
      %s146 = sphi 0, %s145
      %s160 = sphi 0, %s146
      %s164 = sphi 0, %s164
      %s166 = sphi 0, %s164
      %s167 = sphi 0, %s166
      %s181 = sphi 0, %s167
      %s185 = sphi 0, %s185
      %s187 = sphi 0, %s185
      %s188 = sphi 0, %s187
      %s202 = sphi 0, %s188
      %s206 = sphi 0, %s206
      %s208 = sphi 0, %s206
      %s209 = sphi 0, %s208
      %s223 = sphi 0, %s209
      %s227 = sphi 0, %s227
      %s229 = sphi 0, %s227
      %s230 = sphi 0, %s229
      %s244 = sphi 0, %s230
      %s248 = sphi 0, %s248
      %s250 = sphi 0, %s248
      %s251 = sphi 0, %s250
      %s265 = sphi 0, %s251
      %s271 = sphi 0, %s273
      %s274 = sphi 0, %s271
      %s275 = sphi 0, %s274
      %s291 = sphi 0, %s275
    $region4: #{tpu_custom_call.1} parent=1 // loop_header_branch
      %23 = sbr.rel (%p21) target = $region8
    $region5: #{tpu_custom_call.1} parent=1 // loop_body
      %s25 = ssub.s32 %s20, 1
      %s26 = ssub.s32 %s20, 2
      %s27 = sadd.s32 %s20, 1
      %s28 = ssub.s32 %s20, %s27
      %p29 = scmp.eq.s32.totalorder %s28, 0
      %s31 = sadd.s32 %s30, 1
      %s32 = scalar_select %p29, %s30, %s31
      %p35 = pneg %p29
      %p36 = scmp.eq.s32.totalorder %s20, 1
      %p37 = por %p35, %p36
      %p38 = scmp.ne.s32.totalorder %s30, %s33
      %p39 = scmp.eq.s32.totalorder %s20, 0
      %p40 = por %p38, %p39
      %p41 = scmp.ne.s32.totalorder %s30, %s33
      %p42 = scmp.eq.s32.totalorder %s25, 1
      %p43 = por %p41, %p42
      %p44 = scmp.ne.s32.totalorder %s33, %s34
      %p45 = scmp.eq.s32.totalorder %s25, 0
      %p46 = por %p44, %p45
      %p47 = scmp.ne.s32.totalorder %s33, %s34
      %p48 = scmp.eq.s32.totalorder %s26, 1
      %p49 = por %p47, %p48
      %p51 = scmp.ne.s32.totalorder %s34, %s50
      %p52 = scmp.eq.s32.totalorder %s26, 0
      %p53 = por %p51, %p52
      %s54 = ssub.s32 %s20, %s27
      %p55 = scmp.eq.s32.totalorder %s54, 0
      %s57 = sadd.s32 %s56, 1
      %s58 = scalar_select %p55, %s56, %s57
      %p61 = pneg %p55
      %p62 = scmp.eq.s32.totalorder %s20, 1
      %p63 = por %p61, %p62
      %p64 = scmp.ne.s32.totalorder %s56, %s59
      %p65 = scmp.eq.s32.totalorder %s20, 0
      %p66 = por %p64, %p65
      %p67 = scmp.ne.s32.totalorder %s56, %s59
      %p68 = scmp.eq.s32.totalorder %s25, 1
      %p69 = por %p67, %p68
      %p70 = scmp.ne.s32.totalorder %s59, %s60
      %p71 = scmp.eq.s32.totalorder %s25, 0
      %p72 = por %p70, %p71
      %p73 = scmp.ne.s32.totalorder %s59, %s60
      %p74 = scmp.eq.s32.totalorder %s26, 1
      %p75 = por %p73, %p74
      %p77 = scmp.ne.s32.totalorder %s60, %s76
      %p78 = scmp.eq.s32.totalorder %s26, 0
      %p79 = por %p77, %p78
      %s81 = sadd.s32 %s80, 1
      %p84 = scmp.eq.s32.totalorder %s20, 1
      %p85 = scmp.ne.s32.totalorder %s80, %s82
      %p86 = scmp.eq.s32.totalorder %s20, 0
      %p87 = por %p85, %p86
      %p88 = scmp.ne.s32.totalorder %s80, %s82
      %p89 = scmp.eq.s32.totalorder %s25, 1
      %p90 = por %p88, %p89
      %p91 = scmp.ne.s32.totalorder %s82, %s83
      %p92 = scmp.eq.s32.totalorder %s25, 0
      %p93 = por %p91, %p92
      %p94 = scmp.ne.s32.totalorder %s82, %s83
      %p95 = scmp.eq.s32.totalorder %s26, 1
      %p96 = por %p94, %p95
      %p98 = scmp.ne.s32.totalorder %s83, %s97
      %p99 = scmp.eq.s32.totalorder %s26, 0
      %p100 = por %p98, %p99
      %s102 = sadd.s32 %s101, 1
      %p105 = scmp.eq.s32.totalorder %s20, 1
      %p106 = scmp.ne.s32.totalorder %s101, %s103
      %p107 = scmp.eq.s32.totalorder %s20, 0
      %p108 = por %p106, %p107
      %p109 = scmp.ne.s32.totalorder %s101, %s103
      %p110 = scmp.eq.s32.totalorder %s25, 1
      %p111 = por %p109, %p110
      %p112 = scmp.ne.s32.totalorder %s103, %s104
      %p113 = scmp.eq.s32.totalorder %s25, 0
      %p114 = por %p112, %p113
      %p115 = scmp.ne.s32.totalorder %s103, %s104
      %p116 = scmp.eq.s32.totalorder %s26, 1
      %p117 = por %p115, %p116
      %p119 = scmp.ne.s32.totalorder %s104, %s118
      %p120 = scmp.eq.s32.totalorder %s26, 0
      %p121 = por %p119, %p120
      %s123 = sadd.s32 %s122, 1
      %p126 = scmp.eq.s32.totalorder %s20, 1
      %p127 = scmp.ne.s32.totalorder %s122, %s124
      %p128 = scmp.eq.s32.totalorder %s20, 0
      %p129 = por %p127, %p128
      %p130 = scmp.ne.s32.totalorder %s122, %s124
      %p131 = scmp.eq.s32.totalorder %s25, 1
      %p132 = por %p130, %p131
      %p133 = scmp.ne.s32.totalorder %s124, %s125
      %p134 = scmp.eq.s32.totalorder %s25, 0
      %p135 = por %p133, %p134
      %p136 = scmp.ne.s32.totalorder %s124, %s125
      %p137 = scmp.eq.s32.totalorder %s26, 1
      %p138 = por %p136, %p137
      %p140 = scmp.ne.s32.totalorder %s125, %s139
      %p141 = scmp.eq.s32.totalorder %s26, 0
      %p142 = por %p140, %p141
      %s144 = sadd.s32 %s143, 1
      %p147 = scmp.eq.s32.totalorder %s20, 1
      %p148 = scmp.ne.s32.totalorder %s143, %s145
      %p149 = scmp.eq.s32.totalorder %s20, 0
      %p150 = por %p148, %p149
      %p151 = scmp.ne.s32.totalorder %s143, %s145
      %p152 = scmp.eq.s32.totalorder %s25, 1
      %p153 = por %p151, %p152
      %p154 = scmp.ne.s32.totalorder %s145, %s146
      %p155 = scmp.eq.s32.totalorder %s25, 0
      %p156 = por %p154, %p155
      %p157 = scmp.ne.s32.totalorder %s145, %s146
      %p158 = scmp.eq.s32.totalorder %s26, 1
      %p159 = por %p157, %p158
      %p161 = scmp.ne.s32.totalorder %s146, %s160
      %p162 = scmp.eq.s32.totalorder %s26, 0
      %p163 = por %p161, %p162
      %s165 = sadd.s32 %s164, 1
      %p168 = scmp.eq.s32.totalorder %s20, 1
      %p169 = scmp.ne.s32.totalorder %s164, %s166
      %p170 = scmp.eq.s32.totalorder %s20, 0
      %p171 = por %p169, %p170
      %p172 = scmp.ne.s32.totalorder %s164, %s166
      %p173 = scmp.eq.s32.totalorder %s25, 1
      %p174 = por %p172, %p173
      %p175 = scmp.ne.s32.totalorder %s166, %s167
      %p176 = scmp.eq.s32.totalorder %s25, 0
      %p177 = por %p175, %p176
      %p178 = scmp.ne.s32.totalorder %s166, %s167
      %p179 = scmp.eq.s32.totalorder %s26, 1
      %p180 = por %p178, %p179
      %p182 = scmp.ne.s32.totalorder %s167, %s181
      %p183 = scmp.eq.s32.totalorder %s26, 0
      %p184 = por %p182, %p183
      %s186 = sadd.s32 %s185, 1
      %p189 = scmp.eq.s32.totalorder %s20, 1
      %p190 = scmp.ne.s32.totalorder %s185, %s187
      %p191 = scmp.eq.s32.totalorder %s20, 0
      %p192 = por %p190, %p191
      %p193 = scmp.ne.s32.totalorder %s185, %s187
      %p194 = scmp.eq.s32.totalorder %s25, 1
      %p195 = por %p193, %p194
      %p196 = scmp.ne.s32.totalorder %s187, %s188
      %p197 = scmp.eq.s32.totalorder %s25, 0
      %p198 = por %p196, %p197
      %p199 = scmp.ne.s32.totalorder %s187, %s188
      %p200 = scmp.eq.s32.totalorder %s26, 1
      %p201 = por %p199, %p200
      %p203 = scmp.ne.s32.totalorder %s188, %s202
      %p204 = scmp.eq.s32.totalorder %s26, 0
      %p205 = por %p203, %p204
      %s207 = sadd.s32 %s206, 1
      %p210 = scmp.eq.s32.totalorder %s20, 1
      %p211 = scmp.ne.s32.totalorder %s206, %s208
      %p212 = scmp.eq.s32.totalorder %s20, 0
      %p213 = por %p211, %p212
      %p214 = scmp.ne.s32.totalorder %s206, %s208
      %p215 = scmp.eq.s32.totalorder %s25, 1
      %p216 = por %p214, %p215
      %p217 = scmp.ne.s32.totalorder %s208, %s209
      %p218 = scmp.eq.s32.totalorder %s25, 0
      %p219 = por %p217, %p218
      %p220 = scmp.ne.s32.totalorder %s208, %s209
      %p221 = scmp.eq.s32.totalorder %s26, 1
      %p222 = por %p220, %p221
      %p224 = scmp.ne.s32.totalorder %s209, %s223
      %p225 = scmp.eq.s32.totalorder %s26, 0
      %p226 = por %p224, %p225
      %s228 = sadd.s32 %s227, 1
      %p231 = scmp.eq.s32.totalorder %s20, 1
      %p232 = scmp.ne.s32.totalorder %s227, %s229
      %p233 = scmp.eq.s32.totalorder %s20, 0
      %p234 = por %p232, %p233
      %p235 = scmp.ne.s32.totalorder %s227, %s229
      %p236 = scmp.eq.s32.totalorder %s25, 1
      %p237 = por %p235, %p236
      %p238 = scmp.ne.s32.totalorder %s229, %s230
      %p239 = scmp.eq.s32.totalorder %s25, 0
      %p240 = por %p238, %p239
      %p241 = scmp.ne.s32.totalorder %s229, %s230
      %p242 = scmp.eq.s32.totalorder %s26, 1
      %p243 = por %p241, %p242
      %p245 = scmp.ne.s32.totalorder %s230, %s244
      %p246 = scmp.eq.s32.totalorder %s26, 0
      %p247 = por %p245, %p246
      %s249 = sadd.s32 %s248, 1
      %p252 = scmp.eq.s32.totalorder %s20, 1
      %p253 = scmp.ne.s32.totalorder %s248, %s250
      %p254 = scmp.eq.s32.totalorder %s20, 0
      %p255 = por %p253, %p254
      %p256 = scmp.ne.s32.totalorder %s248, %s250
      %p257 = scmp.eq.s32.totalorder %s25, 1
      %p258 = por %p256, %p257
      %p259 = scmp.ne.s32.totalorder %s250, %s251
      %p260 = scmp.eq.s32.totalorder %s25, 0
      %p261 = por %p259, %p260
      %p262 = scmp.ne.s32.totalorder %s250, %s251
      %p263 = scmp.eq.s32.totalorder %s26, 1
      %p264 = por %p262, %p263
      %p266 = scmp.ne.s32.totalorder %s251, %s265
      %p267 = scmp.eq.s32.totalorder %s26, 0
      %p268 = por %p266, %p267
      %s269 = ssub.s32 %s20, %s27
      %p270 = scmp.eq.s32.totalorder %s269, 0
      %s272 = sadd.s32 %s271, 1
      %s273 = scalar_select %p270, %s271, %s272
      %p276 = pneg %p270
      %p277 = scmp.eq.s32.totalorder %s20, 1
      %p278 = por %p276, %p277
      %p279 = scmp.ne.s32.totalorder %s271, %s274
      %p280 = scmp.eq.s32.totalorder %s20, 0
      %p281 = por %p279, %p280
      %p282 = scmp.ne.s32.totalorder %s271, %s274
      %p283 = scmp.eq.s32.totalorder %s25, 1
      %p284 = por %p282, %p283
      %p285 = scmp.ne.s32.totalorder %s274, %s275
      %p286 = scmp.eq.s32.totalorder %s25, 0
      %p287 = por %p285, %p286
      %p288 = scmp.ne.s32.totalorder %s274, %s275
      %p289 = scmp.eq.s32.totalorder %s26, 1
      %p290 = por %p288, %p289
      %p292 = scmp.ne.s32.totalorder %s275, %s291
      %p293 = scmp.eq.s32.totalorder %s26, 0
      %p294 = por %p292, %p293
      %p295 = scmp.le.s32.totalorder 1, %s20
      %p296 = scmp.lt.s32.totalorder %s20, 3
      %p297 = pnand %p295, %p296
      %p298 = pneg %p297
      // Predicated region
      $region9: #{tpu_custom_call.1} parent=5 // pred_check
        _
      $region10: #{tpu_custom_call.1} parent=5 // pred_check_branch
        %300 = sbr.rel (%p297) target = $region12
      $region11: #{tpu_custom_call.1} parent=5 // pred_region
        %s301 = ssub.s32 %s20, 1
        // Predicated region
        $region13: #{tpu_custom_call.1} parent=11 // pred_check
          %p302 = pneg %p93
        $region14: #{tpu_custom_call.1} parent=11 // pred_check_branch
          %304 = sbr.rel (%p302) target = $region16
        $region15: #{tpu_custom_call.1} parent=11 // pred_region
          _
        $region16: #{tpu_custom_call.1} parent=11 // pred_fallthru
          _
        // Predicated region
        $region17: #{tpu_custom_call.1} parent=11 // pred_check
          %p305 = pneg %p114
        $region18: #{tpu_custom_call.1} parent=11 // pred_check_branch
          %307 = sbr.rel (%p305) target = $region20
        $region19: #{tpu_custom_call.1} parent=11 // pred_region
          _
        $region20: #{tpu_custom_call.1} parent=11 // pred_fallthru
          _
        // Predicated region
        $region21: #{tpu_custom_call.1} parent=11 // pred_check
          %p308 = pneg %p135
        $region22: #{tpu_custom_call.1} parent=11 // pred_check_branch
          %310 = sbr.rel (%p308) target = $region24
        $region23: #{tpu_custom_call.1} parent=11 // pred_region
          _
        $region24: #{tpu_custom_call.1} parent=11 // pred_fallthru
          _
        // Predicated region
        $region25: #{tpu_custom_call.1} parent=11 // pred_check
          %p311 = pneg %p156
        $region26: #{tpu_custom_call.1} parent=11 // pred_check_branch
          %313 = sbr.rel (%p311) target = $region28
        $region27: #{tpu_custom_call.1} parent=11 // pred_region
          _
        $region28: #{tpu_custom_call.1} parent=11 // pred_fallthru
          _
        // Predicated region
        $region29: #{tpu_custom_call.1} parent=11 // pred_check
          %p314 = pneg %p177
        $region30: #{tpu_custom_call.1} parent=11 // pred_check_branch
          %316 = sbr.rel (%p314) target = $region32
        $region31: #{tpu_custom_call.1} parent=11 // pred_region
          _
        $region32: #{tpu_custom_call.1} parent=11 // pred_fallthru
          _
        // Predicated region
        $region33: #{tpu_custom_call.1} parent=11 // pred_check
          %p317 = pneg %p198
        $region34: #{tpu_custom_call.1} parent=11 // pred_check_branch
          %319 = sbr.rel (%p317) target = $region36
        $region35: #{tpu_custom_call.1} parent=11 // pred_region
          _
        $region36: #{tpu_custom_call.1} parent=11 // pred_fallthru
          _
        // Predicated region
        $region37: #{tpu_custom_call.1} parent=11 // pred_check
          %p320 = pneg %p219
        $region38: #{tpu_custom_call.1} parent=11 // pred_check_branch
          %322 = sbr.rel (%p320) target = $region40
        $region39: #{tpu_custom_call.1} parent=11 // pred_region
          _
        $region40: #{tpu_custom_call.1} parent=11 // pred_fallthru
          _
        // Predicated region
        $region41: #{tpu_custom_call.1} parent=11 // pred_check
          %p323 = pneg %p240
        $region42: #{tpu_custom_call.1} parent=11 // pred_check_branch
          %325 = sbr.rel (%p323) target = $region44
        $region43: #{tpu_custom_call.1} parent=11 // pred_region
          _
        $region44: #{tpu_custom_call.1} parent=11 // pred_fallthru
          _
        // Predicated region
        $region45: #{tpu_custom_call.1} parent=11 // pred_check
          %p326 = pneg %p261
        $region46: #{tpu_custom_call.1} parent=11 // pred_check_branch
          %328 = sbr.rel (%p326) target = $region48
        $region47: #{tpu_custom_call.1} parent=11 // pred_region
          _
        $region48: #{tpu_custom_call.1} parent=11 // pred_fallthru
          _
      $region12: #{tpu_custom_call.1} parent=5 // pred_fallthru
        _
      %p329 = scmp.lt.s32.totalorder %s20, 2
      // Predicated region
      $region49: #{tpu_custom_call.1} parent=5 // pred_check
        %p330 = pneg %p329
      $region50: #{tpu_custom_call.1} parent=5 // pred_check_branch
        %332 = sbr.rel (%p330) target = $region52
      $region51: #{tpu_custom_call.1} parent=5 // pred_region
        // Predicated region
        $region53: #{tpu_custom_call.1} parent=51 // pred_check
          %p333 = pneg %p40
        $region54: #{tpu_custom_call.1} parent=51 // pred_check_branch
          %335 = sbr.rel (%p333) target = $region56
        $region55: #{tpu_custom_call.1} parent=51 // pred_region
          %s336 = smul.u32 2, %s20
          %p337 = scmp.lt.s32.totalorder %s336, 3
          %s338 = scalar_select %p337, %s336, 3
          %s339 = smul.addr %s338, 80
          %s340 = smul.addr %s339, 8
          %s341 = scalar_lea.vmem %s0, %s340
          %s342 = smul.u32 2, %s20
        $region56: #{tpu_custom_call.1} parent=51 // pred_fallthru
          _
        // Predicated region
        $region57: #{tpu_custom_call.1} parent=51 // pred_check
          %p343 = pneg %p66
        $region58: #{tpu_custom_call.1} parent=51 // pred_check_branch
          %345 = sbr.rel (%p343) target = $region60
        $region59: #{tpu_custom_call.1} parent=51 // pred_region
          %s346 = smul.u32 2, %s20
          %p347 = scmp.lt.s32.totalorder %s346, 3
          %s348 = scalar_select %p347, %s346, 3
          %s349 = smul.addr %s348, 4
          %s350 = smul.addr %s349, 8
          %s351 = scalar_lea.vmem %s1, %s350
          %s352 = smul.u32 2, %s20
        $region60: #{tpu_custom_call.1} parent=51 // pred_fallthru
          _
      $region52: #{tpu_custom_call.1} parent=5 // pred_fallthru
        _
      %p353 = scmp.le.s32.totalorder 1, %s20
      %p354 = scmp.lt.s32.totalorder %s20, 3
      %p355 = pnand %p353, %p354
      %p356 = pneg %p355
      // Predicated region
      $region61: #{tpu_custom_call.1} parent=5 // pred_check
        _
      $region62: #{tpu_custom_call.1} parent=5 // pred_check_branch
        %358 = sbr.rel (%p355) target = $region64
      $region63: #{tpu_custom_call.1} parent=5 // pred_region
        %s359 = ssub.s32 %s20, 1
        %s360 = smul.u32 2, %s25
        %p361 = scmp.lt.s32.totalorder %s360, 3
        %s362 = scalar_select %p361, %s360, 3
        %s363 = smul.addr %s362, 80
        %s364 = smul.addr %s363, 8
        %s365 = scalar_lea.vmem %s0, %s364
        %p366 = pneg %p46
        %p367 = pneg %p43
        %s368 = smul.u32 2, %s25
        %p369 = scmp.lt.s32.totalorder %s368, 3
        %s370 = scalar_select %p369, %s368, 3
        %s371 = smul.addr %s370, 4
        %s372 = smul.addr %s371, 8
        %s373 = scalar_lea.vmem %s1, %s372
        %p374 = pneg %p72
        %p375 = pneg %p69
        %p376 = pneg %p93
        %p377 = pneg %p90
        %p378 = pneg %p114
        %p379 = pneg %p111
        %p380 = pneg %p135
        %p381 = pneg %p132
        %p382 = pneg %p156
        %p383 = pneg %p153
        %p384 = pneg %p177
        %p385 = pneg %p174
        %p386 = pneg %p198
        %p387 = pneg %p195
        %p388 = pneg %p219
        %p389 = pneg %p216
        %p390 = pneg %p240
        %p391 = pneg %p237
        %p392 = pneg %p261
        %p393 = pneg %p258
        %p394 = pneg %p287
        %p395 = pneg %p284
        %s396 = sand.u32 %s274, 1
        %s397 = scalar_lea.sflag [#allocation3], %s396
        %s398 = sand.u32 %s274, 1
        %s399 = smul.addr %s398, 64
        %s400 = scalar_lea.vmem [#allocation2], %s399
        %s401 = smul.u32 2, %s25
        %p402 = scmp.lt.s32.totalorder %s401, 3
        %s403 = scalar_select %p402, %s401, 3
        %s404 = smul.addr %s403, 80
        %s405 = smul.addr %s404, 8
        %s406 = scalar_lea.vmem %s0, %s405
        %s407 = smul.u32 2, %s25
        %s408 = smul.u32 2, %s25
        %p409 = scmp.lt.s32.totalorder %s408, 3
        %s410 = scalar_select %p409, %s408, 3
        %s411 = smul.addr %s410, 4
        %s412 = smul.addr %s411, 8
        %s413 = scalar_lea.vmem %s1, %s412
        %s414 = smul.u32 2, %s25
        %s415 = smul.u32 2, %s25
        %v417 = vld [vmem:[%s406] sm:$0xff]
        %v418 = vld [vmem:[%s406 + $0x8] sm:$0xff]
        %v419 = vld [vmem:[%s406 + $0x10] sm:$0xff]
        %v420 = vld [vmem:[%s406 + $0x18] sm:$0x3]
        %v421 = vld [vmem:[%s406 + $0x20] sm:$0xff]
        %v422 = vld [vmem:[%s406 + $0x28] sm:$0xff]
        %v423 = vld [vmem:[%s406 + $0x30] sm:$0xff]
        %v424 = vld [vmem:[%s406 + $0x38] sm:$0x3]
        %v425 = vld [vmem:[%s406 + $0x40] sm:$0xff]
        %v426 = vld [vmem:[%s406 + $0x48] sm:$0xff]
        %v427 = vld [vmem:[%s406 + $0x50] sm:$0xff]
        %v428 = vld [vmem:[%s406 + $0x58] sm:$0x3]
        %v429 = vld [vmem:[%s406 + $0x60] sm:$0xff]
        %v430 = vld [vmem:[%s406 + $0x68] sm:$0xff]
        %v431 = vld [vmem:[%s406 + $0x70] sm:$0xff]
        %v432 = vld [vmem:[%s406 + $0x78] sm:$0x3]
        %v433 = vld [vmem:[%s406 + $0x80] sm:$0xff]
        %v434 = vld [vmem:[%s406 + $0x88] sm:$0xff]
        %v435 = vld [vmem:[%s406 + $0x90] sm:$0xff]
        %v436 = vld [vmem:[%s406 + $0x98] sm:$0x3]
        %v437 = vld [vmem:[%s406 + $0xa0] sm:$0xff]
        %v438 = vld [vmem:[%s406 + $0xa8] sm:$0xff]
        %v439 = vld [vmem:[%s406 + $0xb0] sm:$0xff]
        %v440 = vld [vmem:[%s406 + $0xb8] sm:$0x3]
        %v441 = vld [vmem:[%s406 + $0xc0] sm:$0xff]
        %v442 = vld [vmem:[%s406 + $0xc8] sm:$0xff]
        %v443 = vld [vmem:[%s406 + $0xd0] sm:$0xff]
        %v444 = vld [vmem:[%s406 + $0xd8] sm:$0x3]
        %v445 = vld [vmem:[%s406 + $0xe0] sm:$0xff]
        %v446 = vld [vmem:[%s406 + $0xe8] sm:$0xff]
        %v447 = vld [vmem:[%s406 + $0xf0] sm:$0xff]
        %v448 = vld [vmem:[%s406 + $0xf8] sm:$0x3]
        %v449 = vld [vmem:[%s406 + $0x100] sm:$0xff]
        %v450 = vld [vmem:[%s406 + $0x108] sm:$0xff]
        %v451 = vld [vmem:[%s406 + $0x110] sm:$0xff]
        %v452 = vld [vmem:[%s406 + $0x118] sm:$0x3]
        %v453 = vld [vmem:[%s406 + $0x120] sm:$0xff]
        %v454 = vld [vmem:[%s406 + $0x128] sm:$0xff]
        %v455 = vld [vmem:[%s406 + $0x130] sm:$0xff]
        %v456 = vld [vmem:[%s406 + $0x138] sm:$0x3]
        %v457 = vld [vmem:[%s406 + $0x140] sm:$0xff]
        %v458 = vld [vmem:[%s406 + $0x148] sm:$0xff]
        %v459 = vld [vmem:[%s406 + $0x150] sm:$0xff]
        %v460 = vld [vmem:[%s406 + $0x158] sm:$0x3]
        %v461 = vld [vmem:[%s406 + $0x160] sm:$0xff]
        %v462 = vld [vmem:[%s406 + $0x168] sm:$0xff]
        %v463 = vld [vmem:[%s406 + $0x170] sm:$0xff]
        %v464 = vld [vmem:[%s406 + $0x178] sm:$0x3]
        %v465 = vld [vmem:[%s406 + $0x180] sm:$0xff]
        %v466 = vld [vmem:[%s406 + $0x188] sm:$0xff]
        %v467 = vld [vmem:[%s406 + $0x190] sm:$0xff]
        %v468 = vld [vmem:[%s406 + $0x198] sm:$0x3]
        %v469 = vld [vmem:[%s406 + $0x1a0] sm:$0xff]
        %v470 = vld [vmem:[%s406 + $0x1a8] sm:$0xff]
        %v471 = vld [vmem:[%s406 + $0x1b0] sm:$0xff]
        %v472 = vld [vmem:[%s406 + $0x1b8] sm:$0x3]
        %v473 = vld [vmem:[%s406 + $0x1c0] sm:$0xff]
        %v474 = vld [vmem:[%s406 + $0x1c8] sm:$0xff]
        %v475 = vld [vmem:[%s406 + $0x1d0] sm:$0xff]
        %v476 = vld [vmem:[%s406 + $0x1d8] sm:$0x3]
        %v477 = vld [vmem:[%s406 + $0x1e0] sm:$0xff]
        %v478 = vld [vmem:[%s406 + $0x1e8] sm:$0xff]
        %v479 = vld [vmem:[%s406 + $0x1f0] sm:$0xff]
        %v480 = vld [vmem:[%s406 + $0x1f8] sm:$0x3]
        %v481 = vld [vmem:[%s406 + $0x200] sm:$0xff]
        %v482 = vld [vmem:[%s406 + $0x208] sm:$0xff]
        %v483 = vld [vmem:[%s406 + $0x210] sm:$0xff]
        %v484 = vld [vmem:[%s406 + $0x218] sm:$0x3]
        %v485 = vld [vmem:[%s406 + $0x220] sm:$0xff]
        %v486 = vld [vmem:[%s406 + $0x228] sm:$0xff]
        %v487 = vld [vmem:[%s406 + $0x230] sm:$0xff]
        %v488 = vld [vmem:[%s406 + $0x238] sm:$0x3]
        %v489 = vld [vmem:[%s406 + $0x240] sm:$0xff]
        %v490 = vld [vmem:[%s406 + $0x248] sm:$0xff]
        %v491 = vld [vmem:[%s406 + $0x250] sm:$0xff]
        %v492 = vld [vmem:[%s406 + $0x258] sm:$0x3]
        %v493 = vld [vmem:[%s406 + $0x260] sm:$0xff]
        %v494 = vld [vmem:[%s406 + $0x268] sm:$0xff]
        %v495 = vld [vmem:[%s406 + $0x270] sm:$0xff]
        %v496 = vld [vmem:[%s406 + $0x278] sm:$0x3]
        %v497 = vld [vmem:[%s406 + $0x280] sm:$0xff]
        %v498 = vld [vmem:[%s406 + $0x288] sm:$0xff]
        %v499 = vld [vmem:[%s406 + $0x290] sm:$0xff]
        %v500 = vld [vmem:[%s406 + $0x298] sm:$0x3]
        %v501 = vld [vmem:[%s406 + $0x2a0] sm:$0xff]
        %v502 = vld [vmem:[%s406 + $0x2a8] sm:$0xff]
        %v503 = vld [vmem:[%s406 + $0x2b0] sm:$0xff]
        %v504 = vld [vmem:[%s406 + $0x2b8] sm:$0x3]
        %v505 = vld [vmem:[%s406 + $0x2c0] sm:$0xff]
        %v506 = vld [vmem:[%s406 + $0x2c8] sm:$0xff]
        %v507 = vld [vmem:[%s406 + $0x2d0] sm:$0xff]
        %v508 = vld [vmem:[%s406 + $0x2d8] sm:$0x3]
        %v509 = vld [vmem:[%s406 + $0x2e0] sm:$0xff]
        %v510 = vld [vmem:[%s406 + $0x2e8] sm:$0xff]
        %v511 = vld [vmem:[%s406 + $0x2f0] sm:$0xff]
        %v512 = vld [vmem:[%s406 + $0x2f8] sm:$0x3]
        %v513 = vld [vmem:[%s406 + $0x300] sm:$0xff]
        %v514 = vld [vmem:[%s406 + $0x308] sm:$0xff]
        %v515 = vld [vmem:[%s406 + $0x310] sm:$0xff]
        %v516 = vld [vmem:[%s406 + $0x318] sm:$0x3]
        %v517 = vld [vmem:[%s406 + $0x320] sm:$0xff]
        %v518 = vld [vmem:[%s406 + $0x328] sm:$0xff]
        %v519 = vld [vmem:[%s406 + $0x330] sm:$0xff]
        %v520 = vld [vmem:[%s406 + $0x338] sm:$0x3]
        %v521 = vld [vmem:[%s406 + $0x340] sm:$0xff]
        %v522 = vld [vmem:[%s406 + $0x348] sm:$0xff]
        %v523 = vld [vmem:[%s406 + $0x350] sm:$0xff]
        %v524 = vld [vmem:[%s406 + $0x358] sm:$0x3]
        %v525 = vld [vmem:[%s406 + $0x360] sm:$0xff]
        %v526 = vld [vmem:[%s406 + $0x368] sm:$0xff]
        %v527 = vld [vmem:[%s406 + $0x370] sm:$0xff]
        %v528 = vld [vmem:[%s406 + $0x378] sm:$0x3]
        %v529 = vld [vmem:[%s406 + $0x380] sm:$0xff]
        %v530 = vld [vmem:[%s406 + $0x388] sm:$0xff]
        %v531 = vld [vmem:[%s406 + $0x390] sm:$0xff]
        %v532 = vld [vmem:[%s406 + $0x398] sm:$0x3]
        %v533 = vld [vmem:[%s406 + $0x3a0] sm:$0xff]
        %v534 = vld [vmem:[%s406 + $0x3a8] sm:$0xff]
        %v535 = vld [vmem:[%s406 + $0x3b0] sm:$0xff]
        %v536 = vld [vmem:[%s406 + $0x3b8] sm:$0x3]
        %v537 = vld [vmem:[%s406 + $0x3c0] sm:$0xff]
        %v538 = vld [vmem:[%s406 + $0x3c8] sm:$0xff]
        %v539 = vld [vmem:[%s406 + $0x3d0] sm:$0xff]
        %v540 = vld [vmem:[%s406 + $0x3d8] sm:$0x3]
        %v541 = vld [vmem:[%s406 + $0x3e0] sm:$0xff]
        %v542 = vld [vmem:[%s406 + $0x3e8] sm:$0xff]
        %v543 = vld [vmem:[%s406 + $0x3f0] sm:$0xff]
        %v544 = vld [vmem:[%s406 + $0x3f8] sm:$0x3]
        %v545 = vld [vmem:[%s406 + $0x400] sm:$0xff]
        %v546 = vld [vmem:[%s406 + $0x408] sm:$0xff]
        %v547 = vld [vmem:[%s406 + $0x410] sm:$0xff]
        %v548 = vld [vmem:[%s406 + $0x418] sm:$0x3]
        %v549 = vld [vmem:[%s406 + $0x420] sm:$0xff]
        %v550 = vld [vmem:[%s406 + $0x428] sm:$0xff]
        %v551 = vld [vmem:[%s406 + $0x430] sm:$0xff]
        %v552 = vld [vmem:[%s406 + $0x438] sm:$0x3]
        %v553 = vld [vmem:[%s406 + $0x440] sm:$0xff]
        %v554 = vld [vmem:[%s406 + $0x448] sm:$0xff]
        %v555 = vld [vmem:[%s406 + $0x450] sm:$0xff]
        %v556 = vld [vmem:[%s406 + $0x458] sm:$0x3]
        %v557 = vld [vmem:[%s406 + $0x460] sm:$0xff]
        %v558 = vld [vmem:[%s406 + $0x468] sm:$0xff]
        %v559 = vld [vmem:[%s406 + $0x470] sm:$0xff]
        %v560 = vld [vmem:[%s406 + $0x478] sm:$0x3]
        %v561 = vld [vmem:[%s406 + $0x480] sm:$0xff]
        %v562 = vld [vmem:[%s406 + $0x488] sm:$0xff]
        %v563 = vld [vmem:[%s406 + $0x490] sm:$0xff]
        %v564 = vld [vmem:[%s406 + $0x498] sm:$0x3]
        %v565 = vld [vmem:[%s406 + $0x4a0] sm:$0xff]
        %v566 = vld [vmem:[%s406 + $0x4a8] sm:$0xff]
        %v567 = vld [vmem:[%s406 + $0x4b0] sm:$0xff]
        %v568 = vld [vmem:[%s406 + $0x4b8] sm:$0x3]
        %v569 = vld [vmem:[%s406 + $0x4c0] sm:$0xff]
        %v570 = vld [vmem:[%s406 + $0x4c8] sm:$0xff]
        %v571 = vld [vmem:[%s406 + $0x4d0] sm:$0xff]
        %v572 = vld [vmem:[%s406 + $0x4d8] sm:$0x3]
        %v573 = vld [vmem:[%s406 + $0x4e0] sm:$0xff]
        %v574 = vld [vmem:[%s406 + $0x4e8] sm:$0xff]
        %v575 = vld [vmem:[%s406 + $0x4f0] sm:$0xff]
        %v576 = vld [vmem:[%s406 + $0x4f8] sm:$0x3]
        %vm721 = vcmask 1046528
        %v722 = vrot.slane %v417, 1
        %v723 = vrot.slane %v418, 1
        %v724 = vsel %vm721, %v722, %v723
        %v725 = vrot.slane %v419, 1
        %v726 = vsel %vm721, %v723, %v725
        %v727 = vrot.slane %v420, 1
        %v728 = vsel %vm721, %v725, %v727
        %v729 = vrot.slane %v421, 1
        %v730 = vrot.slane %v422, 1
        %v731 = vsel %vm721, %v729, %v730
        %v732 = vrot.slane %v423, 1
        %v733 = vsel %vm721, %v730, %v732
        %v734 = vrot.slane %v424, 1
        %v735 = vsel %vm721, %v732, %v734
        %v736 = vrot.slane %v425, 1
        %v737 = vrot.slane %v426, 1
        %v738 = vsel %vm721, %v736, %v737
        %v739 = vrot.slane %v427, 1
        %v740 = vsel %vm721, %v737, %v739
        %v741 = vrot.slane %v428, 1
        %v742 = vsel %vm721, %v739, %v741
        %v743 = vrot.slane %v429, 1
        %v744 = vrot.slane %v430, 1
        %v745 = vsel %vm721, %v743, %v744
        %v746 = vrot.slane %v431, 1
        %v747 = vsel %vm721, %v744, %v746
        %v748 = vrot.slane %v432, 1
        %v749 = vsel %vm721, %v746, %v748
        %v750 = vrot.slane %v433, 1
        %v751 = vrot.slane %v434, 1
        %v752 = vsel %vm721, %v750, %v751
        %v753 = vrot.slane %v435, 1
        %v754 = vsel %vm721, %v751, %v753
        %v755 = vrot.slane %v436, 1
        %v756 = vsel %vm721, %v753, %v755
        %v757 = vrot.slane %v437, 1
        %v758 = vrot.slane %v438, 1
        %v759 = vsel %vm721, %v757, %v758
        %v760 = vrot.slane %v439, 1
        %v761 = vsel %vm721, %v758, %v760
        %v762 = vrot.slane %v440, 1
        %v763 = vsel %vm721, %v760, %v762
        %v764 = vrot.slane %v441, 1
        %v765 = vrot.slane %v442, 1
        %v766 = vsel %vm721, %v764, %v765
        %v767 = vrot.slane %v443, 1
        %v768 = vsel %vm721, %v765, %v767
        %v769 = vrot.slane %v444, 1
        %v770 = vsel %vm721, %v767, %v769
        %v771 = vrot.slane %v445, 1
        %v772 = vrot.slane %v446, 1
        %v773 = vsel %vm721, %v771, %v772
        %v774 = vrot.slane %v447, 1
        %v775 = vsel %vm721, %v772, %v774
        %v776 = vrot.slane %v448, 1
        %v777 = vsel %vm721, %v774, %v776
        %v778 = vrot.slane %v449, 1
        %v779 = vrot.slane %v450, 1
        %v780 = vsel %vm721, %v778, %v779
        %v781 = vrot.slane %v451, 1
        %v782 = vsel %vm721, %v779, %v781
        %v783 = vrot.slane %v452, 1
        %v784 = vsel %vm721, %v781, %v783
        %v785 = vrot.slane %v453, 1
        %v786 = vrot.slane %v454, 1
        %v787 = vsel %vm721, %v785, %v786
        %v788 = vrot.slane %v455, 1
        %v789 = vsel %vm721, %v786, %v788
        %v790 = vrot.slane %v456, 1
        %v791 = vsel %vm721, %v788, %v790
        %v792 = vrot.slane %v457, 1
        %v793 = vrot.slane %v458, 1
        %v794 = vsel %vm721, %v792, %v793
        %v795 = vrot.slane %v459, 1
        %v796 = vsel %vm721, %v793, %v795
        %v797 = vrot.slane %v460, 1
        %v798 = vsel %vm721, %v795, %v797
        %v799 = vrot.slane %v461, 1
        %v800 = vrot.slane %v462, 1
        %v801 = vsel %vm721, %v799, %v800
        %v802 = vrot.slane %v463, 1
        %v803 = vsel %vm721, %v800, %v802
        %v804 = vrot.slane %v464, 1
        %v805 = vsel %vm721, %v802, %v804
        %v806 = vrot.slane %v465, 1
        %v807 = vrot.slane %v466, 1
        %v808 = vsel %vm721, %v806, %v807
        %v809 = vrot.slane %v467, 1
        %v810 = vsel %vm721, %v807, %v809
        %v811 = vrot.slane %v468, 1
        %v812 = vsel %vm721, %v809, %v811
        %v813 = vrot.slane %v469, 1
        %v814 = vrot.slane %v470, 1
        %v815 = vsel %vm721, %v813, %v814
        %v816 = vrot.slane %v471, 1
        %v817 = vsel %vm721, %v814, %v816
        %v818 = vrot.slane %v472, 1
        %v819 = vsel %vm721, %v816, %v818
        %v820 = vrot.slane %v473, 1
        %v821 = vrot.slane %v474, 1
        %v822 = vsel %vm721, %v820, %v821
        %v823 = vrot.slane %v475, 1
        %v824 = vsel %vm721, %v821, %v823
        %v825 = vrot.slane %v476, 1
        %v826 = vsel %vm721, %v823, %v825
        %v827 = vrot.slane %v477, 1
        %v828 = vrot.slane %v478, 1
        %v829 = vsel %vm721, %v827, %v828
        %v830 = vrot.slane %v479, 1
        %v831 = vsel %vm721, %v828, %v830
        %v832 = vrot.slane %v480, 1
        %v833 = vsel %vm721, %v830, %v832
        %v834 = vrot.slane %v481, 1
        %v835 = vrot.slane %v482, 1
        %v836 = vsel %vm721, %v834, %v835
        %v837 = vrot.slane %v483, 1
        %v838 = vsel %vm721, %v835, %v837
        %v839 = vrot.slane %v484, 1
        %v840 = vsel %vm721, %v837, %v839
        %v841 = vrot.slane %v485, 1
        %v842 = vrot.slane %v486, 1
        %v843 = vsel %vm721, %v841, %v842
        %v844 = vrot.slane %v487, 1
        %v845 = vsel %vm721, %v842, %v844
        %v846 = vrot.slane %v488, 1
        %v847 = vsel %vm721, %v844, %v846
        %v848 = vrot.slane %v497, 1
        %v849 = vrot.slane %v498, 1
        %v850 = vsel %vm721, %v848, %v849
        %v851 = vrot.slane %v499, 1
        %v852 = vsel %vm721, %v849, %v851
        %v853 = vrot.slane %v500, 1
        %v854 = vsel %vm721, %v851, %v853
        %v855 = vrot.slane %v501, 1
        %v856 = vrot.slane %v502, 1
        %v857 = vsel %vm721, %v855, %v856
        %v858 = vrot.slane %v503, 1
        %v859 = vsel %vm721, %v856, %v858
        %v860 = vrot.slane %v504, 1
        %v861 = vsel %vm721, %v858, %v860
        %v862 = vrot.slane %v505, 1
        %v863 = vrot.slane %v506, 1
        %v864 = vsel %vm721, %v862, %v863
        %v865 = vrot.slane %v507, 1
        %v866 = vsel %vm721, %v863, %v865
        %v867 = vrot.slane %v508, 1
        %v868 = vsel %vm721, %v865, %v867
        %v869 = vrot.slane %v509, 1
        %v870 = vrot.slane %v510, 1
        %v871 = vsel %vm721, %v869, %v870
        %v872 = vrot.slane %v511, 1
        %v873 = vsel %vm721, %v870, %v872
        %v874 = vrot.slane %v512, 1
        %v875 = vsel %vm721, %v872, %v874
        %v876 = vrot.slane %v513, 1
        %v877 = vrot.slane %v514, 1
        %v878 = vsel %vm721, %v876, %v877
        %v879 = vrot.slane %v515, 1
        %v880 = vsel %vm721, %v877, %v879
        %v881 = vrot.slane %v516, 1
        %v882 = vsel %vm721, %v879, %v881
        %v883 = vrot.slane %v517, 1
        %v884 = vrot.slane %v518, 1
        %v885 = vsel %vm721, %v883, %v884
        %v886 = vrot.slane %v519, 1
        %v887 = vsel %vm721, %v884, %v886
        %v888 = vrot.slane %v520, 1
        %v889 = vsel %vm721, %v886, %v888
        %v890 = vrot.slane %v521, 1
        %v891 = vrot.slane %v522, 1
        %v892 = vsel %vm721, %v890, %v891
        %v893 = vrot.slane %v523, 1
        %v894 = vsel %vm721, %v891, %v893
        %v895 = vrot.slane %v524, 1
        %v896 = vsel %vm721, %v893, %v895
        %v897 = vrot.slane %v525, 1
        %v898 = vrot.slane %v526, 1
        %v899 = vsel %vm721, %v897, %v898
        %v900 = vrot.slane %v527, 1
        %v901 = vsel %vm721, %v898, %v900
        %v902 = vrot.slane %v528, 1
        %v903 = vsel %vm721, %v900, %v902
        %v904 = vrot.slane %v529, 1
        %v905 = vrot.slane %v530, 1
        %v906 = vsel %vm721, %v904, %v905
        %v907 = vrot.slane %v531, 1
        %v908 = vsel %vm721, %v905, %v907
        %v909 = vrot.slane %v532, 1
        %v910 = vsel %vm721, %v907, %v909
        %v911 = vrot.slane %v533, 1
        %v912 = vrot.slane %v534, 1
        %v913 = vsel %vm721, %v911, %v912
        %v914 = vrot.slane %v535, 1
        %v915 = vsel %vm721, %v912, %v914
        %v916 = vrot.slane %v536, 1
        %v917 = vsel %vm721, %v914, %v916
        %v918 = vrot.slane %v537, 1
        %v919 = vrot.slane %v538, 1
        %v920 = vsel %vm721, %v918, %v919
        %v921 = vrot.slane %v539, 1
        %v922 = vsel %vm721, %v919, %v921
        %v923 = vrot.slane %v540, 1
        %v924 = vsel %vm721, %v921, %v923
        %v925 = vrot.slane %v541, 1
        %v926 = vrot.slane %v542, 1
        %v927 = vsel %vm721, %v925, %v926
        %v928 = vrot.slane %v543, 1
        %v929 = vsel %vm721, %v926, %v928
        %v930 = vrot.slane %v544, 1
        %v931 = vsel %vm721, %v928, %v930
        %v932 = vrot.slane %v545, 1
        %v933 = vrot.slane %v546, 1
        %v934 = vsel %vm721, %v932, %v933
        %v935 = vrot.slane %v547, 1
        %v936 = vsel %vm721, %v933, %v935
        %v937 = vrot.slane %v548, 1
        %v938 = vsel %vm721, %v935, %v937
        %v939 = vrot.slane %v549, 1
        %v940 = vrot.slane %v550, 1
        %v941 = vsel %vm721, %v939, %v940
        %v942 = vrot.slane %v551, 1
        %v943 = vsel %vm721, %v940, %v942
        %v944 = vrot.slane %v552, 1
        %v945 = vsel %vm721, %v942, %v944
        %v946 = vrot.slane %v553, 1
        %v947 = vrot.slane %v554, 1
        %v948 = vsel %vm721, %v946, %v947
        %v949 = vrot.slane %v555, 1
        %v950 = vsel %vm721, %v947, %v949
        %v951 = vrot.slane %v556, 1
        %v952 = vsel %vm721, %v949, %v951
        %v953 = vrot.slane %v557, 1
        %v954 = vrot.slane %v558, 1
        %v955 = vsel %vm721, %v953, %v954
        %v956 = vrot.slane %v559, 1
        %v957 = vsel %vm721, %v954, %v956
        %v958 = vrot.slane %v560, 1
        %v959 = vsel %vm721, %v956, %v958
        %v960 = vrot.slane %v561, 1
        %v961 = vrot.slane %v562, 1
        %v962 = vsel %vm721, %v960, %v961
        %v963 = vrot.slane %v563, 1
        %v964 = vsel %vm721, %v961, %v963
        %v965 = vrot.slane %v564, 1
        %v966 = vsel %vm721, %v963, %v965
        %v967 = vrot.slane %v565, 1
        %v968 = vrot.slane %v566, 1
        %v969 = vsel %vm721, %v967, %v968
        %v970 = vrot.slane %v567, 1
        %v971 = vsel %vm721, %v968, %v970
        %v972 = vrot.slane %v568, 1
        %v973 = vsel %vm721, %v970, %v972
        %vm974 = vcmask 1045504
        %v975 = vrot.slane %v417, 2
        %v976 = vrot.slane %v418, 2
        %v977 = vsel %vm974, %v975, %v976
        %v978 = vrot.slane %v419, 2
        %v979 = vsel %vm974, %v976, %v978
        %v980 = vrot.slane %v420, 2
        %v981 = vsel %vm974, %v978, %v980
        %v982 = vrot.slane %v421, 2
        %v983 = vrot.slane %v422, 2
        %v984 = vsel %vm974, %v982, %v983
        %v985 = vrot.slane %v423, 2
        %v986 = vsel %vm974, %v983, %v985
        %v987 = vrot.slane %v424, 2
        %v988 = vsel %vm974, %v985, %v987
        %v989 = vrot.slane %v425, 2
        %v990 = vrot.slane %v426, 2
        %v991 = vsel %vm974, %v989, %v990
        %v992 = vrot.slane %v427, 2
        %v993 = vsel %vm974, %v990, %v992
        %v994 = vrot.slane %v428, 2
        %v995 = vsel %vm974, %v992, %v994
        %v996 = vrot.slane %v429, 2
        %v997 = vrot.slane %v430, 2
        %v998 = vsel %vm974, %v996, %v997
        %v999 = vrot.slane %v431, 2
        %v1000 = vsel %vm974, %v997, %v999
        %v1001 = vrot.slane %v432, 2
        %v1002 = vsel %vm974, %v999, %v1001
        %v1003 = vrot.slane %v433, 2
        %v1004 = vrot.slane %v434, 2
        %v1005 = vsel %vm974, %v1003, %v1004
        %v1006 = vrot.slane %v435, 2
        %v1007 = vsel %vm974, %v1004, %v1006
        %v1008 = vrot.slane %v436, 2
        %v1009 = vsel %vm974, %v1006, %v1008
        %v1010 = vrot.slane %v437, 2
        %v1011 = vrot.slane %v438, 2
        %v1012 = vsel %vm974, %v1010, %v1011
        %v1013 = vrot.slane %v439, 2
        %v1014 = vsel %vm974, %v1011, %v1013
        %v1015 = vrot.slane %v440, 2
        %v1016 = vsel %vm974, %v1013, %v1015
        %v1017 = vrot.slane %v441, 2
        %v1018 = vrot.slane %v442, 2
        %v1019 = vsel %vm974, %v1017, %v1018
        %v1020 = vrot.slane %v443, 2
        %v1021 = vsel %vm974, %v1018, %v1020
        %v1022 = vrot.slane %v444, 2
        %v1023 = vsel %vm974, %v1020, %v1022
        %v1024 = vrot.slane %v445, 2
        %v1025 = vrot.slane %v446, 2
        %v1026 = vsel %vm974, %v1024, %v1025
        %v1027 = vrot.slane %v447, 2
        %v1028 = vsel %vm974, %v1025, %v1027
        %v1029 = vrot.slane %v448, 2
        %v1030 = vsel %vm974, %v1027, %v1029
        %v1031 = vrot.slane %v449, 2
        %v1032 = vrot.slane %v450, 2
        %v1033 = vsel %vm974, %v1031, %v1032
        %v1034 = vrot.slane %v451, 2
        %v1035 = vsel %vm974, %v1032, %v1034
        %v1036 = vrot.slane %v452, 2
        %v1037 = vsel %vm974, %v1034, %v1036
        %v1038 = vrot.slane %v453, 2
        %v1039 = vrot.slane %v454, 2
        %v1040 = vsel %vm974, %v1038, %v1039
        %v1041 = vrot.slane %v455, 2
        %v1042 = vsel %vm974, %v1039, %v1041
        %v1043 = vrot.slane %v456, 2
        %v1044 = vsel %vm974, %v1041, %v1043
        %v1045 = vrot.slane %v457, 2
        %v1046 = vrot.slane %v458, 2
        %v1047 = vsel %vm974, %v1045, %v1046
        %v1048 = vrot.slane %v459, 2
        %v1049 = vsel %vm974, %v1046, %v1048
        %v1050 = vrot.slane %v460, 2
        %v1051 = vsel %vm974, %v1048, %v1050
        %v1052 = vrot.slane %v461, 2
        %v1053 = vrot.slane %v462, 2
        %v1054 = vsel %vm974, %v1052, %v1053
        %v1055 = vrot.slane %v463, 2
        %v1056 = vsel %vm974, %v1053, %v1055
        %v1057 = vrot.slane %v464, 2
        %v1058 = vsel %vm974, %v1055, %v1057
        %v1059 = vrot.slane %v465, 2
        %v1060 = vrot.slane %v466, 2
        %v1061 = vsel %vm974, %v1059, %v1060
        %v1062 = vrot.slane %v467, 2
        %v1063 = vsel %vm974, %v1060, %v1062
        %v1064 = vrot.slane %v468, 2
        %v1065 = vsel %vm974, %v1062, %v1064
        %v1066 = vrot.slane %v469, 2
        %v1067 = vrot.slane %v470, 2
        %v1068 = vsel %vm974, %v1066, %v1067
        %v1069 = vrot.slane %v471, 2
        %v1070 = vsel %vm974, %v1067, %v1069
        %v1071 = vrot.slane %v472, 2
        %v1072 = vsel %vm974, %v1069, %v1071
        %v1073 = vrot.slane %v473, 2
        %v1074 = vrot.slane %v474, 2
        %v1075 = vsel %vm974, %v1073, %v1074
        %v1076 = vrot.slane %v475, 2
        %v1077 = vsel %vm974, %v1074, %v1076
        %v1078 = vrot.slane %v476, 2
        %v1079 = vsel %vm974, %v1076, %v1078
        %v1080 = vrot.slane %v477, 2
        %v1081 = vrot.slane %v478, 2
        %v1082 = vsel %vm974, %v1080, %v1081
        %v1083 = vrot.slane %v479, 2
        %v1084 = vsel %vm974, %v1081, %v1083
        %v1085 = vrot.slane %v480, 2
        %v1086 = vsel %vm974, %v1083, %v1085
        %v1087 = vrot.slane %v481, 2
        %v1088 = vrot.slane %v482, 2
        %v1089 = vsel %vm974, %v1087, %v1088
        %v1090 = vrot.slane %v483, 2
        %v1091 = vsel %vm974, %v1088, %v1090
        %v1092 = vrot.slane %v484, 2
        %v1093 = vsel %vm974, %v1090, %v1092
        %v1094 = vrot.slane %v485, 2
        %v1095 = vrot.slane %v486, 2
        %v1096 = vsel %vm974, %v1094, %v1095
        %v1097 = vrot.slane %v487, 2
        %v1098 = vsel %vm974, %v1095, %v1097
        %v1099 = vrot.slane %v488, 2
        %v1100 = vsel %vm974, %v1097, %v1099
        %v1101 = vrot.slane %v497, 2
        %v1102 = vrot.slane %v498, 2
        %v1103 = vsel %vm974, %v1101, %v1102
        %v1104 = vrot.slane %v499, 2
        %v1105 = vsel %vm974, %v1102, %v1104
        %v1106 = vrot.slane %v500, 2
        %v1107 = vsel %vm974, %v1104, %v1106
        %v1108 = vrot.slane %v501, 2
        %v1109 = vrot.slane %v502, 2
        %v1110 = vsel %vm974, %v1108, %v1109
        %v1111 = vrot.slane %v503, 2
        %v1112 = vsel %vm974, %v1109, %v1111
        %v1113 = vrot.slane %v504, 2
        %v1114 = vsel %vm974, %v1111, %v1113
        %v1115 = vrot.slane %v505, 2
        %v1116 = vrot.slane %v506, 2
        %v1117 = vsel %vm974, %v1115, %v1116
        %v1118 = vrot.slane %v507, 2
        %v1119 = vsel %vm974, %v1116, %v1118
        %v1120 = vrot.slane %v508, 2
        %v1121 = vsel %vm974, %v1118, %v1120
        %v1122 = vrot.slane %v509, 2
        %v1123 = vrot.slane %v510, 2
        %v1124 = vsel %vm974, %v1122, %v1123
        %v1125 = vrot.slane %v511, 2
        %v1126 = vsel %vm974, %v1123, %v1125
        %v1127 = vrot.slane %v512, 2
        %v1128 = vsel %vm974, %v1125, %v1127
        %v1129 = vrot.slane %v513, 2
        %v1130 = vrot.slane %v514, 2
        %v1131 = vsel %vm974, %v1129, %v1130
        %v1132 = vrot.slane %v515, 2
        %v1133 = vsel %vm974, %v1130, %v1132
        %v1134 = vrot.slane %v516, 2
        %v1135 = vsel %vm974, %v1132, %v1134
        %v1136 = vrot.slane %v517, 2
        %v1137 = vrot.slane %v518, 2
        %v1138 = vsel %vm974, %v1136, %v1137
        %v1139 = vrot.slane %v519, 2
        %v1140 = vsel %vm974, %v1137, %v1139
        %v1141 = vrot.slane %v520, 2
        %v1142 = vsel %vm974, %v1139, %v1141
        %v1143 = vrot.slane %v521, 2
        %v1144 = vrot.slane %v522, 2
        %v1145 = vsel %vm974, %v1143, %v1144
        %v1146 = vrot.slane %v523, 2
        %v1147 = vsel %vm974, %v1144, %v1146
        %v1148 = vrot.slane %v524, 2
        %v1149 = vsel %vm974, %v1146, %v1148
        %v1150 = vrot.slane %v525, 2
        %v1151 = vrot.slane %v526, 2
        %v1152 = vsel %vm974, %v1150, %v1151
        %v1153 = vrot.slane %v527, 2
        %v1154 = vsel %vm974, %v1151, %v1153
        %v1155 = vrot.slane %v528, 2
        %v1156 = vsel %vm974, %v1153, %v1155
        %v1157 = vrot.slane %v529, 2
        %v1158 = vrot.slane %v530, 2
        %v1159 = vsel %vm974, %v1157, %v1158
        %v1160 = vrot.slane %v531, 2
        %v1161 = vsel %vm974, %v1158, %v1160
        %v1162 = vrot.slane %v532, 2
        %v1163 = vsel %vm974, %v1160, %v1162
        %v1164 = vrot.slane %v533, 2
        %v1165 = vrot.slane %v534, 2
        %v1166 = vsel %vm974, %v1164, %v1165
        %v1167 = vrot.slane %v535, 2
        %v1168 = vsel %vm974, %v1165, %v1167
        %v1169 = vrot.slane %v536, 2
        %v1170 = vsel %vm974, %v1167, %v1169
        %v1171 = vrot.slane %v537, 2
        %v1172 = vrot.slane %v538, 2
        %v1173 = vsel %vm974, %v1171, %v1172
        %v1174 = vrot.slane %v539, 2
        %v1175 = vsel %vm974, %v1172, %v1174
        %v1176 = vrot.slane %v540, 2
        %v1177 = vsel %vm974, %v1174, %v1176
        %v1178 = vrot.slane %v541, 2
        %v1179 = vrot.slane %v542, 2
        %v1180 = vsel %vm974, %v1178, %v1179
        %v1181 = vrot.slane %v543, 2
        %v1182 = vsel %vm974, %v1179, %v1181
        %v1183 = vrot.slane %v544, 2
        %v1184 = vsel %vm974, %v1181, %v1183
        %v1185 = vrot.slane %v545, 2
        %v1186 = vrot.slane %v546, 2
        %v1187 = vsel %vm974, %v1185, %v1186
        %v1188 = vrot.slane %v547, 2
        %v1189 = vsel %vm974, %v1186, %v1188
        %v1190 = vrot.slane %v548, 2
        %v1191 = vsel %vm974, %v1188, %v1190
        %v1192 = vrot.slane %v549, 2
        %v1193 = vrot.slane %v550, 2
        %v1194 = vsel %vm974, %v1192, %v1193
        %v1195 = vrot.slane %v551, 2
        %v1196 = vsel %vm974, %v1193, %v1195
        %v1197 = vrot.slane %v552, 2
        %v1198 = vsel %vm974, %v1195, %v1197
        %v1199 = vrot.slane %v553, 2
        %v1200 = vrot.slane %v554, 2
        %v1201 = vsel %vm974, %v1199, %v1200
        %v1202 = vrot.slane %v555, 2
        %v1203 = vsel %vm974, %v1200, %v1202
        %v1204 = vrot.slane %v556, 2
        %v1205 = vsel %vm974, %v1202, %v1204
        %v1206 = vrot.slane %v557, 2
        %v1207 = vrot.slane %v558, 2
        %v1208 = vsel %vm974, %v1206, %v1207
        %v1209 = vrot.slane %v559, 2
        %v1210 = vsel %vm974, %v1207, %v1209
        %v1211 = vrot.slane %v560, 2
        %v1212 = vsel %vm974, %v1209, %v1211
        %v1213 = vrot.slane %v561, 2
        %v1214 = vrot.slane %v562, 2
        %v1215 = vsel %vm974, %v1213, %v1214
        %v1216 = vrot.slane %v563, 2
        %v1217 = vsel %vm974, %v1214, %v1216
        %v1218 = vrot.slane %v564, 2
        %v1219 = vsel %vm974, %v1216, %v1218
        %v1220 = vrot.slane %v565, 2
        %v1221 = vrot.slane %v566, 2
        %v1222 = vsel %vm974, %v1220, %v1221
        %v1223 = vrot.slane %v567, 2
        %v1224 = vsel %vm974, %v1221, %v1223
        %v1225 = vrot.slane %v568, 2
        %v1226 = vsel %vm974, %v1223, %v1225
        %v1235 = vrot.slane %v489, 1
        %v1236 = vrot.slane %v490, 1
        %v1237 = vsel %vm721, %v1235, %v1236
        %v1238 = vrot.slane %v491, 1
        %v1239 = vsel %vm721, %v1236, %v1238
        %v1240 = vrot.slane %v492, 1
        %v1241 = vsel %vm721, %v1238, %v1240
        %v1242 = vrot.slane %v569, 1
        %v1243 = vrot.slane %v570, 1
        %v1244 = vsel %vm721, %v1242, %v1243
        %v1245 = vrot.slane %v571, 1
        %v1246 = vsel %vm721, %v1243, %v1245
        %v1247 = vrot.slane %v572, 1
        %v1248 = vsel %vm721, %v1245, %v1247
        %v1249 = vrot.slane %v489, 2
        %v1250 = vrot.slane %v490, 2
        %v1251 = vsel %vm974, %v1249, %v1250
        %v1252 = vrot.slane %v491, 2
        %v1253 = vsel %vm974, %v1250, %v1252
        %v1254 = vrot.slane %v492, 2
        %v1255 = vsel %vm974, %v1252, %v1254
        %v1256 = vrot.slane %v569, 2
        %v1257 = vrot.slane %v570, 2
        %v1258 = vsel %vm974, %v1256, %v1257
        %v1259 = vrot.slane %v571, 2
        %v1260 = vsel %vm974, %v1257, %v1259
        %v1261 = vrot.slane %v572, 2
        %v1262 = vsel %vm974, %v1259, %v1261
        %v1271 = vrot.slane %v493, 1
        %v1272 = vrot.slane %v494, 1
        %v1273 = vsel %vm721, %v1271, %v1272
        %v1274 = vrot.slane %v495, 1
        %v1275 = vsel %vm721, %v1272, %v1274
        %v1276 = vrot.slane %v496, 1
        %v1277 = vsel %vm721, %v1274, %v1276
        %v1278 = vrot.slane %v573, 1
        %v1279 = vrot.slane %v574, 1
        %v1280 = vsel %vm721, %v1278, %v1279
        %v1281 = vrot.slane %v575, 1
        %v1282 = vsel %vm721, %v1279, %v1281
        %v1283 = vrot.slane %v576, 1
        %v1284 = vsel %vm721, %v1281, %v1283
        %v1285 = vrot.slane %v493, 2
        %v1286 = vrot.slane %v494, 2
        %v1287 = vsel %vm974, %v1285, %v1286
        %v1288 = vrot.slane %v495, 2
        %v1289 = vsel %vm974, %v1286, %v1288
        %v1290 = vrot.slane %v496, 2
        %v1291 = vsel %vm974, %v1288, %v1290
        %v1292 = vrot.slane %v573, 2
        %v1293 = vrot.slane %v574, 2
        %v1294 = vsel %vm974, %v1292, %v1293
        %v1295 = vrot.slane %v575, 2
        %v1296 = vsel %vm974, %v1293, %v1295
        %v1297 = vrot.slane %v576, 2
        %v1298 = vsel %vm974, %v1295, %v1297
        %1407 = vrot.lane.b32.xlu0 %v724, 16
        %v1408 = vpop.permute.xlu0 %1407
        %1409 = vrot.lane.b32.xlu0 %v726, 16
        %v1410 = vpop.permute.xlu0 %1409
        %1411 = vrot.lane.b32.xlu0 %v728, 16
        %v1412 = vpop.permute.xlu0 %1411
        %1413 = vrot.lane.b32.xlu0 %v731, 16
        %v1414 = vpop.permute.xlu0 %1413
        %1415 = vrot.lane.b32.xlu0 %v733, 16
        %v1416 = vpop.permute.xlu0 %1415
        %1417 = vrot.lane.b32.xlu0 %v735, 16
        %v1418 = vpop.permute.xlu0 %1417
        %1419 = vrot.lane.b32.xlu0 %v738, 16
        %v1420 = vpop.permute.xlu0 %1419
        %1421 = vrot.lane.b32.xlu0 %v740, 16
        %v1422 = vpop.permute.xlu0 %1421
        %1423 = vrot.lane.b32.xlu0 %v742, 16
        %v1424 = vpop.permute.xlu0 %1423
        %1425 = vrot.lane.b32.xlu0 %v745, 16
        %v1426 = vpop.permute.xlu0 %1425
        %1427 = vrot.lane.b32.xlu0 %v747, 16
        %v1428 = vpop.permute.xlu0 %1427
        %1429 = vrot.lane.b32.xlu0 %v749, 16
        %v1430 = vpop.permute.xlu0 %1429
        %1431 = vrot.lane.b32.xlu0 %v752, 16
        %v1432 = vpop.permute.xlu0 %1431
        %1433 = vrot.lane.b32.xlu0 %v754, 16
        %v1434 = vpop.permute.xlu0 %1433
        %1435 = vrot.lane.b32.xlu0 %v756, 16
        %v1436 = vpop.permute.xlu0 %1435
        %1437 = vrot.lane.b32.xlu0 %v759, 16
        %v1438 = vpop.permute.xlu0 %1437
        %1439 = vrot.lane.b32.xlu0 %v761, 16
        %v1440 = vpop.permute.xlu0 %1439
        %1441 = vrot.lane.b32.xlu0 %v763, 16
        %v1442 = vpop.permute.xlu0 %1441
        %1443 = vrot.lane.b32.xlu0 %v766, 16
        %v1444 = vpop.permute.xlu0 %1443
        %1445 = vrot.lane.b32.xlu0 %v768, 16
        %v1446 = vpop.permute.xlu0 %1445
        %1447 = vrot.lane.b32.xlu0 %v770, 16
        %v1448 = vpop.permute.xlu0 %1447
        %1449 = vrot.lane.b32.xlu0 %v773, 16
        %v1450 = vpop.permute.xlu0 %1449
        %1451 = vrot.lane.b32.xlu0 %v775, 16
        %v1452 = vpop.permute.xlu0 %1451
        %1453 = vrot.lane.b32.xlu0 %v777, 16
        %v1454 = vpop.permute.xlu0 %1453
        %1455 = vrot.lane.b32.xlu0 %v780, 16
        %v1456 = vpop.permute.xlu0 %1455
        %1457 = vrot.lane.b32.xlu0 %v782, 16
        %v1458 = vpop.permute.xlu0 %1457
        %1459 = vrot.lane.b32.xlu0 %v784, 16
        %v1460 = vpop.permute.xlu0 %1459
        %1461 = vrot.lane.b32.xlu0 %v787, 16
        %v1462 = vpop.permute.xlu0 %1461
        %1463 = vrot.lane.b32.xlu0 %v789, 16
        %v1464 = vpop.permute.xlu0 %1463
        %1465 = vrot.lane.b32.xlu0 %v791, 16
        %v1466 = vpop.permute.xlu0 %1465
        %1467 = vrot.lane.b32.xlu0 %v794, 16
        %v1468 = vpop.permute.xlu0 %1467
        %1469 = vrot.lane.b32.xlu0 %v796, 16
        %v1470 = vpop.permute.xlu0 %1469
        %1471 = vrot.lane.b32.xlu0 %v798, 16
        %v1472 = vpop.permute.xlu0 %1471
        %1473 = vrot.lane.b32.xlu0 %v801, 16
        %v1474 = vpop.permute.xlu0 %1473
        %1475 = vrot.lane.b32.xlu0 %v803, 16
        %v1476 = vpop.permute.xlu0 %1475
        %1477 = vrot.lane.b32.xlu0 %v805, 16
        %v1478 = vpop.permute.xlu0 %1477
        %1479 = vrot.lane.b32.xlu0 %v808, 16
        %v1480 = vpop.permute.xlu0 %1479
        %1481 = vrot.lane.b32.xlu0 %v810, 16
        %v1482 = vpop.permute.xlu0 %1481
        %1483 = vrot.lane.b32.xlu0 %v812, 16
        %v1484 = vpop.permute.xlu0 %1483
        %1485 = vrot.lane.b32.xlu0 %v815, 16
        %v1486 = vpop.permute.xlu0 %1485
        %1487 = vrot.lane.b32.xlu0 %v817, 16
        %v1488 = vpop.permute.xlu0 %1487
        %1489 = vrot.lane.b32.xlu0 %v819, 16
        %v1490 = vpop.permute.xlu0 %1489
        %1491 = vrot.lane.b32.xlu0 %v822, 16
        %v1492 = vpop.permute.xlu0 %1491
        %1493 = vrot.lane.b32.xlu0 %v824, 16
        %v1494 = vpop.permute.xlu0 %1493
        %1495 = vrot.lane.b32.xlu0 %v826, 16
        %v1496 = vpop.permute.xlu0 %1495
        %1497 = vrot.lane.b32.xlu0 %v829, 16
        %v1498 = vpop.permute.xlu0 %1497
        %1499 = vrot.lane.b32.xlu0 %v831, 16
        %v1500 = vpop.permute.xlu0 %1499
        %1501 = vrot.lane.b32.xlu0 %v833, 16
        %v1502 = vpop.permute.xlu0 %1501
        %1503 = vrot.lane.b32.xlu0 %v836, 16
        %v1504 = vpop.permute.xlu0 %1503
        %1505 = vrot.lane.b32.xlu0 %v838, 16
        %v1506 = vpop.permute.xlu0 %1505
        %1507 = vrot.lane.b32.xlu0 %v840, 16
        %v1508 = vpop.permute.xlu0 %1507
        %1509 = vrot.lane.b32.xlu0 %v843, 16
        %v1510 = vpop.permute.xlu0 %1509
        %1511 = vrot.lane.b32.xlu0 %v845, 16
        %v1512 = vpop.permute.xlu0 %1511
        %1513 = vrot.lane.b32.xlu0 %v847, 16
        %v1514 = vpop.permute.xlu0 %1513
        %1515 = vrot.lane.b32.xlu0 %v850, 16
        %v1516 = vpop.permute.xlu0 %1515
        %1517 = vrot.lane.b32.xlu0 %v852, 16
        %v1518 = vpop.permute.xlu0 %1517
        %1519 = vrot.lane.b32.xlu0 %v854, 16
        %v1520 = vpop.permute.xlu0 %1519
        %1521 = vrot.lane.b32.xlu0 %v857, 16
        %v1522 = vpop.permute.xlu0 %1521
        %1523 = vrot.lane.b32.xlu0 %v859, 16
        %v1524 = vpop.permute.xlu0 %1523
        %1525 = vrot.lane.b32.xlu0 %v861, 16
        %v1526 = vpop.permute.xlu0 %1525
        %1527 = vrot.lane.b32.xlu0 %v864, 16
        %v1528 = vpop.permute.xlu0 %1527
        %1529 = vrot.lane.b32.xlu0 %v866, 16
        %v1530 = vpop.permute.xlu0 %1529
        %1531 = vrot.lane.b32.xlu0 %v868, 16
        %v1532 = vpop.permute.xlu0 %1531
        %1533 = vrot.lane.b32.xlu0 %v871, 16
        %v1534 = vpop.permute.xlu0 %1533
        %1535 = vrot.lane.b32.xlu0 %v873, 16
        %v1536 = vpop.permute.xlu0 %1535
        %1537 = vrot.lane.b32.xlu0 %v875, 16
        %v1538 = vpop.permute.xlu0 %1537
        %1539 = vrot.lane.b32.xlu0 %v878, 16
        %v1540 = vpop.permute.xlu0 %1539
        %1541 = vrot.lane.b32.xlu0 %v880, 16
        %v1542 = vpop.permute.xlu0 %1541
        %1543 = vrot.lane.b32.xlu0 %v882, 16
        %v1544 = vpop.permute.xlu0 %1543
        %1545 = vrot.lane.b32.xlu0 %v885, 16
        %v1546 = vpop.permute.xlu0 %1545
        %1547 = vrot.lane.b32.xlu0 %v887, 16
        %v1548 = vpop.permute.xlu0 %1547
        %1549 = vrot.lane.b32.xlu0 %v889, 16
        %v1550 = vpop.permute.xlu0 %1549
        %1551 = vrot.lane.b32.xlu0 %v892, 16
        %v1552 = vpop.permute.xlu0 %1551
        %1553 = vrot.lane.b32.xlu0 %v894, 16
        %v1554 = vpop.permute.xlu0 %1553
        %1555 = vrot.lane.b32.xlu0 %v896, 16
        %v1556 = vpop.permute.xlu0 %1555
        %1557 = vrot.lane.b32.xlu0 %v899, 16
        %v1558 = vpop.permute.xlu0 %1557
        %1559 = vrot.lane.b32.xlu0 %v901, 16
        %v1560 = vpop.permute.xlu0 %1559
        %1561 = vrot.lane.b32.xlu0 %v903, 16
        %v1562 = vpop.permute.xlu0 %1561
        %1563 = vrot.lane.b32.xlu0 %v906, 16
        %v1564 = vpop.permute.xlu0 %1563
        %1565 = vrot.lane.b32.xlu0 %v908, 16
        %v1566 = vpop.permute.xlu0 %1565
        %1567 = vrot.lane.b32.xlu0 %v910, 16
        %v1568 = vpop.permute.xlu0 %1567
        %1569 = vrot.lane.b32.xlu0 %v913, 16
        %v1570 = vpop.permute.xlu0 %1569
        %1571 = vrot.lane.b32.xlu0 %v915, 16
        %v1572 = vpop.permute.xlu0 %1571
        %1573 = vrot.lane.b32.xlu0 %v917, 16
        %v1574 = vpop.permute.xlu0 %1573
        %1575 = vrot.lane.b32.xlu0 %v920, 16
        %v1576 = vpop.permute.xlu0 %1575
        %1577 = vrot.lane.b32.xlu0 %v922, 16
        %v1578 = vpop.permute.xlu0 %1577
        %1579 = vrot.lane.b32.xlu0 %v924, 16
        %v1580 = vpop.permute.xlu0 %1579
        %1581 = vrot.lane.b32.xlu0 %v927, 16
        %v1582 = vpop.permute.xlu0 %1581
        %1583 = vrot.lane.b32.xlu0 %v929, 16
        %v1584 = vpop.permute.xlu0 %1583
        %1585 = vrot.lane.b32.xlu0 %v931, 16
        %v1586 = vpop.permute.xlu0 %1585
        %1587 = vrot.lane.b32.xlu0 %v934, 16
        %v1588 = vpop.permute.xlu0 %1587
        %1589 = vrot.lane.b32.xlu0 %v936, 16
        %v1590 = vpop.permute.xlu0 %1589
        %1591 = vrot.lane.b32.xlu0 %v938, 16
        %v1592 = vpop.permute.xlu0 %1591
        %1593 = vrot.lane.b32.xlu0 %v941, 16
        %v1594 = vpop.permute.xlu0 %1593
        %1595 = vrot.lane.b32.xlu0 %v943, 16
        %v1596 = vpop.permute.xlu0 %1595
        %1597 = vrot.lane.b32.xlu0 %v945, 16
        %v1598 = vpop.permute.xlu0 %1597
        %1599 = vrot.lane.b32.xlu0 %v948, 16
        %v1600 = vpop.permute.xlu0 %1599
        %1601 = vrot.lane.b32.xlu0 %v950, 16
        %v1602 = vpop.permute.xlu0 %1601
        %1603 = vrot.lane.b32.xlu0 %v952, 16
        %v1604 = vpop.permute.xlu0 %1603
        %1605 = vrot.lane.b32.xlu0 %v955, 16
        %v1606 = vpop.permute.xlu0 %1605
        %1607 = vrot.lane.b32.xlu0 %v957, 16
        %v1608 = vpop.permute.xlu0 %1607
        %1609 = vrot.lane.b32.xlu0 %v959, 16
        %v1610 = vpop.permute.xlu0 %1609
        %1611 = vrot.lane.b32.xlu0 %v962, 16
        %v1612 = vpop.permute.xlu0 %1611
        %1613 = vrot.lane.b32.xlu0 %v964, 16
        %v1614 = vpop.permute.xlu0 %1613
        %1615 = vrot.lane.b32.xlu0 %v966, 16
        %v1616 = vpop.permute.xlu0 %1615
        %1617 = vrot.lane.b32.xlu0 %v969, 16
        %v1618 = vpop.permute.xlu0 %1617
        %1619 = vrot.lane.b32.xlu0 %v971, 16
        %v1620 = vpop.permute.xlu0 %1619
        %1621 = vrot.lane.b32.xlu0 %v973, 16
        %v1622 = vpop.permute.xlu0 %1621
        %1731 = vrot.lane.b32.xlu0 %v977, 32
        %v1732 = vpop.permute.xlu0 %1731
        %1733 = vrot.lane.b32.xlu0 %v979, 32
        %v1734 = vpop.permute.xlu0 %1733
        %1735 = vrot.lane.b32.xlu0 %v981, 32
        %v1736 = vpop.permute.xlu0 %1735
        %1737 = vrot.lane.b32.xlu0 %v984, 32
        %v1738 = vpop.permute.xlu0 %1737
        %1739 = vrot.lane.b32.xlu0 %v986, 32
        %v1740 = vpop.permute.xlu0 %1739
        %1741 = vrot.lane.b32.xlu0 %v988, 32
        %v1742 = vpop.permute.xlu0 %1741
        %1743 = vrot.lane.b32.xlu0 %v991, 32
        %v1744 = vpop.permute.xlu0 %1743
        %1745 = vrot.lane.b32.xlu0 %v993, 32
        %v1746 = vpop.permute.xlu0 %1745
        %1747 = vrot.lane.b32.xlu0 %v995, 32
        %v1748 = vpop.permute.xlu0 %1747
        %1749 = vrot.lane.b32.xlu0 %v998, 32
        %v1750 = vpop.permute.xlu0 %1749
        %1751 = vrot.lane.b32.xlu0 %v1000, 32
        %v1752 = vpop.permute.xlu0 %1751
        %1753 = vrot.lane.b32.xlu0 %v1002, 32
        %v1754 = vpop.permute.xlu0 %1753
        %1755 = vrot.lane.b32.xlu0 %v1005, 32
        %v1756 = vpop.permute.xlu0 %1755
        %1757 = vrot.lane.b32.xlu0 %v1007, 32
        %v1758 = vpop.permute.xlu0 %1757
        %1759 = vrot.lane.b32.xlu0 %v1009, 32
        %v1760 = vpop.permute.xlu0 %1759
        %1761 = vrot.lane.b32.xlu0 %v1012, 32
        %v1762 = vpop.permute.xlu0 %1761
        %1763 = vrot.lane.b32.xlu0 %v1014, 32
        %v1764 = vpop.permute.xlu0 %1763
        %1765 = vrot.lane.b32.xlu0 %v1016, 32
        %v1766 = vpop.permute.xlu0 %1765
        %1767 = vrot.lane.b32.xlu0 %v1019, 32
        %v1768 = vpop.permute.xlu0 %1767
        %1769 = vrot.lane.b32.xlu0 %v1021, 32
        %v1770 = vpop.permute.xlu0 %1769
        %1771 = vrot.lane.b32.xlu0 %v1023, 32
        %v1772 = vpop.permute.xlu0 %1771
        %1773 = vrot.lane.b32.xlu0 %v1026, 32
        %v1774 = vpop.permute.xlu0 %1773
        %1775 = vrot.lane.b32.xlu0 %v1028, 32
        %v1776 = vpop.permute.xlu0 %1775
        %1777 = vrot.lane.b32.xlu0 %v1030, 32
        %v1778 = vpop.permute.xlu0 %1777
        %1779 = vrot.lane.b32.xlu0 %v1033, 32
        %v1780 = vpop.permute.xlu0 %1779
        %1781 = vrot.lane.b32.xlu0 %v1035, 32
        %v1782 = vpop.permute.xlu0 %1781
        %1783 = vrot.lane.b32.xlu0 %v1037, 32
        %v1784 = vpop.permute.xlu0 %1783
        %1785 = vrot.lane.b32.xlu0 %v1040, 32
        %v1786 = vpop.permute.xlu0 %1785
        %1787 = vrot.lane.b32.xlu0 %v1042, 32
        %v1788 = vpop.permute.xlu0 %1787
        %1789 = vrot.lane.b32.xlu0 %v1044, 32
        %v1790 = vpop.permute.xlu0 %1789
        %1791 = vrot.lane.b32.xlu0 %v1047, 32
        %v1792 = vpop.permute.xlu0 %1791
        %1793 = vrot.lane.b32.xlu0 %v1049, 32
        %v1794 = vpop.permute.xlu0 %1793
        %1795 = vrot.lane.b32.xlu0 %v1051, 32
        %v1796 = vpop.permute.xlu0 %1795
        %1797 = vrot.lane.b32.xlu0 %v1054, 32
        %v1798 = vpop.permute.xlu0 %1797
        %1799 = vrot.lane.b32.xlu0 %v1056, 32
        %v1800 = vpop.permute.xlu0 %1799
        %1801 = vrot.lane.b32.xlu0 %v1058, 32
        %v1802 = vpop.permute.xlu0 %1801
        %1803 = vrot.lane.b32.xlu0 %v1061, 32
        %v1804 = vpop.permute.xlu0 %1803
        %1805 = vrot.lane.b32.xlu0 %v1063, 32
        %v1806 = vpop.permute.xlu0 %1805
        %1807 = vrot.lane.b32.xlu0 %v1065, 32
        %v1808 = vpop.permute.xlu0 %1807
        %1809 = vrot.lane.b32.xlu0 %v1068, 32
        %v1810 = vpop.permute.xlu0 %1809
        %1811 = vrot.lane.b32.xlu0 %v1070, 32
        %v1812 = vpop.permute.xlu0 %1811
        %1813 = vrot.lane.b32.xlu0 %v1072, 32
        %v1814 = vpop.permute.xlu0 %1813
        %1815 = vrot.lane.b32.xlu0 %v1075, 32
        %v1816 = vpop.permute.xlu0 %1815
        %1817 = vrot.lane.b32.xlu0 %v1077, 32
        %v1818 = vpop.permute.xlu0 %1817
        %1819 = vrot.lane.b32.xlu0 %v1079, 32
        %v1820 = vpop.permute.xlu0 %1819
        %1821 = vrot.lane.b32.xlu0 %v1082, 32
        %v1822 = vpop.permute.xlu0 %1821
        %1823 = vrot.lane.b32.xlu0 %v1084, 32
        %v1824 = vpop.permute.xlu0 %1823
        %1825 = vrot.lane.b32.xlu0 %v1086, 32
        %v1826 = vpop.permute.xlu0 %1825
        %1827 = vrot.lane.b32.xlu0 %v1089, 32
        %v1828 = vpop.permute.xlu0 %1827
        %1829 = vrot.lane.b32.xlu0 %v1091, 32
        %v1830 = vpop.permute.xlu0 %1829
        %1831 = vrot.lane.b32.xlu0 %v1093, 32
        %v1832 = vpop.permute.xlu0 %1831
        %1833 = vrot.lane.b32.xlu0 %v1096, 32
        %v1834 = vpop.permute.xlu0 %1833
        %1835 = vrot.lane.b32.xlu0 %v1098, 32
        %v1836 = vpop.permute.xlu0 %1835
        %1837 = vrot.lane.b32.xlu0 %v1100, 32
        %v1838 = vpop.permute.xlu0 %1837
        %1839 = vrot.lane.b32.xlu0 %v1103, 32
        %v1840 = vpop.permute.xlu0 %1839
        %1841 = vrot.lane.b32.xlu0 %v1105, 32
        %v1842 = vpop.permute.xlu0 %1841
        %1843 = vrot.lane.b32.xlu0 %v1107, 32
        %v1844 = vpop.permute.xlu0 %1843
        %1845 = vrot.lane.b32.xlu0 %v1110, 32
        %v1846 = vpop.permute.xlu0 %1845
        %1847 = vrot.lane.b32.xlu0 %v1112, 32
        %v1848 = vpop.permute.xlu0 %1847
        %1849 = vrot.lane.b32.xlu0 %v1114, 32
        %v1850 = vpop.permute.xlu0 %1849
        %1851 = vrot.lane.b32.xlu0 %v1117, 32
        %v1852 = vpop.permute.xlu0 %1851
        %1853 = vrot.lane.b32.xlu0 %v1119, 32
        %v1854 = vpop.permute.xlu0 %1853
        %1855 = vrot.lane.b32.xlu0 %v1121, 32
        %v1856 = vpop.permute.xlu0 %1855
        %1857 = vrot.lane.b32.xlu0 %v1124, 32
        %v1858 = vpop.permute.xlu0 %1857
        %1859 = vrot.lane.b32.xlu0 %v1126, 32
        %v1860 = vpop.permute.xlu0 %1859
        %1861 = vrot.lane.b32.xlu0 %v1128, 32
        %v1862 = vpop.permute.xlu0 %1861
        %1863 = vrot.lane.b32.xlu0 %v1131, 32
        %v1864 = vpop.permute.xlu0 %1863
        %1865 = vrot.lane.b32.xlu0 %v1133, 32
        %v1866 = vpop.permute.xlu0 %1865
        %1867 = vrot.lane.b32.xlu0 %v1135, 32
        %v1868 = vpop.permute.xlu0 %1867
        %1869 = vrot.lane.b32.xlu0 %v1138, 32
        %v1870 = vpop.permute.xlu0 %1869
        %1871 = vrot.lane.b32.xlu0 %v1140, 32
        %v1872 = vpop.permute.xlu0 %1871
        %1873 = vrot.lane.b32.xlu0 %v1142, 32
        %v1874 = vpop.permute.xlu0 %1873
        %1875 = vrot.lane.b32.xlu0 %v1145, 32
        %v1876 = vpop.permute.xlu0 %1875
        %1877 = vrot.lane.b32.xlu0 %v1147, 32
        %v1878 = vpop.permute.xlu0 %1877
        %1879 = vrot.lane.b32.xlu0 %v1149, 32
        %v1880 = vpop.permute.xlu0 %1879
        %1881 = vrot.lane.b32.xlu0 %v1152, 32
        %v1882 = vpop.permute.xlu0 %1881
        %1883 = vrot.lane.b32.xlu0 %v1154, 32
        %v1884 = vpop.permute.xlu0 %1883
        %1885 = vrot.lane.b32.xlu0 %v1156, 32
        %v1886 = vpop.permute.xlu0 %1885
        %1887 = vrot.lane.b32.xlu0 %v1159, 32
        %v1888 = vpop.permute.xlu0 %1887
        %1889 = vrot.lane.b32.xlu0 %v1161, 32
        %v1890 = vpop.permute.xlu0 %1889
        %1891 = vrot.lane.b32.xlu0 %v1163, 32
        %v1892 = vpop.permute.xlu0 %1891
        %1893 = vrot.lane.b32.xlu0 %v1166, 32
        %v1894 = vpop.permute.xlu0 %1893
        %1895 = vrot.lane.b32.xlu0 %v1168, 32
        %v1896 = vpop.permute.xlu0 %1895
        %1897 = vrot.lane.b32.xlu0 %v1170, 32
        %v1898 = vpop.permute.xlu0 %1897
        %1899 = vrot.lane.b32.xlu0 %v1173, 32
        %v1900 = vpop.permute.xlu0 %1899
        %1901 = vrot.lane.b32.xlu0 %v1175, 32
        %v1902 = vpop.permute.xlu0 %1901
        %1903 = vrot.lane.b32.xlu0 %v1177, 32
        %v1904 = vpop.permute.xlu0 %1903
        %1905 = vrot.lane.b32.xlu0 %v1180, 32
        %v1906 = vpop.permute.xlu0 %1905
        %1907 = vrot.lane.b32.xlu0 %v1182, 32
        %v1908 = vpop.permute.xlu0 %1907
        %1909 = vrot.lane.b32.xlu0 %v1184, 32
        %v1910 = vpop.permute.xlu0 %1909
        %1911 = vrot.lane.b32.xlu0 %v1187, 32
        %v1912 = vpop.permute.xlu0 %1911
        %1913 = vrot.lane.b32.xlu0 %v1189, 32
        %v1914 = vpop.permute.xlu0 %1913
        %1915 = vrot.lane.b32.xlu0 %v1191, 32
        %v1916 = vpop.permute.xlu0 %1915
        %1917 = vrot.lane.b32.xlu0 %v1194, 32
        %v1918 = vpop.permute.xlu0 %1917
        %1919 = vrot.lane.b32.xlu0 %v1196, 32
        %v1920 = vpop.permute.xlu0 %1919
        %1921 = vrot.lane.b32.xlu0 %v1198, 32
        %v1922 = vpop.permute.xlu0 %1921
        %1923 = vrot.lane.b32.xlu0 %v1201, 32
        %v1924 = vpop.permute.xlu0 %1923
        %1925 = vrot.lane.b32.xlu0 %v1203, 32
        %v1926 = vpop.permute.xlu0 %1925
        %1927 = vrot.lane.b32.xlu0 %v1205, 32
        %v1928 = vpop.permute.xlu0 %1927
        %1929 = vrot.lane.b32.xlu0 %v1208, 32
        %v1930 = vpop.permute.xlu0 %1929
        %1931 = vrot.lane.b32.xlu0 %v1210, 32
        %v1932 = vpop.permute.xlu0 %1931
        %1933 = vrot.lane.b32.xlu0 %v1212, 32
        %v1934 = vpop.permute.xlu0 %1933
        %1935 = vrot.lane.b32.xlu0 %v1215, 32
        %v1936 = vpop.permute.xlu0 %1935
        %1937 = vrot.lane.b32.xlu0 %v1217, 32
        %v1938 = vpop.permute.xlu0 %1937
        %1939 = vrot.lane.b32.xlu0 %v1219, 32
        %v1940 = vpop.permute.xlu0 %1939
        %1941 = vrot.lane.b32.xlu0 %v1222, 32
        %v1942 = vpop.permute.xlu0 %1941
        %1943 = vrot.lane.b32.xlu0 %v1224, 32
        %v1944 = vpop.permute.xlu0 %1943
        %1945 = vrot.lane.b32.xlu0 %v1226, 32
        %v1946 = vpop.permute.xlu0 %1945
        %2055 = vrot.lane.b32.xlu0 %v421, 48
        %v2056 = vpop.permute.xlu0 %2055
        %2057 = vrot.lane.b32.xlu0 %v422, 48
        %v2058 = vpop.permute.xlu0 %2057
        %2059 = vrot.lane.b32.xlu0 %v423, 48
        %v2060 = vpop.permute.xlu0 %2059
        %2061 = vrot.lane.b32.xlu0 %v425, 48
        %v2062 = vpop.permute.xlu0 %2061
        %2063 = vrot.lane.b32.xlu0 %v426, 48
        %v2064 = vpop.permute.xlu0 %2063
        %2065 = vrot.lane.b32.xlu0 %v427, 48
        %v2066 = vpop.permute.xlu0 %2065
        %2067 = vrot.lane.b32.xlu0 %v429, 48
        %v2068 = vpop.permute.xlu0 %2067
        %2069 = vrot.lane.b32.xlu0 %v430, 48
        %v2070 = vpop.permute.xlu0 %2069
        %2071 = vrot.lane.b32.xlu0 %v431, 48
        %v2072 = vpop.permute.xlu0 %2071
        %2073 = vrot.lane.b32.xlu0 %v433, 48
        %v2074 = vpop.permute.xlu0 %2073
        %2075 = vrot.lane.b32.xlu0 %v434, 48
        %v2076 = vpop.permute.xlu0 %2075
        %2077 = vrot.lane.b32.xlu0 %v435, 48
        %v2078 = vpop.permute.xlu0 %2077
        %2079 = vrot.lane.b32.xlu0 %v437, 48
        %v2080 = vpop.permute.xlu0 %2079
        %2081 = vrot.lane.b32.xlu0 %v438, 48
        %v2082 = vpop.permute.xlu0 %2081
        %2083 = vrot.lane.b32.xlu0 %v439, 48
        %v2084 = vpop.permute.xlu0 %2083
        %2085 = vrot.lane.b32.xlu0 %v441, 48
        %v2086 = vpop.permute.xlu0 %2085
        %2087 = vrot.lane.b32.xlu0 %v442, 48
        %v2088 = vpop.permute.xlu0 %2087
        %2089 = vrot.lane.b32.xlu0 %v443, 48
        %v2090 = vpop.permute.xlu0 %2089
        %2091 = vrot.lane.b32.xlu0 %v445, 48
        %v2092 = vpop.permute.xlu0 %2091
        %2093 = vrot.lane.b32.xlu0 %v446, 48
        %v2094 = vpop.permute.xlu0 %2093
        %2095 = vrot.lane.b32.xlu0 %v447, 48
        %v2096 = vpop.permute.xlu0 %2095
        %2097 = vrot.lane.b32.xlu0 %v449, 48
        %v2098 = vpop.permute.xlu0 %2097
        %2099 = vrot.lane.b32.xlu0 %v450, 48
        %v2100 = vpop.permute.xlu0 %2099
        %2101 = vrot.lane.b32.xlu0 %v451, 48
        %v2102 = vpop.permute.xlu0 %2101
        %2103 = vrot.lane.b32.xlu0 %v453, 48
        %v2104 = vpop.permute.xlu0 %2103
        %2105 = vrot.lane.b32.xlu0 %v454, 48
        %v2106 = vpop.permute.xlu0 %2105
        %2107 = vrot.lane.b32.xlu0 %v455, 48
        %v2108 = vpop.permute.xlu0 %2107
        %2109 = vrot.lane.b32.xlu0 %v457, 48
        %v2110 = vpop.permute.xlu0 %2109
        %2111 = vrot.lane.b32.xlu0 %v458, 48
        %v2112 = vpop.permute.xlu0 %2111
        %2113 = vrot.lane.b32.xlu0 %v459, 48
        %v2114 = vpop.permute.xlu0 %2113
        %2115 = vrot.lane.b32.xlu0 %v461, 48
        %v2116 = vpop.permute.xlu0 %2115
        %2117 = vrot.lane.b32.xlu0 %v462, 48
        %v2118 = vpop.permute.xlu0 %2117
        %2119 = vrot.lane.b32.xlu0 %v463, 48
        %v2120 = vpop.permute.xlu0 %2119
        %2121 = vrot.lane.b32.xlu0 %v465, 48
        %v2122 = vpop.permute.xlu0 %2121
        %2123 = vrot.lane.b32.xlu0 %v466, 48
        %v2124 = vpop.permute.xlu0 %2123
        %2125 = vrot.lane.b32.xlu0 %v467, 48
        %v2126 = vpop.permute.xlu0 %2125
        %2127 = vrot.lane.b32.xlu0 %v469, 48
        %v2128 = vpop.permute.xlu0 %2127
        %2129 = vrot.lane.b32.xlu0 %v470, 48
        %v2130 = vpop.permute.xlu0 %2129
        %2131 = vrot.lane.b32.xlu0 %v471, 48
        %v2132 = vpop.permute.xlu0 %2131
        %2133 = vrot.lane.b32.xlu0 %v473, 48
        %v2134 = vpop.permute.xlu0 %2133
        %2135 = vrot.lane.b32.xlu0 %v474, 48
        %v2136 = vpop.permute.xlu0 %2135
        %2137 = vrot.lane.b32.xlu0 %v475, 48
        %v2138 = vpop.permute.xlu0 %2137
        %2139 = vrot.lane.b32.xlu0 %v477, 48
        %v2140 = vpop.permute.xlu0 %2139
        %2141 = vrot.lane.b32.xlu0 %v478, 48
        %v2142 = vpop.permute.xlu0 %2141
        %2143 = vrot.lane.b32.xlu0 %v479, 48
        %v2144 = vpop.permute.xlu0 %2143
        %2145 = vrot.lane.b32.xlu0 %v481, 48
        %v2146 = vpop.permute.xlu0 %2145
        %2147 = vrot.lane.b32.xlu0 %v482, 48
        %v2148 = vpop.permute.xlu0 %2147
        %2149 = vrot.lane.b32.xlu0 %v483, 48
        %v2150 = vpop.permute.xlu0 %2149
        %2151 = vrot.lane.b32.xlu0 %v485, 48
        %v2152 = vpop.permute.xlu0 %2151
        %2153 = vrot.lane.b32.xlu0 %v486, 48
        %v2154 = vpop.permute.xlu0 %2153
        %2155 = vrot.lane.b32.xlu0 %v487, 48
        %v2156 = vpop.permute.xlu0 %2155
        %2157 = vrot.lane.b32.xlu0 %v489, 48
        %v2158 = vpop.permute.xlu0 %2157
        %2159 = vrot.lane.b32.xlu0 %v490, 48
        %v2160 = vpop.permute.xlu0 %2159
        %2161 = vrot.lane.b32.xlu0 %v491, 48
        %v2162 = vpop.permute.xlu0 %2161
        %2163 = vrot.lane.b32.xlu0 %v501, 48
        %v2164 = vpop.permute.xlu0 %2163
        %2165 = vrot.lane.b32.xlu0 %v502, 48
        %v2166 = vpop.permute.xlu0 %2165
        %2167 = vrot.lane.b32.xlu0 %v503, 48
        %v2168 = vpop.permute.xlu0 %2167
        %2169 = vrot.lane.b32.xlu0 %v505, 48
        %v2170 = vpop.permute.xlu0 %2169
        %2171 = vrot.lane.b32.xlu0 %v506, 48
        %v2172 = vpop.permute.xlu0 %2171
        %2173 = vrot.lane.b32.xlu0 %v507, 48
        %v2174 = vpop.permute.xlu0 %2173
        %2175 = vrot.lane.b32.xlu0 %v509, 48
        %v2176 = vpop.permute.xlu0 %2175
        %2177 = vrot.lane.b32.xlu0 %v510, 48
        %v2178 = vpop.permute.xlu0 %2177
        %2179 = vrot.lane.b32.xlu0 %v511, 48
        %v2180 = vpop.permute.xlu0 %2179
        %2181 = vrot.lane.b32.xlu0 %v513, 48
        %v2182 = vpop.permute.xlu0 %2181
        %2183 = vrot.lane.b32.xlu0 %v514, 48
        %v2184 = vpop.permute.xlu0 %2183
        %2185 = vrot.lane.b32.xlu0 %v515, 48
        %v2186 = vpop.permute.xlu0 %2185
        %2187 = vrot.lane.b32.xlu0 %v517, 48
        %v2188 = vpop.permute.xlu0 %2187
        %2189 = vrot.lane.b32.xlu0 %v518, 48
        %v2190 = vpop.permute.xlu0 %2189
        %2191 = vrot.lane.b32.xlu0 %v519, 48
        %v2192 = vpop.permute.xlu0 %2191
        %2193 = vrot.lane.b32.xlu0 %v521, 48
        %v2194 = vpop.permute.xlu0 %2193
        %2195 = vrot.lane.b32.xlu0 %v522, 48
        %v2196 = vpop.permute.xlu0 %2195
        %2197 = vrot.lane.b32.xlu0 %v523, 48
        %v2198 = vpop.permute.xlu0 %2197
        %2199 = vrot.lane.b32.xlu0 %v525, 48
        %v2200 = vpop.permute.xlu0 %2199
        %2201 = vrot.lane.b32.xlu0 %v526, 48
        %v2202 = vpop.permute.xlu0 %2201
        %2203 = vrot.lane.b32.xlu0 %v527, 48
        %v2204 = vpop.permute.xlu0 %2203
        %2205 = vrot.lane.b32.xlu0 %v529, 48
        %v2206 = vpop.permute.xlu0 %2205
        %2207 = vrot.lane.b32.xlu0 %v530, 48
        %v2208 = vpop.permute.xlu0 %2207
        %2209 = vrot.lane.b32.xlu0 %v531, 48
        %v2210 = vpop.permute.xlu0 %2209
        %2211 = vrot.lane.b32.xlu0 %v533, 48
        %v2212 = vpop.permute.xlu0 %2211
        %2213 = vrot.lane.b32.xlu0 %v534, 48
        %v2214 = vpop.permute.xlu0 %2213
        %2215 = vrot.lane.b32.xlu0 %v535, 48
        %v2216 = vpop.permute.xlu0 %2215
        %2217 = vrot.lane.b32.xlu0 %v537, 48
        %v2218 = vpop.permute.xlu0 %2217
        %2219 = vrot.lane.b32.xlu0 %v538, 48
        %v2220 = vpop.permute.xlu0 %2219
        %2221 = vrot.lane.b32.xlu0 %v539, 48
        %v2222 = vpop.permute.xlu0 %2221
        %2223 = vrot.lane.b32.xlu0 %v541, 48
        %v2224 = vpop.permute.xlu0 %2223
        %2225 = vrot.lane.b32.xlu0 %v542, 48
        %v2226 = vpop.permute.xlu0 %2225
        %2227 = vrot.lane.b32.xlu0 %v543, 48
        %v2228 = vpop.permute.xlu0 %2227
        %2229 = vrot.lane.b32.xlu0 %v545, 48
        %v2230 = vpop.permute.xlu0 %2229
        %2231 = vrot.lane.b32.xlu0 %v546, 48
        %v2232 = vpop.permute.xlu0 %2231
        %2233 = vrot.lane.b32.xlu0 %v547, 48
        %v2234 = vpop.permute.xlu0 %2233
        %2235 = vrot.lane.b32.xlu0 %v549, 48
        %v2236 = vpop.permute.xlu0 %2235
        %2237 = vrot.lane.b32.xlu0 %v550, 48
        %v2238 = vpop.permute.xlu0 %2237
        %2239 = vrot.lane.b32.xlu0 %v551, 48
        %v2240 = vpop.permute.xlu0 %2239
        %2241 = vrot.lane.b32.xlu0 %v553, 48
        %v2242 = vpop.permute.xlu0 %2241
        %2243 = vrot.lane.b32.xlu0 %v554, 48
        %v2244 = vpop.permute.xlu0 %2243
        %2245 = vrot.lane.b32.xlu0 %v555, 48
        %v2246 = vpop.permute.xlu0 %2245
        %2247 = vrot.lane.b32.xlu0 %v557, 48
        %v2248 = vpop.permute.xlu0 %2247
        %2249 = vrot.lane.b32.xlu0 %v558, 48
        %v2250 = vpop.permute.xlu0 %2249
        %2251 = vrot.lane.b32.xlu0 %v559, 48
        %v2252 = vpop.permute.xlu0 %2251
        %2253 = vrot.lane.b32.xlu0 %v561, 48
        %v2254 = vpop.permute.xlu0 %2253
        %2255 = vrot.lane.b32.xlu0 %v562, 48
        %v2256 = vpop.permute.xlu0 %2255
        %2257 = vrot.lane.b32.xlu0 %v563, 48
        %v2258 = vpop.permute.xlu0 %2257
        %2259 = vrot.lane.b32.xlu0 %v565, 48
        %v2260 = vpop.permute.xlu0 %2259
        %2261 = vrot.lane.b32.xlu0 %v566, 48
        %v2262 = vpop.permute.xlu0 %2261
        %2263 = vrot.lane.b32.xlu0 %v567, 48
        %v2264 = vpop.permute.xlu0 %2263
        %2265 = vrot.lane.b32.xlu0 %v569, 48
        %v2266 = vpop.permute.xlu0 %2265
        %2267 = vrot.lane.b32.xlu0 %v570, 48
        %v2268 = vpop.permute.xlu0 %2267
        %2269 = vrot.lane.b32.xlu0 %v571, 48
        %v2270 = vpop.permute.xlu0 %2269
        %2379 = vrot.lane.b32.xlu0 %v731, 64
        %v2380 = vpop.permute.xlu0 %2379
        %2381 = vrot.lane.b32.xlu0 %v733, 64
        %v2382 = vpop.permute.xlu0 %2381
        %2383 = vrot.lane.b32.xlu0 %v735, 64
        %v2384 = vpop.permute.xlu0 %2383
        %2385 = vrot.lane.b32.xlu0 %v738, 64
        %v2386 = vpop.permute.xlu0 %2385
        %2387 = vrot.lane.b32.xlu0 %v740, 64
        %v2388 = vpop.permute.xlu0 %2387
        %2389 = vrot.lane.b32.xlu0 %v742, 64
        %v2390 = vpop.permute.xlu0 %2389
        %2391 = vrot.lane.b32.xlu0 %v745, 64
        %v2392 = vpop.permute.xlu0 %2391
        %2393 = vrot.lane.b32.xlu0 %v747, 64
        %v2394 = vpop.permute.xlu0 %2393
        %2395 = vrot.lane.b32.xlu0 %v749, 64
        %v2396 = vpop.permute.xlu0 %2395
        %2397 = vrot.lane.b32.xlu0 %v752, 64
        %v2398 = vpop.permute.xlu0 %2397
        %2399 = vrot.lane.b32.xlu0 %v754, 64
        %v2400 = vpop.permute.xlu0 %2399
        %2401 = vrot.lane.b32.xlu0 %v756, 64
        %v2402 = vpop.permute.xlu0 %2401
        %2403 = vrot.lane.b32.xlu0 %v759, 64
        %v2404 = vpop.permute.xlu0 %2403
        %2405 = vrot.lane.b32.xlu0 %v761, 64
        %v2406 = vpop.permute.xlu0 %2405
        %2407 = vrot.lane.b32.xlu0 %v763, 64
        %v2408 = vpop.permute.xlu0 %2407
        %2409 = vrot.lane.b32.xlu0 %v766, 64
        %v2410 = vpop.permute.xlu0 %2409
        %2411 = vrot.lane.b32.xlu0 %v768, 64
        %v2412 = vpop.permute.xlu0 %2411
        %2413 = vrot.lane.b32.xlu0 %v770, 64
        %v2414 = vpop.permute.xlu0 %2413
        %2415 = vrot.lane.b32.xlu0 %v773, 64
        %v2416 = vpop.permute.xlu0 %2415
        %2417 = vrot.lane.b32.xlu0 %v775, 64
        %v2418 = vpop.permute.xlu0 %2417
        %2419 = vrot.lane.b32.xlu0 %v777, 64
        %v2420 = vpop.permute.xlu0 %2419
        %2421 = vrot.lane.b32.xlu0 %v780, 64
        %v2422 = vpop.permute.xlu0 %2421
        %2423 = vrot.lane.b32.xlu0 %v782, 64
        %v2424 = vpop.permute.xlu0 %2423
        %2425 = vrot.lane.b32.xlu0 %v784, 64
        %v2426 = vpop.permute.xlu0 %2425
        %2427 = vrot.lane.b32.xlu0 %v787, 64
        %v2428 = vpop.permute.xlu0 %2427
        %2429 = vrot.lane.b32.xlu0 %v789, 64
        %v2430 = vpop.permute.xlu0 %2429
        %2431 = vrot.lane.b32.xlu0 %v791, 64
        %v2432 = vpop.permute.xlu0 %2431
        %2433 = vrot.lane.b32.xlu0 %v794, 64
        %v2434 = vpop.permute.xlu0 %2433
        %2435 = vrot.lane.b32.xlu0 %v796, 64
        %v2436 = vpop.permute.xlu0 %2435
        %2437 = vrot.lane.b32.xlu0 %v798, 64
        %v2438 = vpop.permute.xlu0 %2437
        %2439 = vrot.lane.b32.xlu0 %v801, 64
        %v2440 = vpop.permute.xlu0 %2439
        %2441 = vrot.lane.b32.xlu0 %v803, 64
        %v2442 = vpop.permute.xlu0 %2441
        %2443 = vrot.lane.b32.xlu0 %v805, 64
        %v2444 = vpop.permute.xlu0 %2443
        %2445 = vrot.lane.b32.xlu0 %v808, 64
        %v2446 = vpop.permute.xlu0 %2445
        %2447 = vrot.lane.b32.xlu0 %v810, 64
        %v2448 = vpop.permute.xlu0 %2447
        %2449 = vrot.lane.b32.xlu0 %v812, 64
        %v2450 = vpop.permute.xlu0 %2449
        %2451 = vrot.lane.b32.xlu0 %v815, 64
        %v2452 = vpop.permute.xlu0 %2451
        %2453 = vrot.lane.b32.xlu0 %v817, 64
        %v2454 = vpop.permute.xlu0 %2453
        %2455 = vrot.lane.b32.xlu0 %v819, 64
        %v2456 = vpop.permute.xlu0 %2455
        %2457 = vrot.lane.b32.xlu0 %v822, 64
        %v2458 = vpop.permute.xlu0 %2457
        %2459 = vrot.lane.b32.xlu0 %v824, 64
        %v2460 = vpop.permute.xlu0 %2459
        %2461 = vrot.lane.b32.xlu0 %v826, 64
        %v2462 = vpop.permute.xlu0 %2461
        %2463 = vrot.lane.b32.xlu0 %v829, 64
        %v2464 = vpop.permute.xlu0 %2463
        %2465 = vrot.lane.b32.xlu0 %v831, 64
        %v2466 = vpop.permute.xlu0 %2465
        %2467 = vrot.lane.b32.xlu0 %v833, 64
        %v2468 = vpop.permute.xlu0 %2467
        %2469 = vrot.lane.b32.xlu0 %v836, 64
        %v2470 = vpop.permute.xlu0 %2469
        %2471 = vrot.lane.b32.xlu0 %v838, 64
        %v2472 = vpop.permute.xlu0 %2471
        %2473 = vrot.lane.b32.xlu0 %v840, 64
        %v2474 = vpop.permute.xlu0 %2473
        %2475 = vrot.lane.b32.xlu0 %v843, 64
        %v2476 = vpop.permute.xlu0 %2475
        %2477 = vrot.lane.b32.xlu0 %v845, 64
        %v2478 = vpop.permute.xlu0 %2477
        %2479 = vrot.lane.b32.xlu0 %v847, 64
        %v2480 = vpop.permute.xlu0 %2479
        %2481 = vrot.lane.b32.xlu0 %v1237, 64
        %v2482 = vpop.permute.xlu0 %2481
        %2483 = vrot.lane.b32.xlu0 %v1239, 64
        %v2484 = vpop.permute.xlu0 %2483
        %2485 = vrot.lane.b32.xlu0 %v1241, 64
        %v2486 = vpop.permute.xlu0 %2485
        %2487 = vrot.lane.b32.xlu0 %v857, 64
        %v2488 = vpop.permute.xlu0 %2487
        %2489 = vrot.lane.b32.xlu0 %v859, 64
        %v2490 = vpop.permute.xlu0 %2489
        %2491 = vrot.lane.b32.xlu0 %v861, 64
        %v2492 = vpop.permute.xlu0 %2491
        %2493 = vrot.lane.b32.xlu0 %v864, 64
        %v2494 = vpop.permute.xlu0 %2493
        %2495 = vrot.lane.b32.xlu0 %v866, 64
        %v2496 = vpop.permute.xlu0 %2495
        %2497 = vrot.lane.b32.xlu0 %v868, 64
        %v2498 = vpop.permute.xlu0 %2497
        %2499 = vrot.lane.b32.xlu0 %v871, 64
        %v2500 = vpop.permute.xlu0 %2499
        %2501 = vrot.lane.b32.xlu0 %v873, 64
        %v2502 = vpop.permute.xlu0 %2501
        %2503 = vrot.lane.b32.xlu0 %v875, 64
        %v2504 = vpop.permute.xlu0 %2503
        %2505 = vrot.lane.b32.xlu0 %v878, 64
        %v2506 = vpop.permute.xlu0 %2505
        %2507 = vrot.lane.b32.xlu0 %v880, 64
        %v2508 = vpop.permute.xlu0 %2507
        %2509 = vrot.lane.b32.xlu0 %v882, 64
        %v2510 = vpop.permute.xlu0 %2509
        %2511 = vrot.lane.b32.xlu0 %v885, 64
        %v2512 = vpop.permute.xlu0 %2511
        %2513 = vrot.lane.b32.xlu0 %v887, 64
        %v2514 = vpop.permute.xlu0 %2513
        %2515 = vrot.lane.b32.xlu0 %v889, 64
        %v2516 = vpop.permute.xlu0 %2515
        %2517 = vrot.lane.b32.xlu0 %v892, 64
        %v2518 = vpop.permute.xlu0 %2517
        %2519 = vrot.lane.b32.xlu0 %v894, 64
        %v2520 = vpop.permute.xlu0 %2519
        %2521 = vrot.lane.b32.xlu0 %v896, 64
        %v2522 = vpop.permute.xlu0 %2521
        %2523 = vrot.lane.b32.xlu0 %v899, 64
        %v2524 = vpop.permute.xlu0 %2523
        %2525 = vrot.lane.b32.xlu0 %v901, 64
        %v2526 = vpop.permute.xlu0 %2525
        %2527 = vrot.lane.b32.xlu0 %v903, 64
        %v2528 = vpop.permute.xlu0 %2527
        %2529 = vrot.lane.b32.xlu0 %v906, 64
        %v2530 = vpop.permute.xlu0 %2529
        %2531 = vrot.lane.b32.xlu0 %v908, 64
        %v2532 = vpop.permute.xlu0 %2531
        %2533 = vrot.lane.b32.xlu0 %v910, 64
        %v2534 = vpop.permute.xlu0 %2533
        %2535 = vrot.lane.b32.xlu0 %v913, 64
        %v2536 = vpop.permute.xlu0 %2535
        %2537 = vrot.lane.b32.xlu0 %v915, 64
        %v2538 = vpop.permute.xlu0 %2537
        %2539 = vrot.lane.b32.xlu0 %v917, 64
        %v2540 = vpop.permute.xlu0 %2539
        %2541 = vrot.lane.b32.xlu0 %v920, 64
        %v2542 = vpop.permute.xlu0 %2541
        %2543 = vrot.lane.b32.xlu0 %v922, 64
        %v2544 = vpop.permute.xlu0 %2543
        %2545 = vrot.lane.b32.xlu0 %v924, 64
        %v2546 = vpop.permute.xlu0 %2545
        %2547 = vrot.lane.b32.xlu0 %v927, 64
        %v2548 = vpop.permute.xlu0 %2547
        %2549 = vrot.lane.b32.xlu0 %v929, 64
        %v2550 = vpop.permute.xlu0 %2549
        %2551 = vrot.lane.b32.xlu0 %v931, 64
        %v2552 = vpop.permute.xlu0 %2551
        %2553 = vrot.lane.b32.xlu0 %v934, 64
        %v2554 = vpop.permute.xlu0 %2553
        %2555 = vrot.lane.b32.xlu0 %v936, 64
        %v2556 = vpop.permute.xlu0 %2555
        %2557 = vrot.lane.b32.xlu0 %v938, 64
        %v2558 = vpop.permute.xlu0 %2557
        %2559 = vrot.lane.b32.xlu0 %v941, 64
        %v2560 = vpop.permute.xlu0 %2559
        %2561 = vrot.lane.b32.xlu0 %v943, 64
        %v2562 = vpop.permute.xlu0 %2561
        %2563 = vrot.lane.b32.xlu0 %v945, 64
        %v2564 = vpop.permute.xlu0 %2563
        %2565 = vrot.lane.b32.xlu0 %v948, 64
        %v2566 = vpop.permute.xlu0 %2565
        %2567 = vrot.lane.b32.xlu0 %v950, 64
        %v2568 = vpop.permute.xlu0 %2567
        %2569 = vrot.lane.b32.xlu0 %v952, 64
        %v2570 = vpop.permute.xlu0 %2569
        %2571 = vrot.lane.b32.xlu0 %v955, 64
        %v2572 = vpop.permute.xlu0 %2571
        %2573 = vrot.lane.b32.xlu0 %v957, 64
        %v2574 = vpop.permute.xlu0 %2573
        %2575 = vrot.lane.b32.xlu0 %v959, 64
        %v2576 = vpop.permute.xlu0 %2575
        %2577 = vrot.lane.b32.xlu0 %v962, 64
        %v2578 = vpop.permute.xlu0 %2577
        %2579 = vrot.lane.b32.xlu0 %v964, 64
        %v2580 = vpop.permute.xlu0 %2579
        %2581 = vrot.lane.b32.xlu0 %v966, 64
        %v2582 = vpop.permute.xlu0 %2581
        %2583 = vrot.lane.b32.xlu0 %v969, 64
        %v2584 = vpop.permute.xlu0 %2583
        %2585 = vrot.lane.b32.xlu0 %v971, 64
        %v2586 = vpop.permute.xlu0 %2585
        %2587 = vrot.lane.b32.xlu0 %v973, 64
        %v2588 = vpop.permute.xlu0 %2587
        %2589 = vrot.lane.b32.xlu0 %v1244, 64
        %v2590 = vpop.permute.xlu0 %2589
        %2591 = vrot.lane.b32.xlu0 %v1246, 64
        %v2592 = vpop.permute.xlu0 %2591
        %2593 = vrot.lane.b32.xlu0 %v1248, 64
        %v2594 = vpop.permute.xlu0 %2593
        %2703 = vrot.lane.b32.xlu0 %v984, 80
        %v2704 = vpop.permute.xlu0 %2703
        %2705 = vrot.lane.b32.xlu0 %v986, 80
        %v2706 = vpop.permute.xlu0 %2705
        %2707 = vrot.lane.b32.xlu0 %v988, 80
        %v2708 = vpop.permute.xlu0 %2707
        %2709 = vrot.lane.b32.xlu0 %v991, 80
        %v2710 = vpop.permute.xlu0 %2709
        %2711 = vrot.lane.b32.xlu0 %v993, 80
        %v2712 = vpop.permute.xlu0 %2711
        %2713 = vrot.lane.b32.xlu0 %v995, 80
        %v2714 = vpop.permute.xlu0 %2713
        %2715 = vrot.lane.b32.xlu0 %v998, 80
        %v2716 = vpop.permute.xlu0 %2715
        %2717 = vrot.lane.b32.xlu0 %v1000, 80
        %v2718 = vpop.permute.xlu0 %2717
        %2719 = vrot.lane.b32.xlu0 %v1002, 80
        %v2720 = vpop.permute.xlu0 %2719
        %2721 = vrot.lane.b32.xlu0 %v1005, 80
        %v2722 = vpop.permute.xlu0 %2721
        %2723 = vrot.lane.b32.xlu0 %v1007, 80
        %v2724 = vpop.permute.xlu0 %2723
        %2725 = vrot.lane.b32.xlu0 %v1009, 80
        %v2726 = vpop.permute.xlu0 %2725
        %2727 = vrot.lane.b32.xlu0 %v1012, 80
        %v2728 = vpop.permute.xlu0 %2727
        %2729 = vrot.lane.b32.xlu0 %v1014, 80
        %v2730 = vpop.permute.xlu0 %2729
        %2731 = vrot.lane.b32.xlu0 %v1016, 80
        %v2732 = vpop.permute.xlu0 %2731
        %2733 = vrot.lane.b32.xlu0 %v1019, 80
        %v2734 = vpop.permute.xlu0 %2733
        %2735 = vrot.lane.b32.xlu0 %v1021, 80
        %v2736 = vpop.permute.xlu0 %2735
        %2737 = vrot.lane.b32.xlu0 %v1023, 80
        %v2738 = vpop.permute.xlu0 %2737
        %2739 = vrot.lane.b32.xlu0 %v1026, 80
        %v2740 = vpop.permute.xlu0 %2739
        %2741 = vrot.lane.b32.xlu0 %v1028, 80
        %v2742 = vpop.permute.xlu0 %2741
        %2743 = vrot.lane.b32.xlu0 %v1030, 80
        %v2744 = vpop.permute.xlu0 %2743
        %2745 = vrot.lane.b32.xlu0 %v1033, 80
        %v2746 = vpop.permute.xlu0 %2745
        %2747 = vrot.lane.b32.xlu0 %v1035, 80
        %v2748 = vpop.permute.xlu0 %2747
        %2749 = vrot.lane.b32.xlu0 %v1037, 80
        %v2750 = vpop.permute.xlu0 %2749
        %2751 = vrot.lane.b32.xlu0 %v1040, 80
        %v2752 = vpop.permute.xlu0 %2751
        %2753 = vrot.lane.b32.xlu0 %v1042, 80
        %v2754 = vpop.permute.xlu0 %2753
        %2755 = vrot.lane.b32.xlu0 %v1044, 80
        %v2756 = vpop.permute.xlu0 %2755
        %2757 = vrot.lane.b32.xlu0 %v1047, 80
        %v2758 = vpop.permute.xlu0 %2757
        %2759 = vrot.lane.b32.xlu0 %v1049, 80
        %v2760 = vpop.permute.xlu0 %2759
        %2761 = vrot.lane.b32.xlu0 %v1051, 80
        %v2762 = vpop.permute.xlu0 %2761
        %2763 = vrot.lane.b32.xlu0 %v1054, 80
        %v2764 = vpop.permute.xlu0 %2763
        %2765 = vrot.lane.b32.xlu0 %v1056, 80
        %v2766 = vpop.permute.xlu0 %2765
        %2767 = vrot.lane.b32.xlu0 %v1058, 80
        %v2768 = vpop.permute.xlu0 %2767
        %2769 = vrot.lane.b32.xlu0 %v1061, 80
        %v2770 = vpop.permute.xlu0 %2769
        %2771 = vrot.lane.b32.xlu0 %v1063, 80
        %v2772 = vpop.permute.xlu0 %2771
        %2773 = vrot.lane.b32.xlu0 %v1065, 80
        %v2774 = vpop.permute.xlu0 %2773
        %2775 = vrot.lane.b32.xlu0 %v1068, 80
        %v2776 = vpop.permute.xlu0 %2775
        %2777 = vrot.lane.b32.xlu0 %v1070, 80
        %v2778 = vpop.permute.xlu0 %2777
        %2779 = vrot.lane.b32.xlu0 %v1072, 80
        %v2780 = vpop.permute.xlu0 %2779
        %2781 = vrot.lane.b32.xlu0 %v1075, 80
        %v2782 = vpop.permute.xlu0 %2781
        %2783 = vrot.lane.b32.xlu0 %v1077, 80
        %v2784 = vpop.permute.xlu0 %2783
        %2785 = vrot.lane.b32.xlu0 %v1079, 80
        %v2786 = vpop.permute.xlu0 %2785
        %2787 = vrot.lane.b32.xlu0 %v1082, 80
        %v2788 = vpop.permute.xlu0 %2787
        %2789 = vrot.lane.b32.xlu0 %v1084, 80
        %v2790 = vpop.permute.xlu0 %2789
        %2791 = vrot.lane.b32.xlu0 %v1086, 80
        %v2792 = vpop.permute.xlu0 %2791
        %2793 = vrot.lane.b32.xlu0 %v1089, 80
        %v2794 = vpop.permute.xlu0 %2793
        %2795 = vrot.lane.b32.xlu0 %v1091, 80
        %v2796 = vpop.permute.xlu0 %2795
        %2797 = vrot.lane.b32.xlu0 %v1093, 80
        %v2798 = vpop.permute.xlu0 %2797
        %2799 = vrot.lane.b32.xlu0 %v1096, 80
        %v2800 = vpop.permute.xlu0 %2799
        %2801 = vrot.lane.b32.xlu0 %v1098, 80
        %v2802 = vpop.permute.xlu0 %2801
        %2803 = vrot.lane.b32.xlu0 %v1100, 80
        %v2804 = vpop.permute.xlu0 %2803
        %2805 = vrot.lane.b32.xlu0 %v1251, 80
        %v2806 = vpop.permute.xlu0 %2805
        %2807 = vrot.lane.b32.xlu0 %v1253, 80
        %v2808 = vpop.permute.xlu0 %2807
        %2809 = vrot.lane.b32.xlu0 %v1255, 80
        %v2810 = vpop.permute.xlu0 %2809
        %2811 = vrot.lane.b32.xlu0 %v1110, 80
        %v2812 = vpop.permute.xlu0 %2811
        %2813 = vrot.lane.b32.xlu0 %v1112, 80
        %v2814 = vpop.permute.xlu0 %2813
        %2815 = vrot.lane.b32.xlu0 %v1114, 80
        %v2816 = vpop.permute.xlu0 %2815
        %2817 = vrot.lane.b32.xlu0 %v1117, 80
        %v2818 = vpop.permute.xlu0 %2817
        %2819 = vrot.lane.b32.xlu0 %v1119, 80
        %v2820 = vpop.permute.xlu0 %2819
        %2821 = vrot.lane.b32.xlu0 %v1121, 80
        %v2822 = vpop.permute.xlu0 %2821
        %2823 = vrot.lane.b32.xlu0 %v1124, 80
        %v2824 = vpop.permute.xlu0 %2823
        %2825 = vrot.lane.b32.xlu0 %v1126, 80
        %v2826 = vpop.permute.xlu0 %2825
        %2827 = vrot.lane.b32.xlu0 %v1128, 80
        %v2828 = vpop.permute.xlu0 %2827
        %2829 = vrot.lane.b32.xlu0 %v1131, 80
        %v2830 = vpop.permute.xlu0 %2829
        %2831 = vrot.lane.b32.xlu0 %v1133, 80
        %v2832 = vpop.permute.xlu0 %2831
        %2833 = vrot.lane.b32.xlu0 %v1135, 80
        %v2834 = vpop.permute.xlu0 %2833
        %2835 = vrot.lane.b32.xlu0 %v1138, 80
        %v2836 = vpop.permute.xlu0 %2835
        %2837 = vrot.lane.b32.xlu0 %v1140, 80
        %v2838 = vpop.permute.xlu0 %2837
        %2839 = vrot.lane.b32.xlu0 %v1142, 80
        %v2840 = vpop.permute.xlu0 %2839
        %2841 = vrot.lane.b32.xlu0 %v1145, 80
        %v2842 = vpop.permute.xlu0 %2841
        %2843 = vrot.lane.b32.xlu0 %v1147, 80
        %v2844 = vpop.permute.xlu0 %2843
        %2845 = vrot.lane.b32.xlu0 %v1149, 80
        %v2846 = vpop.permute.xlu0 %2845
        %2847 = vrot.lane.b32.xlu0 %v1152, 80
        %v2848 = vpop.permute.xlu0 %2847
        %2849 = vrot.lane.b32.xlu0 %v1154, 80
        %v2850 = vpop.permute.xlu0 %2849
        %2851 = vrot.lane.b32.xlu0 %v1156, 80
        %v2852 = vpop.permute.xlu0 %2851
        %2853 = vrot.lane.b32.xlu0 %v1159, 80
        %v2854 = vpop.permute.xlu0 %2853
        %2855 = vrot.lane.b32.xlu0 %v1161, 80
        %v2856 = vpop.permute.xlu0 %2855
        %2857 = vrot.lane.b32.xlu0 %v1163, 80
        %v2858 = vpop.permute.xlu0 %2857
        %2859 = vrot.lane.b32.xlu0 %v1166, 80
        %v2860 = vpop.permute.xlu0 %2859
        %2861 = vrot.lane.b32.xlu0 %v1168, 80
        %v2862 = vpop.permute.xlu0 %2861
        %2863 = vrot.lane.b32.xlu0 %v1170, 80
        %v2864 = vpop.permute.xlu0 %2863
        %2865 = vrot.lane.b32.xlu0 %v1173, 80
        %v2866 = vpop.permute.xlu0 %2865
        %2867 = vrot.lane.b32.xlu0 %v1175, 80
        %v2868 = vpop.permute.xlu0 %2867
        %2869 = vrot.lane.b32.xlu0 %v1177, 80
        %v2870 = vpop.permute.xlu0 %2869
        %2871 = vrot.lane.b32.xlu0 %v1180, 80
        %v2872 = vpop.permute.xlu0 %2871
        %2873 = vrot.lane.b32.xlu0 %v1182, 80
        %v2874 = vpop.permute.xlu0 %2873
        %2875 = vrot.lane.b32.xlu0 %v1184, 80
        %v2876 = vpop.permute.xlu0 %2875
        %2877 = vrot.lane.b32.xlu0 %v1187, 80
        %v2878 = vpop.permute.xlu0 %2877
        %2879 = vrot.lane.b32.xlu0 %v1189, 80
        %v2880 = vpop.permute.xlu0 %2879
        %2881 = vrot.lane.b32.xlu0 %v1191, 80
        %v2882 = vpop.permute.xlu0 %2881
        %2883 = vrot.lane.b32.xlu0 %v1194, 80
        %v2884 = vpop.permute.xlu0 %2883
        %2885 = vrot.lane.b32.xlu0 %v1196, 80
        %v2886 = vpop.permute.xlu0 %2885
        %2887 = vrot.lane.b32.xlu0 %v1198, 80
        %v2888 = vpop.permute.xlu0 %2887
        %2889 = vrot.lane.b32.xlu0 %v1201, 80
        %v2890 = vpop.permute.xlu0 %2889
        %2891 = vrot.lane.b32.xlu0 %v1203, 80
        %v2892 = vpop.permute.xlu0 %2891
        %2893 = vrot.lane.b32.xlu0 %v1205, 80
        %v2894 = vpop.permute.xlu0 %2893
        %2895 = vrot.lane.b32.xlu0 %v1208, 80
        %v2896 = vpop.permute.xlu0 %2895
        %2897 = vrot.lane.b32.xlu0 %v1210, 80
        %v2898 = vpop.permute.xlu0 %2897
        %2899 = vrot.lane.b32.xlu0 %v1212, 80
        %v2900 = vpop.permute.xlu0 %2899
        %2901 = vrot.lane.b32.xlu0 %v1215, 80
        %v2902 = vpop.permute.xlu0 %2901
        %2903 = vrot.lane.b32.xlu0 %v1217, 80
        %v2904 = vpop.permute.xlu0 %2903
        %2905 = vrot.lane.b32.xlu0 %v1219, 80
        %v2906 = vpop.permute.xlu0 %2905
        %2907 = vrot.lane.b32.xlu0 %v1222, 80
        %v2908 = vpop.permute.xlu0 %2907
        %2909 = vrot.lane.b32.xlu0 %v1224, 80
        %v2910 = vpop.permute.xlu0 %2909
        %2911 = vrot.lane.b32.xlu0 %v1226, 80
        %v2912 = vpop.permute.xlu0 %2911
        %2913 = vrot.lane.b32.xlu0 %v1258, 80
        %v2914 = vpop.permute.xlu0 %2913
        %2915 = vrot.lane.b32.xlu0 %v1260, 80
        %v2916 = vpop.permute.xlu0 %2915
        %2917 = vrot.lane.b32.xlu0 %v1262, 80
        %v2918 = vpop.permute.xlu0 %2917
        %3027 = vrot.lane.b32.xlu0 %v425, 96
        %v3028 = vpop.permute.xlu0 %3027
        %3029 = vrot.lane.b32.xlu0 %v426, 96
        %v3030 = vpop.permute.xlu0 %3029
        %3031 = vrot.lane.b32.xlu0 %v427, 96
        %v3032 = vpop.permute.xlu0 %3031
        %3033 = vrot.lane.b32.xlu0 %v429, 96
        %v3034 = vpop.permute.xlu0 %3033
        %3035 = vrot.lane.b32.xlu0 %v430, 96
        %v3036 = vpop.permute.xlu0 %3035
        %3037 = vrot.lane.b32.xlu0 %v431, 96
        %v3038 = vpop.permute.xlu0 %3037
        %3039 = vrot.lane.b32.xlu0 %v433, 96
        %v3040 = vpop.permute.xlu0 %3039
        %3041 = vrot.lane.b32.xlu0 %v434, 96
        %v3042 = vpop.permute.xlu0 %3041
        %3043 = vrot.lane.b32.xlu0 %v435, 96
        %v3044 = vpop.permute.xlu0 %3043
        %3045 = vrot.lane.b32.xlu0 %v437, 96
        %v3046 = vpop.permute.xlu0 %3045
        %3047 = vrot.lane.b32.xlu0 %v438, 96
        %v3048 = vpop.permute.xlu0 %3047
        %3049 = vrot.lane.b32.xlu0 %v439, 96
        %v3050 = vpop.permute.xlu0 %3049
        %3051 = vrot.lane.b32.xlu0 %v441, 96
        %v3052 = vpop.permute.xlu0 %3051
        %3053 = vrot.lane.b32.xlu0 %v442, 96
        %v3054 = vpop.permute.xlu0 %3053
        %3055 = vrot.lane.b32.xlu0 %v443, 96
        %v3056 = vpop.permute.xlu0 %3055
        %3057 = vrot.lane.b32.xlu0 %v445, 96
        %v3058 = vpop.permute.xlu0 %3057
        %3059 = vrot.lane.b32.xlu0 %v446, 96
        %v3060 = vpop.permute.xlu0 %3059
        %3061 = vrot.lane.b32.xlu0 %v447, 96
        %v3062 = vpop.permute.xlu0 %3061
        %3063 = vrot.lane.b32.xlu0 %v449, 96
        %v3064 = vpop.permute.xlu0 %3063
        %3065 = vrot.lane.b32.xlu0 %v450, 96
        %v3066 = vpop.permute.xlu0 %3065
        %3067 = vrot.lane.b32.xlu0 %v451, 96
        %v3068 = vpop.permute.xlu0 %3067
        %3069 = vrot.lane.b32.xlu0 %v453, 96
        %v3070 = vpop.permute.xlu0 %3069
        %3071 = vrot.lane.b32.xlu0 %v454, 96
        %v3072 = vpop.permute.xlu0 %3071
        %3073 = vrot.lane.b32.xlu0 %v455, 96
        %v3074 = vpop.permute.xlu0 %3073
        %3075 = vrot.lane.b32.xlu0 %v457, 96
        %v3076 = vpop.permute.xlu0 %3075
        %3077 = vrot.lane.b32.xlu0 %v458, 96
        %v3078 = vpop.permute.xlu0 %3077
        %3079 = vrot.lane.b32.xlu0 %v459, 96
        %v3080 = vpop.permute.xlu0 %3079
        %3081 = vrot.lane.b32.xlu0 %v461, 96
        %v3082 = vpop.permute.xlu0 %3081
        %3083 = vrot.lane.b32.xlu0 %v462, 96
        %v3084 = vpop.permute.xlu0 %3083
        %3085 = vrot.lane.b32.xlu0 %v463, 96
        %v3086 = vpop.permute.xlu0 %3085
        %3087 = vrot.lane.b32.xlu0 %v465, 96
        %v3088 = vpop.permute.xlu0 %3087
        %3089 = vrot.lane.b32.xlu0 %v466, 96
        %v3090 = vpop.permute.xlu0 %3089
        %3091 = vrot.lane.b32.xlu0 %v467, 96
        %v3092 = vpop.permute.xlu0 %3091
        %3093 = vrot.lane.b32.xlu0 %v469, 96
        %v3094 = vpop.permute.xlu0 %3093
        %3095 = vrot.lane.b32.xlu0 %v470, 96
        %v3096 = vpop.permute.xlu0 %3095
        %3097 = vrot.lane.b32.xlu0 %v471, 96
        %v3098 = vpop.permute.xlu0 %3097
        %3099 = vrot.lane.b32.xlu0 %v473, 96
        %v3100 = vpop.permute.xlu0 %3099
        %3101 = vrot.lane.b32.xlu0 %v474, 96
        %v3102 = vpop.permute.xlu0 %3101
        %3103 = vrot.lane.b32.xlu0 %v475, 96
        %v3104 = vpop.permute.xlu0 %3103
        %3105 = vrot.lane.b32.xlu0 %v477, 96
        %v3106 = vpop.permute.xlu0 %3105
        %3107 = vrot.lane.b32.xlu0 %v478, 96
        %v3108 = vpop.permute.xlu0 %3107
        %3109 = vrot.lane.b32.xlu0 %v479, 96
        %v3110 = vpop.permute.xlu0 %3109
        %3111 = vrot.lane.b32.xlu0 %v481, 96
        %v3112 = vpop.permute.xlu0 %3111
        %3113 = vrot.lane.b32.xlu0 %v482, 96
        %v3114 = vpop.permute.xlu0 %3113
        %3115 = vrot.lane.b32.xlu0 %v483, 96
        %v3116 = vpop.permute.xlu0 %3115
        %3117 = vrot.lane.b32.xlu0 %v485, 96
        %v3118 = vpop.permute.xlu0 %3117
        %3119 = vrot.lane.b32.xlu0 %v486, 96
        %v3120 = vpop.permute.xlu0 %3119
        %3121 = vrot.lane.b32.xlu0 %v487, 96
        %v3122 = vpop.permute.xlu0 %3121
        %3123 = vrot.lane.b32.xlu0 %v489, 96
        %v3124 = vpop.permute.xlu0 %3123
        %3125 = vrot.lane.b32.xlu0 %v490, 96
        %v3126 = vpop.permute.xlu0 %3125
        %3127 = vrot.lane.b32.xlu0 %v491, 96
        %v3128 = vpop.permute.xlu0 %3127
        %3129 = vrot.lane.b32.xlu0 %v493, 96
        %v3130 = vpop.permute.xlu0 %3129
        %3131 = vrot.lane.b32.xlu0 %v494, 96
        %v3132 = vpop.permute.xlu0 %3131
        %3133 = vrot.lane.b32.xlu0 %v495, 96
        %v3134 = vpop.permute.xlu0 %3133
        %3135 = vrot.lane.b32.xlu0 %v505, 96
        %v3136 = vpop.permute.xlu0 %3135
        %3137 = vrot.lane.b32.xlu0 %v506, 96
        %v3138 = vpop.permute.xlu0 %3137
        %3139 = vrot.lane.b32.xlu0 %v507, 96
        %v3140 = vpop.permute.xlu0 %3139
        %3141 = vrot.lane.b32.xlu0 %v509, 96
        %v3142 = vpop.permute.xlu0 %3141
        %3143 = vrot.lane.b32.xlu0 %v510, 96
        %v3144 = vpop.permute.xlu0 %3143
        %3145 = vrot.lane.b32.xlu0 %v511, 96
        %v3146 = vpop.permute.xlu0 %3145
        %3147 = vrot.lane.b32.xlu0 %v513, 96
        %v3148 = vpop.permute.xlu0 %3147
        %3149 = vrot.lane.b32.xlu0 %v514, 96
        %v3150 = vpop.permute.xlu0 %3149
        %3151 = vrot.lane.b32.xlu0 %v515, 96
        %v3152 = vpop.permute.xlu0 %3151
        %3153 = vrot.lane.b32.xlu0 %v517, 96
        %v3154 = vpop.permute.xlu0 %3153
        %3155 = vrot.lane.b32.xlu0 %v518, 96
        %v3156 = vpop.permute.xlu0 %3155
        %3157 = vrot.lane.b32.xlu0 %v519, 96
        %v3158 = vpop.permute.xlu0 %3157
        %3159 = vrot.lane.b32.xlu0 %v521, 96
        %v3160 = vpop.permute.xlu0 %3159
        %3161 = vrot.lane.b32.xlu0 %v522, 96
        %v3162 = vpop.permute.xlu0 %3161
        %3163 = vrot.lane.b32.xlu0 %v523, 96
        %v3164 = vpop.permute.xlu0 %3163
        %3165 = vrot.lane.b32.xlu0 %v525, 96
        %v3166 = vpop.permute.xlu0 %3165
        %3167 = vrot.lane.b32.xlu0 %v526, 96
        %v3168 = vpop.permute.xlu0 %3167
        %3169 = vrot.lane.b32.xlu0 %v527, 96
        %v3170 = vpop.permute.xlu0 %3169
        %3171 = vrot.lane.b32.xlu0 %v529, 96
        %v3172 = vpop.permute.xlu0 %3171
        %3173 = vrot.lane.b32.xlu0 %v530, 96
        %v3174 = vpop.permute.xlu0 %3173
        %3175 = vrot.lane.b32.xlu0 %v531, 96
        %v3176 = vpop.permute.xlu0 %3175
        %3177 = vrot.lane.b32.xlu0 %v533, 96
        %v3178 = vpop.permute.xlu0 %3177
        %3179 = vrot.lane.b32.xlu0 %v534, 96
        %v3180 = vpop.permute.xlu0 %3179
        %3181 = vrot.lane.b32.xlu0 %v535, 96
        %v3182 = vpop.permute.xlu0 %3181
        %3183 = vrot.lane.b32.xlu0 %v537, 96
        %v3184 = vpop.permute.xlu0 %3183
        %3185 = vrot.lane.b32.xlu0 %v538, 96
        %v3186 = vpop.permute.xlu0 %3185
        %3187 = vrot.lane.b32.xlu0 %v539, 96
        %v3188 = vpop.permute.xlu0 %3187
        %3189 = vrot.lane.b32.xlu0 %v541, 96
        %v3190 = vpop.permute.xlu0 %3189
        %3191 = vrot.lane.b32.xlu0 %v542, 96
        %v3192 = vpop.permute.xlu0 %3191
        %3193 = vrot.lane.b32.xlu0 %v543, 96
        %v3194 = vpop.permute.xlu0 %3193
        %3195 = vrot.lane.b32.xlu0 %v545, 96
        %v3196 = vpop.permute.xlu0 %3195
        %3197 = vrot.lane.b32.xlu0 %v546, 96
        %v3198 = vpop.permute.xlu0 %3197
        %3199 = vrot.lane.b32.xlu0 %v547, 96
        %v3200 = vpop.permute.xlu0 %3199
        %3201 = vrot.lane.b32.xlu0 %v549, 96
        %v3202 = vpop.permute.xlu0 %3201
        %3203 = vrot.lane.b32.xlu0 %v550, 96
        %v3204 = vpop.permute.xlu0 %3203
        %3205 = vrot.lane.b32.xlu0 %v551, 96
        %v3206 = vpop.permute.xlu0 %3205
        %3207 = vrot.lane.b32.xlu0 %v553, 96
        %v3208 = vpop.permute.xlu0 %3207
        %3209 = vrot.lane.b32.xlu0 %v554, 96
        %v3210 = vpop.permute.xlu0 %3209
        %3211 = vrot.lane.b32.xlu0 %v555, 96
        %v3212 = vpop.permute.xlu0 %3211
        %3213 = vrot.lane.b32.xlu0 %v557, 96
        %v3214 = vpop.permute.xlu0 %3213
        %3215 = vrot.lane.b32.xlu0 %v558, 96
        %v3216 = vpop.permute.xlu0 %3215
        %3217 = vrot.lane.b32.xlu0 %v559, 96
        %v3218 = vpop.permute.xlu0 %3217
        %3219 = vrot.lane.b32.xlu0 %v561, 96
        %v3220 = vpop.permute.xlu0 %3219
        %3221 = vrot.lane.b32.xlu0 %v562, 96
        %v3222 = vpop.permute.xlu0 %3221
        %3223 = vrot.lane.b32.xlu0 %v563, 96
        %v3224 = vpop.permute.xlu0 %3223
        %3225 = vrot.lane.b32.xlu0 %v565, 96
        %v3226 = vpop.permute.xlu0 %3225
        %3227 = vrot.lane.b32.xlu0 %v566, 96
        %v3228 = vpop.permute.xlu0 %3227
        %3229 = vrot.lane.b32.xlu0 %v567, 96
        %v3230 = vpop.permute.xlu0 %3229
        %3231 = vrot.lane.b32.xlu0 %v569, 96
        %v3232 = vpop.permute.xlu0 %3231
        %3233 = vrot.lane.b32.xlu0 %v570, 96
        %v3234 = vpop.permute.xlu0 %3233
        %3235 = vrot.lane.b32.xlu0 %v571, 96
        %v3236 = vpop.permute.xlu0 %3235
        %3237 = vrot.lane.b32.xlu0 %v573, 96
        %v3238 = vpop.permute.xlu0 %3237
        %3239 = vrot.lane.b32.xlu0 %v574, 96
        %v3240 = vpop.permute.xlu0 %3239
        %3241 = vrot.lane.b32.xlu0 %v575, 96
        %v3242 = vpop.permute.xlu0 %3241
        %3351 = vrot.lane.b32.xlu0 %v738, 112
        %v3352 = vpop.permute.xlu0 %3351
        %3353 = vrot.lane.b32.xlu0 %v740, 112
        %v3354 = vpop.permute.xlu0 %3353
        %3355 = vrot.lane.b32.xlu0 %v742, 112
        %v3356 = vpop.permute.xlu0 %3355
        %3357 = vrot.lane.b32.xlu0 %v745, 112
        %v3358 = vpop.permute.xlu0 %3357
        %3359 = vrot.lane.b32.xlu0 %v747, 112
        %v3360 = vpop.permute.xlu0 %3359
        %3361 = vrot.lane.b32.xlu0 %v749, 112
        %v3362 = vpop.permute.xlu0 %3361
        %3363 = vrot.lane.b32.xlu0 %v752, 112
        %v3364 = vpop.permute.xlu0 %3363
        %3365 = vrot.lane.b32.xlu0 %v754, 112
        %v3366 = vpop.permute.xlu0 %3365
        %3367 = vrot.lane.b32.xlu0 %v756, 112
        %v3368 = vpop.permute.xlu0 %3367
        %3369 = vrot.lane.b32.xlu0 %v759, 112
        %v3370 = vpop.permute.xlu0 %3369
        %3371 = vrot.lane.b32.xlu0 %v761, 112
        %v3372 = vpop.permute.xlu0 %3371
        %3373 = vrot.lane.b32.xlu0 %v763, 112
        %v3374 = vpop.permute.xlu0 %3373
        %3375 = vrot.lane.b32.xlu0 %v766, 112
        %v3376 = vpop.permute.xlu0 %3375
        %3377 = vrot.lane.b32.xlu0 %v768, 112
        %v3378 = vpop.permute.xlu0 %3377
        %3379 = vrot.lane.b32.xlu0 %v770, 112
        %v3380 = vpop.permute.xlu0 %3379
        %3381 = vrot.lane.b32.xlu0 %v773, 112
        %v3382 = vpop.permute.xlu0 %3381
        %3383 = vrot.lane.b32.xlu0 %v775, 112
        %v3384 = vpop.permute.xlu0 %3383
        %3385 = vrot.lane.b32.xlu0 %v777, 112
        %v3386 = vpop.permute.xlu0 %3385
        %3387 = vrot.lane.b32.xlu0 %v780, 112
        %v3388 = vpop.permute.xlu0 %3387
        %3389 = vrot.lane.b32.xlu0 %v782, 112
        %v3390 = vpop.permute.xlu0 %3389
        %3391 = vrot.lane.b32.xlu0 %v784, 112
        %v3392 = vpop.permute.xlu0 %3391
        %3393 = vrot.lane.b32.xlu0 %v787, 112
        %v3394 = vpop.permute.xlu0 %3393
        %3395 = vrot.lane.b32.xlu0 %v789, 112
        %v3396 = vpop.permute.xlu0 %3395
        %3397 = vrot.lane.b32.xlu0 %v791, 112
        %v3398 = vpop.permute.xlu0 %3397
        %3399 = vrot.lane.b32.xlu0 %v794, 112
        %v3400 = vpop.permute.xlu0 %3399
        %3401 = vrot.lane.b32.xlu0 %v796, 112
        %v3402 = vpop.permute.xlu0 %3401
        %3403 = vrot.lane.b32.xlu0 %v798, 112
        %v3404 = vpop.permute.xlu0 %3403
        %3405 = vrot.lane.b32.xlu0 %v801, 112
        %v3406 = vpop.permute.xlu0 %3405
        %3407 = vrot.lane.b32.xlu0 %v803, 112
        %v3408 = vpop.permute.xlu0 %3407
        %3409 = vrot.lane.b32.xlu0 %v805, 112
        %v3410 = vpop.permute.xlu0 %3409
        %3411 = vrot.lane.b32.xlu0 %v808, 112
        %v3412 = vpop.permute.xlu0 %3411
        %3413 = vrot.lane.b32.xlu0 %v810, 112
        %v3414 = vpop.permute.xlu0 %3413
        %3415 = vrot.lane.b32.xlu0 %v812, 112
        %v3416 = vpop.permute.xlu0 %3415
        %3417 = vrot.lane.b32.xlu0 %v815, 112
        %v3418 = vpop.permute.xlu0 %3417
        %3419 = vrot.lane.b32.xlu0 %v817, 112
        %v3420 = vpop.permute.xlu0 %3419
        %3421 = vrot.lane.b32.xlu0 %v819, 112
        %v3422 = vpop.permute.xlu0 %3421
        %3423 = vrot.lane.b32.xlu0 %v822, 112
        %v3424 = vpop.permute.xlu0 %3423
        %3425 = vrot.lane.b32.xlu0 %v824, 112
        %v3426 = vpop.permute.xlu0 %3425
        %3427 = vrot.lane.b32.xlu0 %v826, 112
        %v3428 = vpop.permute.xlu0 %3427
        %3429 = vrot.lane.b32.xlu0 %v829, 112
        %v3430 = vpop.permute.xlu0 %3429
        %3431 = vrot.lane.b32.xlu0 %v831, 112
        %v3432 = vpop.permute.xlu0 %3431
        %3433 = vrot.lane.b32.xlu0 %v833, 112
        %v3434 = vpop.permute.xlu0 %3433
        %3435 = vrot.lane.b32.xlu0 %v836, 112
        %v3436 = vpop.permute.xlu0 %3435
        %3437 = vrot.lane.b32.xlu0 %v838, 112
        %v3438 = vpop.permute.xlu0 %3437
        %3439 = vrot.lane.b32.xlu0 %v840, 112
        %v3440 = vpop.permute.xlu0 %3439
        %3441 = vrot.lane.b32.xlu0 %v843, 112
        %v3442 = vpop.permute.xlu0 %3441
        %3443 = vrot.lane.b32.xlu0 %v845, 112
        %v3444 = vpop.permute.xlu0 %3443
        %3445 = vrot.lane.b32.xlu0 %v847, 112
        %v3446 = vpop.permute.xlu0 %3445
        %3447 = vrot.lane.b32.xlu0 %v1237, 112
        %v3448 = vpop.permute.xlu0 %3447
        %3449 = vrot.lane.b32.xlu0 %v1239, 112
        %v3450 = vpop.permute.xlu0 %3449
        %3451 = vrot.lane.b32.xlu0 %v1241, 112
        %v3452 = vpop.permute.xlu0 %3451
        %3453 = vrot.lane.b32.xlu0 %v1273, 112
        %v3454 = vpop.permute.xlu0 %3453
        %3455 = vrot.lane.b32.xlu0 %v1275, 112
        %v3456 = vpop.permute.xlu0 %3455
        %3457 = vrot.lane.b32.xlu0 %v1277, 112
        %v3458 = vpop.permute.xlu0 %3457
        %3459 = vrot.lane.b32.xlu0 %v864, 112
        %v3460 = vpop.permute.xlu0 %3459
        %3461 = vrot.lane.b32.xlu0 %v866, 112
        %v3462 = vpop.permute.xlu0 %3461
        %3463 = vrot.lane.b32.xlu0 %v868, 112
        %v3464 = vpop.permute.xlu0 %3463
        %3465 = vrot.lane.b32.xlu0 %v871, 112
        %v3466 = vpop.permute.xlu0 %3465
        %3467 = vrot.lane.b32.xlu0 %v873, 112
        %v3468 = vpop.permute.xlu0 %3467
        %3469 = vrot.lane.b32.xlu0 %v875, 112
        %v3470 = vpop.permute.xlu0 %3469
        %3471 = vrot.lane.b32.xlu0 %v878, 112
        %v3472 = vpop.permute.xlu0 %3471
        %3473 = vrot.lane.b32.xlu0 %v880, 112
        %v3474 = vpop.permute.xlu0 %3473
        %3475 = vrot.lane.b32.xlu0 %v882, 112
        %v3476 = vpop.permute.xlu0 %3475
        %3477 = vrot.lane.b32.xlu0 %v885, 112
        %v3478 = vpop.permute.xlu0 %3477
        %3479 = vrot.lane.b32.xlu0 %v887, 112
        %v3480 = vpop.permute.xlu0 %3479
        %3481 = vrot.lane.b32.xlu0 %v889, 112
        %v3482 = vpop.permute.xlu0 %3481
        %3483 = vrot.lane.b32.xlu0 %v892, 112
        %v3484 = vpop.permute.xlu0 %3483
        %3485 = vrot.lane.b32.xlu0 %v894, 112
        %v3486 = vpop.permute.xlu0 %3485
        %3487 = vrot.lane.b32.xlu0 %v896, 112
        %v3488 = vpop.permute.xlu0 %3487
        %3489 = vrot.lane.b32.xlu0 %v899, 112
        %v3490 = vpop.permute.xlu0 %3489
        %3491 = vrot.lane.b32.xlu0 %v901, 112
        %v3492 = vpop.permute.xlu0 %3491
        %3493 = vrot.lane.b32.xlu0 %v903, 112
        %v3494 = vpop.permute.xlu0 %3493
        %3495 = vrot.lane.b32.xlu0 %v906, 112
        %v3496 = vpop.permute.xlu0 %3495
        %3497 = vrot.lane.b32.xlu0 %v908, 112
        %v3498 = vpop.permute.xlu0 %3497
        %3499 = vrot.lane.b32.xlu0 %v910, 112
        %v3500 = vpop.permute.xlu0 %3499
        %3501 = vrot.lane.b32.xlu0 %v913, 112
        %v3502 = vpop.permute.xlu0 %3501
        %3503 = vrot.lane.b32.xlu0 %v915, 112
        %v3504 = vpop.permute.xlu0 %3503
        %3505 = vrot.lane.b32.xlu0 %v917, 112
        %v3506 = vpop.permute.xlu0 %3505
        %3507 = vrot.lane.b32.xlu0 %v920, 112
        %v3508 = vpop.permute.xlu0 %3507
        %3509 = vrot.lane.b32.xlu0 %v922, 112
        %v3510 = vpop.permute.xlu0 %3509
        %3511 = vrot.lane.b32.xlu0 %v924, 112
        %v3512 = vpop.permute.xlu0 %3511
        %3513 = vrot.lane.b32.xlu0 %v927, 112
        %v3514 = vpop.permute.xlu0 %3513
        %3515 = vrot.lane.b32.xlu0 %v929, 112
        %v3516 = vpop.permute.xlu0 %3515
        %3517 = vrot.lane.b32.xlu0 %v931, 112
        %v3518 = vpop.permute.xlu0 %3517
        %3519 = vrot.lane.b32.xlu0 %v934, 112
        %v3520 = vpop.permute.xlu0 %3519
        %3521 = vrot.lane.b32.xlu0 %v936, 112
        %v3522 = vpop.permute.xlu0 %3521
        %3523 = vrot.lane.b32.xlu0 %v938, 112
        %v3524 = vpop.permute.xlu0 %3523
        %3525 = vrot.lane.b32.xlu0 %v941, 112
        %v3526 = vpop.permute.xlu0 %3525
        %3527 = vrot.lane.b32.xlu0 %v943, 112
        %v3528 = vpop.permute.xlu0 %3527
        %3529 = vrot.lane.b32.xlu0 %v945, 112
        %v3530 = vpop.permute.xlu0 %3529
        %3531 = vrot.lane.b32.xlu0 %v948, 112
        %v3532 = vpop.permute.xlu0 %3531
        %3533 = vrot.lane.b32.xlu0 %v950, 112
        %v3534 = vpop.permute.xlu0 %3533
        %3535 = vrot.lane.b32.xlu0 %v952, 112
        %v3536 = vpop.permute.xlu0 %3535
        %3537 = vrot.lane.b32.xlu0 %v955, 112
        %v3538 = vpop.permute.xlu0 %3537
        %3539 = vrot.lane.b32.xlu0 %v957, 112
        %v3540 = vpop.permute.xlu0 %3539
        %3541 = vrot.lane.b32.xlu0 %v959, 112
        %v3542 = vpop.permute.xlu0 %3541
        %3543 = vrot.lane.b32.xlu0 %v962, 112
        %v3544 = vpop.permute.xlu0 %3543
        %3545 = vrot.lane.b32.xlu0 %v964, 112
        %v3546 = vpop.permute.xlu0 %3545
        %3547 = vrot.lane.b32.xlu0 %v966, 112
        %v3548 = vpop.permute.xlu0 %3547
        %3549 = vrot.lane.b32.xlu0 %v969, 112
        %v3550 = vpop.permute.xlu0 %3549
        %3551 = vrot.lane.b32.xlu0 %v971, 112
        %v3552 = vpop.permute.xlu0 %3551
        %3553 = vrot.lane.b32.xlu0 %v973, 112
        %v3554 = vpop.permute.xlu0 %3553
        %3555 = vrot.lane.b32.xlu0 %v1244, 112
        %v3556 = vpop.permute.xlu0 %3555
        %3557 = vrot.lane.b32.xlu0 %v1246, 112
        %v3558 = vpop.permute.xlu0 %3557
        %3559 = vrot.lane.b32.xlu0 %v1248, 112
        %v3560 = vpop.permute.xlu0 %3559
        %3561 = vrot.lane.b32.xlu0 %v1280, 112
        %v3562 = vpop.permute.xlu0 %3561
        %3563 = vrot.lane.b32.xlu0 %v1282, 112
        %v3564 = vpop.permute.xlu0 %3563
        %3565 = vrot.lane.b32.xlu0 %v1284, 112
        %v3566 = vpop.permute.xlu0 %3565
        %vm3675 = vcmask 130048
        %v3676 = vsel %vm3675, %v417, %v1408
        %v3677 = vsel %vm3675, %v418, %v1410
        %v3678 = vsel %vm3675, %v419, %v1412
        %v3679 = vsel %vm3675, %v421, %v1414
        %v3680 = vsel %vm3675, %v422, %v1416
        %v3681 = vsel %vm3675, %v423, %v1418
        %v3682 = vsel %vm3675, %v425, %v1420
        %v3683 = vsel %vm3675, %v426, %v1422
        %v3684 = vsel %vm3675, %v427, %v1424
        %v3685 = vsel %vm3675, %v429, %v1426
        %v3686 = vsel %vm3675, %v430, %v1428
        %v3687 = vsel %vm3675, %v431, %v1430
        %v3688 = vsel %vm3675, %v433, %v1432
        %v3689 = vsel %vm3675, %v434, %v1434
        %v3690 = vsel %vm3675, %v435, %v1436
        %v3691 = vsel %vm3675, %v437, %v1438
        %v3692 = vsel %vm3675, %v438, %v1440
        %v3693 = vsel %vm3675, %v439, %v1442
        %v3694 = vsel %vm3675, %v441, %v1444
        %v3695 = vsel %vm3675, %v442, %v1446
        %v3696 = vsel %vm3675, %v443, %v1448
        %v3697 = vsel %vm3675, %v445, %v1450
        %v3698 = vsel %vm3675, %v446, %v1452
        %v3699 = vsel %vm3675, %v447, %v1454
        %v3700 = vsel %vm3675, %v449, %v1456
        %v3701 = vsel %vm3675, %v450, %v1458
        %v3702 = vsel %vm3675, %v451, %v1460
        %v3703 = vsel %vm3675, %v453, %v1462
        %v3704 = vsel %vm3675, %v454, %v1464
        %v3705 = vsel %vm3675, %v455, %v1466
        %v3706 = vsel %vm3675, %v457, %v1468
        %v3707 = vsel %vm3675, %v458, %v1470
        %v3708 = vsel %vm3675, %v459, %v1472
        %v3709 = vsel %vm3675, %v461, %v1474
        %v3710 = vsel %vm3675, %v462, %v1476
        %v3711 = vsel %vm3675, %v463, %v1478
        %v3712 = vsel %vm3675, %v465, %v1480
        %v3713 = vsel %vm3675, %v466, %v1482
        %v3714 = vsel %vm3675, %v467, %v1484
        %v3715 = vsel %vm3675, %v469, %v1486
        %v3716 = vsel %vm3675, %v470, %v1488
        %v3717 = vsel %vm3675, %v471, %v1490
        %v3718 = vsel %vm3675, %v473, %v1492
        %v3719 = vsel %vm3675, %v474, %v1494
        %v3720 = vsel %vm3675, %v475, %v1496
        %v3721 = vsel %vm3675, %v477, %v1498
        %v3722 = vsel %vm3675, %v478, %v1500
        %v3723 = vsel %vm3675, %v479, %v1502
        %v3724 = vsel %vm3675, %v481, %v1504
        %v3725 = vsel %vm3675, %v482, %v1506
        %v3726 = vsel %vm3675, %v483, %v1508
        %v3727 = vsel %vm3675, %v485, %v1510
        %v3728 = vsel %vm3675, %v486, %v1512
        %v3729 = vsel %vm3675, %v487, %v1514
        %v3730 = vsel %vm3675, %v497, %v1516
        %v3731 = vsel %vm3675, %v498, %v1518
        %v3732 = vsel %vm3675, %v499, %v1520
        %v3733 = vsel %vm3675, %v501, %v1522
        %v3734 = vsel %vm3675, %v502, %v1524
        %v3735 = vsel %vm3675, %v503, %v1526
        %v3736 = vsel %vm3675, %v505, %v1528
        %v3737 = vsel %vm3675, %v506, %v1530
        %v3738 = vsel %vm3675, %v507, %v1532
        %v3739 = vsel %vm3675, %v509, %v1534
        %v3740 = vsel %vm3675, %v510, %v1536
        %v3741 = vsel %vm3675, %v511, %v1538
        %v3742 = vsel %vm3675, %v513, %v1540
        %v3743 = vsel %vm3675, %v514, %v1542
        %v3744 = vsel %vm3675, %v515, %v1544
        %v3745 = vsel %vm3675, %v517, %v1546
        %v3746 = vsel %vm3675, %v518, %v1548
        %v3747 = vsel %vm3675, %v519, %v1550
        %v3748 = vsel %vm3675, %v521, %v1552
        %v3749 = vsel %vm3675, %v522, %v1554
        %v3750 = vsel %vm3675, %v523, %v1556
        %v3751 = vsel %vm3675, %v525, %v1558
        %v3752 = vsel %vm3675, %v526, %v1560
        %v3753 = vsel %vm3675, %v527, %v1562
        %v3754 = vsel %vm3675, %v529, %v1564
        %v3755 = vsel %vm3675, %v530, %v1566
        %v3756 = vsel %vm3675, %v531, %v1568
        %v3757 = vsel %vm3675, %v533, %v1570
        %v3758 = vsel %vm3675, %v534, %v1572
        %v3759 = vsel %vm3675, %v535, %v1574
        %v3760 = vsel %vm3675, %v537, %v1576
        %v3761 = vsel %vm3675, %v538, %v1578
        %v3762 = vsel %vm3675, %v539, %v1580
        %v3763 = vsel %vm3675, %v541, %v1582
        %v3764 = vsel %vm3675, %v542, %v1584
        %v3765 = vsel %vm3675, %v543, %v1586
        %v3766 = vsel %vm3675, %v545, %v1588
        %v3767 = vsel %vm3675, %v546, %v1590
        %v3768 = vsel %vm3675, %v547, %v1592
        %v3769 = vsel %vm3675, %v549, %v1594
        %v3770 = vsel %vm3675, %v550, %v1596
        %v3771 = vsel %vm3675, %v551, %v1598
        %v3772 = vsel %vm3675, %v553, %v1600
        %v3773 = vsel %vm3675, %v554, %v1602
        %v3774 = vsel %vm3675, %v555, %v1604
        %v3775 = vsel %vm3675, %v557, %v1606
        %v3776 = vsel %vm3675, %v558, %v1608
        %v3777 = vsel %vm3675, %v559, %v1610
        %v3778 = vsel %vm3675, %v561, %v1612
        %v3779 = vsel %vm3675, %v562, %v1614
        %v3780 = vsel %vm3675, %v563, %v1616
        %v3781 = vsel %vm3675, %v565, %v1618
        %v3782 = vsel %vm3675, %v566, %v1620
        %v3783 = vsel %vm3675, %v567, %v1622
        %vm3784 = vcmask 261120
        %v3785 = vsel %vm3784, %v3676, %v1732
        %v3786 = vsel %vm3784, %v3677, %v1734
        %v3787 = vsel %vm3784, %v3678, %v1736
        %v3788 = vsel %vm3784, %v3679, %v1738
        %v3789 = vsel %vm3784, %v3680, %v1740
        %v3790 = vsel %vm3784, %v3681, %v1742
        %v3791 = vsel %vm3784, %v3682, %v1744
        %v3792 = vsel %vm3784, %v3683, %v1746
        %v3793 = vsel %vm3784, %v3684, %v1748
        %v3794 = vsel %vm3784, %v3685, %v1750
        %v3795 = vsel %vm3784, %v3686, %v1752
        %v3796 = vsel %vm3784, %v3687, %v1754
        %v3797 = vsel %vm3784, %v3688, %v1756
        %v3798 = vsel %vm3784, %v3689, %v1758
        %v3799 = vsel %vm3784, %v3690, %v1760
        %v3800 = vsel %vm3784, %v3691, %v1762
        %v3801 = vsel %vm3784, %v3692, %v1764
        %v3802 = vsel %vm3784, %v3693, %v1766
        %v3803 = vsel %vm3784, %v3694, %v1768
        %v3804 = vsel %vm3784, %v3695, %v1770
        %v3805 = vsel %vm3784, %v3696, %v1772
        %v3806 = vsel %vm3784, %v3697, %v1774
        %v3807 = vsel %vm3784, %v3698, %v1776
        %v3808 = vsel %vm3784, %v3699, %v1778
        %v3809 = vsel %vm3784, %v3700, %v1780
        %v3810 = vsel %vm3784, %v3701, %v1782
        %v3811 = vsel %vm3784, %v3702, %v1784
        %v3812 = vsel %vm3784, %v3703, %v1786
        %v3813 = vsel %vm3784, %v3704, %v1788
        %v3814 = vsel %vm3784, %v3705, %v1790
        %v3815 = vsel %vm3784, %v3706, %v1792
        %v3816 = vsel %vm3784, %v3707, %v1794
        %v3817 = vsel %vm3784, %v3708, %v1796
        %v3818 = vsel %vm3784, %v3709, %v1798
        %v3819 = vsel %vm3784, %v3710, %v1800
        %v3820 = vsel %vm3784, %v3711, %v1802
        %v3821 = vsel %vm3784, %v3712, %v1804
        %v3822 = vsel %vm3784, %v3713, %v1806
        %v3823 = vsel %vm3784, %v3714, %v1808
        %v3824 = vsel %vm3784, %v3715, %v1810
        %v3825 = vsel %vm3784, %v3716, %v1812
        %v3826 = vsel %vm3784, %v3717, %v1814
        %v3827 = vsel %vm3784, %v3718, %v1816
        %v3828 = vsel %vm3784, %v3719, %v1818
        %v3829 = vsel %vm3784, %v3720, %v1820
        %v3830 = vsel %vm3784, %v3721, %v1822
        %v3831 = vsel %vm3784, %v3722, %v1824
        %v3832 = vsel %vm3784, %v3723, %v1826
        %v3833 = vsel %vm3784, %v3724, %v1828
        %v3834 = vsel %vm3784, %v3725, %v1830
        %v3835 = vsel %vm3784, %v3726, %v1832
        %v3836 = vsel %vm3784, %v3727, %v1834
        %v3837 = vsel %vm3784, %v3728, %v1836
        %v3838 = vsel %vm3784, %v3729, %v1838
        %v3839 = vsel %vm3784, %v3730, %v1840
        %v3840 = vsel %vm3784, %v3731, %v1842
        %v3841 = vsel %vm3784, %v3732, %v1844
        %v3842 = vsel %vm3784, %v3733, %v1846
        %v3843 = vsel %vm3784, %v3734, %v1848
        %v3844 = vsel %vm3784, %v3735, %v1850
        %v3845 = vsel %vm3784, %v3736, %v1852
        %v3846 = vsel %vm3784, %v3737, %v1854
        %v3847 = vsel %vm3784, %v3738, %v1856
        %v3848 = vsel %vm3784, %v3739, %v1858
        %v3849 = vsel %vm3784, %v3740, %v1860
        %v3850 = vsel %vm3784, %v3741, %v1862
        %v3851 = vsel %vm3784, %v3742, %v1864
        %v3852 = vsel %vm3784, %v3743, %v1866
        %v3853 = vsel %vm3784, %v3744, %v1868
        %v3854 = vsel %vm3784, %v3745, %v1870
        %v3855 = vsel %vm3784, %v3746, %v1872
        %v3856 = vsel %vm3784, %v3747, %v1874
        %v3857 = vsel %vm3784, %v3748, %v1876
        %v3858 = vsel %vm3784, %v3749, %v1878
        %v3859 = vsel %vm3784, %v3750, %v1880
        %v3860 = vsel %vm3784, %v3751, %v1882
        %v3861 = vsel %vm3784, %v3752, %v1884
        %v3862 = vsel %vm3784, %v3753, %v1886
        %v3863 = vsel %vm3784, %v3754, %v1888
        %v3864 = vsel %vm3784, %v3755, %v1890
        %v3865 = vsel %vm3784, %v3756, %v1892
        %v3866 = vsel %vm3784, %v3757, %v1894
        %v3867 = vsel %vm3784, %v3758, %v1896
        %v3868 = vsel %vm3784, %v3759, %v1898
        %v3869 = vsel %vm3784, %v3760, %v1900
        %v3870 = vsel %vm3784, %v3761, %v1902
        %v3871 = vsel %vm3784, %v3762, %v1904
        %v3872 = vsel %vm3784, %v3763, %v1906
        %v3873 = vsel %vm3784, %v3764, %v1908
        %v3874 = vsel %vm3784, %v3765, %v1910
        %v3875 = vsel %vm3784, %v3766, %v1912
        %v3876 = vsel %vm3784, %v3767, %v1914
        %v3877 = vsel %vm3784, %v3768, %v1916
        %v3878 = vsel %vm3784, %v3769, %v1918
        %v3879 = vsel %vm3784, %v3770, %v1920
        %v3880 = vsel %vm3784, %v3771, %v1922
        %v3881 = vsel %vm3784, %v3772, %v1924
        %v3882 = vsel %vm3784, %v3773, %v1926
        %v3883 = vsel %vm3784, %v3774, %v1928
        %v3884 = vsel %vm3784, %v3775, %v1930
        %v3885 = vsel %vm3784, %v3776, %v1932
        %v3886 = vsel %vm3784, %v3777, %v1934
        %v3887 = vsel %vm3784, %v3778, %v1936
        %v3888 = vsel %vm3784, %v3779, %v1938
        %v3889 = vsel %vm3784, %v3780, %v1940
        %v3890 = vsel %vm3784, %v3781, %v1942
        %v3891 = vsel %vm3784, %v3782, %v1944
        %v3892 = vsel %vm3784, %v3783, %v1946
        %vm3893 = vcmask 392192
        %v3894 = vsel %vm3893, %v3785, %v2056
        %v3895 = vsel %vm3893, %v3786, %v2058
        %v3896 = vsel %vm3893, %v3787, %v2060
        %v3897 = vsel %vm3893, %v3788, %v2062
        %v3898 = vsel %vm3893, %v3789, %v2064
        %v3899 = vsel %vm3893, %v3790, %v2066
        %v3900 = vsel %vm3893, %v3791, %v2068
        %v3901 = vsel %vm3893, %v3792, %v2070
        %v3902 = vsel %vm3893, %v3793, %v2072
        %v3903 = vsel %vm3893, %v3794, %v2074
        %v3904 = vsel %vm3893, %v3795, %v2076
        %v3905 = vsel %vm3893, %v3796, %v2078
        %v3906 = vsel %vm3893, %v3797, %v2080
        %v3907 = vsel %vm3893, %v3798, %v2082
        %v3908 = vsel %vm3893, %v3799, %v2084
        %v3909 = vsel %vm3893, %v3800, %v2086
        %v3910 = vsel %vm3893, %v3801, %v2088
        %v3911 = vsel %vm3893, %v3802, %v2090
        %v3912 = vsel %vm3893, %v3803, %v2092
        %v3913 = vsel %vm3893, %v3804, %v2094
        %v3914 = vsel %vm3893, %v3805, %v2096
        %v3915 = vsel %vm3893, %v3806, %v2098
        %v3916 = vsel %vm3893, %v3807, %v2100
        %v3917 = vsel %vm3893, %v3808, %v2102
        %v3918 = vsel %vm3893, %v3809, %v2104
        %v3919 = vsel %vm3893, %v3810, %v2106
        %v3920 = vsel %vm3893, %v3811, %v2108
        %v3921 = vsel %vm3893, %v3812, %v2110
        %v3922 = vsel %vm3893, %v3813, %v2112
        %v3923 = vsel %vm3893, %v3814, %v2114
        %v3924 = vsel %vm3893, %v3815, %v2116
        %v3925 = vsel %vm3893, %v3816, %v2118
        %v3926 = vsel %vm3893, %v3817, %v2120
        %v3927 = vsel %vm3893, %v3818, %v2122
        %v3928 = vsel %vm3893, %v3819, %v2124
        %v3929 = vsel %vm3893, %v3820, %v2126
        %v3930 = vsel %vm3893, %v3821, %v2128
        %v3931 = vsel %vm3893, %v3822, %v2130
        %v3932 = vsel %vm3893, %v3823, %v2132
        %v3933 = vsel %vm3893, %v3824, %v2134
        %v3934 = vsel %vm3893, %v3825, %v2136
        %v3935 = vsel %vm3893, %v3826, %v2138
        %v3936 = vsel %vm3893, %v3827, %v2140
        %v3937 = vsel %vm3893, %v3828, %v2142
        %v3938 = vsel %vm3893, %v3829, %v2144
        %v3939 = vsel %vm3893, %v3830, %v2146
        %v3940 = vsel %vm3893, %v3831, %v2148
        %v3941 = vsel %vm3893, %v3832, %v2150
        %v3942 = vsel %vm3893, %v3833, %v2152
        %v3943 = vsel %vm3893, %v3834, %v2154
        %v3944 = vsel %vm3893, %v3835, %v2156
        %v3945 = vsel %vm3893, %v3836, %v2158
        %v3946 = vsel %vm3893, %v3837, %v2160
        %v3947 = vsel %vm3893, %v3838, %v2162
        %v3948 = vsel %vm3893, %v3839, %v2164
        %v3949 = vsel %vm3893, %v3840, %v2166
        %v3950 = vsel %vm3893, %v3841, %v2168
        %v3951 = vsel %vm3893, %v3842, %v2170
        %v3952 = vsel %vm3893, %v3843, %v2172
        %v3953 = vsel %vm3893, %v3844, %v2174
        %v3954 = vsel %vm3893, %v3845, %v2176
        %v3955 = vsel %vm3893, %v3846, %v2178
        %v3956 = vsel %vm3893, %v3847, %v2180
        %v3957 = vsel %vm3893, %v3848, %v2182
        %v3958 = vsel %vm3893, %v3849, %v2184
        %v3959 = vsel %vm3893, %v3850, %v2186
        %v3960 = vsel %vm3893, %v3851, %v2188
        %v3961 = vsel %vm3893, %v3852, %v2190
        %v3962 = vsel %vm3893, %v3853, %v2192
        %v3963 = vsel %vm3893, %v3854, %v2194
        %v3964 = vsel %vm3893, %v3855, %v2196
        %v3965 = vsel %vm3893, %v3856, %v2198
        %v3966 = vsel %vm3893, %v3857, %v2200
        %v3967 = vsel %vm3893, %v3858, %v2202
        %v3968 = vsel %vm3893, %v3859, %v2204
        %v3969 = vsel %vm3893, %v3860, %v2206
        %v3970 = vsel %vm3893, %v3861, %v2208
        %v3971 = vsel %vm3893, %v3862, %v2210
        %v3972 = vsel %vm3893, %v3863, %v2212
        %v3973 = vsel %vm3893, %v3864, %v2214
        %v3974 = vsel %vm3893, %v3865, %v2216
        %v3975 = vsel %vm3893, %v3866, %v2218
        %v3976 = vsel %vm3893, %v3867, %v2220
        %v3977 = vsel %vm3893, %v3868, %v2222
        %v3978 = vsel %vm3893, %v3869, %v2224
        %v3979 = vsel %vm3893, %v3870, %v2226
        %v3980 = vsel %vm3893, %v3871, %v2228
        %v3981 = vsel %vm3893, %v3872, %v2230
        %v3982 = vsel %vm3893, %v3873, %v2232
        %v3983 = vsel %vm3893, %v3874, %v2234
        %v3984 = vsel %vm3893, %v3875, %v2236
        %v3985 = vsel %vm3893, %v3876, %v2238
        %v3986 = vsel %vm3893, %v3877, %v2240
        %v3987 = vsel %vm3893, %v3878, %v2242
        %v3988 = vsel %vm3893, %v3879, %v2244
        %v3989 = vsel %vm3893, %v3880, %v2246
        %v3990 = vsel %vm3893, %v3881, %v2248
        %v3991 = vsel %vm3893, %v3882, %v2250
        %v3992 = vsel %vm3893, %v3883, %v2252
        %v3993 = vsel %vm3893, %v3884, %v2254
        %v3994 = vsel %vm3893, %v3885, %v2256
        %v3995 = vsel %vm3893, %v3886, %v2258
        %v3996 = vsel %vm3893, %v3887, %v2260
        %v3997 = vsel %vm3893, %v3888, %v2262
        %v3998 = vsel %vm3893, %v3889, %v2264
        %v3999 = vsel %vm3893, %v3890, %v2266
        %v4000 = vsel %vm3893, %v3891, %v2268
        %v4001 = vsel %vm3893, %v3892, %v2270
        %vm4002 = vcmask 523264
        %v4003 = vsel %vm4002, %v3894, %v2380
        %v4004 = vsel %vm4002, %v3895, %v2382
        %v4005 = vsel %vm4002, %v3896, %v2384
        %v4006 = vsel %vm4002, %v3897, %v2386
        %v4007 = vsel %vm4002, %v3898, %v2388
        %v4008 = vsel %vm4002, %v3899, %v2390
        %v4009 = vsel %vm4002, %v3900, %v2392
        %v4010 = vsel %vm4002, %v3901, %v2394
        %v4011 = vsel %vm4002, %v3902, %v2396
        %v4012 = vsel %vm4002, %v3903, %v2398
        %v4013 = vsel %vm4002, %v3904, %v2400
        %v4014 = vsel %vm4002, %v3905, %v2402
        %v4015 = vsel %vm4002, %v3906, %v2404
        %v4016 = vsel %vm4002, %v3907, %v2406
        %v4017 = vsel %vm4002, %v3908, %v2408
        %v4018 = vsel %vm4002, %v3909, %v2410
        %v4019 = vsel %vm4002, %v3910, %v2412
        %v4020 = vsel %vm4002, %v3911, %v2414
        %v4021 = vsel %vm4002, %v3912, %v2416
        %v4022 = vsel %vm4002, %v3913, %v2418
        %v4023 = vsel %vm4002, %v3914, %v2420
        %v4024 = vsel %vm4002, %v3915, %v2422
        %v4025 = vsel %vm4002, %v3916, %v2424
        %v4026 = vsel %vm4002, %v3917, %v2426
        %v4027 = vsel %vm4002, %v3918, %v2428
        %v4028 = vsel %vm4002, %v3919, %v2430
        %v4029 = vsel %vm4002, %v3920, %v2432
        %v4030 = vsel %vm4002, %v3921, %v2434
        %v4031 = vsel %vm4002, %v3922, %v2436
        %v4032 = vsel %vm4002, %v3923, %v2438
        %v4033 = vsel %vm4002, %v3924, %v2440
        %v4034 = vsel %vm4002, %v3925, %v2442
        %v4035 = vsel %vm4002, %v3926, %v2444
        %v4036 = vsel %vm4002, %v3927, %v2446
        %v4037 = vsel %vm4002, %v3928, %v2448
        %v4038 = vsel %vm4002, %v3929, %v2450
        %v4039 = vsel %vm4002, %v3930, %v2452
        %v4040 = vsel %vm4002, %v3931, %v2454
        %v4041 = vsel %vm4002, %v3932, %v2456
        %v4042 = vsel %vm4002, %v3933, %v2458
        %v4043 = vsel %vm4002, %v3934, %v2460
        %v4044 = vsel %vm4002, %v3935, %v2462
        %v4045 = vsel %vm4002, %v3936, %v2464
        %v4046 = vsel %vm4002, %v3937, %v2466
        %v4047 = vsel %vm4002, %v3938, %v2468
        %v4048 = vsel %vm4002, %v3939, %v2470
        %v4049 = vsel %vm4002, %v3940, %v2472
        %v4050 = vsel %vm4002, %v3941, %v2474
        %v4051 = vsel %vm4002, %v3942, %v2476
        %v4052 = vsel %vm4002, %v3943, %v2478
        %v4053 = vsel %vm4002, %v3944, %v2480
        %v4054 = vsel %vm4002, %v3945, %v2482
        %v4055 = vsel %vm4002, %v3946, %v2484
        %v4056 = vsel %vm4002, %v3947, %v2486
        %v4057 = vsel %vm4002, %v3948, %v2488
        %v4058 = vsel %vm4002, %v3949, %v2490
        %v4059 = vsel %vm4002, %v3950, %v2492
        %v4060 = vsel %vm4002, %v3951, %v2494
        %v4061 = vsel %vm4002, %v3952, %v2496
        %v4062 = vsel %vm4002, %v3953, %v2498
        %v4063 = vsel %vm4002, %v3954, %v2500
        %v4064 = vsel %vm4002, %v3955, %v2502
        %v4065 = vsel %vm4002, %v3956, %v2504
        %v4066 = vsel %vm4002, %v3957, %v2506
        %v4067 = vsel %vm4002, %v3958, %v2508
        %v4068 = vsel %vm4002, %v3959, %v2510
        %v4069 = vsel %vm4002, %v3960, %v2512
        %v4070 = vsel %vm4002, %v3961, %v2514
        %v4071 = vsel %vm4002, %v3962, %v2516
        %v4072 = vsel %vm4002, %v3963, %v2518
        %v4073 = vsel %vm4002, %v3964, %v2520
        %v4074 = vsel %vm4002, %v3965, %v2522
        %v4075 = vsel %vm4002, %v3966, %v2524
        %v4076 = vsel %vm4002, %v3967, %v2526
        %v4077 = vsel %vm4002, %v3968, %v2528
        %v4078 = vsel %vm4002, %v3969, %v2530
        %v4079 = vsel %vm4002, %v3970, %v2532
        %v4080 = vsel %vm4002, %v3971, %v2534
        %v4081 = vsel %vm4002, %v3972, %v2536
        %v4082 = vsel %vm4002, %v3973, %v2538
        %v4083 = vsel %vm4002, %v3974, %v2540
        %v4084 = vsel %vm4002, %v3975, %v2542
        %v4085 = vsel %vm4002, %v3976, %v2544
        %v4086 = vsel %vm4002, %v3977, %v2546
        %v4087 = vsel %vm4002, %v3978, %v2548
        %v4088 = vsel %vm4002, %v3979, %v2550
        %v4089 = vsel %vm4002, %v3980, %v2552
        %v4090 = vsel %vm4002, %v3981, %v2554
        %v4091 = vsel %vm4002, %v3982, %v2556
        %v4092 = vsel %vm4002, %v3983, %v2558
        %v4093 = vsel %vm4002, %v3984, %v2560
        %v4094 = vsel %vm4002, %v3985, %v2562
        %v4095 = vsel %vm4002, %v3986, %v2564
        %v4096 = vsel %vm4002, %v3987, %v2566
        %v4097 = vsel %vm4002, %v3988, %v2568
        %v4098 = vsel %vm4002, %v3989, %v2570
        %v4099 = vsel %vm4002, %v3990, %v2572
        %v4100 = vsel %vm4002, %v3991, %v2574
        %v4101 = vsel %vm4002, %v3992, %v2576
        %v4102 = vsel %vm4002, %v3993, %v2578
        %v4103 = vsel %vm4002, %v3994, %v2580
        %v4104 = vsel %vm4002, %v3995, %v2582
        %v4105 = vsel %vm4002, %v3996, %v2584
        %v4106 = vsel %vm4002, %v3997, %v2586
        %v4107 = vsel %vm4002, %v3998, %v2588
        %v4108 = vsel %vm4002, %v3999, %v2590
        %v4109 = vsel %vm4002, %v4000, %v2592
        %v4110 = vsel %vm4002, %v4001, %v2594
        %vm4111 = vcmask 654336
        %v4112 = vsel %vm4111, %v4003, %v2704
        %v4113 = vsel %vm4111, %v4004, %v2706
        %v4114 = vsel %vm4111, %v4005, %v2708
        %v4115 = vsel %vm4111, %v4006, %v2710
        %v4116 = vsel %vm4111, %v4007, %v2712
        %v4117 = vsel %vm4111, %v4008, %v2714
        %v4118 = vsel %vm4111, %v4009, %v2716
        %v4119 = vsel %vm4111, %v4010, %v2718
        %v4120 = vsel %vm4111, %v4011, %v2720
        %v4121 = vsel %vm4111, %v4012, %v2722
        %v4122 = vsel %vm4111, %v4013, %v2724
        %v4123 = vsel %vm4111, %v4014, %v2726
        %v4124 = vsel %vm4111, %v4015, %v2728
        %v4125 = vsel %vm4111, %v4016, %v2730
        %v4126 = vsel %vm4111, %v4017, %v2732
        %v4127 = vsel %vm4111, %v4018, %v2734
        %v4128 = vsel %vm4111, %v4019, %v2736
        %v4129 = vsel %vm4111, %v4020, %v2738
        %v4130 = vsel %vm4111, %v4021, %v2740
        %v4131 = vsel %vm4111, %v4022, %v2742
        %v4132 = vsel %vm4111, %v4023, %v2744
        %v4133 = vsel %vm4111, %v4024, %v2746
        %v4134 = vsel %vm4111, %v4025, %v2748
        %v4135 = vsel %vm4111, %v4026, %v2750
        %v4136 = vsel %vm4111, %v4027, %v2752
        %v4137 = vsel %vm4111, %v4028, %v2754
        %v4138 = vsel %vm4111, %v4029, %v2756
        %v4139 = vsel %vm4111, %v4030, %v2758
        %v4140 = vsel %vm4111, %v4031, %v2760
        %v4141 = vsel %vm4111, %v4032, %v2762
        %v4142 = vsel %vm4111, %v4033, %v2764
        %v4143 = vsel %vm4111, %v4034, %v2766
        %v4144 = vsel %vm4111, %v4035, %v2768
        %v4145 = vsel %vm4111, %v4036, %v2770
        %v4146 = vsel %vm4111, %v4037, %v2772
        %v4147 = vsel %vm4111, %v4038, %v2774
        %v4148 = vsel %vm4111, %v4039, %v2776
        %v4149 = vsel %vm4111, %v4040, %v2778
        %v4150 = vsel %vm4111, %v4041, %v2780
        %v4151 = vsel %vm4111, %v4042, %v2782
        %v4152 = vsel %vm4111, %v4043, %v2784
        %v4153 = vsel %vm4111, %v4044, %v2786
        %v4154 = vsel %vm4111, %v4045, %v2788
        %v4155 = vsel %vm4111, %v4046, %v2790
        %v4156 = vsel %vm4111, %v4047, %v2792
        %v4157 = vsel %vm4111, %v4048, %v2794
        %v4158 = vsel %vm4111, %v4049, %v2796
        %v4159 = vsel %vm4111, %v4050, %v2798
        %v4160 = vsel %vm4111, %v4051, %v2800
        %v4161 = vsel %vm4111, %v4052, %v2802
        %v4162 = vsel %vm4111, %v4053, %v2804
        %v4163 = vsel %vm4111, %v4054, %v2806
        %v4164 = vsel %vm4111, %v4055, %v2808
        %v4165 = vsel %vm4111, %v4056, %v2810
        %v4166 = vsel %vm4111, %v4057, %v2812
        %v4167 = vsel %vm4111, %v4058, %v2814
        %v4168 = vsel %vm4111, %v4059, %v2816
        %v4169 = vsel %vm4111, %v4060, %v2818
        %v4170 = vsel %vm4111, %v4061, %v2820
        %v4171 = vsel %vm4111, %v4062, %v2822
        %v4172 = vsel %vm4111, %v4063, %v2824
        %v4173 = vsel %vm4111, %v4064, %v2826
        %v4174 = vsel %vm4111, %v4065, %v2828
        %v4175 = vsel %vm4111, %v4066, %v2830
        %v4176 = vsel %vm4111, %v4067, %v2832
        %v4177 = vsel %vm4111, %v4068, %v2834
        %v4178 = vsel %vm4111, %v4069, %v2836
        %v4179 = vsel %vm4111, %v4070, %v2838
        %v4180 = vsel %vm4111, %v4071, %v2840
        %v4181 = vsel %vm4111, %v4072, %v2842
        %v4182 = vsel %vm4111, %v4073, %v2844
        %v4183 = vsel %vm4111, %v4074, %v2846
        %v4184 = vsel %vm4111, %v4075, %v2848
        %v4185 = vsel %vm4111, %v4076, %v2850
        %v4186 = vsel %vm4111, %v4077, %v2852
        %v4187 = vsel %vm4111, %v4078, %v2854
        %v4188 = vsel %vm4111, %v4079, %v2856
        %v4189 = vsel %vm4111, %v4080, %v2858
        %v4190 = vsel %vm4111, %v4081, %v2860
        %v4191 = vsel %vm4111, %v4082, %v2862
        %v4192 = vsel %vm4111, %v4083, %v2864
        %v4193 = vsel %vm4111, %v4084, %v2866
        %v4194 = vsel %vm4111, %v4085, %v2868
        %v4195 = vsel %vm4111, %v4086, %v2870
        %v4196 = vsel %vm4111, %v4087, %v2872
        %v4197 = vsel %vm4111, %v4088, %v2874
        %v4198 = vsel %vm4111, %v4089, %v2876
        %v4199 = vsel %vm4111, %v4090, %v2878
        %v4200 = vsel %vm4111, %v4091, %v2880
        %v4201 = vsel %vm4111, %v4092, %v2882
        %v4202 = vsel %vm4111, %v4093, %v2884
        %v4203 = vsel %vm4111, %v4094, %v2886
        %v4204 = vsel %vm4111, %v4095, %v2888
        %v4205 = vsel %vm4111, %v4096, %v2890
        %v4206 = vsel %vm4111, %v4097, %v2892
        %v4207 = vsel %vm4111, %v4098, %v2894
        %v4208 = vsel %vm4111, %v4099, %v2896
        %v4209 = vsel %vm4111, %v4100, %v2898
        %v4210 = vsel %vm4111, %v4101, %v2900
        %v4211 = vsel %vm4111, %v4102, %v2902
        %v4212 = vsel %vm4111, %v4103, %v2904
        %v4213 = vsel %vm4111, %v4104, %v2906
        %v4214 = vsel %vm4111, %v4105, %v2908
        %v4215 = vsel %vm4111, %v4106, %v2910
        %v4216 = vsel %vm4111, %v4107, %v2912
        %v4217 = vsel %vm4111, %v4108, %v2914
        %v4218 = vsel %vm4111, %v4109, %v2916
        %v4219 = vsel %vm4111, %v4110, %v2918
        %vm4220 = vcmask 785408
        %v4221 = vsel %vm4220, %v4112, %v3028
        %v4222 = vsel %vm4220, %v4113, %v3030
        %v4223 = vsel %vm4220, %v4114, %v3032
        %v4224 = vsel %vm4220, %v4115, %v3034
        %v4225 = vsel %vm4220, %v4116, %v3036
        %v4226 = vsel %vm4220, %v4117, %v3038
        %v4227 = vsel %vm4220, %v4118, %v3040
        %v4228 = vsel %vm4220, %v4119, %v3042
        %v4229 = vsel %vm4220, %v4120, %v3044
        %v4230 = vsel %vm4220, %v4121, %v3046
        %v4231 = vsel %vm4220, %v4122, %v3048
        %v4232 = vsel %vm4220, %v4123, %v3050
        %v4233 = vsel %vm4220, %v4124, %v3052
        %v4234 = vsel %vm4220, %v4125, %v3054
        %v4235 = vsel %vm4220, %v4126, %v3056
        %v4236 = vsel %vm4220, %v4127, %v3058
        %v4237 = vsel %vm4220, %v4128, %v3060
        %v4238 = vsel %vm4220, %v4129, %v3062
        %v4239 = vsel %vm4220, %v4130, %v3064
        %v4240 = vsel %vm4220, %v4131, %v3066
        %v4241 = vsel %vm4220, %v4132, %v3068
        %v4242 = vsel %vm4220, %v4133, %v3070
        %v4243 = vsel %vm4220, %v4134, %v3072
        %v4244 = vsel %vm4220, %v4135, %v3074
        %v4245 = vsel %vm4220, %v4136, %v3076
        %v4246 = vsel %vm4220, %v4137, %v3078
        %v4247 = vsel %vm4220, %v4138, %v3080
        %v4248 = vsel %vm4220, %v4139, %v3082
        %v4249 = vsel %vm4220, %v4140, %v3084
        %v4250 = vsel %vm4220, %v4141, %v3086
        %v4251 = vsel %vm4220, %v4142, %v3088
        %v4252 = vsel %vm4220, %v4143, %v3090
        %v4253 = vsel %vm4220, %v4144, %v3092
        %v4254 = vsel %vm4220, %v4145, %v3094
        %v4255 = vsel %vm4220, %v4146, %v3096
        %v4256 = vsel %vm4220, %v4147, %v3098
        %v4257 = vsel %vm4220, %v4148, %v3100
        %v4258 = vsel %vm4220, %v4149, %v3102
        %v4259 = vsel %vm4220, %v4150, %v3104
        %v4260 = vsel %vm4220, %v4151, %v3106
        %v4261 = vsel %vm4220, %v4152, %v3108
        %v4262 = vsel %vm4220, %v4153, %v3110
        %v4263 = vsel %vm4220, %v4154, %v3112
        %v4264 = vsel %vm4220, %v4155, %v3114
        %v4265 = vsel %vm4220, %v4156, %v3116
        %v4266 = vsel %vm4220, %v4157, %v3118
        %v4267 = vsel %vm4220, %v4158, %v3120
        %v4268 = vsel %vm4220, %v4159, %v3122
        %v4269 = vsel %vm4220, %v4160, %v3124
        %v4270 = vsel %vm4220, %v4161, %v3126
        %v4271 = vsel %vm4220, %v4162, %v3128
        %v4272 = vsel %vm4220, %v4163, %v3130
        %v4273 = vsel %vm4220, %v4164, %v3132
        %v4274 = vsel %vm4220, %v4165, %v3134
        %v4275 = vsel %vm4220, %v4166, %v3136
        %v4276 = vsel %vm4220, %v4167, %v3138
        %v4277 = vsel %vm4220, %v4168, %v3140
        %v4278 = vsel %vm4220, %v4169, %v3142
        %v4279 = vsel %vm4220, %v4170, %v3144
        %v4280 = vsel %vm4220, %v4171, %v3146
        %v4281 = vsel %vm4220, %v4172, %v3148
        %v4282 = vsel %vm4220, %v4173, %v3150
        %v4283 = vsel %vm4220, %v4174, %v3152
        %v4284 = vsel %vm4220, %v4175, %v3154
        %v4285 = vsel %vm4220, %v4176, %v3156
        %v4286 = vsel %vm4220, %v4177, %v3158
        %v4287 = vsel %vm4220, %v4178, %v3160
        %v4288 = vsel %vm4220, %v4179, %v3162
        %v4289 = vsel %vm4220, %v4180, %v3164
        %v4290 = vsel %vm4220, %v4181, %v3166
        %v4291 = vsel %vm4220, %v4182, %v3168
        %v4292 = vsel %vm4220, %v4183, %v3170
        %v4293 = vsel %vm4220, %v4184, %v3172
        %v4294 = vsel %vm4220, %v4185, %v3174
        %v4295 = vsel %vm4220, %v4186, %v3176
        %v4296 = vsel %vm4220, %v4187, %v3178
        %v4297 = vsel %vm4220, %v4188, %v3180
        %v4298 = vsel %vm4220, %v4189, %v3182
        %v4299 = vsel %vm4220, %v4190, %v3184
        %v4300 = vsel %vm4220, %v4191, %v3186
        %v4301 = vsel %vm4220, %v4192, %v3188
        %v4302 = vsel %vm4220, %v4193, %v3190
        %v4303 = vsel %vm4220, %v4194, %v3192
        %v4304 = vsel %vm4220, %v4195, %v3194
        %v4305 = vsel %vm4220, %v4196, %v3196
        %v4306 = vsel %vm4220, %v4197, %v3198
        %v4307 = vsel %vm4220, %v4198, %v3200
        %v4308 = vsel %vm4220, %v4199, %v3202
        %v4309 = vsel %vm4220, %v4200, %v3204
        %v4310 = vsel %vm4220, %v4201, %v3206
        %v4311 = vsel %vm4220, %v4202, %v3208
        %v4312 = vsel %vm4220, %v4203, %v3210
        %v4313 = vsel %vm4220, %v4204, %v3212
        %v4314 = vsel %vm4220, %v4205, %v3214
        %v4315 = vsel %vm4220, %v4206, %v3216
        %v4316 = vsel %vm4220, %v4207, %v3218
        %v4317 = vsel %vm4220, %v4208, %v3220
        %v4318 = vsel %vm4220, %v4209, %v3222
        %v4319 = vsel %vm4220, %v4210, %v3224
        %v4320 = vsel %vm4220, %v4211, %v3226
        %v4321 = vsel %vm4220, %v4212, %v3228
        %v4322 = vsel %vm4220, %v4213, %v3230
        %v4323 = vsel %vm4220, %v4214, %v3232
        %v4324 = vsel %vm4220, %v4215, %v3234
        %v4325 = vsel %vm4220, %v4216, %v3236
        %v4326 = vsel %vm4220, %v4217, %v3238
        %v4327 = vsel %vm4220, %v4218, %v3240
        %v4328 = vsel %vm4220, %v4219, %v3242
        %vm4329 = vcmask 916480
        %v4330 = vsel %vm4329, %v4221, %v3352
        %v4331 = vsel %vm4329, %v4222, %v3354
        %v4332 = vsel %vm4329, %v4223, %v3356
        %v4333 = vsel %vm4329, %v4224, %v3358
        %v4334 = vsel %vm4329, %v4225, %v3360
        %v4335 = vsel %vm4329, %v4226, %v3362
        %v4336 = vsel %vm4329, %v4227, %v3364
        %v4337 = vsel %vm4329, %v4228, %v3366
        %v4338 = vsel %vm4329, %v4229, %v3368
        %v4339 = vsel %vm4329, %v4230, %v3370
        %v4340 = vsel %vm4329, %v4231, %v3372
        %v4341 = vsel %vm4329, %v4232, %v3374
        %v4342 = vsel %vm4329, %v4233, %v3376
        %v4343 = vsel %vm4329, %v4234, %v3378
        %v4344 = vsel %vm4329, %v4235, %v3380
        %v4345 = vsel %vm4329, %v4236, %v3382
        %v4346 = vsel %vm4329, %v4237, %v3384
        %v4347 = vsel %vm4329, %v4238, %v3386
        %v4348 = vsel %vm4329, %v4239, %v3388
        %v4349 = vsel %vm4329, %v4240, %v3390
        %v4350 = vsel %vm4329, %v4241, %v3392
        %v4351 = vsel %vm4329, %v4242, %v3394
        %v4352 = vsel %vm4329, %v4243, %v3396
        %v4353 = vsel %vm4329, %v4244, %v3398
        %v4354 = vsel %vm4329, %v4245, %v3400
        %v4355 = vsel %vm4329, %v4246, %v3402
        %v4356 = vsel %vm4329, %v4247, %v3404
        %v4357 = vsel %vm4329, %v4248, %v3406
        %v4358 = vsel %vm4329, %v4249, %v3408
        %v4359 = vsel %vm4329, %v4250, %v3410
        %v4360 = vsel %vm4329, %v4251, %v3412
        %v4361 = vsel %vm4329, %v4252, %v3414
        %v4362 = vsel %vm4329, %v4253, %v3416
        %v4363 = vsel %vm4329, %v4254, %v3418
        %v4364 = vsel %vm4329, %v4255, %v3420
        %v4365 = vsel %vm4329, %v4256, %v3422
        %v4366 = vsel %vm4329, %v4257, %v3424
        %v4367 = vsel %vm4329, %v4258, %v3426
        %v4368 = vsel %vm4329, %v4259, %v3428
        %v4369 = vsel %vm4329, %v4260, %v3430
        %v4370 = vsel %vm4329, %v4261, %v3432
        %v4371 = vsel %vm4329, %v4262, %v3434
        %v4372 = vsel %vm4329, %v4263, %v3436
        %v4373 = vsel %vm4329, %v4264, %v3438
        %v4374 = vsel %vm4329, %v4265, %v3440
        %v4375 = vsel %vm4329, %v4266, %v3442
        %v4376 = vsel %vm4329, %v4267, %v3444
        %v4377 = vsel %vm4329, %v4268, %v3446
        %v4378 = vsel %vm4329, %v4269, %v3448
        %v4379 = vsel %vm4329, %v4270, %v3450
        %v4380 = vsel %vm4329, %v4271, %v3452
        %v4381 = vsel %vm4329, %v4272, %v3454
        %v4382 = vsel %vm4329, %v4273, %v3456
        %v4383 = vsel %vm4329, %v4274, %v3458
        %v4384 = vsel %vm4329, %v4275, %v3460
        %v4385 = vsel %vm4329, %v4276, %v3462
        %v4386 = vsel %vm4329, %v4277, %v3464
        %v4387 = vsel %vm4329, %v4278, %v3466
        %v4388 = vsel %vm4329, %v4279, %v3468
        %v4389 = vsel %vm4329, %v4280, %v3470
        %v4390 = vsel %vm4329, %v4281, %v3472
        %v4391 = vsel %vm4329, %v4282, %v3474
        %v4392 = vsel %vm4329, %v4283, %v3476
        %v4393 = vsel %vm4329, %v4284, %v3478
        %v4394 = vsel %vm4329, %v4285, %v3480
        %v4395 = vsel %vm4329, %v4286, %v3482
        %v4396 = vsel %vm4329, %v4287, %v3484
        %v4397 = vsel %vm4329, %v4288, %v3486
        %v4398 = vsel %vm4329, %v4289, %v3488
        %v4399 = vsel %vm4329, %v4290, %v3490
        %v4400 = vsel %vm4329, %v4291, %v3492
        %v4401 = vsel %vm4329, %v4292, %v3494
        %v4402 = vsel %vm4329, %v4293, %v3496
        %v4403 = vsel %vm4329, %v4294, %v3498
        %v4404 = vsel %vm4329, %v4295, %v3500
        %v4405 = vsel %vm4329, %v4296, %v3502
        %v4406 = vsel %vm4329, %v4297, %v3504
        %v4407 = vsel %vm4329, %v4298, %v3506
        %v4408 = vsel %vm4329, %v4299, %v3508
        %v4409 = vsel %vm4329, %v4300, %v3510
        %v4410 = vsel %vm4329, %v4301, %v3512
        %v4411 = vsel %vm4329, %v4302, %v3514
        %v4412 = vsel %vm4329, %v4303, %v3516
        %v4413 = vsel %vm4329, %v4304, %v3518
        %v4414 = vsel %vm4329, %v4305, %v3520
        %v4415 = vsel %vm4329, %v4306, %v3522
        %v4416 = vsel %vm4329, %v4307, %v3524
        %v4417 = vsel %vm4329, %v4308, %v3526
        %v4418 = vsel %vm4329, %v4309, %v3528
        %v4419 = vsel %vm4329, %v4310, %v3530
        %v4420 = vsel %vm4329, %v4311, %v3532
        %v4421 = vsel %vm4329, %v4312, %v3534
        %v4422 = vsel %vm4329, %v4313, %v3536
        %v4423 = vsel %vm4329, %v4314, %v3538
        %v4424 = vsel %vm4329, %v4315, %v3540
        %v4425 = vsel %vm4329, %v4316, %v3542
        %v4426 = vsel %vm4329, %v4317, %v3544
        %v4427 = vsel %vm4329, %v4318, %v3546
        %v4428 = vsel %vm4329, %v4319, %v3548
        %v4429 = vsel %vm4329, %v4320, %v3550
        %v4430 = vsel %vm4329, %v4321, %v3552
        %v4431 = vsel %vm4329, %v4322, %v3554
        %v4432 = vsel %vm4329, %v4323, %v3556
        %v4433 = vsel %vm4329, %v4324, %v3558
        %v4434 = vsel %vm4329, %v4325, %v3560
        %v4435 = vsel %vm4329, %v4326, %v3562
        %v4436 = vsel %vm4329, %v4327, %v3564
        %v4437 = vsel %vm4329, %v4328, %v3566
        %v4438 = vpack.c.bf16 %v4331, %v4330
        %v4439 = vpack.c.bf16 %v993, %v991
        %v4440 = vpack.c.bf16 %v4333, %v4332
        %v4441 = vpack.c.bf16 %v998, %v995
        %v4442 = vpack.c.bf16 %v4335, %v4334
        %v4443 = vpack.c.bf16 %v1002, %v1000
        %v4444 = vpack.c.bf16 %v4337, %v4336
        %v4445 = vpack.c.bf16 %v1007, %v1005
        %v4446 = vpack.c.bf16 %v4339, %v4338
        %v4447 = vpack.c.bf16 %v1012, %v1009
        %v4448 = vpack.c.bf16 %v4341, %v4340
        %v4449 = vpack.c.bf16 %v1016, %v1014
        %v4450 = vpack.c.bf16 %v4343, %v4342
        %v4451 = vpack.c.bf16 %v1021, %v1019
        %v4452 = vpack.c.bf16 %v4345, %v4344
        %v4453 = vpack.c.bf16 %v1026, %v1023
        %v4454 = vpack.c.bf16 %v4347, %v4346
        %v4455 = vpack.c.bf16 %v1030, %v1028
        %v4456 = vpack.c.bf16 %v4349, %v4348
        %v4457 = vpack.c.bf16 %v1035, %v1033
        %v4458 = vpack.c.bf16 %v4351, %v4350
        %v4459 = vpack.c.bf16 %v1040, %v1037
        %v4460 = vpack.c.bf16 %v4353, %v4352
        %v4461 = vpack.c.bf16 %v1044, %v1042
        %v4462 = vpack.c.bf16 %v4355, %v4354
        %v4463 = vpack.c.bf16 %v1049, %v1047
        %v4464 = vpack.c.bf16 %v4357, %v4356
        %v4465 = vpack.c.bf16 %v1054, %v1051
        %v4466 = vpack.c.bf16 %v4359, %v4358
        %v4467 = vpack.c.bf16 %v1058, %v1056
        %v4468 = vpack.c.bf16 %v4361, %v4360
        %v4469 = vpack.c.bf16 %v1063, %v1061
        %v4470 = vpack.c.bf16 %v4363, %v4362
        %v4471 = vpack.c.bf16 %v1068, %v1065
        %v4472 = vpack.c.bf16 %v4365, %v4364
        %v4473 = vpack.c.bf16 %v1072, %v1070
        %v4474 = vpack.c.bf16 %v4367, %v4366
        %v4475 = vpack.c.bf16 %v1077, %v1075
        %v4476 = vpack.c.bf16 %v4369, %v4368
        %v4477 = vpack.c.bf16 %v1082, %v1079
        %v4478 = vpack.c.bf16 %v4371, %v4370
        %v4479 = vpack.c.bf16 %v1086, %v1084
        %v4480 = vpack.c.bf16 %v4373, %v4372
        %v4481 = vpack.c.bf16 %v1091, %v1089
        %v4482 = vpack.c.bf16 %v4375, %v4374
        %v4483 = vpack.c.bf16 %v1096, %v1093
        %v4484 = vpack.c.bf16 %v4377, %v4376
        %v4485 = vpack.c.bf16 %v1100, %v1098
        %v4486 = vpack.c.bf16 %v4379, %v4378
        %v4487 = vpack.c.bf16 %v1253, %v1251
        %v4488 = vpack.c.bf16 %v4381, %v4380
        %v4489 = vpack.c.bf16 %v1287, %v1255
        %v4490 = vpack.c.bf16 %v4383, %v4382
        %v4491 = vpack.c.bf16 %v1291, %v1289
        %v4492 = vpack.c.bf16 %v4385, %v4384
        %v4493 = vpack.c.bf16 %v1119, %v1117
        %v4494 = vpack.c.bf16 %v4387, %v4386
        %v4495 = vpack.c.bf16 %v1124, %v1121
        %v4496 = vpack.c.bf16 %v4389, %v4388
        %v4497 = vpack.c.bf16 %v1128, %v1126
        %v4498 = vpack.c.bf16 %v4391, %v4390
        %v4499 = vpack.c.bf16 %v1133, %v1131
        %v4500 = vpack.c.bf16 %v4393, %v4392
        %v4501 = vpack.c.bf16 %v1138, %v1135
        %v4502 = vpack.c.bf16 %v4395, %v4394
        %v4503 = vpack.c.bf16 %v1142, %v1140
        %v4504 = vpack.c.bf16 %v4397, %v4396
        %v4505 = vpack.c.bf16 %v1147, %v1145
        %v4506 = vpack.c.bf16 %v4399, %v4398
        %v4507 = vpack.c.bf16 %v1152, %v1149
        %v4508 = vpack.c.bf16 %v4401, %v4400
        %v4509 = vpack.c.bf16 %v1156, %v1154
        %v4510 = vpack.c.bf16 %v4403, %v4402
        %v4511 = vpack.c.bf16 %v1161, %v1159
        %v4512 = vpack.c.bf16 %v4405, %v4404
        %v4513 = vpack.c.bf16 %v1166, %v1163
        %v4514 = vpack.c.bf16 %v4407, %v4406
        %v4515 = vpack.c.bf16 %v1170, %v1168
        %v4516 = vpack.c.bf16 %v4409, %v4408
        %v4517 = vpack.c.bf16 %v1175, %v1173
        %v4518 = vpack.c.bf16 %v4411, %v4410
        %v4519 = vpack.c.bf16 %v1180, %v1177
        %v4520 = vpack.c.bf16 %v4413, %v4412
        %v4521 = vpack.c.bf16 %v1184, %v1182
        %v4522 = vpack.c.bf16 %v4415, %v4414
        %v4523 = vpack.c.bf16 %v1189, %v1187
        %v4524 = vpack.c.bf16 %v4417, %v4416
        %v4525 = vpack.c.bf16 %v1194, %v1191
        %v4526 = vpack.c.bf16 %v4419, %v4418
        %v4527 = vpack.c.bf16 %v1198, %v1196
        %v4528 = vpack.c.bf16 %v4421, %v4420
        %v4529 = vpack.c.bf16 %v1203, %v1201
        %v4530 = vpack.c.bf16 %v4423, %v4422
        %v4531 = vpack.c.bf16 %v1208, %v1205
        %v4532 = vpack.c.bf16 %v4425, %v4424
        %v4533 = vpack.c.bf16 %v1212, %v1210
        %v4534 = vpack.c.bf16 %v4427, %v4426
        %v4535 = vpack.c.bf16 %v1217, %v1215
        %v4536 = vpack.c.bf16 %v4429, %v4428
        %v4537 = vpack.c.bf16 %v1222, %v1219
        %v4538 = vpack.c.bf16 %v4431, %v4430
        %v4539 = vpack.c.bf16 %v1226, %v1224
        %v4540 = vpack.c.bf16 %v4433, %v4432
        %v4541 = vpack.c.bf16 %v1260, %v1258
        %v4542 = vpack.c.bf16 %v4435, %v4434
        %v4543 = vpack.c.bf16 %v1294, %v1262
        %v4544 = vpack.c.bf16 %v4437, %v4436
        %v4545 = vpack.c.bf16 %v1298, %v1296
        %v4546 = vld [vmem:[%s3] sm:$0xf]
        %v4547 = vld [vmem:[%s3 + $0x4] sm:$0xf]
        %v4548 = vld [vmem:[%s3 + $0x8] sm:$0xf]
        %v4549 = vld [vmem:[%s3 + $0xc] sm:$0xf]
        %v4550 = vld [vmem:[%s3 + $0x10] sm:$0xf]
        %v4551 = vld [vmem:[%s3 + $0x14] sm:$0xf]
        %v4552 = vld [vmem:[%s3 + $0x18] sm:$0xf]
        %v4553 = vld [vmem:[%s3 + $0x1c] sm:$0xf]
        %v4554 = vld [vmem:[%s3 + $0x20] sm:$0xf]
        %v4555 = vld [vmem:[%s3 + $0x24] sm:$0xf]
        %v4556 = vld [vmem:[%s3 + $0x28] sm:$0xf]
        %v4557 = vld [vmem:[%s3 + $0x2c] sm:$0xf]
        %v4558 = vld [vmem:[%s3 + $0x30] sm:$0xf]
        %v4559 = vld [vmem:[%s3 + $0x34] sm:$0xf]
        %v4560 = vld [vmem:[%s3 + $0x38] sm:$0xf]
        %v4561 = vld [vmem:[%s3 + $0x3c] sm:$0xf]
        %v4562 = vld [vmem:[%s3 + $0x40] sm:$0xf]
        %v4563 = vld [vmem:[%s3 + $0x44] sm:$0xf]
        %v4564 = vld [vmem:[%s4] sm:$0x1]
        %v4566 = vlaneseq
        %v4567 = vshrl.u32 %v4566, 7
        %v4568 = vsub.s32 0, %v4567
        %v4569 = vrot.slane %v4564, %v4568
        %v4589 = vunpack.c.l.b16 %v4546
        %v4590 = vunpack.c.l.b16 %v4547
        %v4591 = vunpack.c.l.b16 %v4548
        %v4592 = vunpack.c.l.b16 %v4549
        %v4593 = vunpack.c.l.b16 %v4550
        %v4594 = vunpack.c.l.b16 %v4551
        %v4595 = vunpack.c.l.b16 %v4552
        %v4596 = vunpack.c.l.b16 %v4553
        %v4597 = vunpack.c.l.b16 %v4554
        %v4598 = vunpack.c.l.b16 %v4555
        %v4599 = vunpack.c.l.b16 %v4556
        %v4600 = vunpack.c.l.b16 %v4557
        %v4601 = vunpack.c.l.b16 %v4558
        %v4602 = vunpack.c.l.b16 %v4559
        %v4603 = vunpack.c.l.b16 %v4560
        %v4604 = vunpack.c.l.b16 %v4561
        %v4605 = vunpack.c.l.b16 %v4562
        %v4606 = vunpack.c.l.b16 %v4563
        %v4607 = vpack.c.b16 %v4590, %v4589
        %v4608 = vpack.c.b16 %v4592, %v4591
        %v4609 = vpack.c.b16 %v4594, %v4593
        %v4610 = vpack.c.b16 %v4596, %v4595
        %v4611 = vpack.c.b16 %v4598, %v4597
        %v4612 = vpack.c.b16 %v4600, %v4599
        %v4613 = vpack.c.b16 %v4602, %v4601
        %v4614 = vpack.c.b16 %v4604, %v4603
        %v4615 = vpack.c.b16 %v4606, %v4605
        %v4626 = vsel %vm3675, %v4439, 0
        %v4629 = vsel %vm3675, %v4441, 0
        %v4632 = vsel %vm3675, %v4443, 0
        %v4635 = vsel %vm3675, %v4445, 0
        %v4638 = vsel %vm3675, %v4447, 0
        %v4641 = vsel %vm3675, %v4449, 0
        %v4644 = vsel %vm3675, %v4451, 0
        %v4647 = vsel %vm3675, %v4453, 0
        %v4650 = vsel %vm3675, %v4455, 0
        %v4653 = vsel %vm3675, %v4457, 0
        %v4656 = vsel %vm3675, %v4459, 0
        %v4659 = vsel %vm3675, %v4461, 0
        %v4662 = vsel %vm3675, %v4463, 0
        %v4665 = vsel %vm3675, %v4465, 0
        %v4668 = vsel %vm3675, %v4467, 0
        %v4671 = vsel %vm3675, %v4469, 0
        %v4674 = vsel %vm3675, %v4471, 0
        %v4677 = vsel %vm3675, %v4473, 0
        %v4680 = vsel %vm3675, %v4475, 0
        %v4683 = vsel %vm3675, %v4477, 0
        %v4686 = vsel %vm3675, %v4479, 0
        %v4689 = vsel %vm3675, %v4481, 0
        %v4692 = vsel %vm3675, %v4483, 0
        %v4695 = vsel %vm3675, %v4485, 0
        %v4698 = vsel %vm3675, %v4487, 0
        %v4701 = vsel %vm3675, %v4489, 0
        %v4704 = vsel %vm3675, %v4491, 0
        %v4707 = vsel %vm3675, %v4493, 0
        %v4710 = vsel %vm3675, %v4495, 0
        %v4713 = vsel %vm3675, %v4497, 0
        %v4716 = vsel %vm3675, %v4499, 0
        %v4719 = vsel %vm3675, %v4501, 0
        %v4722 = vsel %vm3675, %v4503, 0
        %v4725 = vsel %vm3675, %v4505, 0
        %v4728 = vsel %vm3675, %v4507, 0
        %v4731 = vsel %vm3675, %v4509, 0
        %v4734 = vsel %vm3675, %v4511, 0
        %v4737 = vsel %vm3675, %v4513, 0
        %v4740 = vsel %vm3675, %v4515, 0
        %v4743 = vsel %vm3675, %v4517, 0
        %v4746 = vsel %vm3675, %v4519, 0
        %v4749 = vsel %vm3675, %v4521, 0
        %v4752 = vsel %vm3675, %v4523, 0
        %v4755 = vsel %vm3675, %v4525, 0
        %v4758 = vsel %vm3675, %v4527, 0
        %v4761 = vsel %vm3675, %v4529, 0
        %v4764 = vsel %vm3675, %v4531, 0
        %v4767 = vsel %vm3675, %v4533, 0
        %v4770 = vsel %vm3675, %v4535, 0
        %v4773 = vsel %vm3675, %v4537, 0
        %v4776 = vsel %vm3675, %v4539, 0
        %v4779 = vsel %vm3675, %v4541, 0
        %v4782 = vsel %vm3675, %v4543, 0
        %v4785 = vsel %vm3675, %v4545, 0
        %4787 = vmatprep.subr.bf16.mxu0 0
        %4788 = vmatpush1.bf16.msra.mxu0 %v4607
        %4789 = vmatprep.subr.bf16.mxu0 0
        %4790 = vmatpush1.bf16.msra.mxu0 %v4608
        %4791 = vmatprep.subr.bf16.mxu0 0
        %4792 = vmatpush1.bf16.msra.mxu0 %v4609
        %4793 = vmatprep.subr.bf16.mxu0 0
        %4794 = vmatpush1.bf16.msra.mxu0 %v4610
        %4795 = vmatprep.subr.bf16.mxu0 0
        %4796 = vmatpush1.bf16.msra.mxu0 %v4611
        %4797 = vmatprep.subr.bf16.mxu0 0
        %4798 = vmatpush1.bf16.msra.mxu0 %v4612
        %4799 = vmatprep.subr.bf16.mxu0 0
        %4800 = vmatpush1.bf16.msra.mxu0 %v4613
        %4801 = vmatprep.subr.bf16.mxu0 0
        %4802 = vmatpush1.bf16.msra.mxu0 %v4614
        %4803 = vmatprep.subr.bf16.mxu0 0
        %4804 = vmatpush1.bf16.msra.mxu0 %v4615
        %4805 = vmatprep.subr.bf16.mxu0 0
        %4806 = vmatpush1.bf16.msra.mxu0 0
        %4807 = vmatprep.subr.bf16.mxu0 0
        %4808 = vmatpush1.bf16.msra.mxu0 0
        %4809 = vmatprep.subr.bf16.mxu0 0
        %4810 = vmatpush1.bf16.msra.mxu0 0
        %4811 = vmatprep.subr.bf16.mxu0 0
        %4812 = vmatpush1.bf16.msra.mxu0 0
        %4813 = vmatprep.subr.bf16.mxu0 0
        %4814 = vmatpush1.bf16.msra.mxu0 0
        %4815 = vmatprep.subr.bf16.mxu0 0
        %4816 = vmatpush1.bf16.msra.mxu0 0
        %4817 = vmatprep.subr.bf16.mxu0 0
        %4818 = vmatpush1.bf16.msra.mxu0 0
        %4819 = vmatprep.mubr.bf16.mxu0 %v4626
        %4820 = vmatmul.mubr.bf16.gmra.mrb[0].mxu0 %v4438
        %v4821 = vpop.f32.mrb[0].mxu0
        %v4822 = vadd.f32 %v4569, %v4821
        %v4823 = vpop.f32.mrb[0].mxu0
        %v4824 = vpop.f32.mrb[0].mxu0
        %v4825 = vadd.f32 %v4569, %v4824
        %v4826 = vpop.f32.mrb[0].mxu0
        %4827 = vmatprep.mubr.bf16.mxu0 %v4629
        %4828 = vmatmul.mubr.bf16.gmra.mrb[0].mxu0 %v4440
        %v4829 = vpop.f32.mrb[0].mxu0
        %v4830 = vadd.f32 %v4569, %v4829
        %v4831 = vpop.f32.mrb[0].mxu0
        %v4832 = vpop.f32.mrb[0].mxu0
        %v4833 = vadd.f32 %v4569, %v4832
        %v4834 = vpop.f32.mrb[0].mxu0
        %4835 = vmatprep.mubr.bf16.mxu0 %v4632
        %4836 = vmatmul.mubr.bf16.gmra.mrb[0].mxu0 %v4442
        %v4837 = vpop.f32.mrb[0].mxu0
        %v4838 = vadd.f32 %v4569, %v4837
        %v4839 = vpop.f32.mrb[0].mxu0
        %v4840 = vpop.f32.mrb[0].mxu0
        %v4841 = vadd.f32 %v4569, %v4840
        %v4842 = vpop.f32.mrb[0].mxu0
        %4843 = vmatprep.mubr.bf16.mxu0 %v4635
        %4844 = vmatmul.mubr.bf16.gmra.mrb[0].mxu0 %v4444
        %v4845 = vpop.f32.mrb[0].mxu0
        %v4846 = vadd.f32 %v4569, %v4845
        %v4847 = vpop.f32.mrb[0].mxu0
        %v4848 = vpop.f32.mrb[0].mxu0
        %v4849 = vadd.f32 %v4569, %v4848
        %v4850 = vpop.f32.mrb[0].mxu0
        %4851 = vmatprep.mubr.bf16.mxu0 %v4638
        %4852 = vmatmul.mubr.bf16.gmra.mrb[0].mxu0 %v4446
        %v4853 = vpop.f32.mrb[0].mxu0
        %v4854 = vadd.f32 %v4569, %v4853
        %v4855 = vpop.f32.mrb[0].mxu0
        %v4856 = vpop.f32.mrb[0].mxu0
        %v4857 = vadd.f32 %v4569, %v4856
        %v4858 = vpop.f32.mrb[0].mxu0
        %4859 = vmatprep.mubr.bf16.mxu0 %v4641
        %4860 = vmatmul.mubr.bf16.gmra.mrb[0].mxu0 %v4448
        %v4861 = vpop.f32.mrb[0].mxu0
        %v4862 = vadd.f32 %v4569, %v4861
        %v4863 = vpop.f32.mrb[0].mxu0
        %v4864 = vpop.f32.mrb[0].mxu0
        %v4865 = vadd.f32 %v4569, %v4864
        %v4866 = vpop.f32.mrb[0].mxu0
        %4867 = vmatprep.mubr.bf16.mxu0 %v4644
        %4868 = vmatmul.mubr.bf16.gmra.mrb[0].mxu0 %v4450
        %v4869 = vpop.f32.mrb[0].mxu0
        %v4870 = vadd.f32 %v4569, %v4869
        %v4871 = vpop.f32.mrb[0].mxu0
        %v4872 = vpop.f32.mrb[0].mxu0
        %v4873 = vadd.f32 %v4569, %v4872
        %v4874 = vpop.f32.mrb[0].mxu0
        %4875 = vmatprep.mubr.bf16.mxu0 %v4647
        %4876 = vmatmul.mubr.bf16.gmra.mrb[0].mxu0 %v4452
        %v4877 = vpop.f32.mrb[0].mxu0
        %v4878 = vadd.f32 %v4569, %v4877
        %v4879 = vpop.f32.mrb[0].mxu0
        %v4880 = vpop.f32.mrb[0].mxu0
        %v4881 = vadd.f32 %v4569, %v4880
        %v4882 = vpop.f32.mrb[0].mxu0
        %4883 = vmatprep.mubr.bf16.mxu0 %v4650
        %4884 = vmatmul.mubr.bf16.gmra.mrb[0].mxu0 %v4454
        %v4885 = vpop.f32.mrb[0].mxu0
        %v4886 = vadd.f32 %v4569, %v4885
        %v4887 = vpop.f32.mrb[0].mxu0
        %v4888 = vpop.f32.mrb[0].mxu0
        %v4889 = vadd.f32 %v4569, %v4888
        %v4890 = vpop.f32.mrb[0].mxu0
        %4891 = vmatprep.mubr.bf16.mxu0 %v4653
        %4892 = vmatmul.mubr.bf16.gmra.mrb[0].mxu0 %v4456
        %v4893 = vpop.f32.mrb[0].mxu0
        %v4894 = vadd.f32 %v4569, %v4893
        %v4895 = vpop.f32.mrb[0].mxu0
        %v4896 = vpop.f32.mrb[0].mxu0
        %v4897 = vadd.f32 %v4569, %v4896
        %v4898 = vpop.f32.mrb[0].mxu0
        %4899 = vmatprep.mubr.bf16.mxu0 %v4656
        %4900 = vmatmul.mubr.bf16.gmra.mrb[0].mxu0 %v4458
        %v4901 = vpop.f32.mrb[0].mxu0
        %v4902 = vadd.f32 %v4569, %v4901
        %v4903 = vpop.f32.mrb[0].mxu0
        %v4904 = vpop.f32.mrb[0].mxu0
        %v4905 = vadd.f32 %v4569, %v4904
        %v4906 = vpop.f32.mrb[0].mxu0
        %4907 = vmatprep.mubr.bf16.mxu0 %v4659
        %4908 = vmatmul.mubr.bf16.gmra.mrb[0].mxu0 %v4460
        %v4909 = vpop.f32.mrb[0].mxu0
        %v4910 = vadd.f32 %v4569, %v4909
        %v4911 = vpop.f32.mrb[0].mxu0
        %v4912 = vpop.f32.mrb[0].mxu0
        %v4913 = vadd.f32 %v4569, %v4912
        %v4914 = vpop.f32.mrb[0].mxu0
        %4915 = vmatprep.mubr.bf16.mxu0 %v4662
        %4916 = vmatmul.mubr.bf16.gmra.mrb[0].mxu0 %v4462
        %v4917 = vpop.f32.mrb[0].mxu0
        %v4918 = vadd.f32 %v4569, %v4917
        %v4919 = vpop.f32.mrb[0].mxu0
        %v4920 = vpop.f32.mrb[0].mxu0
        %v4921 = vadd.f32 %v4569, %v4920
        %v4922 = vpop.f32.mrb[0].mxu0
        %4923 = vmatprep.mubr.bf16.mxu0 %v4665
        %4924 = vmatmul.mubr.bf16.gmra.mrb[0].mxu0 %v4464
        %v4925 = vpop.f32.mrb[0].mxu0
        %v4926 = vadd.f32 %v4569, %v4925
        %v4927 = vpop.f32.mrb[0].mxu0
        %v4928 = vpop.f32.mrb[0].mxu0
        %v4929 = vadd.f32 %v4569, %v4928
        %v4930 = vpop.f32.mrb[0].mxu0
        %4931 = vmatprep.mubr.bf16.mxu0 %v4668
        %4932 = vmatmul.mubr.bf16.gmra.mrb[0].mxu0 %v4466
        %v4933 = vpop.f32.mrb[0].mxu0
        %v4934 = vadd.f32 %v4569, %v4933
        %v4935 = vpop.f32.mrb[0].mxu0
        %v4936 = vpop.f32.mrb[0].mxu0
        %v4937 = vadd.f32 %v4569, %v4936
        %v4938 = vpop.f32.mrb[0].mxu0
        %4939 = vmatprep.mubr.bf16.mxu0 %v4671
        %4940 = vmatmul.mubr.bf16.gmra.mrb[0].mxu0 %v4468
        %v4941 = vpop.f32.mrb[0].mxu0
        %v4942 = vadd.f32 %v4569, %v4941
        %v4943 = vpop.f32.mrb[0].mxu0
        %v4944 = vpop.f32.mrb[0].mxu0
        %v4945 = vadd.f32 %v4569, %v4944
        %v4946 = vpop.f32.mrb[0].mxu0
        %4947 = vmatprep.mubr.bf16.mxu0 %v4674
        %4948 = vmatmul.mubr.bf16.gmra.mrb[0].mxu0 %v4470
        %v4949 = vpop.f32.mrb[0].mxu0
        %v4950 = vadd.f32 %v4569, %v4949
        %v4951 = vpop.f32.mrb[0].mxu0
        %v4952 = vpop.f32.mrb[0].mxu0
        %v4953 = vadd.f32 %v4569, %v4952
        %v4954 = vpop.f32.mrb[0].mxu0
        %4955 = vmatprep.mubr.bf16.mxu0 %v4677
        %4956 = vmatmul.mubr.bf16.gmra.mrb[0].mxu0 %v4472
        %v4957 = vpop.f32.mrb[0].mxu0
        %v4958 = vadd.f32 %v4569, %v4957
        %v4959 = vpop.f32.mrb[0].mxu0
        %v4960 = vpop.f32.mrb[0].mxu0
        %v4961 = vadd.f32 %v4569, %v4960
        %v4962 = vpop.f32.mrb[0].mxu0
        %4963 = vmatprep.mubr.bf16.mxu0 %v4680
        %4964 = vmatmul.mubr.bf16.gmra.mrb[0].mxu0 %v4474
        %v4965 = vpop.f32.mrb[0].mxu0
        %v4966 = vadd.f32 %v4569, %v4965
        %v4967 = vpop.f32.mrb[0].mxu0
        %v4968 = vpop.f32.mrb[0].mxu0
        %v4969 = vadd.f32 %v4569, %v4968
        %v4970 = vpop.f32.mrb[0].mxu0
        %4971 = vmatprep.mubr.bf16.mxu0 %v4683
        %4972 = vmatmul.mubr.bf16.gmra.mrb[0].mxu0 %v4476
        %v4973 = vpop.f32.mrb[0].mxu0
        %v4974 = vadd.f32 %v4569, %v4973
        %v4975 = vpop.f32.mrb[0].mxu0
        %v4976 = vpop.f32.mrb[0].mxu0
        %v4977 = vadd.f32 %v4569, %v4976
        %v4978 = vpop.f32.mrb[0].mxu0
        %4979 = vmatprep.mubr.bf16.mxu0 %v4686
        %4980 = vmatmul.mubr.bf16.gmra.mrb[0].mxu0 %v4478
        %v4981 = vpop.f32.mrb[0].mxu0
        %v4982 = vadd.f32 %v4569, %v4981
        %v4983 = vpop.f32.mrb[0].mxu0
        %v4984 = vpop.f32.mrb[0].mxu0
        %v4985 = vadd.f32 %v4569, %v4984
        %v4986 = vpop.f32.mrb[0].mxu0
        %4987 = vmatprep.mubr.bf16.mxu0 %v4689
        %4988 = vmatmul.mubr.bf16.gmra.mrb[0].mxu0 %v4480
        %v4989 = vpop.f32.mrb[0].mxu0
        %v4990 = vadd.f32 %v4569, %v4989
        %v4991 = vpop.f32.mrb[0].mxu0
        %v4992 = vpop.f32.mrb[0].mxu0
        %v4993 = vadd.f32 %v4569, %v4992
        %v4994 = vpop.f32.mrb[0].mxu0
        %4995 = vmatprep.mubr.bf16.mxu0 %v4692
        %4996 = vmatmul.mubr.bf16.gmra.mrb[0].mxu0 %v4482
        %v4997 = vpop.f32.mrb[0].mxu0
        %v4998 = vadd.f32 %v4569, %v4997
        %v4999 = vpop.f32.mrb[0].mxu0
        %v5000 = vpop.f32.mrb[0].mxu0
        %v5001 = vadd.f32 %v4569, %v5000
        %v5002 = vpop.f32.mrb[0].mxu0
        %5003 = vmatprep.mubr.bf16.mxu0 %v4695
        %5004 = vmatmul.mubr.bf16.gmra.mrb[0].mxu0 %v4484
        %v5005 = vpop.f32.mrb[0].mxu0
        %v5006 = vadd.f32 %v4569, %v5005
        %v5007 = vpop.f32.mrb[0].mxu0
        %v5008 = vpop.f32.mrb[0].mxu0
        %v5009 = vadd.f32 %v4569, %v5008
        %v5010 = vpop.f32.mrb[0].mxu0
        %5011 = vmatprep.mubr.bf16.mxu0 %v4698
        %5012 = vmatmul.mubr.bf16.gmra.mrb[0].mxu0 %v4486
        %v5013 = vpop.f32.mrb[0].mxu0
        %v5014 = vadd.f32 %v4569, %v5013
        %v5015 = vpop.f32.mrb[0].mxu0
        %v5016 = vpop.f32.mrb[0].mxu0
        %v5017 = vadd.f32 %v4569, %v5016
        %v5018 = vpop.f32.mrb[0].mxu0
        %5019 = vmatprep.mubr.bf16.mxu0 %v4701
        %5020 = vmatmul.mubr.bf16.gmra.mrb[0].mxu0 %v4488
        %v5021 = vpop.f32.mrb[0].mxu0
        %v5022 = vadd.f32 %v4569, %v5021
        %v5023 = vpop.f32.mrb[0].mxu0
        %v5024 = vpop.f32.mrb[0].mxu0
        %v5025 = vadd.f32 %v4569, %v5024
        %v5026 = vpop.f32.mrb[0].mxu0
        %5027 = vmatprep.mubr.bf16.mxu0 %v4704
        %5028 = vmatmul.mubr.bf16.gmra.mrb[0].mxu0 %v4490
        %v5029 = vpop.f32.mrb[0].mxu0
        %v5030 = vadd.f32 %v4569, %v5029
        %v5031 = vpop.f32.mrb[0].mxu0
        %v5032 = vpop.f32.mrb[0].mxu0
        %v5033 = vadd.f32 %v4569, %v5032
        %v5034 = vpop.f32.mrb[0].mxu0
        %5035 = vmatprep.mubr.bf16.mxu0 %v4707
        %5036 = vmatmul.mubr.bf16.gmra.mrb[0].mxu0 %v4492
        %v5037 = vpop.f32.mrb[0].mxu0
        %v5038 = vadd.f32 %v4569, %v5037
        %v5039 = vpop.f32.mrb[0].mxu0
        %v5040 = vpop.f32.mrb[0].mxu0
        %v5041 = vadd.f32 %v4569, %v5040
        %v5042 = vpop.f32.mrb[0].mxu0
        %5043 = vmatprep.mubr.bf16.mxu0 %v4710
        %5044 = vmatmul.mubr.bf16.gmra.mrb[0].mxu0 %v4494
        %v5045 = vpop.f32.mrb[0].mxu0
        %v5046 = vadd.f32 %v4569, %v5045
        %v5047 = vpop.f32.mrb[0].mxu0
        %v5048 = vpop.f32.mrb[0].mxu0
        %v5049 = vadd.f32 %v4569, %v5048
        %v5050 = vpop.f32.mrb[0].mxu0
        %5051 = vmatprep.mubr.bf16.mxu0 %v4713
        %5052 = vmatmul.mubr.bf16.gmra.mrb[0].mxu0 %v4496
        %v5053 = vpop.f32.mrb[0].mxu0
        %v5054 = vadd.f32 %v4569, %v5053
        %v5055 = vpop.f32.mrb[0].mxu0
        %v5056 = vpop.f32.mrb[0].mxu0
        %v5057 = vadd.f32 %v4569, %v5056
        %v5058 = vpop.f32.mrb[0].mxu0
        %5059 = vmatprep.mubr.bf16.mxu0 %v4716
        %5060 = vmatmul.mubr.bf16.gmra.mrb[0].mxu0 %v4498
        %v5061 = vpop.f32.mrb[0].mxu0
        %v5062 = vadd.f32 %v4569, %v5061
        %v5063 = vpop.f32.mrb[0].mxu0
        %v5064 = vpop.f32.mrb[0].mxu0
        %v5065 = vadd.f32 %v4569, %v5064
        %v5066 = vpop.f32.mrb[0].mxu0
        %5067 = vmatprep.mubr.bf16.mxu0 %v4719
        %5068 = vmatmul.mubr.bf16.gmra.mrb[0].mxu0 %v4500
        %v5069 = vpop.f32.mrb[0].mxu0
        %v5070 = vadd.f32 %v4569, %v5069
        %v5071 = vpop.f32.mrb[0].mxu0
        %v5072 = vpop.f32.mrb[0].mxu0
        %v5073 = vadd.f32 %v4569, %v5072
        %v5074 = vpop.f32.mrb[0].mxu0
        %5075 = vmatprep.mubr.bf16.mxu0 %v4722
        %5076 = vmatmul.mubr.bf16.gmra.mrb[0].mxu0 %v4502
        %v5077 = vpop.f32.mrb[0].mxu0
        %v5078 = vadd.f32 %v4569, %v5077
        %v5079 = vpop.f32.mrb[0].mxu0
        %v5080 = vpop.f32.mrb[0].mxu0
        %v5081 = vadd.f32 %v4569, %v5080
        %v5082 = vpop.f32.mrb[0].mxu0
        %5083 = vmatprep.mubr.bf16.mxu0 %v4725
        %5084 = vmatmul.mubr.bf16.gmra.mrb[0].mxu0 %v4504
        %v5085 = vpop.f32.mrb[0].mxu0
        %v5086 = vadd.f32 %v4569, %v5085
        %v5087 = vpop.f32.mrb[0].mxu0
        %v5088 = vpop.f32.mrb[0].mxu0
        %v5089 = vadd.f32 %v4569, %v5088
        %v5090 = vpop.f32.mrb[0].mxu0
        %5091 = vmatprep.mubr.bf16.mxu0 %v4728
        %5092 = vmatmul.mubr.bf16.gmra.mrb[0].mxu0 %v4506
        %v5093 = vpop.f32.mrb[0].mxu0
        %v5094 = vadd.f32 %v4569, %v5093
        %v5095 = vpop.f32.mrb[0].mxu0
        %v5096 = vpop.f32.mrb[0].mxu0
        %v5097 = vadd.f32 %v4569, %v5096
        %v5098 = vpop.f32.mrb[0].mxu0
        %5099 = vmatprep.mubr.bf16.mxu0 %v4731
        %5100 = vmatmul.mubr.bf16.gmra.mrb[0].mxu0 %v4508
        %v5101 = vpop.f32.mrb[0].mxu0
        %v5102 = vadd.f32 %v4569, %v5101
        %v5103 = vpop.f32.mrb[0].mxu0
        %v5104 = vpop.f32.mrb[0].mxu0
        %v5105 = vadd.f32 %v4569, %v5104
        %v5106 = vpop.f32.mrb[0].mxu0
        %5107 = vmatprep.mubr.bf16.mxu0 %v4734
        %5108 = vmatmul.mubr.bf16.gmra.mrb[0].mxu0 %v4510
        %v5109 = vpop.f32.mrb[0].mxu0
        %v5110 = vadd.f32 %v4569, %v5109
        %v5111 = vpop.f32.mrb[0].mxu0
        %v5112 = vpop.f32.mrb[0].mxu0
        %v5113 = vadd.f32 %v4569, %v5112
        %v5114 = vpop.f32.mrb[0].mxu0
        %5115 = vmatprep.mubr.bf16.mxu0 %v4737
        %5116 = vmatmul.mubr.bf16.gmra.mrb[0].mxu0 %v4512
        %v5117 = vpop.f32.mrb[0].mxu0
        %v5118 = vadd.f32 %v4569, %v5117
        %v5119 = vpop.f32.mrb[0].mxu0
        %v5120 = vpop.f32.mrb[0].mxu0
        %v5121 = vadd.f32 %v4569, %v5120
        %v5122 = vpop.f32.mrb[0].mxu0
        %5123 = vmatprep.mubr.bf16.mxu0 %v4740
        %5124 = vmatmul.mubr.bf16.gmra.mrb[0].mxu0 %v4514
        %v5125 = vpop.f32.mrb[0].mxu0
        %v5126 = vadd.f32 %v4569, %v5125
        %v5127 = vpop.f32.mrb[0].mxu0
        %v5128 = vpop.f32.mrb[0].mxu0
        %v5129 = vadd.f32 %v4569, %v5128
        %v5130 = vpop.f32.mrb[0].mxu0
        %5131 = vmatprep.mubr.bf16.mxu0 %v4743
        %5132 = vmatmul.mubr.bf16.gmra.mrb[0].mxu0 %v4516
        %v5133 = vpop.f32.mrb[0].mxu0
        %v5134 = vadd.f32 %v4569, %v5133
        %v5135 = vpop.f32.mrb[0].mxu0
        %v5136 = vpop.f32.mrb[0].mxu0
        %v5137 = vadd.f32 %v4569, %v5136
        %v5138 = vpop.f32.mrb[0].mxu0
        %5139 = vmatprep.mubr.bf16.mxu0 %v4746
        %5140 = vmatmul.mubr.bf16.gmra.mrb[0].mxu0 %v4518
        %v5141 = vpop.f32.mrb[0].mxu0
        %v5142 = vadd.f32 %v4569, %v5141
        %v5143 = vpop.f32.mrb[0].mxu0
        %v5144 = vpop.f32.mrb[0].mxu0
        %v5145 = vadd.f32 %v4569, %v5144
        %v5146 = vpop.f32.mrb[0].mxu0
        %5147 = vmatprep.mubr.bf16.mxu0 %v4749
        %5148 = vmatmul.mubr.bf16.gmra.mrb[0].mxu0 %v4520
        %v5149 = vpop.f32.mrb[0].mxu0
        %v5150 = vadd.f32 %v4569, %v5149
        %v5151 = vpop.f32.mrb[0].mxu0
        %v5152 = vpop.f32.mrb[0].mxu0
        %v5153 = vadd.f32 %v4569, %v5152
        %v5154 = vpop.f32.mrb[0].mxu0
        %5155 = vmatprep.mubr.bf16.mxu0 %v4752
        %5156 = vmatmul.mubr.bf16.gmra.mrb[0].mxu0 %v4522
        %v5157 = vpop.f32.mrb[0].mxu0
        %v5158 = vadd.f32 %v4569, %v5157
        %v5159 = vpop.f32.mrb[0].mxu0
        %v5160 = vpop.f32.mrb[0].mxu0
        %v5161 = vadd.f32 %v4569, %v5160
        %v5162 = vpop.f32.mrb[0].mxu0
        %5163 = vmatprep.mubr.bf16.mxu0 %v4755
        %5164 = vmatmul.mubr.bf16.gmra.mrb[0].mxu0 %v4524
        %v5165 = vpop.f32.mrb[0].mxu0
        %v5166 = vadd.f32 %v4569, %v5165
        %v5167 = vpop.f32.mrb[0].mxu0
        %v5168 = vpop.f32.mrb[0].mxu0
        %v5169 = vadd.f32 %v4569, %v5168
        %v5170 = vpop.f32.mrb[0].mxu0
        %5171 = vmatprep.mubr.bf16.mxu0 %v4758
        %5172 = vmatmul.mubr.bf16.gmra.mrb[0].mxu0 %v4526
        %v5173 = vpop.f32.mrb[0].mxu0
        %v5174 = vadd.f32 %v4569, %v5173
        %v5175 = vpop.f32.mrb[0].mxu0
        %v5176 = vpop.f32.mrb[0].mxu0
        %v5177 = vadd.f32 %v4569, %v5176
        %v5178 = vpop.f32.mrb[0].mxu0
        %5179 = vmatprep.mubr.bf16.mxu0 %v4761
        %5180 = vmatmul.mubr.bf16.gmra.mrb[0].mxu0 %v4528
        %v5181 = vpop.f32.mrb[0].mxu0
        %v5182 = vadd.f32 %v4569, %v5181
        %v5183 = vpop.f32.mrb[0].mxu0
        %v5184 = vpop.f32.mrb[0].mxu0
        %v5185 = vadd.f32 %v4569, %v5184
        %v5186 = vpop.f32.mrb[0].mxu0
        %5187 = vmatprep.mubr.bf16.mxu0 %v4764
        %5188 = vmatmul.mubr.bf16.gmra.mrb[0].mxu0 %v4530
        %v5189 = vpop.f32.mrb[0].mxu0
        %v5190 = vadd.f32 %v4569, %v5189
        %v5191 = vpop.f32.mrb[0].mxu0
        %v5192 = vpop.f32.mrb[0].mxu0
        %v5193 = vadd.f32 %v4569, %v5192
        %v5194 = vpop.f32.mrb[0].mxu0
        %5195 = vmatprep.mubr.bf16.mxu0 %v4767
        %5196 = vmatmul.mubr.bf16.gmra.mrb[0].mxu0 %v4532
        %v5197 = vpop.f32.mrb[0].mxu0
        %v5198 = vadd.f32 %v4569, %v5197
        %v5199 = vpop.f32.mrb[0].mxu0
        %v5200 = vpop.f32.mrb[0].mxu0
        %v5201 = vadd.f32 %v4569, %v5200
        %v5202 = vpop.f32.mrb[0].mxu0
        %5203 = vmatprep.mubr.bf16.mxu0 %v4770
        %5204 = vmatmul.mubr.bf16.gmra.mrb[0].mxu0 %v4534
        %v5205 = vpop.f32.mrb[0].mxu0
        %v5206 = vadd.f32 %v4569, %v5205
        %v5207 = vpop.f32.mrb[0].mxu0
        %v5208 = vpop.f32.mrb[0].mxu0
        %v5209 = vadd.f32 %v4569, %v5208
        %v5210 = vpop.f32.mrb[0].mxu0
        %5211 = vmatprep.mubr.bf16.mxu0 %v4773
        %5212 = vmatmul.mubr.bf16.gmra.mrb[0].mxu0 %v4536
        %v5213 = vpop.f32.mrb[0].mxu0
        %v5214 = vadd.f32 %v4569, %v5213
        %v5215 = vpop.f32.mrb[0].mxu0
        %v5216 = vpop.f32.mrb[0].mxu0
        %v5217 = vadd.f32 %v4569, %v5216
        %v5218 = vpop.f32.mrb[0].mxu0
        %5219 = vmatprep.mubr.bf16.mxu0 %v4776
        %5220 = vmatmul.mubr.bf16.gmra.mrb[0].mxu0 %v4538
        %v5221 = vpop.f32.mrb[0].mxu0
        %v5222 = vadd.f32 %v4569, %v5221
        %v5223 = vpop.f32.mrb[0].mxu0
        %v5224 = vpop.f32.mrb[0].mxu0
        %v5225 = vadd.f32 %v4569, %v5224
        %v5226 = vpop.f32.mrb[0].mxu0
        %5227 = vmatprep.mubr.bf16.mxu0 %v4779
        %5228 = vmatmul.mubr.bf16.gmra.mrb[0].mxu0 %v4540
        %v5229 = vpop.f32.mrb[0].mxu0
        %v5230 = vadd.f32 %v4569, %v5229
        %v5231 = vpop.f32.mrb[0].mxu0
        %v5232 = vpop.f32.mrb[0].mxu0
        %v5233 = vadd.f32 %v4569, %v5232
        %v5234 = vpop.f32.mrb[0].mxu0
        %5235 = vmatprep.mubr.bf16.mxu0 %v4782
        %5236 = vmatmul.mubr.bf16.gmra.mrb[0].mxu0 %v4542
        %v5237 = vpop.f32.mrb[0].mxu0
        %v5238 = vadd.f32 %v4569, %v5237
        %v5239 = vpop.f32.mrb[0].mxu0
        %v5240 = vpop.f32.mrb[0].mxu0
        %v5241 = vadd.f32 %v4569, %v5240
        %v5242 = vpop.f32.mrb[0].mxu0
        %5243 = vmatprep.mubr.bf16.mxu0 %v4785
        %5244 = vmatmul.mubr.bf16.gmra.mrb[0].mxu0 %v4544
        %v5245 = vpop.f32.mrb[0].mxu0
        %v5246 = vadd.f32 %v4569, %v5245
        %v5247 = vpop.f32.mrb[0].mxu0
        %v5248 = vpop.f32.mrb[0].mxu0
        %v5249 = vadd.f32 %v4569, %v5248
        %v5250 = vpop.f32.mrb[0].mxu0
        %5251 = vdwg.mxu0
        %v5252 = vmax.f32 %v4822, 0.0
        %v5253 = vmax.f32 %v4825, 0.0
        %v5254 = vmax.f32 %v4830, 0.0
        %v5255 = vmax.f32 %v4833, 0.0
        %v5256 = vmax.f32 %v4838, 0.0
        %v5257 = vmax.f32 %v4841, 0.0
        %v5258 = vmax.f32 %v4846, 0.0
        %v5259 = vmax.f32 %v4849, 0.0
        %v5260 = vmax.f32 %v4854, 0.0
        %v5261 = vmax.f32 %v4857, 0.0
        %v5262 = vmax.f32 %v4862, 0.0
        %v5263 = vmax.f32 %v4865, 0.0
        %v5264 = vmax.f32 %v4870, 0.0
        %v5265 = vmax.f32 %v4873, 0.0
        %v5266 = vmax.f32 %v4878, 0.0
        %v5267 = vmax.f32 %v4881, 0.0
        %v5268 = vmax.f32 %v4886, 0.0
        %v5269 = vmax.f32 %v4889, 0.0
        %v5270 = vmax.f32 %v4894, 0.0
        %v5271 = vmax.f32 %v4897, 0.0
        %v5272 = vmax.f32 %v4902, 0.0
        %v5273 = vmax.f32 %v4905, 0.0
        %v5274 = vmax.f32 %v4910, 0.0
        %v5275 = vmax.f32 %v4913, 0.0
        %v5276 = vmax.f32 %v4918, 0.0
        %v5277 = vmax.f32 %v4921, 0.0
        %v5278 = vmax.f32 %v4926, 0.0
        %v5279 = vmax.f32 %v4929, 0.0
        %v5280 = vmax.f32 %v4934, 0.0
        %v5281 = vmax.f32 %v4937, 0.0
        %v5282 = vmax.f32 %v4942, 0.0
        %v5283 = vmax.f32 %v4945, 0.0
        %v5284 = vmax.f32 %v4950, 0.0
        %v5285 = vmax.f32 %v4953, 0.0
        %v5286 = vmax.f32 %v4958, 0.0
        %v5287 = vmax.f32 %v4961, 0.0
        %v5288 = vmax.f32 %v4966, 0.0
        %v5289 = vmax.f32 %v4969, 0.0
        %v5290 = vmax.f32 %v4974, 0.0
        %v5291 = vmax.f32 %v4977, 0.0
        %v5292 = vmax.f32 %v4982, 0.0
        %v5293 = vmax.f32 %v4985, 0.0
        %v5294 = vmax.f32 %v4990, 0.0
        %v5295 = vmax.f32 %v4993, 0.0
        %v5296 = vmax.f32 %v4998, 0.0
        %v5297 = vmax.f32 %v5001, 0.0
        %v5298 = vmax.f32 %v5006, 0.0
        %v5299 = vmax.f32 %v5009, 0.0
        %v5300 = vmax.f32 %v5014, 0.0
        %v5301 = vmax.f32 %v5017, 0.0
        %v5302 = vmax.f32 %v5022, 0.0
        %v5303 = vmax.f32 %v5025, 0.0
        %v5304 = vmax.f32 %v5030, 0.0
        %v5305 = vmax.f32 %v5033, 0.0
        %v5306 = vmax.f32 %v5038, 0.0
        %v5307 = vmax.f32 %v5041, 0.0
        %v5308 = vmax.f32 %v5046, 0.0
        %v5309 = vmax.f32 %v5049, 0.0
        %v5310 = vmax.f32 %v5054, 0.0
        %v5311 = vmax.f32 %v5057, 0.0
        %v5312 = vmax.f32 %v5062, 0.0
        %v5313 = vmax.f32 %v5065, 0.0
        %v5314 = vmax.f32 %v5070, 0.0
        %v5315 = vmax.f32 %v5073, 0.0
        %v5316 = vmax.f32 %v5078, 0.0
        %v5317 = vmax.f32 %v5081, 0.0
        %v5318 = vmax.f32 %v5086, 0.0
        %v5319 = vmax.f32 %v5089, 0.0
        %v5320 = vmax.f32 %v5094, 0.0
        %v5321 = vmax.f32 %v5097, 0.0
        %v5322 = vmax.f32 %v5102, 0.0
        %v5323 = vmax.f32 %v5105, 0.0
        %v5324 = vmax.f32 %v5110, 0.0
        %v5325 = vmax.f32 %v5113, 0.0
        %v5326 = vmax.f32 %v5118, 0.0
        %v5327 = vmax.f32 %v5121, 0.0
        %v5328 = vmax.f32 %v5126, 0.0
        %v5329 = vmax.f32 %v5129, 0.0
        %v5330 = vmax.f32 %v5134, 0.0
        %v5331 = vmax.f32 %v5137, 0.0
        %v5332 = vmax.f32 %v5142, 0.0
        %v5333 = vmax.f32 %v5145, 0.0
        %v5334 = vmax.f32 %v5150, 0.0
        %v5335 = vmax.f32 %v5153, 0.0
        %v5336 = vmax.f32 %v5158, 0.0
        %v5337 = vmax.f32 %v5161, 0.0
        %v5338 = vmax.f32 %v5166, 0.0
        %v5339 = vmax.f32 %v5169, 0.0
        %v5340 = vmax.f32 %v5174, 0.0
        %v5341 = vmax.f32 %v5177, 0.0
        %v5342 = vmax.f32 %v5182, 0.0
        %v5343 = vmax.f32 %v5185, 0.0
        %v5344 = vmax.f32 %v5190, 0.0
        %v5345 = vmax.f32 %v5193, 0.0
        %v5346 = vmax.f32 %v5198, 0.0
        %v5347 = vmax.f32 %v5201, 0.0
        %v5348 = vmax.f32 %v5206, 0.0
        %v5349 = vmax.f32 %v5209, 0.0
        %v5350 = vmax.f32 %v5214, 0.0
        %v5351 = vmax.f32 %v5217, 0.0
        %v5352 = vmax.f32 %v5222, 0.0
        %v5353 = vmax.f32 %v5225, 0.0
        %v5354 = vmax.f32 %v5230, 0.0
        %v5355 = vmax.f32 %v5233, 0.0
        %v5356 = vmax.f32 %v5238, 0.0
        %v5357 = vmax.f32 %v5241, 0.0
        %v5358 = vmax.f32 %v5246, 0.0
        %v5359 = vmax.f32 %v5249, 0.0
        %v5360 = vld [vmem:[%s2] sm:$0xff]
        %v5361 = vld [vmem:[%s2 + $0x8] sm:$0xff]
        %v5362 = vld [vmem:[%s2 + $0x10] sm:$0xff]
        %v5363 = vld [vmem:[%s2 + $0x18] sm:$0xff]
        %v5364 = vld [vmem:[%s2 + $0x20] sm:$0xff]
        %v5365 = vld [vmem:[%s2 + $0x28] sm:$0xff]
        %v5366 = vld [vmem:[%s2 + $0x30] sm:$0xff]
        %v5367 = vld [vmem:[%s2 + $0x38] sm:$0xff]
        %v5368 = vld [vmem:[%s2 + $0x40] sm:$0xff]
        %v5369 = vld [vmem:[%s2 + $0x48] sm:$0xff]
        %v5370 = vld [vmem:[%s2 + $0x50] sm:$0xff]
        %v5371 = vld [vmem:[%s2 + $0x58] sm:$0xff]
        %v5372 = vld [vmem:[%s2 + $0x60] sm:$0xff]
        %v5373 = vld [vmem:[%s2 + $0x68] sm:$0xff]
        %v5374 = vld [vmem:[%s2 + $0x70] sm:$0xff]
        %v5375 = vld [vmem:[%s2 + $0x78] sm:$0xff]
        %v5376 = vld [vmem:[%s2 + $0x80] sm:$0xff]
        %v5377 = vld [vmem:[%s2 + $0x88] sm:$0xff]
        %v5378 = vld [vmem:[%s2 + $0x90] sm:$0xff]
        %v5379 = vld [vmem:[%s2 + $0x98] sm:$0xff]
        %v5380 = vld [vmem:[%s2 + $0xa0] sm:$0xff]
        %v5381 = vld [vmem:[%s2 + $0xa8] sm:$0xff]
        %v5382 = vld [vmem:[%s2 + $0xb0] sm:$0xff]
        %v5383 = vld [vmem:[%s2 + $0xb8] sm:$0xff]
        %v5384 = vld [vmem:[%s2 + $0xc0] sm:$0xff]
        %v5385 = vld [vmem:[%s2 + $0xc8] sm:$0xff]
        %v5386 = vld [vmem:[%s2 + $0xd0] sm:$0xff]
        %v5387 = vld [vmem:[%s2 + $0xd8] sm:$0xff]
        %v5388 = vld [vmem:[%s2 + $0xe0] sm:$0xff]
        %v5389 = vld [vmem:[%s2 + $0xe8] sm:$0xff]
        %v5390 = vld [vmem:[%s2 + $0xf0] sm:$0xff]
        %v5391 = vld [vmem:[%s2 + $0xf8] sm:$0xff]
        %v5392 = vld [vmem:[%s2 + $0x100] sm:$0xff]
        %v5393 = vld [vmem:[%s2 + $0x108] sm:$0xff]
        %v5394 = vld [vmem:[%s2 + $0x110] sm:$0xff]
        %v5395 = vld [vmem:[%s2 + $0x118] sm:$0xff]
        %v5396 = vld [vmem:[%s2 + $0x120] sm:$0xff]
        %v5397 = vld [vmem:[%s2 + $0x128] sm:$0xff]
        %v5398 = vld [vmem:[%s2 + $0x130] sm:$0xff]
        %v5399 = vld [vmem:[%s2 + $0x138] sm:$0xff]
        %v5400 = vld [vmem:[%s2 + $0x140] sm:$0xff]
        %v5401 = vld [vmem:[%s2 + $0x148] sm:$0xff]
        %v5402 = vld [vmem:[%s2 + $0x150] sm:$0xff]
        %v5403 = vld [vmem:[%s2 + $0x158] sm:$0xff]
        %v5404 = vld [vmem:[%s2 + $0x160] sm:$0xff]
        %v5405 = vld [vmem:[%s2 + $0x168] sm:$0xff]
        %v5406 = vld [vmem:[%s2 + $0x170] sm:$0xff]
        %v5407 = vld [vmem:[%s2 + $0x178] sm:$0xff]
        %v5408 = vld [vmem:[%s2 + $0x180] sm:$0xff]
        %v5409 = vld [vmem:[%s2 + $0x188] sm:$0xff]
        %v5410 = vld [vmem:[%s2 + $0x190] sm:$0xff]
        %v5411 = vld [vmem:[%s2 + $0x198] sm:$0xff]
        %v5412 = vld [vmem:[%s2 + $0x1a0] sm:$0xff]
        %v5413 = vld [vmem:[%s2 + $0x1a8] sm:$0xff]
        %v5414 = vld [vmem:[%s2 + $0x1b0] sm:$0xff]
        %v5415 = vld [vmem:[%s2 + $0x1b8] sm:$0xff]
        %v5416 = vld [vmem:[%s2 + $0x1c0] sm:$0xff]
        %v5417 = vld [vmem:[%s2 + $0x1c8] sm:$0xff]
        %v5418 = vld [vmem:[%s2 + $0x1d0] sm:$0xff]
        %v5419 = vld [vmem:[%s2 + $0x1d8] sm:$0xff]
        %v5420 = vld [vmem:[%s2 + $0x1e0] sm:$0xff]
        %v5421 = vld [vmem:[%s2 + $0x1e8] sm:$0xff]
        %v5422 = vld [vmem:[%s2 + $0x1f0] sm:$0xff]
        %v5423 = vld [vmem:[%s2 + $0x1f8] sm:$0xff]
        %v5424 = vld [vmem:[%s2 + $0x200] sm:$0xff]
        %v5425 = vld [vmem:[%s2 + $0x208] sm:$0xff]
        %v5426 = vld [vmem:[%s2 + $0x210] sm:$0xff]
        %v5427 = vld [vmem:[%s2 + $0x218] sm:$0xff]
        %v5428 = vld [vmem:[%s2 + $0x220] sm:$0xff]
        %v5429 = vld [vmem:[%s2 + $0x228] sm:$0xff]
        %v5430 = vld [vmem:[%s2 + $0x230] sm:$0xff]
        %v5431 = vld [vmem:[%s2 + $0x238] sm:$0xff]
        %v5432 = vld [vmem:[%s2 + $0x240] sm:$0xff]
        %v5433 = vld [vmem:[%s2 + $0x248] sm:$0xff]
        %v5434 = vld [vmem:[%s2 + $0x250] sm:$0xff]
        %v5435 = vld [vmem:[%s2 + $0x258] sm:$0xff]
        %v5436 = vld [vmem:[%s2 + $0x260] sm:$0xff]
        %v5437 = vld [vmem:[%s2 + $0x268] sm:$0xff]
        %v5438 = vld [vmem:[%s2 + $0x270] sm:$0xff]
        %v5439 = vld [vmem:[%s2 + $0x278] sm:$0xff]
        %v5440 = vld [vmem:[%s2 + $0x280] sm:$0xff]
        %v5441 = vld [vmem:[%s2 + $0x288] sm:$0xff]
        %v5442 = vld [vmem:[%s2 + $0x290] sm:$0xff]
        %v5443 = vld [vmem:[%s2 + $0x298] sm:$0xff]
        %v5444 = vld [vmem:[%s2 + $0x2a0] sm:$0xff]
        %v5445 = vld [vmem:[%s2 + $0x2a8] sm:$0xff]
        %v5446 = vld [vmem:[%s2 + $0x2b0] sm:$0xff]
        %v5447 = vld [vmem:[%s2 + $0x2b8] sm:$0xff]
        %v5448 = vld [vmem:[%s2 + $0x2c0] sm:$0xff]
        %v5449 = vld [vmem:[%s2 + $0x2c8] sm:$0xff]
        %v5450 = vld [vmem:[%s2 + $0x2d0] sm:$0xff]
        %v5451 = vld [vmem:[%s2 + $0x2d8] sm:$0xff]
        %v5452 = vld [vmem:[%s2 + $0x2e0] sm:$0xff]
        %v5453 = vld [vmem:[%s2 + $0x2e8] sm:$0xff]
        %v5454 = vld [vmem:[%s2 + $0x2f0] sm:$0xff]
        %v5455 = vld [vmem:[%s2 + $0x2f8] sm:$0xff]
        %v5456 = vld [vmem:[%s2 + $0x300] sm:$0xff]
        %v5457 = vld [vmem:[%s2 + $0x308] sm:$0xff]
        %v5458 = vld [vmem:[%s2 + $0x310] sm:$0xff]
        %v5459 = vld [vmem:[%s2 + $0x318] sm:$0xff]
        %v5460 = vld [vmem:[%s2 + $0x320] sm:$0xff]
        %v5461 = vld [vmem:[%s2 + $0x328] sm:$0xff]
        %v5462 = vld [vmem:[%s2 + $0x330] sm:$0xff]
        %v5463 = vld [vmem:[%s2 + $0x338] sm:$0xff]
        %v5464 = vld [vmem:[%s2 + $0x340] sm:$0xff]
        %v5465 = vld [vmem:[%s2 + $0x348] sm:$0xff]
        %v5466 = vld [vmem:[%s2 + $0x350] sm:$0xff]
        %v5467 = vld [vmem:[%s2 + $0x358] sm:$0xff]
        %5469 = vset.pattern.permute.xlu0 0
        %5470 = vperm.xlu0 %5469, %v5360
        %v5471 = vpop.permute.xlu0 %5470
        %5474 = vset.pattern.permute.xlu0 0
        %5475 = vperm.xlu0 %5474, %v5361
        %v5476 = vpop.permute.xlu0 %5475
        %5479 = vset.pattern.permute.xlu0 0
        %5480 = vperm.xlu0 %5479, %v5362
        %v5481 = vpop.permute.xlu0 %5480
        %5484 = vset.pattern.permute.xlu0 0
        %5485 = vperm.xlu0 %5484, %v5363
        %v5486 = vpop.permute.xlu0 %5485
        %5489 = vset.pattern.permute.xlu0 0
        %5490 = vperm.xlu0 %5489, %v5364
        %v5491 = vpop.permute.xlu0 %5490
        %5494 = vset.pattern.permute.xlu0 0
        %5495 = vperm.xlu0 %5494, %v5365
        %v5496 = vpop.permute.xlu0 %5495
        %5499 = vset.pattern.permute.xlu0 0
        %5500 = vperm.xlu0 %5499, %v5366
        %v5501 = vpop.permute.xlu0 %5500
        %5504 = vset.pattern.permute.xlu0 0
        %5505 = vperm.xlu0 %5504, %v5367
        %v5506 = vpop.permute.xlu0 %5505
        %5509 = vset.pattern.permute.xlu0 0
        %5510 = vperm.xlu0 %5509, %v5368
        %v5511 = vpop.permute.xlu0 %5510
        %5514 = vset.pattern.permute.xlu0 0
        %5515 = vperm.xlu0 %5514, %v5369
        %v5516 = vpop.permute.xlu0 %5515
        %5519 = vset.pattern.permute.xlu0 0
        %5520 = vperm.xlu0 %5519, %v5370
        %v5521 = vpop.permute.xlu0 %5520
        %5524 = vset.pattern.permute.xlu0 0
        %5525 = vperm.xlu0 %5524, %v5371
        %v5526 = vpop.permute.xlu0 %5525
        %5529 = vset.pattern.permute.xlu0 0
        %5530 = vperm.xlu0 %5529, %v5372
        %v5531 = vpop.permute.xlu0 %5530
        %5534 = vset.pattern.permute.xlu0 0
        %5535 = vperm.xlu0 %5534, %v5373
        %v5536 = vpop.permute.xlu0 %5535
        %5539 = vset.pattern.permute.xlu0 0
        %5540 = vperm.xlu0 %5539, %v5374
        %v5541 = vpop.permute.xlu0 %5540
        %5544 = vset.pattern.permute.xlu0 0
        %5545 = vperm.xlu0 %5544, %v5375
        %v5546 = vpop.permute.xlu0 %5545
        %5549 = vset.pattern.permute.xlu0 0
        %5550 = vperm.xlu0 %5549, %v5376
        %v5551 = vpop.permute.xlu0 %5550
        %5554 = vset.pattern.permute.xlu0 0
        %5555 = vperm.xlu0 %5554, %v5377
        %v5556 = vpop.permute.xlu0 %5555
        %5559 = vset.pattern.permute.xlu0 0
        %5560 = vperm.xlu0 %5559, %v5378
        %v5561 = vpop.permute.xlu0 %5560
        %5564 = vset.pattern.permute.xlu0 0
        %5565 = vperm.xlu0 %5564, %v5379
        %v5566 = vpop.permute.xlu0 %5565
        %5569 = vset.pattern.permute.xlu0 0
        %5570 = vperm.xlu0 %5569, %v5380
        %v5571 = vpop.permute.xlu0 %5570
        %5574 = vset.pattern.permute.xlu0 0
        %5575 = vperm.xlu0 %5574, %v5381
        %v5576 = vpop.permute.xlu0 %5575
        %5579 = vset.pattern.permute.xlu0 0
        %5580 = vperm.xlu0 %5579, %v5382
        %v5581 = vpop.permute.xlu0 %5580
        %5584 = vset.pattern.permute.xlu0 0
        %5585 = vperm.xlu0 %5584, %v5383
        %v5586 = vpop.permute.xlu0 %5585
        %5589 = vset.pattern.permute.xlu0 0
        %5590 = vperm.xlu0 %5589, %v5384
        %v5591 = vpop.permute.xlu0 %5590
        %5594 = vset.pattern.permute.xlu0 0
        %5595 = vperm.xlu0 %5594, %v5385
        %v5596 = vpop.permute.xlu0 %5595
        %5599 = vset.pattern.permute.xlu0 0
        %5600 = vperm.xlu0 %5599, %v5386
        %v5601 = vpop.permute.xlu0 %5600
        %5604 = vset.pattern.permute.xlu0 0
        %5605 = vperm.xlu0 %5604, %v5387
        %v5606 = vpop.permute.xlu0 %5605
        %5609 = vset.pattern.permute.xlu0 0
        %5610 = vperm.xlu0 %5609, %v5388
        %v5611 = vpop.permute.xlu0 %5610
        %5614 = vset.pattern.permute.xlu0 0
        %5615 = vperm.xlu0 %5614, %v5389
        %v5616 = vpop.permute.xlu0 %5615
        %5619 = vset.pattern.permute.xlu0 0
        %5620 = vperm.xlu0 %5619, %v5390
        %v5621 = vpop.permute.xlu0 %5620
        %5624 = vset.pattern.permute.xlu0 0
        %5625 = vperm.xlu0 %5624, %v5391
        %v5626 = vpop.permute.xlu0 %5625
        %5629 = vset.pattern.permute.xlu0 0
        %5630 = vperm.xlu0 %5629, %v5392
        %v5631 = vpop.permute.xlu0 %5630
        %5634 = vset.pattern.permute.xlu0 0
        %5635 = vperm.xlu0 %5634, %v5393
        %v5636 = vpop.permute.xlu0 %5635
        %5639 = vset.pattern.permute.xlu0 0
        %5640 = vperm.xlu0 %5639, %v5394
        %v5641 = vpop.permute.xlu0 %5640
        %5644 = vset.pattern.permute.xlu0 0
        %5645 = vperm.xlu0 %5644, %v5395
        %v5646 = vpop.permute.xlu0 %5645
        %5649 = vset.pattern.permute.xlu0 0
        %5650 = vperm.xlu0 %5649, %v5396
        %v5651 = vpop.permute.xlu0 %5650
        %5654 = vset.pattern.permute.xlu0 0
        %5655 = vperm.xlu0 %5654, %v5397
        %v5656 = vpop.permute.xlu0 %5655
        %5659 = vset.pattern.permute.xlu0 0
        %5660 = vperm.xlu0 %5659, %v5398
        %v5661 = vpop.permute.xlu0 %5660
        %5664 = vset.pattern.permute.xlu0 0
        %5665 = vperm.xlu0 %5664, %v5399
        %v5666 = vpop.permute.xlu0 %5665
        %5669 = vset.pattern.permute.xlu0 0
        %5670 = vperm.xlu0 %5669, %v5400
        %v5671 = vpop.permute.xlu0 %5670
        %5674 = vset.pattern.permute.xlu0 0
        %5675 = vperm.xlu0 %5674, %v5401
        %v5676 = vpop.permute.xlu0 %5675
        %5679 = vset.pattern.permute.xlu0 0
        %5680 = vperm.xlu0 %5679, %v5402
        %v5681 = vpop.permute.xlu0 %5680
        %5684 = vset.pattern.permute.xlu0 0
        %5685 = vperm.xlu0 %5684, %v5403
        %v5686 = vpop.permute.xlu0 %5685
        %5689 = vset.pattern.permute.xlu0 0
        %5690 = vperm.xlu0 %5689, %v5404
        %v5691 = vpop.permute.xlu0 %5690
        %5694 = vset.pattern.permute.xlu0 0
        %5695 = vperm.xlu0 %5694, %v5405
        %v5696 = vpop.permute.xlu0 %5695
        %5699 = vset.pattern.permute.xlu0 0
        %5700 = vperm.xlu0 %5699, %v5406
        %v5701 = vpop.permute.xlu0 %5700
        %5704 = vset.pattern.permute.xlu0 0
        %5705 = vperm.xlu0 %5704, %v5407
        %v5706 = vpop.permute.xlu0 %5705
        %5709 = vset.pattern.permute.xlu0 0
        %5710 = vperm.xlu0 %5709, %v5408
        %v5711 = vpop.permute.xlu0 %5710
        %5714 = vset.pattern.permute.xlu0 0
        %5715 = vperm.xlu0 %5714, %v5409
        %v5716 = vpop.permute.xlu0 %5715
        %5719 = vset.pattern.permute.xlu0 0
        %5720 = vperm.xlu0 %5719, %v5410
        %v5721 = vpop.permute.xlu0 %5720
        %5724 = vset.pattern.permute.xlu0 0
        %5725 = vperm.xlu0 %5724, %v5411
        %v5726 = vpop.permute.xlu0 %5725
        %5729 = vset.pattern.permute.xlu0 0
        %5730 = vperm.xlu0 %5729, %v5412
        %v5731 = vpop.permute.xlu0 %5730
        %5734 = vset.pattern.permute.xlu0 0
        %5735 = vperm.xlu0 %5734, %v5413
        %v5736 = vpop.permute.xlu0 %5735
        %5739 = vset.pattern.permute.xlu0 0
        %5740 = vperm.xlu0 %5739, %v5414
        %v5741 = vpop.permute.xlu0 %5740
        %5744 = vset.pattern.permute.xlu0 0
        %5745 = vperm.xlu0 %5744, %v5415
        %v5746 = vpop.permute.xlu0 %5745
        %5749 = vset.pattern.permute.xlu0 0
        %5750 = vperm.xlu0 %5749, %v5416
        %v5751 = vpop.permute.xlu0 %5750
        %5754 = vset.pattern.permute.xlu0 0
        %5755 = vperm.xlu0 %5754, %v5417
        %v5756 = vpop.permute.xlu0 %5755
        %5759 = vset.pattern.permute.xlu0 0
        %5760 = vperm.xlu0 %5759, %v5418
        %v5761 = vpop.permute.xlu0 %5760
        %5764 = vset.pattern.permute.xlu0 0
        %5765 = vperm.xlu0 %5764, %v5419
        %v5766 = vpop.permute.xlu0 %5765
        %5769 = vset.pattern.permute.xlu0 0
        %5770 = vperm.xlu0 %5769, %v5420
        %v5771 = vpop.permute.xlu0 %5770
        %5774 = vset.pattern.permute.xlu0 0
        %5775 = vperm.xlu0 %5774, %v5421
        %v5776 = vpop.permute.xlu0 %5775
        %5779 = vset.pattern.permute.xlu0 0
        %5780 = vperm.xlu0 %5779, %v5422
        %v5781 = vpop.permute.xlu0 %5780
        %5784 = vset.pattern.permute.xlu0 0
        %5785 = vperm.xlu0 %5784, %v5423
        %v5786 = vpop.permute.xlu0 %5785
        %5789 = vset.pattern.permute.xlu0 0
        %5790 = vperm.xlu0 %5789, %v5424
        %v5791 = vpop.permute.xlu0 %5790
        %5794 = vset.pattern.permute.xlu0 0
        %5795 = vperm.xlu0 %5794, %v5425
        %v5796 = vpop.permute.xlu0 %5795
        %5799 = vset.pattern.permute.xlu0 0
        %5800 = vperm.xlu0 %5799, %v5426
        %v5801 = vpop.permute.xlu0 %5800
        %5804 = vset.pattern.permute.xlu0 0
        %5805 = vperm.xlu0 %5804, %v5427
        %v5806 = vpop.permute.xlu0 %5805
        %5809 = vset.pattern.permute.xlu0 0
        %5810 = vperm.xlu0 %5809, %v5428
        %v5811 = vpop.permute.xlu0 %5810
        %5814 = vset.pattern.permute.xlu0 0
        %5815 = vperm.xlu0 %5814, %v5429
        %v5816 = vpop.permute.xlu0 %5815
        %5819 = vset.pattern.permute.xlu0 0
        %5820 = vperm.xlu0 %5819, %v5430
        %v5821 = vpop.permute.xlu0 %5820
        %5824 = vset.pattern.permute.xlu0 0
        %5825 = vperm.xlu0 %5824, %v5431
        %v5826 = vpop.permute.xlu0 %5825
        %5829 = vset.pattern.permute.xlu0 0
        %5830 = vperm.xlu0 %5829, %v5432
        %v5831 = vpop.permute.xlu0 %5830
        %5834 = vset.pattern.permute.xlu0 0
        %5835 = vperm.xlu0 %5834, %v5433
        %v5836 = vpop.permute.xlu0 %5835
        %5839 = vset.pattern.permute.xlu0 0
        %5840 = vperm.xlu0 %5839, %v5434
        %v5841 = vpop.permute.xlu0 %5840
        %5844 = vset.pattern.permute.xlu0 0
        %5845 = vperm.xlu0 %5844, %v5435
        %v5846 = vpop.permute.xlu0 %5845
        %5849 = vset.pattern.permute.xlu0 0
        %5850 = vperm.xlu0 %5849, %v5436
        %v5851 = vpop.permute.xlu0 %5850
        %5854 = vset.pattern.permute.xlu0 0
        %5855 = vperm.xlu0 %5854, %v5437
        %v5856 = vpop.permute.xlu0 %5855
        %5859 = vset.pattern.permute.xlu0 0
        %5860 = vperm.xlu0 %5859, %v5438
        %v5861 = vpop.permute.xlu0 %5860
        %5864 = vset.pattern.permute.xlu0 0
        %5865 = vperm.xlu0 %5864, %v5439
        %v5866 = vpop.permute.xlu0 %5865
        %5869 = vset.pattern.permute.xlu0 0
        %5870 = vperm.xlu0 %5869, %v5440
        %v5871 = vpop.permute.xlu0 %5870
        %5874 = vset.pattern.permute.xlu0 0
        %5875 = vperm.xlu0 %5874, %v5441
        %v5876 = vpop.permute.xlu0 %5875
        %5879 = vset.pattern.permute.xlu0 0
        %5880 = vperm.xlu0 %5879, %v5442
        %v5881 = vpop.permute.xlu0 %5880
        %5884 = vset.pattern.permute.xlu0 0
        %5885 = vperm.xlu0 %5884, %v5443
        %v5886 = vpop.permute.xlu0 %5885
        %5889 = vset.pattern.permute.xlu0 0
        %5890 = vperm.xlu0 %5889, %v5444
        %v5891 = vpop.permute.xlu0 %5890
        %5894 = vset.pattern.permute.xlu0 0
        %5895 = vperm.xlu0 %5894, %v5445
        %v5896 = vpop.permute.xlu0 %5895
        %5899 = vset.pattern.permute.xlu0 0
        %5900 = vperm.xlu0 %5899, %v5446
        %v5901 = vpop.permute.xlu0 %5900
        %5904 = vset.pattern.permute.xlu0 0
        %5905 = vperm.xlu0 %5904, %v5447
        %v5906 = vpop.permute.xlu0 %5905
        %5909 = vset.pattern.permute.xlu0 0
        %5910 = vperm.xlu0 %5909, %v5448
        %v5911 = vpop.permute.xlu0 %5910
        %5914 = vset.pattern.permute.xlu0 0
        %5915 = vperm.xlu0 %5914, %v5449
        %v5916 = vpop.permute.xlu0 %5915
        %5919 = vset.pattern.permute.xlu0 0
        %5920 = vperm.xlu0 %5919, %v5450
        %v5921 = vpop.permute.xlu0 %5920
        %5924 = vset.pattern.permute.xlu0 0
        %5925 = vperm.xlu0 %5924, %v5451
        %v5926 = vpop.permute.xlu0 %5925
        %5929 = vset.pattern.permute.xlu0 0
        %5930 = vperm.xlu0 %5929, %v5452
        %v5931 = vpop.permute.xlu0 %5930
        %5934 = vset.pattern.permute.xlu0 0
        %5935 = vperm.xlu0 %5934, %v5453
        %v5936 = vpop.permute.xlu0 %5935
        %5939 = vset.pattern.permute.xlu0 0
        %5940 = vperm.xlu0 %5939, %v5454
        %v5941 = vpop.permute.xlu0 %5940
        %5944 = vset.pattern.permute.xlu0 0
        %5945 = vperm.xlu0 %5944, %v5455
        %v5946 = vpop.permute.xlu0 %5945
        %5949 = vset.pattern.permute.xlu0 0
        %5950 = vperm.xlu0 %5949, %v5456
        %v5951 = vpop.permute.xlu0 %5950
        %5954 = vset.pattern.permute.xlu0 0
        %5955 = vperm.xlu0 %5954, %v5457
        %v5956 = vpop.permute.xlu0 %5955
        %5959 = vset.pattern.permute.xlu0 0
        %5960 = vperm.xlu0 %5959, %v5458
        %v5961 = vpop.permute.xlu0 %5960
        %5964 = vset.pattern.permute.xlu0 0
        %5965 = vperm.xlu0 %5964, %v5459
        %v5966 = vpop.permute.xlu0 %5965
        %5969 = vset.pattern.permute.xlu0 0
        %5970 = vperm.xlu0 %5969, %v5460
        %v5971 = vpop.permute.xlu0 %5970
        %5974 = vset.pattern.permute.xlu0 0
        %5975 = vperm.xlu0 %5974, %v5461
        %v5976 = vpop.permute.xlu0 %5975
        %5979 = vset.pattern.permute.xlu0 0
        %5980 = vperm.xlu0 %5979, %v5462
        %v5981 = vpop.permute.xlu0 %5980
        %5984 = vset.pattern.permute.xlu0 0
        %5985 = vperm.xlu0 %5984, %v5463
        %v5986 = vpop.permute.xlu0 %5985
        %5989 = vset.pattern.permute.xlu0 0
        %5990 = vperm.xlu0 %5989, %v5464
        %v5991 = vpop.permute.xlu0 %5990
        %5994 = vset.pattern.permute.xlu0 0
        %5995 = vperm.xlu0 %5994, %v5465
        %v5996 = vpop.permute.xlu0 %5995
        %5999 = vset.pattern.permute.xlu0 0
        %6000 = vperm.xlu0 %5999, %v5466
        %v6001 = vpop.permute.xlu0 %6000
        %6004 = vset.pattern.permute.xlu0 0
        %6005 = vperm.xlu0 %6004, %v5467
        %v6006 = vpop.permute.xlu0 %6005
        %v6008 = vmul.f32 %v5252, %v5471
        %v6009 = vmul.f32 %v5253, %v5476
        %v6010 = vmul.f32 %v5254, %v5481
        %v6011 = vmul.f32 %v5255, %v5486
        %v6012 = vmul.f32 %v5256, %v5491
        %v6013 = vmul.f32 %v5257, %v5496
        %v6014 = vmul.f32 %v5258, %v5501
        %v6015 = vmul.f32 %v5259, %v5506
        %v6016 = vmul.f32 %v5260, %v5511
        %v6017 = vmul.f32 %v5261, %v5516
        %v6018 = vmul.f32 %v5262, %v5521
        %v6019 = vmul.f32 %v5263, %v5526
        %v6020 = vmul.f32 %v5264, %v5531
        %v6021 = vmul.f32 %v5265, %v5536
        %v6022 = vmul.f32 %v5266, %v5541
        %v6023 = vmul.f32 %v5267, %v5546
        %v6024 = vmul.f32 %v5268, %v5551
        %v6025 = vmul.f32 %v5269, %v5556
        %v6026 = vmul.f32 %v5270, %v5561
        %v6027 = vmul.f32 %v5271, %v5566
        %v6028 = vmul.f32 %v5272, %v5571
        %v6029 = vmul.f32 %v5273, %v5576
        %v6030 = vmul.f32 %v5274, %v5581
        %v6031 = vmul.f32 %v5275, %v5586
        %v6032 = vmul.f32 %v5276, %v5591
        %v6033 = vmul.f32 %v5277, %v5596
        %v6034 = vmul.f32 %v5278, %v5601
        %v6035 = vmul.f32 %v5279, %v5606
        %v6036 = vmul.f32 %v5280, %v5611
        %v6037 = vmul.f32 %v5281, %v5616
        %v6038 = vmul.f32 %v5282, %v5621
        %v6039 = vmul.f32 %v5283, %v5626
        %v6040 = vmul.f32 %v5284, %v5631
        %v6041 = vmul.f32 %v5285, %v5636
        %v6042 = vmul.f32 %v5286, %v5641
        %v6043 = vmul.f32 %v5287, %v5646
        %v6044 = vmul.f32 %v5288, %v5651
        %v6045 = vmul.f32 %v5289, %v5656
        %v6046 = vmul.f32 %v5290, %v5661
        %v6047 = vmul.f32 %v5291, %v5666
        %v6048 = vmul.f32 %v5292, %v5671
        %v6049 = vmul.f32 %v5293, %v5676
        %v6050 = vmul.f32 %v5294, %v5681
        %v6051 = vmul.f32 %v5295, %v5686
        %v6052 = vmul.f32 %v5296, %v5691
        %v6053 = vmul.f32 %v5297, %v5696
        %v6054 = vmul.f32 %v5298, %v5701
        %v6055 = vmul.f32 %v5299, %v5706
        %v6056 = vmul.f32 %v5300, %v5711
        %v6057 = vmul.f32 %v5301, %v5716
        %v6058 = vmul.f32 %v5302, %v5721
        %v6059 = vmul.f32 %v5303, %v5726
        %v6060 = vmul.f32 %v5304, %v5731
        %v6061 = vmul.f32 %v5305, %v5736
        %v6062 = vmul.f32 %v5306, %v5741
        %v6063 = vmul.f32 %v5307, %v5746
        %v6064 = vmul.f32 %v5308, %v5751
        %v6065 = vmul.f32 %v5309, %v5756
        %v6066 = vmul.f32 %v5310, %v5761
        %v6067 = vmul.f32 %v5311, %v5766
        %v6068 = vmul.f32 %v5312, %v5771
        %v6069 = vmul.f32 %v5313, %v5776
        %v6070 = vmul.f32 %v5314, %v5781
        %v6071 = vmul.f32 %v5315, %v5786
        %v6072 = vmul.f32 %v5316, %v5791
        %v6073 = vmul.f32 %v5317, %v5796
        %v6074 = vmul.f32 %v5318, %v5801
        %v6075 = vmul.f32 %v5319, %v5806
        %v6076 = vmul.f32 %v5320, %v5811
        %v6077 = vmul.f32 %v5321, %v5816
        %v6078 = vmul.f32 %v5322, %v5821
        %v6079 = vmul.f32 %v5323, %v5826
        %v6080 = vmul.f32 %v5324, %v5831
        %v6081 = vmul.f32 %v5325, %v5836
        %v6082 = vmul.f32 %v5326, %v5841
        %v6083 = vmul.f32 %v5327, %v5846
        %v6084 = vmul.f32 %v5328, %v5851
        %v6085 = vmul.f32 %v5329, %v5856
        %v6086 = vmul.f32 %v5330, %v5861
        %v6087 = vmul.f32 %v5331, %v5866
        %v6088 = vmul.f32 %v5332, %v5871
        %v6089 = vmul.f32 %v5333, %v5876
        %v6090 = vmul.f32 %v5334, %v5881
        %v6091 = vmul.f32 %v5335, %v5886
        %v6092 = vmul.f32 %v5336, %v5891
        %v6093 = vmul.f32 %v5337, %v5896
        %v6094 = vmul.f32 %v5338, %v5901
        %v6095 = vmul.f32 %v5339, %v5906
        %v6096 = vmul.f32 %v5340, %v5911
        %v6097 = vmul.f32 %v5341, %v5916
        %v6098 = vmul.f32 %v5342, %v5921
        %v6099 = vmul.f32 %v5343, %v5926
        %v6100 = vmul.f32 %v5344, %v5931
        %v6101 = vmul.f32 %v5345, %v5936
        %v6102 = vmul.f32 %v5346, %v5941
        %v6103 = vmul.f32 %v5347, %v5946
        %v6104 = vmul.f32 %v5348, %v5951
        %v6105 = vmul.f32 %v5349, %v5956
        %v6106 = vmul.f32 %v5350, %v5961
        %v6107 = vmul.f32 %v5351, %v5966
        %v6108 = vmul.f32 %v5352, %v5971
        %v6109 = vmul.f32 %v5353, %v5976
        %v6110 = vmul.f32 %v5354, %v5981
        %v6111 = vmul.f32 %v5355, %v5986
        %v6112 = vmul.f32 %v5356, %v5991
        %v6113 = vmul.f32 %v5357, %v5996
        %v6114 = vmul.f32 %v5358, %v6001
        %v6115 = vmul.f32 %v5359, %v6006
        %v6212 = vrot.slane %v6008, 1
        %v6213 = vrot.slane %v6009, 1
        %v6214 = vsel %vm721, %v6212, %v6213
        %v6215 = vrot.slane %v6010, 1
        %v6216 = vsel %vm721, %v6213, %v6215
        %v6217 = vrot.slane %v6011, 1
        %v6218 = vrot.slane %v6012, 1
        %v6219 = vsel %vm721, %v6217, %v6218
        %v6220 = vrot.slane %v6013, 1
        %v6221 = vsel %vm721, %v6218, %v6220
        %v6222 = vrot.slane %v6014, 1
        %v6223 = vrot.slane %v6015, 1
        %v6224 = vsel %vm721, %v6222, %v6223
        %v6225 = vrot.slane %v6016, 1
        %v6226 = vsel %vm721, %v6223, %v6225
        %v6227 = vrot.slane %v6017, 1
        %v6228 = vrot.slane %v6018, 1
        %v6229 = vsel %vm721, %v6227, %v6228
        %v6230 = vrot.slane %v6019, 1
        %v6231 = vsel %vm721, %v6228, %v6230
        %v6232 = vrot.slane %v6020, 1
        %v6233 = vrot.slane %v6021, 1
        %v6234 = vsel %vm721, %v6232, %v6233
        %v6235 = vrot.slane %v6022, 1
        %v6236 = vsel %vm721, %v6233, %v6235
        %v6237 = vrot.slane %v6023, 1
        %v6238 = vrot.slane %v6024, 1
        %v6239 = vsel %vm721, %v6237, %v6238
        %v6240 = vrot.slane %v6025, 1
        %v6241 = vsel %vm721, %v6238, %v6240
        %v6242 = vrot.slane %v6026, 1
        %v6243 = vrot.slane %v6027, 1
        %v6244 = vsel %vm721, %v6242, %v6243
        %v6245 = vrot.slane %v6028, 1
        %v6246 = vsel %vm721, %v6243, %v6245
        %v6247 = vrot.slane %v6029, 1
        %v6248 = vrot.slane %v6030, 1
        %v6249 = vsel %vm721, %v6247, %v6248
        %v6250 = vrot.slane %v6031, 1
        %v6251 = vsel %vm721, %v6248, %v6250
        %v6252 = vrot.slane %v6032, 1
        %v6253 = vrot.slane %v6033, 1
        %v6254 = vsel %vm721, %v6252, %v6253
        %v6255 = vrot.slane %v6034, 1
        %v6256 = vsel %vm721, %v6253, %v6255
        %v6257 = vrot.slane %v6035, 1
        %v6258 = vrot.slane %v6036, 1
        %v6259 = vsel %vm721, %v6257, %v6258
        %v6260 = vrot.slane %v6037, 1
        %v6261 = vsel %vm721, %v6258, %v6260
        %v6262 = vrot.slane %v6038, 1
        %v6263 = vrot.slane %v6039, 1
        %v6264 = vsel %vm721, %v6262, %v6263
        %v6265 = vrot.slane %v6040, 1
        %v6266 = vsel %vm721, %v6263, %v6265
        %v6267 = vrot.slane %v6041, 1
        %v6268 = vrot.slane %v6042, 1
        %v6269 = vsel %vm721, %v6267, %v6268
        %v6270 = vrot.slane %v6043, 1
        %v6271 = vsel %vm721, %v6268, %v6270
        %v6272 = vrot.slane %v6044, 1
        %v6273 = vrot.slane %v6045, 1
        %v6274 = vsel %vm721, %v6272, %v6273
        %v6275 = vrot.slane %v6046, 1
        %v6276 = vsel %vm721, %v6273, %v6275
        %v6277 = vrot.slane %v6047, 1
        %v6278 = vrot.slane %v6048, 1
        %v6279 = vsel %vm721, %v6277, %v6278
        %v6280 = vrot.slane %v6049, 1
        %v6281 = vsel %vm721, %v6278, %v6280
        %v6282 = vrot.slane %v6050, 1
        %v6283 = vrot.slane %v6051, 1
        %v6284 = vsel %vm721, %v6282, %v6283
        %v6285 = vrot.slane %v6052, 1
        %v6286 = vsel %vm721, %v6283, %v6285
        %v6287 = vrot.slane %v6053, 1
        %v6288 = vrot.slane %v6054, 1
        %v6289 = vsel %vm721, %v6287, %v6288
        %v6290 = vrot.slane %v6055, 1
        %v6291 = vsel %vm721, %v6288, %v6290
        %v6292 = vrot.slane %v6062, 1
        %v6293 = vrot.slane %v6063, 1
        %v6294 = vsel %vm721, %v6292, %v6293
        %v6295 = vrot.slane %v6064, 1
        %v6296 = vsel %vm721, %v6293, %v6295
        %v6297 = vrot.slane %v6065, 1
        %v6298 = vrot.slane %v6066, 1
        %v6299 = vsel %vm721, %v6297, %v6298
        %v6300 = vrot.slane %v6067, 1
        %v6301 = vsel %vm721, %v6298, %v6300
        %v6302 = vrot.slane %v6068, 1
        %v6303 = vrot.slane %v6069, 1
        %v6304 = vsel %vm721, %v6302, %v6303
        %v6305 = vrot.slane %v6070, 1
        %v6306 = vsel %vm721, %v6303, %v6305
        %v6307 = vrot.slane %v6071, 1
        %v6308 = vrot.slane %v6072, 1
        %v6309 = vsel %vm721, %v6307, %v6308
        %v6310 = vrot.slane %v6073, 1
        %v6311 = vsel %vm721, %v6308, %v6310
        %v6312 = vrot.slane %v6074, 1
        %v6313 = vrot.slane %v6075, 1
        %v6314 = vsel %vm721, %v6312, %v6313
        %v6315 = vrot.slane %v6076, 1
        %v6316 = vsel %vm721, %v6313, %v6315
        %v6317 = vrot.slane %v6077, 1
        %v6318 = vrot.slane %v6078, 1
        %v6319 = vsel %vm721, %v6317, %v6318
        %v6320 = vrot.slane %v6079, 1
        %v6321 = vsel %vm721, %v6318, %v6320
        %v6322 = vrot.slane %v6080, 1
        %v6323 = vrot.slane %v6081, 1
        %v6324 = vsel %vm721, %v6322, %v6323
        %v6325 = vrot.slane %v6082, 1
        %v6326 = vsel %vm721, %v6323, %v6325
        %v6327 = vrot.slane %v6083, 1
        %v6328 = vrot.slane %v6084, 1
        %v6329 = vsel %vm721, %v6327, %v6328
        %v6330 = vrot.slane %v6085, 1
        %v6331 = vsel %vm721, %v6328, %v6330
        %v6332 = vrot.slane %v6086, 1
        %v6333 = vrot.slane %v6087, 1
        %v6334 = vsel %vm721, %v6332, %v6333
        %v6335 = vrot.slane %v6088, 1
        %v6336 = vsel %vm721, %v6333, %v6335
        %v6337 = vrot.slane %v6089, 1
        %v6338 = vrot.slane %v6090, 1
        %v6339 = vsel %vm721, %v6337, %v6338
        %v6340 = vrot.slane %v6091, 1
        %v6341 = vsel %vm721, %v6338, %v6340
        %v6342 = vrot.slane %v6092, 1
        %v6343 = vrot.slane %v6093, 1
        %v6344 = vsel %vm721, %v6342, %v6343
        %v6345 = vrot.slane %v6094, 1
        %v6346 = vsel %vm721, %v6343, %v6345
        %v6347 = vrot.slane %v6095, 1
        %v6348 = vrot.slane %v6096, 1
        %v6349 = vsel %vm721, %v6347, %v6348
        %v6350 = vrot.slane %v6097, 1
        %v6351 = vsel %vm721, %v6348, %v6350
        %v6352 = vrot.slane %v6098, 1
        %v6353 = vrot.slane %v6099, 1
        %v6354 = vsel %vm721, %v6352, %v6353
        %v6355 = vrot.slane %v6100, 1
        %v6356 = vsel %vm721, %v6353, %v6355
        %v6357 = vrot.slane %v6101, 1
        %v6358 = vrot.slane %v6102, 1
        %v6359 = vsel %vm721, %v6357, %v6358
        %v6360 = vrot.slane %v6103, 1
        %v6361 = vsel %vm721, %v6358, %v6360
        %v6362 = vrot.slane %v6104, 1
        %v6363 = vrot.slane %v6105, 1
        %v6364 = vsel %vm721, %v6362, %v6363
        %v6365 = vrot.slane %v6106, 1
        %v6366 = vsel %vm721, %v6363, %v6365
        %v6367 = vrot.slane %v6107, 1
        %v6368 = vrot.slane %v6108, 1
        %v6369 = vsel %vm721, %v6367, %v6368
        %v6370 = vrot.slane %v6109, 1
        %v6371 = vsel %vm721, %v6368, %v6370
        %v6372 = vrot.slane %v6008, 2
        %v6373 = vrot.slane %v6009, 2
        %v6374 = vsel %vm974, %v6372, %v6373
        %v6375 = vrot.slane %v6010, 2
        %v6376 = vsel %vm974, %v6373, %v6375
        %v6377 = vrot.slane %v6011, 2
        %v6378 = vrot.slane %v6012, 2
        %v6379 = vsel %vm974, %v6377, %v6378
        %v6380 = vrot.slane %v6013, 2
        %v6381 = vsel %vm974, %v6378, %v6380
        %v6382 = vrot.slane %v6014, 2
        %v6383 = vrot.slane %v6015, 2
        %v6384 = vsel %vm974, %v6382, %v6383
        %v6385 = vrot.slane %v6016, 2
        %v6386 = vsel %vm974, %v6383, %v6385
        %v6387 = vrot.slane %v6017, 2
        %v6388 = vrot.slane %v6018, 2
        %v6389 = vsel %vm974, %v6387, %v6388
        %v6390 = vrot.slane %v6019, 2
        %v6391 = vsel %vm974, %v6388, %v6390
        %v6392 = vrot.slane %v6020, 2
        %v6393 = vrot.slane %v6021, 2
        %v6394 = vsel %vm974, %v6392, %v6393
        %v6395 = vrot.slane %v6022, 2
        %v6396 = vsel %vm974, %v6393, %v6395
        %v6397 = vrot.slane %v6023, 2
        %v6398 = vrot.slane %v6024, 2
        %v6399 = vsel %vm974, %v6397, %v6398
        %v6400 = vrot.slane %v6025, 2
        %v6401 = vsel %vm974, %v6398, %v6400
        %v6402 = vrot.slane %v6026, 2
        %v6403 = vrot.slane %v6027, 2
        %v6404 = vsel %vm974, %v6402, %v6403
        %v6405 = vrot.slane %v6028, 2
        %v6406 = vsel %vm974, %v6403, %v6405
        %v6407 = vrot.slane %v6029, 2
        %v6408 = vrot.slane %v6030, 2
        %v6409 = vsel %vm974, %v6407, %v6408
        %v6410 = vrot.slane %v6031, 2
        %v6411 = vsel %vm974, %v6408, %v6410
        %v6412 = vrot.slane %v6032, 2
        %v6413 = vrot.slane %v6033, 2
        %v6414 = vsel %vm974, %v6412, %v6413
        %v6415 = vrot.slane %v6034, 2
        %v6416 = vsel %vm974, %v6413, %v6415
        %v6417 = vrot.slane %v6035, 2
        %v6418 = vrot.slane %v6036, 2
        %v6419 = vsel %vm974, %v6417, %v6418
        %v6420 = vrot.slane %v6037, 2
        %v6421 = vsel %vm974, %v6418, %v6420
        %v6422 = vrot.slane %v6038, 2
        %v6423 = vrot.slane %v6039, 2
        %v6424 = vsel %vm974, %v6422, %v6423
        %v6425 = vrot.slane %v6040, 2
        %v6426 = vsel %vm974, %v6423, %v6425
        %v6427 = vrot.slane %v6041, 2
        %v6428 = vrot.slane %v6042, 2
        %v6429 = vsel %vm974, %v6427, %v6428
        %v6430 = vrot.slane %v6043, 2
        %v6431 = vsel %vm974, %v6428, %v6430
        %v6432 = vrot.slane %v6044, 2
        %v6433 = vrot.slane %v6045, 2
        %v6434 = vsel %vm974, %v6432, %v6433
        %v6435 = vrot.slane %v6046, 2
        %v6436 = vsel %vm974, %v6433, %v6435
        %v6437 = vrot.slane %v6047, 2
        %v6438 = vrot.slane %v6048, 2
        %v6439 = vsel %vm974, %v6437, %v6438
        %v6440 = vrot.slane %v6049, 2
        %v6441 = vsel %vm974, %v6438, %v6440
        %v6442 = vrot.slane %v6050, 2
        %v6443 = vrot.slane %v6051, 2
        %v6444 = vsel %vm974, %v6442, %v6443
        %v6445 = vrot.slane %v6052, 2
        %v6446 = vsel %vm974, %v6443, %v6445
        %v6447 = vrot.slane %v6053, 2
        %v6448 = vrot.slane %v6054, 2
        %v6449 = vsel %vm974, %v6447, %v6448
        %v6450 = vrot.slane %v6055, 2
        %v6451 = vsel %vm974, %v6448, %v6450
        %v6452 = vrot.slane %v6062, 2
        %v6453 = vrot.slane %v6063, 2
        %v6454 = vsel %vm974, %v6452, %v6453
        %v6455 = vrot.slane %v6064, 2
        %v6456 = vsel %vm974, %v6453, %v6455
        %v6457 = vrot.slane %v6065, 2
        %v6458 = vrot.slane %v6066, 2
        %v6459 = vsel %vm974, %v6457, %v6458
        %v6460 = vrot.slane %v6067, 2
        %v6461 = vsel %vm974, %v6458, %v6460
        %v6462 = vrot.slane %v6068, 2
        %v6463 = vrot.slane %v6069, 2
        %v6464 = vsel %vm974, %v6462, %v6463
        %v6465 = vrot.slane %v6070, 2
        %v6466 = vsel %vm974, %v6463, %v6465
        %v6467 = vrot.slane %v6071, 2
        %v6468 = vrot.slane %v6072, 2
        %v6469 = vsel %vm974, %v6467, %v6468
        %v6470 = vrot.slane %v6073, 2
        %v6471 = vsel %vm974, %v6468, %v6470
        %v6472 = vrot.slane %v6074, 2
        %v6473 = vrot.slane %v6075, 2
        %v6474 = vsel %vm974, %v6472, %v6473
        %v6475 = vrot.slane %v6076, 2
        %v6476 = vsel %vm974, %v6473, %v6475
        %v6477 = vrot.slane %v6077, 2
        %v6478 = vrot.slane %v6078, 2
        %v6479 = vsel %vm974, %v6477, %v6478
        %v6480 = vrot.slane %v6079, 2
        %v6481 = vsel %vm974, %v6478, %v6480
        %v6482 = vrot.slane %v6080, 2
        %v6483 = vrot.slane %v6081, 2
        %v6484 = vsel %vm974, %v6482, %v6483
        %v6485 = vrot.slane %v6082, 2
        %v6486 = vsel %vm974, %v6483, %v6485
        %v6487 = vrot.slane %v6083, 2
        %v6488 = vrot.slane %v6084, 2
        %v6489 = vsel %vm974, %v6487, %v6488
        %v6490 = vrot.slane %v6085, 2
        %v6491 = vsel %vm974, %v6488, %v6490
        %v6492 = vrot.slane %v6086, 2
        %v6493 = vrot.slane %v6087, 2
        %v6494 = vsel %vm974, %v6492, %v6493
        %v6495 = vrot.slane %v6088, 2
        %v6496 = vsel %vm974, %v6493, %v6495
        %v6497 = vrot.slane %v6089, 2
        %v6498 = vrot.slane %v6090, 2
        %v6499 = vsel %vm974, %v6497, %v6498
        %v6500 = vrot.slane %v6091, 2
        %v6501 = vsel %vm974, %v6498, %v6500
        %v6502 = vrot.slane %v6092, 2
        %v6503 = vrot.slane %v6093, 2
        %v6504 = vsel %vm974, %v6502, %v6503
        %v6505 = vrot.slane %v6094, 2
        %v6506 = vsel %vm974, %v6503, %v6505
        %v6507 = vrot.slane %v6095, 2
        %v6508 = vrot.slane %v6096, 2
        %v6509 = vsel %vm974, %v6507, %v6508
        %v6510 = vrot.slane %v6097, 2
        %v6511 = vsel %vm974, %v6508, %v6510
        %v6512 = vrot.slane %v6098, 2
        %v6513 = vrot.slane %v6099, 2
        %v6514 = vsel %vm974, %v6512, %v6513
        %v6515 = vrot.slane %v6100, 2
        %v6516 = vsel %vm974, %v6513, %v6515
        %v6517 = vrot.slane %v6101, 2
        %v6518 = vrot.slane %v6102, 2
        %v6519 = vsel %vm974, %v6517, %v6518
        %v6520 = vrot.slane %v6103, 2
        %v6521 = vsel %vm974, %v6518, %v6520
        %v6522 = vrot.slane %v6104, 2
        %v6523 = vrot.slane %v6105, 2
        %v6524 = vsel %vm974, %v6522, %v6523
        %v6525 = vrot.slane %v6106, 2
        %v6526 = vsel %vm974, %v6523, %v6525
        %v6527 = vrot.slane %v6107, 2
        %v6528 = vrot.slane %v6108, 2
        %v6529 = vsel %vm974, %v6527, %v6528
        %v6530 = vrot.slane %v6109, 2
        %v6531 = vsel %vm974, %v6528, %v6530
        %v6538 = vrot.slane %v6056, 1
        %v6539 = vrot.slane %v6057, 1
        %v6540 = vsel %vm721, %v6538, %v6539
        %v6541 = vrot.slane %v6058, 1
        %v6542 = vsel %vm721, %v6539, %v6541
        %v6543 = vrot.slane %v6110, 1
        %v6544 = vrot.slane %v6111, 1
        %v6545 = vsel %vm721, %v6543, %v6544
        %v6546 = vrot.slane %v6112, 1
        %v6547 = vsel %vm721, %v6544, %v6546
        %v6548 = vrot.slane %v6056, 2
        %v6549 = vrot.slane %v6057, 2
        %v6550 = vsel %vm974, %v6548, %v6549
        %v6551 = vrot.slane %v6058, 2
        %v6552 = vsel %vm974, %v6549, %v6551
        %v6553 = vrot.slane %v6110, 2
        %v6554 = vrot.slane %v6111, 2
        %v6555 = vsel %vm974, %v6553, %v6554
        %v6556 = vrot.slane %v6112, 2
        %v6557 = vsel %vm974, %v6554, %v6556
        %v6564 = vrot.slane %v6059, 1
        %v6565 = vrot.slane %v6060, 1
        %v6566 = vsel %vm721, %v6564, %v6565
        %v6567 = vrot.slane %v6061, 1
        %v6568 = vsel %vm721, %v6565, %v6567
        %v6569 = vrot.slane %v6113, 1
        %v6570 = vrot.slane %v6114, 1
        %v6571 = vsel %vm721, %v6569, %v6570
        %v6572 = vrot.slane %v6115, 1
        %v6573 = vsel %vm721, %v6570, %v6572
        %v6574 = vrot.slane %v6059, 2
        %v6575 = vrot.slane %v6060, 2
        %v6576 = vsel %vm974, %v6574, %v6575
        %v6577 = vrot.slane %v6061, 2
        %v6578 = vsel %vm974, %v6575, %v6577
        %v6579 = vrot.slane %v6113, 2
        %v6580 = vrot.slane %v6114, 2
        %v6581 = vsel %vm974, %v6579, %v6580
        %v6582 = vrot.slane %v6115, 2
        %v6583 = vsel %vm974, %v6580, %v6582
        %6648 = vrot.lane.b32.xlu0 %v6214, 16
        %v6649 = vpop.permute.xlu0 %6648
        %6650 = vrot.lane.b32.xlu0 %v6216, 16
        %v6651 = vpop.permute.xlu0 %6650
        %6652 = vrot.lane.b32.xlu0 %v6219, 16
        %v6653 = vpop.permute.xlu0 %6652
        %6654 = vrot.lane.b32.xlu0 %v6221, 16
        %v6655 = vpop.permute.xlu0 %6654
        %6656 = vrot.lane.b32.xlu0 %v6224, 16
        %v6657 = vpop.permute.xlu0 %6656
        %6658 = vrot.lane.b32.xlu0 %v6226, 16
        %v6659 = vpop.permute.xlu0 %6658
        %6660 = vrot.lane.b32.xlu0 %v6229, 16
        %v6661 = vpop.permute.xlu0 %6660
        %6662 = vrot.lane.b32.xlu0 %v6231, 16
        %v6663 = vpop.permute.xlu0 %6662
        %6664 = vrot.lane.b32.xlu0 %v6234, 16
        %v6665 = vpop.permute.xlu0 %6664
        %6666 = vrot.lane.b32.xlu0 %v6236, 16
        %v6667 = vpop.permute.xlu0 %6666
        %6668 = vrot.lane.b32.xlu0 %v6239, 16
        %v6669 = vpop.permute.xlu0 %6668
        %6670 = vrot.lane.b32.xlu0 %v6241, 16
        %v6671 = vpop.permute.xlu0 %6670
        %6672 = vrot.lane.b32.xlu0 %v6244, 16
        %v6673 = vpop.permute.xlu0 %6672
        %6674 = vrot.lane.b32.xlu0 %v6246, 16
        %v6675 = vpop.permute.xlu0 %6674
        %6676 = vrot.lane.b32.xlu0 %v6249, 16
        %v6677 = vpop.permute.xlu0 %6676
        %6678 = vrot.lane.b32.xlu0 %v6251, 16
        %v6679 = vpop.permute.xlu0 %6678
        %6680 = vrot.lane.b32.xlu0 %v6254, 16
        %v6681 = vpop.permute.xlu0 %6680
        %6682 = vrot.lane.b32.xlu0 %v6256, 16
        %v6683 = vpop.permute.xlu0 %6682
        %6684 = vrot.lane.b32.xlu0 %v6259, 16
        %v6685 = vpop.permute.xlu0 %6684
        %6686 = vrot.lane.b32.xlu0 %v6261, 16
        %v6687 = vpop.permute.xlu0 %6686
        %6688 = vrot.lane.b32.xlu0 %v6264, 16
        %v6689 = vpop.permute.xlu0 %6688
        %6690 = vrot.lane.b32.xlu0 %v6266, 16
        %v6691 = vpop.permute.xlu0 %6690
        %6692 = vrot.lane.b32.xlu0 %v6269, 16
        %v6693 = vpop.permute.xlu0 %6692
        %6694 = vrot.lane.b32.xlu0 %v6271, 16
        %v6695 = vpop.permute.xlu0 %6694
        %6696 = vrot.lane.b32.xlu0 %v6274, 16
        %v6697 = vpop.permute.xlu0 %6696
        %6698 = vrot.lane.b32.xlu0 %v6276, 16
        %v6699 = vpop.permute.xlu0 %6698
        %6700 = vrot.lane.b32.xlu0 %v6279, 16
        %v6701 = vpop.permute.xlu0 %6700
        %6702 = vrot.lane.b32.xlu0 %v6281, 16
        %v6703 = vpop.permute.xlu0 %6702
        %6704 = vrot.lane.b32.xlu0 %v6284, 16
        %v6705 = vpop.permute.xlu0 %6704
        %6706 = vrot.lane.b32.xlu0 %v6286, 16
        %v6707 = vpop.permute.xlu0 %6706
        %6708 = vrot.lane.b32.xlu0 %v6289, 16
        %v6709 = vpop.permute.xlu0 %6708
        %6710 = vrot.lane.b32.xlu0 %v6291, 16
        %v6711 = vpop.permute.xlu0 %6710
        %6712 = vrot.lane.b32.xlu0 %v6294, 16
        %v6713 = vpop.permute.xlu0 %6712
        %6714 = vrot.lane.b32.xlu0 %v6296, 16
        %v6715 = vpop.permute.xlu0 %6714
        %6716 = vrot.lane.b32.xlu0 %v6299, 16
        %v6717 = vpop.permute.xlu0 %6716
        %6718 = vrot.lane.b32.xlu0 %v6301, 16
        %v6719 = vpop.permute.xlu0 %6718
        %6720 = vrot.lane.b32.xlu0 %v6304, 16
        %v6721 = vpop.permute.xlu0 %6720
        %6722 = vrot.lane.b32.xlu0 %v6306, 16
        %v6723 = vpop.permute.xlu0 %6722
        %6724 = vrot.lane.b32.xlu0 %v6309, 16
        %v6725 = vpop.permute.xlu0 %6724
        %6726 = vrot.lane.b32.xlu0 %v6311, 16
        %v6727 = vpop.permute.xlu0 %6726
        %6728 = vrot.lane.b32.xlu0 %v6314, 16
        %v6729 = vpop.permute.xlu0 %6728
        %6730 = vrot.lane.b32.xlu0 %v6316, 16
        %v6731 = vpop.permute.xlu0 %6730
        %6732 = vrot.lane.b32.xlu0 %v6319, 16
        %v6733 = vpop.permute.xlu0 %6732
        %6734 = vrot.lane.b32.xlu0 %v6321, 16
        %v6735 = vpop.permute.xlu0 %6734
        %6736 = vrot.lane.b32.xlu0 %v6324, 16
        %v6737 = vpop.permute.xlu0 %6736
        %6738 = vrot.lane.b32.xlu0 %v6326, 16
        %v6739 = vpop.permute.xlu0 %6738
        %6740 = vrot.lane.b32.xlu0 %v6329, 16
        %v6741 = vpop.permute.xlu0 %6740
        %6742 = vrot.lane.b32.xlu0 %v6331, 16
        %v6743 = vpop.permute.xlu0 %6742
        %6744 = vrot.lane.b32.xlu0 %v6334, 16
        %v6745 = vpop.permute.xlu0 %6744
        %6746 = vrot.lane.b32.xlu0 %v6336, 16
        %v6747 = vpop.permute.xlu0 %6746
        %6748 = vrot.lane.b32.xlu0 %v6339, 16
        %v6749 = vpop.permute.xlu0 %6748
        %6750 = vrot.lane.b32.xlu0 %v6341, 16
        %v6751 = vpop.permute.xlu0 %6750
        %6752 = vrot.lane.b32.xlu0 %v6344, 16
        %v6753 = vpop.permute.xlu0 %6752
        %6754 = vrot.lane.b32.xlu0 %v6346, 16
        %v6755 = vpop.permute.xlu0 %6754
        %6756 = vrot.lane.b32.xlu0 %v6349, 16
        %v6757 = vpop.permute.xlu0 %6756
        %6758 = vrot.lane.b32.xlu0 %v6351, 16
        %v6759 = vpop.permute.xlu0 %6758
        %6760 = vrot.lane.b32.xlu0 %v6354, 16
        %v6761 = vpop.permute.xlu0 %6760
        %6762 = vrot.lane.b32.xlu0 %v6356, 16
        %v6763 = vpop.permute.xlu0 %6762
        %6764 = vrot.lane.b32.xlu0 %v6359, 16
        %v6765 = vpop.permute.xlu0 %6764
        %6766 = vrot.lane.b32.xlu0 %v6361, 16
        %v6767 = vpop.permute.xlu0 %6766
        %6768 = vrot.lane.b32.xlu0 %v6364, 16
        %v6769 = vpop.permute.xlu0 %6768
        %6770 = vrot.lane.b32.xlu0 %v6366, 16
        %v6771 = vpop.permute.xlu0 %6770
        %6772 = vrot.lane.b32.xlu0 %v6369, 16
        %v6773 = vpop.permute.xlu0 %6772
        %6774 = vrot.lane.b32.xlu0 %v6371, 16
        %v6775 = vpop.permute.xlu0 %6774
        %6840 = vrot.lane.b32.xlu0 %v6374, 32
        %v6841 = vpop.permute.xlu0 %6840
        %6842 = vrot.lane.b32.xlu0 %v6376, 32
        %v6843 = vpop.permute.xlu0 %6842
        %6844 = vrot.lane.b32.xlu0 %v6379, 32
        %v6845 = vpop.permute.xlu0 %6844
        %6846 = vrot.lane.b32.xlu0 %v6381, 32
        %v6847 = vpop.permute.xlu0 %6846
        %6848 = vrot.lane.b32.xlu0 %v6384, 32
        %v6849 = vpop.permute.xlu0 %6848
        %6850 = vrot.lane.b32.xlu0 %v6386, 32
        %v6851 = vpop.permute.xlu0 %6850
        %6852 = vrot.lane.b32.xlu0 %v6389, 32
        %v6853 = vpop.permute.xlu0 %6852
        %6854 = vrot.lane.b32.xlu0 %v6391, 32
        %v6855 = vpop.permute.xlu0 %6854
        %6856 = vrot.lane.b32.xlu0 %v6394, 32
        %v6857 = vpop.permute.xlu0 %6856
        %6858 = vrot.lane.b32.xlu0 %v6396, 32
        %v6859 = vpop.permute.xlu0 %6858
        %6860 = vrot.lane.b32.xlu0 %v6399, 32
        %v6861 = vpop.permute.xlu0 %6860
        %6862 = vrot.lane.b32.xlu0 %v6401, 32
        %v6863 = vpop.permute.xlu0 %6862
        %6864 = vrot.lane.b32.xlu0 %v6404, 32
        %v6865 = vpop.permute.xlu0 %6864
        %6866 = vrot.lane.b32.xlu0 %v6406, 32
        %v6867 = vpop.permute.xlu0 %6866
        %6868 = vrot.lane.b32.xlu0 %v6409, 32
        %v6869 = vpop.permute.xlu0 %6868
        %6870 = vrot.lane.b32.xlu0 %v6411, 32
        %v6871 = vpop.permute.xlu0 %6870
        %6872 = vrot.lane.b32.xlu0 %v6414, 32
        %v6873 = vpop.permute.xlu0 %6872
        %6874 = vrot.lane.b32.xlu0 %v6416, 32
        %v6875 = vpop.permute.xlu0 %6874
        %6876 = vrot.lane.b32.xlu0 %v6419, 32
        %v6877 = vpop.permute.xlu0 %6876
        %6878 = vrot.lane.b32.xlu0 %v6421, 32
        %v6879 = vpop.permute.xlu0 %6878
        %6880 = vrot.lane.b32.xlu0 %v6424, 32
        %v6881 = vpop.permute.xlu0 %6880
        %6882 = vrot.lane.b32.xlu0 %v6426, 32
        %v6883 = vpop.permute.xlu0 %6882
        %6884 = vrot.lane.b32.xlu0 %v6429, 32
        %v6885 = vpop.permute.xlu0 %6884
        %6886 = vrot.lane.b32.xlu0 %v6431, 32
        %v6887 = vpop.permute.xlu0 %6886
        %6888 = vrot.lane.b32.xlu0 %v6434, 32
        %v6889 = vpop.permute.xlu0 %6888
        %6890 = vrot.lane.b32.xlu0 %v6436, 32
        %v6891 = vpop.permute.xlu0 %6890
        %6892 = vrot.lane.b32.xlu0 %v6439, 32
        %v6893 = vpop.permute.xlu0 %6892
        %6894 = vrot.lane.b32.xlu0 %v6441, 32
        %v6895 = vpop.permute.xlu0 %6894
        %6896 = vrot.lane.b32.xlu0 %v6444, 32
        %v6897 = vpop.permute.xlu0 %6896
        %6898 = vrot.lane.b32.xlu0 %v6446, 32
        %v6899 = vpop.permute.xlu0 %6898
        %6900 = vrot.lane.b32.xlu0 %v6449, 32
        %v6901 = vpop.permute.xlu0 %6900
        %6902 = vrot.lane.b32.xlu0 %v6451, 32
        %v6903 = vpop.permute.xlu0 %6902
        %6904 = vrot.lane.b32.xlu0 %v6454, 32
        %v6905 = vpop.permute.xlu0 %6904
        %6906 = vrot.lane.b32.xlu0 %v6456, 32
        %v6907 = vpop.permute.xlu0 %6906
        %6908 = vrot.lane.b32.xlu0 %v6459, 32
        %v6909 = vpop.permute.xlu0 %6908
        %6910 = vrot.lane.b32.xlu0 %v6461, 32
        %v6911 = vpop.permute.xlu0 %6910
        %6912 = vrot.lane.b32.xlu0 %v6464, 32
        %v6913 = vpop.permute.xlu0 %6912
        %6914 = vrot.lane.b32.xlu0 %v6466, 32
        %v6915 = vpop.permute.xlu0 %6914
        %6916 = vrot.lane.b32.xlu0 %v6469, 32
        %v6917 = vpop.permute.xlu0 %6916
        %6918 = vrot.lane.b32.xlu0 %v6471, 32
        %v6919 = vpop.permute.xlu0 %6918
        %6920 = vrot.lane.b32.xlu0 %v6474, 32
        %v6921 = vpop.permute.xlu0 %6920
        %6922 = vrot.lane.b32.xlu0 %v6476, 32
        %v6923 = vpop.permute.xlu0 %6922
        %6924 = vrot.lane.b32.xlu0 %v6479, 32
        %v6925 = vpop.permute.xlu0 %6924
        %6926 = vrot.lane.b32.xlu0 %v6481, 32
        %v6927 = vpop.permute.xlu0 %6926
        %6928 = vrot.lane.b32.xlu0 %v6484, 32
        %v6929 = vpop.permute.xlu0 %6928
        %6930 = vrot.lane.b32.xlu0 %v6486, 32
        %v6931 = vpop.permute.xlu0 %6930
        %6932 = vrot.lane.b32.xlu0 %v6489, 32
        %v6933 = vpop.permute.xlu0 %6932
        %6934 = vrot.lane.b32.xlu0 %v6491, 32
        %v6935 = vpop.permute.xlu0 %6934
        %6936 = vrot.lane.b32.xlu0 %v6494, 32
        %v6937 = vpop.permute.xlu0 %6936
        %6938 = vrot.lane.b32.xlu0 %v6496, 32
        %v6939 = vpop.permute.xlu0 %6938
        %6940 = vrot.lane.b32.xlu0 %v6499, 32
        %v6941 = vpop.permute.xlu0 %6940
        %6942 = vrot.lane.b32.xlu0 %v6501, 32
        %v6943 = vpop.permute.xlu0 %6942
        %6944 = vrot.lane.b32.xlu0 %v6504, 32
        %v6945 = vpop.permute.xlu0 %6944
        %6946 = vrot.lane.b32.xlu0 %v6506, 32
        %v6947 = vpop.permute.xlu0 %6946
        %6948 = vrot.lane.b32.xlu0 %v6509, 32
        %v6949 = vpop.permute.xlu0 %6948
        %6950 = vrot.lane.b32.xlu0 %v6511, 32
        %v6951 = vpop.permute.xlu0 %6950
        %6952 = vrot.lane.b32.xlu0 %v6514, 32
        %v6953 = vpop.permute.xlu0 %6952
        %6954 = vrot.lane.b32.xlu0 %v6516, 32
        %v6955 = vpop.permute.xlu0 %6954
        %6956 = vrot.lane.b32.xlu0 %v6519, 32
        %v6957 = vpop.permute.xlu0 %6956
        %6958 = vrot.lane.b32.xlu0 %v6521, 32
        %v6959 = vpop.permute.xlu0 %6958
        %6960 = vrot.lane.b32.xlu0 %v6524, 32
        %v6961 = vpop.permute.xlu0 %6960
        %6962 = vrot.lane.b32.xlu0 %v6526, 32
        %v6963 = vpop.permute.xlu0 %6962
        %6964 = vrot.lane.b32.xlu0 %v6529, 32
        %v6965 = vpop.permute.xlu0 %6964
        %6966 = vrot.lane.b32.xlu0 %v6531, 32
        %v6967 = vpop.permute.xlu0 %6966
        %7032 = vrot.lane.b32.xlu0 %v6011, 48
        %v7033 = vpop.permute.xlu0 %7032
        %7034 = vrot.lane.b32.xlu0 %v6012, 48
        %v7035 = vpop.permute.xlu0 %7034
        %7036 = vrot.lane.b32.xlu0 %v6014, 48
        %v7037 = vpop.permute.xlu0 %7036
        %7038 = vrot.lane.b32.xlu0 %v6015, 48
        %v7039 = vpop.permute.xlu0 %7038
        %7040 = vrot.lane.b32.xlu0 %v6017, 48
        %v7041 = vpop.permute.xlu0 %7040
        %7042 = vrot.lane.b32.xlu0 %v6018, 48
        %v7043 = vpop.permute.xlu0 %7042
        %7044 = vrot.lane.b32.xlu0 %v6020, 48
        %v7045 = vpop.permute.xlu0 %7044
        %7046 = vrot.lane.b32.xlu0 %v6021, 48
        %v7047 = vpop.permute.xlu0 %7046
        %7048 = vrot.lane.b32.xlu0 %v6023, 48
        %v7049 = vpop.permute.xlu0 %7048
        %7050 = vrot.lane.b32.xlu0 %v6024, 48
        %v7051 = vpop.permute.xlu0 %7050
        %7052 = vrot.lane.b32.xlu0 %v6026, 48
        %v7053 = vpop.permute.xlu0 %7052
        %7054 = vrot.lane.b32.xlu0 %v6027, 48
        %v7055 = vpop.permute.xlu0 %7054
        %7056 = vrot.lane.b32.xlu0 %v6029, 48
        %v7057 = vpop.permute.xlu0 %7056
        %7058 = vrot.lane.b32.xlu0 %v6030, 48
        %v7059 = vpop.permute.xlu0 %7058
        %7060 = vrot.lane.b32.xlu0 %v6032, 48
        %v7061 = vpop.permute.xlu0 %7060
        %7062 = vrot.lane.b32.xlu0 %v6033, 48
        %v7063 = vpop.permute.xlu0 %7062
        %7064 = vrot.lane.b32.xlu0 %v6035, 48
        %v7065 = vpop.permute.xlu0 %7064
        %7066 = vrot.lane.b32.xlu0 %v6036, 48
        %v7067 = vpop.permute.xlu0 %7066
        %7068 = vrot.lane.b32.xlu0 %v6038, 48
        %v7069 = vpop.permute.xlu0 %7068
        %7070 = vrot.lane.b32.xlu0 %v6039, 48
        %v7071 = vpop.permute.xlu0 %7070
        %7072 = vrot.lane.b32.xlu0 %v6041, 48
        %v7073 = vpop.permute.xlu0 %7072
        %7074 = vrot.lane.b32.xlu0 %v6042, 48
        %v7075 = vpop.permute.xlu0 %7074
        %7076 = vrot.lane.b32.xlu0 %v6044, 48
        %v7077 = vpop.permute.xlu0 %7076
        %7078 = vrot.lane.b32.xlu0 %v6045, 48
        %v7079 = vpop.permute.xlu0 %7078
        %7080 = vrot.lane.b32.xlu0 %v6047, 48
        %v7081 = vpop.permute.xlu0 %7080
        %7082 = vrot.lane.b32.xlu0 %v6048, 48
        %v7083 = vpop.permute.xlu0 %7082
        %7084 = vrot.lane.b32.xlu0 %v6050, 48
        %v7085 = vpop.permute.xlu0 %7084
        %7086 = vrot.lane.b32.xlu0 %v6051, 48
        %v7087 = vpop.permute.xlu0 %7086
        %7088 = vrot.lane.b32.xlu0 %v6053, 48
        %v7089 = vpop.permute.xlu0 %7088
        %7090 = vrot.lane.b32.xlu0 %v6054, 48
        %v7091 = vpop.permute.xlu0 %7090
        %7092 = vrot.lane.b32.xlu0 %v6056, 48
        %v7093 = vpop.permute.xlu0 %7092
        %7094 = vrot.lane.b32.xlu0 %v6057, 48
        %v7095 = vpop.permute.xlu0 %7094
        %7096 = vrot.lane.b32.xlu0 %v6065, 48
        %v7097 = vpop.permute.xlu0 %7096
        %7098 = vrot.lane.b32.xlu0 %v6066, 48
        %v7099 = vpop.permute.xlu0 %7098
        %7100 = vrot.lane.b32.xlu0 %v6068, 48
        %v7101 = vpop.permute.xlu0 %7100
        %7102 = vrot.lane.b32.xlu0 %v6069, 48
        %v7103 = vpop.permute.xlu0 %7102
        %7104 = vrot.lane.b32.xlu0 %v6071, 48
        %v7105 = vpop.permute.xlu0 %7104
        %7106 = vrot.lane.b32.xlu0 %v6072, 48
        %v7107 = vpop.permute.xlu0 %7106
        %7108 = vrot.lane.b32.xlu0 %v6074, 48
        %v7109 = vpop.permute.xlu0 %7108
        %7110 = vrot.lane.b32.xlu0 %v6075, 48
        %v7111 = vpop.permute.xlu0 %7110
        %7112 = vrot.lane.b32.xlu0 %v6077, 48
        %v7113 = vpop.permute.xlu0 %7112
        %7114 = vrot.lane.b32.xlu0 %v6078, 48
        %v7115 = vpop.permute.xlu0 %7114
        %7116 = vrot.lane.b32.xlu0 %v6080, 48
        %v7117 = vpop.permute.xlu0 %7116
        %7118 = vrot.lane.b32.xlu0 %v6081, 48
        %v7119 = vpop.permute.xlu0 %7118
        %7120 = vrot.lane.b32.xlu0 %v6083, 48
        %v7121 = vpop.permute.xlu0 %7120
        %7122 = vrot.lane.b32.xlu0 %v6084, 48
        %v7123 = vpop.permute.xlu0 %7122
        %7124 = vrot.lane.b32.xlu0 %v6086, 48
        %v7125 = vpop.permute.xlu0 %7124
        %7126 = vrot.lane.b32.xlu0 %v6087, 48
        %v7127 = vpop.permute.xlu0 %7126
        %7128 = vrot.lane.b32.xlu0 %v6089, 48
        %v7129 = vpop.permute.xlu0 %7128
        %7130 = vrot.lane.b32.xlu0 %v6090, 48
        %v7131 = vpop.permute.xlu0 %7130
        %7132 = vrot.lane.b32.xlu0 %v6092, 48
        %v7133 = vpop.permute.xlu0 %7132
        %7134 = vrot.lane.b32.xlu0 %v6093, 48
        %v7135 = vpop.permute.xlu0 %7134
        %7136 = vrot.lane.b32.xlu0 %v6095, 48
        %v7137 = vpop.permute.xlu0 %7136
        %7138 = vrot.lane.b32.xlu0 %v6096, 48
        %v7139 = vpop.permute.xlu0 %7138
        %7140 = vrot.lane.b32.xlu0 %v6098, 48
        %v7141 = vpop.permute.xlu0 %7140
        %7142 = vrot.lane.b32.xlu0 %v6099, 48
        %v7143 = vpop.permute.xlu0 %7142
        %7144 = vrot.lane.b32.xlu0 %v6101, 48
        %v7145 = vpop.permute.xlu0 %7144
        %7146 = vrot.lane.b32.xlu0 %v6102, 48
        %v7147 = vpop.permute.xlu0 %7146
        %7148 = vrot.lane.b32.xlu0 %v6104, 48
        %v7149 = vpop.permute.xlu0 %7148
        %7150 = vrot.lane.b32.xlu0 %v6105, 48
        %v7151 = vpop.permute.xlu0 %7150
        %7152 = vrot.lane.b32.xlu0 %v6107, 48
        %v7153 = vpop.permute.xlu0 %7152
        %7154 = vrot.lane.b32.xlu0 %v6108, 48
        %v7155 = vpop.permute.xlu0 %7154
        %7156 = vrot.lane.b32.xlu0 %v6110, 48
        %v7157 = vpop.permute.xlu0 %7156
        %7158 = vrot.lane.b32.xlu0 %v6111, 48
        %v7159 = vpop.permute.xlu0 %7158
        %7224 = vrot.lane.b32.xlu0 %v6219, 64
        %v7225 = vpop.permute.xlu0 %7224
        %7226 = vrot.lane.b32.xlu0 %v6221, 64
        %v7227 = vpop.permute.xlu0 %7226
        %7228 = vrot.lane.b32.xlu0 %v6224, 64
        %v7229 = vpop.permute.xlu0 %7228
        %7230 = vrot.lane.b32.xlu0 %v6226, 64
        %v7231 = vpop.permute.xlu0 %7230
        %7232 = vrot.lane.b32.xlu0 %v6229, 64
        %v7233 = vpop.permute.xlu0 %7232
        %7234 = vrot.lane.b32.xlu0 %v6231, 64
        %v7235 = vpop.permute.xlu0 %7234
        %7236 = vrot.lane.b32.xlu0 %v6234, 64
        %v7237 = vpop.permute.xlu0 %7236
        %7238 = vrot.lane.b32.xlu0 %v6236, 64
        %v7239 = vpop.permute.xlu0 %7238
        %7240 = vrot.lane.b32.xlu0 %v6239, 64
        %v7241 = vpop.permute.xlu0 %7240
        %7242 = vrot.lane.b32.xlu0 %v6241, 64
        %v7243 = vpop.permute.xlu0 %7242
        %7244 = vrot.lane.b32.xlu0 %v6244, 64
        %v7245 = vpop.permute.xlu0 %7244
        %7246 = vrot.lane.b32.xlu0 %v6246, 64
        %v7247 = vpop.permute.xlu0 %7246
        %7248 = vrot.lane.b32.xlu0 %v6249, 64
        %v7249 = vpop.permute.xlu0 %7248
        %7250 = vrot.lane.b32.xlu0 %v6251, 64
        %v7251 = vpop.permute.xlu0 %7250
        %7252 = vrot.lane.b32.xlu0 %v6254, 64
        %v7253 = vpop.permute.xlu0 %7252
        %7254 = vrot.lane.b32.xlu0 %v6256, 64
        %v7255 = vpop.permute.xlu0 %7254
        %7256 = vrot.lane.b32.xlu0 %v6259, 64
        %v7257 = vpop.permute.xlu0 %7256
        %7258 = vrot.lane.b32.xlu0 %v6261, 64
        %v7259 = vpop.permute.xlu0 %7258
        %7260 = vrot.lane.b32.xlu0 %v6264, 64
        %v7261 = vpop.permute.xlu0 %7260
        %7262 = vrot.lane.b32.xlu0 %v6266, 64
        %v7263 = vpop.permute.xlu0 %7262
        %7264 = vrot.lane.b32.xlu0 %v6269, 64
        %v7265 = vpop.permute.xlu0 %7264
        %7266 = vrot.lane.b32.xlu0 %v6271, 64
        %v7267 = vpop.permute.xlu0 %7266
        %7268 = vrot.lane.b32.xlu0 %v6274, 64
        %v7269 = vpop.permute.xlu0 %7268
        %7270 = vrot.lane.b32.xlu0 %v6276, 64
        %v7271 = vpop.permute.xlu0 %7270
        %7272 = vrot.lane.b32.xlu0 %v6279, 64
        %v7273 = vpop.permute.xlu0 %7272
        %7274 = vrot.lane.b32.xlu0 %v6281, 64
        %v7275 = vpop.permute.xlu0 %7274
        %7276 = vrot.lane.b32.xlu0 %v6284, 64
        %v7277 = vpop.permute.xlu0 %7276
        %7278 = vrot.lane.b32.xlu0 %v6286, 64
        %v7279 = vpop.permute.xlu0 %7278
        %7280 = vrot.lane.b32.xlu0 %v6289, 64
        %v7281 = vpop.permute.xlu0 %7280
        %7282 = vrot.lane.b32.xlu0 %v6291, 64
        %v7283 = vpop.permute.xlu0 %7282
        %7284 = vrot.lane.b32.xlu0 %v6540, 64
        %v7285 = vpop.permute.xlu0 %7284
        %7286 = vrot.lane.b32.xlu0 %v6542, 64
        %v7287 = vpop.permute.xlu0 %7286
        %7288 = vrot.lane.b32.xlu0 %v6299, 64
        %v7289 = vpop.permute.xlu0 %7288
        %7290 = vrot.lane.b32.xlu0 %v6301, 64
        %v7291 = vpop.permute.xlu0 %7290
        %7292 = vrot.lane.b32.xlu0 %v6304, 64
        %v7293 = vpop.permute.xlu0 %7292
        %7294 = vrot.lane.b32.xlu0 %v6306, 64
        %v7295 = vpop.permute.xlu0 %7294
        %7296 = vrot.lane.b32.xlu0 %v6309, 64
        %v7297 = vpop.permute.xlu0 %7296
        %7298 = vrot.lane.b32.xlu0 %v6311, 64
        %v7299 = vpop.permute.xlu0 %7298
        %7300 = vrot.lane.b32.xlu0 %v6314, 64
        %v7301 = vpop.permute.xlu0 %7300
        %7302 = vrot.lane.b32.xlu0 %v6316, 64
        %v7303 = vpop.permute.xlu0 %7302
        %7304 = vrot.lane.b32.xlu0 %v6319, 64
        %v7305 = vpop.permute.xlu0 %7304
        %7306 = vrot.lane.b32.xlu0 %v6321, 64
        %v7307 = vpop.permute.xlu0 %7306
        %7308 = vrot.lane.b32.xlu0 %v6324, 64
        %v7309 = vpop.permute.xlu0 %7308
        %7310 = vrot.lane.b32.xlu0 %v6326, 64
        %v7311 = vpop.permute.xlu0 %7310
        %7312 = vrot.lane.b32.xlu0 %v6329, 64
        %v7313 = vpop.permute.xlu0 %7312
        %7314 = vrot.lane.b32.xlu0 %v6331, 64
        %v7315 = vpop.permute.xlu0 %7314
        %7316 = vrot.lane.b32.xlu0 %v6334, 64
        %v7317 = vpop.permute.xlu0 %7316
        %7318 = vrot.lane.b32.xlu0 %v6336, 64
        %v7319 = vpop.permute.xlu0 %7318
        %7320 = vrot.lane.b32.xlu0 %v6339, 64
        %v7321 = vpop.permute.xlu0 %7320
        %7322 = vrot.lane.b32.xlu0 %v6341, 64
        %v7323 = vpop.permute.xlu0 %7322
        %7324 = vrot.lane.b32.xlu0 %v6344, 64
        %v7325 = vpop.permute.xlu0 %7324
        %7326 = vrot.lane.b32.xlu0 %v6346, 64
        %v7327 = vpop.permute.xlu0 %7326
        %7328 = vrot.lane.b32.xlu0 %v6349, 64
        %v7329 = vpop.permute.xlu0 %7328
        %7330 = vrot.lane.b32.xlu0 %v6351, 64
        %v7331 = vpop.permute.xlu0 %7330
        %7332 = vrot.lane.b32.xlu0 %v6354, 64
        %v7333 = vpop.permute.xlu0 %7332
        %7334 = vrot.lane.b32.xlu0 %v6356, 64
        %v7335 = vpop.permute.xlu0 %7334
        %7336 = vrot.lane.b32.xlu0 %v6359, 64
        %v7337 = vpop.permute.xlu0 %7336
        %7338 = vrot.lane.b32.xlu0 %v6361, 64
        %v7339 = vpop.permute.xlu0 %7338
        %7340 = vrot.lane.b32.xlu0 %v6364, 64
        %v7341 = vpop.permute.xlu0 %7340
        %7342 = vrot.lane.b32.xlu0 %v6366, 64
        %v7343 = vpop.permute.xlu0 %7342
        %7344 = vrot.lane.b32.xlu0 %v6369, 64
        %v7345 = vpop.permute.xlu0 %7344
        %7346 = vrot.lane.b32.xlu0 %v6371, 64
        %v7347 = vpop.permute.xlu0 %7346
        %7348 = vrot.lane.b32.xlu0 %v6545, 64
        %v7349 = vpop.permute.xlu0 %7348
        %7350 = vrot.lane.b32.xlu0 %v6547, 64
        %v7351 = vpop.permute.xlu0 %7350
        %7416 = vrot.lane.b32.xlu0 %v6379, 80
        %v7417 = vpop.permute.xlu0 %7416
        %7418 = vrot.lane.b32.xlu0 %v6381, 80
        %v7419 = vpop.permute.xlu0 %7418
        %7420 = vrot.lane.b32.xlu0 %v6384, 80
        %v7421 = vpop.permute.xlu0 %7420
        %7422 = vrot.lane.b32.xlu0 %v6386, 80
        %v7423 = vpop.permute.xlu0 %7422
        %7424 = vrot.lane.b32.xlu0 %v6389, 80
        %v7425 = vpop.permute.xlu0 %7424
        %7426 = vrot.lane.b32.xlu0 %v6391, 80
        %v7427 = vpop.permute.xlu0 %7426
        %7428 = vrot.lane.b32.xlu0 %v6394, 80
        %v7429 = vpop.permute.xlu0 %7428
        %7430 = vrot.lane.b32.xlu0 %v6396, 80
        %v7431 = vpop.permute.xlu0 %7430
        %7432 = vrot.lane.b32.xlu0 %v6399, 80
        %v7433 = vpop.permute.xlu0 %7432
        %7434 = vrot.lane.b32.xlu0 %v6401, 80
        %v7435 = vpop.permute.xlu0 %7434
        %7436 = vrot.lane.b32.xlu0 %v6404, 80
        %v7437 = vpop.permute.xlu0 %7436
        %7438 = vrot.lane.b32.xlu0 %v6406, 80
        %v7439 = vpop.permute.xlu0 %7438
        %7440 = vrot.lane.b32.xlu0 %v6409, 80
        %v7441 = vpop.permute.xlu0 %7440
        %7442 = vrot.lane.b32.xlu0 %v6411, 80
        %v7443 = vpop.permute.xlu0 %7442
        %7444 = vrot.lane.b32.xlu0 %v6414, 80
        %v7445 = vpop.permute.xlu0 %7444
        %7446 = vrot.lane.b32.xlu0 %v6416, 80
        %v7447 = vpop.permute.xlu0 %7446
        %7448 = vrot.lane.b32.xlu0 %v6419, 80
        %v7449 = vpop.permute.xlu0 %7448
        %7450 = vrot.lane.b32.xlu0 %v6421, 80
        %v7451 = vpop.permute.xlu0 %7450
        %7452 = vrot.lane.b32.xlu0 %v6424, 80
        %v7453 = vpop.permute.xlu0 %7452
        %7454 = vrot.lane.b32.xlu0 %v6426, 80
        %v7455 = vpop.permute.xlu0 %7454
        %7456 = vrot.lane.b32.xlu0 %v6429, 80
        %v7457 = vpop.permute.xlu0 %7456
        %7458 = vrot.lane.b32.xlu0 %v6431, 80
        %v7459 = vpop.permute.xlu0 %7458
        %7460 = vrot.lane.b32.xlu0 %v6434, 80
        %v7461 = vpop.permute.xlu0 %7460
        %7462 = vrot.lane.b32.xlu0 %v6436, 80
        %v7463 = vpop.permute.xlu0 %7462
        %7464 = vrot.lane.b32.xlu0 %v6439, 80
        %v7465 = vpop.permute.xlu0 %7464
        %7466 = vrot.lane.b32.xlu0 %v6441, 80
        %v7467 = vpop.permute.xlu0 %7466
        %7468 = vrot.lane.b32.xlu0 %v6444, 80
        %v7469 = vpop.permute.xlu0 %7468
        %7470 = vrot.lane.b32.xlu0 %v6446, 80
        %v7471 = vpop.permute.xlu0 %7470
        %7472 = vrot.lane.b32.xlu0 %v6449, 80
        %v7473 = vpop.permute.xlu0 %7472
        %7474 = vrot.lane.b32.xlu0 %v6451, 80
        %v7475 = vpop.permute.xlu0 %7474
        %7476 = vrot.lane.b32.xlu0 %v6550, 80
        %v7477 = vpop.permute.xlu0 %7476
        %7478 = vrot.lane.b32.xlu0 %v6552, 80
        %v7479 = vpop.permute.xlu0 %7478
        %7480 = vrot.lane.b32.xlu0 %v6459, 80
        %v7481 = vpop.permute.xlu0 %7480
        %7482 = vrot.lane.b32.xlu0 %v6461, 80
        %v7483 = vpop.permute.xlu0 %7482
        %7484 = vrot.lane.b32.xlu0 %v6464, 80
        %v7485 = vpop.permute.xlu0 %7484
        %7486 = vrot.lane.b32.xlu0 %v6466, 80
        %v7487 = vpop.permute.xlu0 %7486
        %7488 = vrot.lane.b32.xlu0 %v6469, 80
        %v7489 = vpop.permute.xlu0 %7488
        %7490 = vrot.lane.b32.xlu0 %v6471, 80
        %v7491 = vpop.permute.xlu0 %7490
        %7492 = vrot.lane.b32.xlu0 %v6474, 80
        %v7493 = vpop.permute.xlu0 %7492
        %7494 = vrot.lane.b32.xlu0 %v6476, 80
        %v7495 = vpop.permute.xlu0 %7494
        %7496 = vrot.lane.b32.xlu0 %v6479, 80
        %v7497 = vpop.permute.xlu0 %7496
        %7498 = vrot.lane.b32.xlu0 %v6481, 80
        %v7499 = vpop.permute.xlu0 %7498
        %7500 = vrot.lane.b32.xlu0 %v6484, 80
        %v7501 = vpop.permute.xlu0 %7500
        %7502 = vrot.lane.b32.xlu0 %v6486, 80
        %v7503 = vpop.permute.xlu0 %7502
        %7504 = vrot.lane.b32.xlu0 %v6489, 80
        %v7505 = vpop.permute.xlu0 %7504
        %7506 = vrot.lane.b32.xlu0 %v6491, 80
        %v7507 = vpop.permute.xlu0 %7506
        %7508 = vrot.lane.b32.xlu0 %v6494, 80
        %v7509 = vpop.permute.xlu0 %7508
        %7510 = vrot.lane.b32.xlu0 %v6496, 80
        %v7511 = vpop.permute.xlu0 %7510
        %7512 = vrot.lane.b32.xlu0 %v6499, 80
        %v7513 = vpop.permute.xlu0 %7512
        %7514 = vrot.lane.b32.xlu0 %v6501, 80
        %v7515 = vpop.permute.xlu0 %7514
        %7516 = vrot.lane.b32.xlu0 %v6504, 80
        %v7517 = vpop.permute.xlu0 %7516
        %7518 = vrot.lane.b32.xlu0 %v6506, 80
        %v7519 = vpop.permute.xlu0 %7518
        %7520 = vrot.lane.b32.xlu0 %v6509, 80
        %v7521 = vpop.permute.xlu0 %7520
        %7522 = vrot.lane.b32.xlu0 %v6511, 80
        %v7523 = vpop.permute.xlu0 %7522
        %7524 = vrot.lane.b32.xlu0 %v6514, 80
        %v7525 = vpop.permute.xlu0 %7524
        %7526 = vrot.lane.b32.xlu0 %v6516, 80
        %v7527 = vpop.permute.xlu0 %7526
        %7528 = vrot.lane.b32.xlu0 %v6519, 80
        %v7529 = vpop.permute.xlu0 %7528
        %7530 = vrot.lane.b32.xlu0 %v6521, 80
        %v7531 = vpop.permute.xlu0 %7530
        %7532 = vrot.lane.b32.xlu0 %v6524, 80
        %v7533 = vpop.permute.xlu0 %7532
        %7534 = vrot.lane.b32.xlu0 %v6526, 80
        %v7535 = vpop.permute.xlu0 %7534
        %7536 = vrot.lane.b32.xlu0 %v6529, 80
        %v7537 = vpop.permute.xlu0 %7536
        %7538 = vrot.lane.b32.xlu0 %v6531, 80
        %v7539 = vpop.permute.xlu0 %7538
        %7540 = vrot.lane.b32.xlu0 %v6555, 80
        %v7541 = vpop.permute.xlu0 %7540
        %7542 = vrot.lane.b32.xlu0 %v6557, 80
        %v7543 = vpop.permute.xlu0 %7542
        %7608 = vrot.lane.b32.xlu0 %v6014, 96
        %v7609 = vpop.permute.xlu0 %7608
        %7610 = vrot.lane.b32.xlu0 %v6015, 96
        %v7611 = vpop.permute.xlu0 %7610
        %7612 = vrot.lane.b32.xlu0 %v6017, 96
        %v7613 = vpop.permute.xlu0 %7612
        %7614 = vrot.lane.b32.xlu0 %v6018, 96
        %v7615 = vpop.permute.xlu0 %7614
        %7616 = vrot.lane.b32.xlu0 %v6020, 96
        %v7617 = vpop.permute.xlu0 %7616
        %7618 = vrot.lane.b32.xlu0 %v6021, 96
        %v7619 = vpop.permute.xlu0 %7618
        %7620 = vrot.lane.b32.xlu0 %v6023, 96
        %v7621 = vpop.permute.xlu0 %7620
        %7622 = vrot.lane.b32.xlu0 %v6024, 96
        %v7623 = vpop.permute.xlu0 %7622
        %7624 = vrot.lane.b32.xlu0 %v6026, 96
        %v7625 = vpop.permute.xlu0 %7624
        %7626 = vrot.lane.b32.xlu0 %v6027, 96
        %v7627 = vpop.permute.xlu0 %7626
        %7628 = vrot.lane.b32.xlu0 %v6029, 96
        %v7629 = vpop.permute.xlu0 %7628
        %7630 = vrot.lane.b32.xlu0 %v6030, 96
        %v7631 = vpop.permute.xlu0 %7630
        %7632 = vrot.lane.b32.xlu0 %v6032, 96
        %v7633 = vpop.permute.xlu0 %7632
        %7634 = vrot.lane.b32.xlu0 %v6033, 96
        %v7635 = vpop.permute.xlu0 %7634
        %7636 = vrot.lane.b32.xlu0 %v6035, 96
        %v7637 = vpop.permute.xlu0 %7636
        %7638 = vrot.lane.b32.xlu0 %v6036, 96
        %v7639 = vpop.permute.xlu0 %7638
        %7640 = vrot.lane.b32.xlu0 %v6038, 96
        %v7641 = vpop.permute.xlu0 %7640
        %7642 = vrot.lane.b32.xlu0 %v6039, 96
        %v7643 = vpop.permute.xlu0 %7642
        %7644 = vrot.lane.b32.xlu0 %v6041, 96
        %v7645 = vpop.permute.xlu0 %7644
        %7646 = vrot.lane.b32.xlu0 %v6042, 96
        %v7647 = vpop.permute.xlu0 %7646
        %7648 = vrot.lane.b32.xlu0 %v6044, 96
        %v7649 = vpop.permute.xlu0 %7648
        %7650 = vrot.lane.b32.xlu0 %v6045, 96
        %v7651 = vpop.permute.xlu0 %7650
        %7652 = vrot.lane.b32.xlu0 %v6047, 96
        %v7653 = vpop.permute.xlu0 %7652
        %7654 = vrot.lane.b32.xlu0 %v6048, 96
        %v7655 = vpop.permute.xlu0 %7654
        %7656 = vrot.lane.b32.xlu0 %v6050, 96
        %v7657 = vpop.permute.xlu0 %7656
        %7658 = vrot.lane.b32.xlu0 %v6051, 96
        %v7659 = vpop.permute.xlu0 %7658
        %7660 = vrot.lane.b32.xlu0 %v6053, 96
        %v7661 = vpop.permute.xlu0 %7660
        %7662 = vrot.lane.b32.xlu0 %v6054, 96
        %v7663 = vpop.permute.xlu0 %7662
        %7664 = vrot.lane.b32.xlu0 %v6056, 96
        %v7665 = vpop.permute.xlu0 %7664
        %7666 = vrot.lane.b32.xlu0 %v6057, 96
        %v7667 = vpop.permute.xlu0 %7666
        %7668 = vrot.lane.b32.xlu0 %v6059, 96
        %v7669 = vpop.permute.xlu0 %7668
        %7670 = vrot.lane.b32.xlu0 %v6060, 96
        %v7671 = vpop.permute.xlu0 %7670
        %7672 = vrot.lane.b32.xlu0 %v6068, 96
        %v7673 = vpop.permute.xlu0 %7672
        %7674 = vrot.lane.b32.xlu0 %v6069, 96
        %v7675 = vpop.permute.xlu0 %7674
        %7676 = vrot.lane.b32.xlu0 %v6071, 96
        %v7677 = vpop.permute.xlu0 %7676
        %7678 = vrot.lane.b32.xlu0 %v6072, 96
        %v7679 = vpop.permute.xlu0 %7678
        %7680 = vrot.lane.b32.xlu0 %v6074, 96
        %v7681 = vpop.permute.xlu0 %7680
        %7682 = vrot.lane.b32.xlu0 %v6075, 96
        %v7683 = vpop.permute.xlu0 %7682
        %7684 = vrot.lane.b32.xlu0 %v6077, 96
        %v7685 = vpop.permute.xlu0 %7684
        %7686 = vrot.lane.b32.xlu0 %v6078, 96
        %v7687 = vpop.permute.xlu0 %7686
        %7688 = vrot.lane.b32.xlu0 %v6080, 96
        %v7689 = vpop.permute.xlu0 %7688
        %7690 = vrot.lane.b32.xlu0 %v6081, 96
        %v7691 = vpop.permute.xlu0 %7690
        %7692 = vrot.lane.b32.xlu0 %v6083, 96
        %v7693 = vpop.permute.xlu0 %7692
        %7694 = vrot.lane.b32.xlu0 %v6084, 96
        %v7695 = vpop.permute.xlu0 %7694
        %7696 = vrot.lane.b32.xlu0 %v6086, 96
        %v7697 = vpop.permute.xlu0 %7696
        %7698 = vrot.lane.b32.xlu0 %v6087, 96
        %v7699 = vpop.permute.xlu0 %7698
        %7700 = vrot.lane.b32.xlu0 %v6089, 96
        %v7701 = vpop.permute.xlu0 %7700
        %7702 = vrot.lane.b32.xlu0 %v6090, 96
        %v7703 = vpop.permute.xlu0 %7702
        %7704 = vrot.lane.b32.xlu0 %v6092, 96
        %v7705 = vpop.permute.xlu0 %7704
        %7706 = vrot.lane.b32.xlu0 %v6093, 96
        %v7707 = vpop.permute.xlu0 %7706
        %7708 = vrot.lane.b32.xlu0 %v6095, 96
        %v7709 = vpop.permute.xlu0 %7708
        %7710 = vrot.lane.b32.xlu0 %v6096, 96
        %v7711 = vpop.permute.xlu0 %7710
        %7712 = vrot.lane.b32.xlu0 %v6098, 96
        %v7713 = vpop.permute.xlu0 %7712
        %7714 = vrot.lane.b32.xlu0 %v6099, 96
        %v7715 = vpop.permute.xlu0 %7714
        %7716 = vrot.lane.b32.xlu0 %v6101, 96
        %v7717 = vpop.permute.xlu0 %7716
        %7718 = vrot.lane.b32.xlu0 %v6102, 96
        %v7719 = vpop.permute.xlu0 %7718
        %7720 = vrot.lane.b32.xlu0 %v6104, 96
        %v7721 = vpop.permute.xlu0 %7720
        %7722 = vrot.lane.b32.xlu0 %v6105, 96
        %v7723 = vpop.permute.xlu0 %7722
        %7724 = vrot.lane.b32.xlu0 %v6107, 96
        %v7725 = vpop.permute.xlu0 %7724
        %7726 = vrot.lane.b32.xlu0 %v6108, 96
        %v7727 = vpop.permute.xlu0 %7726
        %7728 = vrot.lane.b32.xlu0 %v6110, 96
        %v7729 = vpop.permute.xlu0 %7728
        %7730 = vrot.lane.b32.xlu0 %v6111, 96
        %v7731 = vpop.permute.xlu0 %7730
        %7732 = vrot.lane.b32.xlu0 %v6113, 96
        %v7733 = vpop.permute.xlu0 %7732
        %7734 = vrot.lane.b32.xlu0 %v6114, 96
        %v7735 = vpop.permute.xlu0 %7734
        %7800 = vrot.lane.b32.xlu0 %v6224, 112
        %v7801 = vpop.permute.xlu0 %7800
        %7802 = vrot.lane.b32.xlu0 %v6226, 112
        %v7803 = vpop.permute.xlu0 %7802
        %7804 = vrot.lane.b32.xlu0 %v6229, 112
        %v7805 = vpop.permute.xlu0 %7804
        %7806 = vrot.lane.b32.xlu0 %v6231, 112
        %v7807 = vpop.permute.xlu0 %7806
        %7808 = vrot.lane.b32.xlu0 %v6234, 112
        %v7809 = vpop.permute.xlu0 %7808
        %7810 = vrot.lane.b32.xlu0 %v6236, 112
        %v7811 = vpop.permute.xlu0 %7810
        %7812 = vrot.lane.b32.xlu0 %v6239, 112
        %v7813 = vpop.permute.xlu0 %7812
        %7814 = vrot.lane.b32.xlu0 %v6241, 112
        %v7815 = vpop.permute.xlu0 %7814
        %7816 = vrot.lane.b32.xlu0 %v6244, 112
        %v7817 = vpop.permute.xlu0 %7816
        %7818 = vrot.lane.b32.xlu0 %v6246, 112
        %v7819 = vpop.permute.xlu0 %7818
        %7820 = vrot.lane.b32.xlu0 %v6249, 112
        %v7821 = vpop.permute.xlu0 %7820
        %7822 = vrot.lane.b32.xlu0 %v6251, 112
        %v7823 = vpop.permute.xlu0 %7822
        %7824 = vrot.lane.b32.xlu0 %v6254, 112
        %v7825 = vpop.permute.xlu0 %7824
        %7826 = vrot.lane.b32.xlu0 %v6256, 112
        %v7827 = vpop.permute.xlu0 %7826
        %7828 = vrot.lane.b32.xlu0 %v6259, 112
        %v7829 = vpop.permute.xlu0 %7828
        %7830 = vrot.lane.b32.xlu0 %v6261, 112
        %v7831 = vpop.permute.xlu0 %7830
        %7832 = vrot.lane.b32.xlu0 %v6264, 112
        %v7833 = vpop.permute.xlu0 %7832
        %7834 = vrot.lane.b32.xlu0 %v6266, 112
        %v7835 = vpop.permute.xlu0 %7834
        %7836 = vrot.lane.b32.xlu0 %v6269, 112
        %v7837 = vpop.permute.xlu0 %7836
        %7838 = vrot.lane.b32.xlu0 %v6271, 112
        %v7839 = vpop.permute.xlu0 %7838
        %7840 = vrot.lane.b32.xlu0 %v6274, 112
        %v7841 = vpop.permute.xlu0 %7840
        %7842 = vrot.lane.b32.xlu0 %v6276, 112
        %v7843 = vpop.permute.xlu0 %7842
        %7844 = vrot.lane.b32.xlu0 %v6279, 112
        %v7845 = vpop.permute.xlu0 %7844
        %7846 = vrot.lane.b32.xlu0 %v6281, 112
        %v7847 = vpop.permute.xlu0 %7846
        %7848 = vrot.lane.b32.xlu0 %v6284, 112
        %v7849 = vpop.permute.xlu0 %7848
        %7850 = vrot.lane.b32.xlu0 %v6286, 112
        %v7851 = vpop.permute.xlu0 %7850
        %7852 = vrot.lane.b32.xlu0 %v6289, 112
        %v7853 = vpop.permute.xlu0 %7852
        %7854 = vrot.lane.b32.xlu0 %v6291, 112
        %v7855 = vpop.permute.xlu0 %7854
        %7856 = vrot.lane.b32.xlu0 %v6540, 112
        %v7857 = vpop.permute.xlu0 %7856
        %7858 = vrot.lane.b32.xlu0 %v6542, 112
        %v7859 = vpop.permute.xlu0 %7858
        %7860 = vrot.lane.b32.xlu0 %v6566, 112
        %v7861 = vpop.permute.xlu0 %7860
        %7862 = vrot.lane.b32.xlu0 %v6568, 112
        %v7863 = vpop.permute.xlu0 %7862
        %7864 = vrot.lane.b32.xlu0 %v6304, 112
        %v7865 = vpop.permute.xlu0 %7864
        %7866 = vrot.lane.b32.xlu0 %v6306, 112
        %v7867 = vpop.permute.xlu0 %7866
        %7868 = vrot.lane.b32.xlu0 %v6309, 112
        %v7869 = vpop.permute.xlu0 %7868
        %7870 = vrot.lane.b32.xlu0 %v6311, 112
        %v7871 = vpop.permute.xlu0 %7870
        %7872 = vrot.lane.b32.xlu0 %v6314, 112
        %v7873 = vpop.permute.xlu0 %7872
        %7874 = vrot.lane.b32.xlu0 %v6316, 112
        %v7875 = vpop.permute.xlu0 %7874
        %7876 = vrot.lane.b32.xlu0 %v6319, 112
        %v7877 = vpop.permute.xlu0 %7876
        %7878 = vrot.lane.b32.xlu0 %v6321, 112
        %v7879 = vpop.permute.xlu0 %7878
        %7880 = vrot.lane.b32.xlu0 %v6324, 112
        %v7881 = vpop.permute.xlu0 %7880
        %7882 = vrot.lane.b32.xlu0 %v6326, 112
        %v7883 = vpop.permute.xlu0 %7882
        %7884 = vrot.lane.b32.xlu0 %v6329, 112
        %v7885 = vpop.permute.xlu0 %7884
        %7886 = vrot.lane.b32.xlu0 %v6331, 112
        %v7887 = vpop.permute.xlu0 %7886
        %7888 = vrot.lane.b32.xlu0 %v6334, 112
        %v7889 = vpop.permute.xlu0 %7888
        %7890 = vrot.lane.b32.xlu0 %v6336, 112
        %v7891 = vpop.permute.xlu0 %7890
        %7892 = vrot.lane.b32.xlu0 %v6339, 112
        %v7893 = vpop.permute.xlu0 %7892
        %7894 = vrot.lane.b32.xlu0 %v6341, 112
        %v7895 = vpop.permute.xlu0 %7894
        %7896 = vrot.lane.b32.xlu0 %v6344, 112
        %v7897 = vpop.permute.xlu0 %7896
        %7898 = vrot.lane.b32.xlu0 %v6346, 112
        %v7899 = vpop.permute.xlu0 %7898
        %7900 = vrot.lane.b32.xlu0 %v6349, 112
        %v7901 = vpop.permute.xlu0 %7900
        %7902 = vrot.lane.b32.xlu0 %v6351, 112
        %v7903 = vpop.permute.xlu0 %7902
        %7904 = vrot.lane.b32.xlu0 %v6354, 112
        %v7905 = vpop.permute.xlu0 %7904
        %7906 = vrot.lane.b32.xlu0 %v6356, 112
        %v7907 = vpop.permute.xlu0 %7906
        %7908 = vrot.lane.b32.xlu0 %v6359, 112
        %v7909 = vpop.permute.xlu0 %7908
        %7910 = vrot.lane.b32.xlu0 %v6361, 112
        %v7911 = vpop.permute.xlu0 %7910
        %7912 = vrot.lane.b32.xlu0 %v6364, 112
        %v7913 = vpop.permute.xlu0 %7912
        %7914 = vrot.lane.b32.xlu0 %v6366, 112
        %v7915 = vpop.permute.xlu0 %7914
        %7916 = vrot.lane.b32.xlu0 %v6369, 112
        %v7917 = vpop.permute.xlu0 %7916
        %7918 = vrot.lane.b32.xlu0 %v6371, 112
        %v7919 = vpop.permute.xlu0 %7918
        %7920 = vrot.lane.b32.xlu0 %v6545, 112
        %v7921 = vpop.permute.xlu0 %7920
        %7922 = vrot.lane.b32.xlu0 %v6547, 112
        %v7923 = vpop.permute.xlu0 %7922
        %7924 = vrot.lane.b32.xlu0 %v6571, 112
        %v7925 = vpop.permute.xlu0 %7924
        %7926 = vrot.lane.b32.xlu0 %v6573, 112
        %v7927 = vpop.permute.xlu0 %7926
        %v7992 = vsel %vm3675, %v6008, %v6649
        %v7993 = vsel %vm3675, %v6009, %v6651
        %v7994 = vsel %vm3675, %v6011, %v6653
        %v7995 = vsel %vm3675, %v6012, %v6655
        %v7996 = vsel %vm3675, %v6014, %v6657
        %v7997 = vsel %vm3675, %v6015, %v6659
        %v7998 = vsel %vm3675, %v6017, %v6661
        %v7999 = vsel %vm3675, %v6018, %v6663
        %v8000 = vsel %vm3675, %v6020, %v6665
        %v8001 = vsel %vm3675, %v6021, %v6667
        %v8002 = vsel %vm3675, %v6023, %v6669
        %v8003 = vsel %vm3675, %v6024, %v6671
        %v8004 = vsel %vm3675, %v6026, %v6673
        %v8005 = vsel %vm3675, %v6027, %v6675
        %v8006 = vsel %vm3675, %v6029, %v6677
        %v8007 = vsel %vm3675, %v6030, %v6679
        %v8008 = vsel %vm3675, %v6032, %v6681
        %v8009 = vsel %vm3675, %v6033, %v6683
        %v8010 = vsel %vm3675, %v6035, %v6685
        %v8011 = vsel %vm3675, %v6036, %v6687
        %v8012 = vsel %vm3675, %v6038, %v6689
        %v8013 = vsel %vm3675, %v6039, %v6691
        %v8014 = vsel %vm3675, %v6041, %v6693
        %v8015 = vsel %vm3675, %v6042, %v6695
        %v8016 = vsel %vm3675, %v6044, %v6697
        %v8017 = vsel %vm3675, %v6045, %v6699
        %v8018 = vsel %vm3675, %v6047, %v6701
        %v8019 = vsel %vm3675, %v6048, %v6703
        %v8020 = vsel %vm3675, %v6050, %v6705
        %v8021 = vsel %vm3675, %v6051, %v6707
        %v8022 = vsel %vm3675, %v6053, %v6709
        %v8023 = vsel %vm3675, %v6054, %v6711
        %v8024 = vsel %vm3675, %v6062, %v6713
        %v8025 = vsel %vm3675, %v6063, %v6715
        %v8026 = vsel %vm3675, %v6065, %v6717
        %v8027 = vsel %vm3675, %v6066, %v6719
        %v8028 = vsel %vm3675, %v6068, %v6721
        %v8029 = vsel %vm3675, %v6069, %v6723
        %v8030 = vsel %vm3675, %v6071, %v6725
        %v8031 = vsel %vm3675, %v6072, %v6727
        %v8032 = vsel %vm3675, %v6074, %v6729
        %v8033 = vsel %vm3675, %v6075, %v6731
        %v8034 = vsel %vm3675, %v6077, %v6733
        %v8035 = vsel %vm3675, %v6078, %v6735
        %v8036 = vsel %vm3675, %v6080, %v6737
        %v8037 = vsel %vm3675, %v6081, %v6739
        %v8038 = vsel %vm3675, %v6083, %v6741
        %v8039 = vsel %vm3675, %v6084, %v6743
        %v8040 = vsel %vm3675, %v6086, %v6745
        %v8041 = vsel %vm3675, %v6087, %v6747
        %v8042 = vsel %vm3675, %v6089, %v6749
        %v8043 = vsel %vm3675, %v6090, %v6751
        %v8044 = vsel %vm3675, %v6092, %v6753
        %v8045 = vsel %vm3675, %v6093, %v6755
        %v8046 = vsel %vm3675, %v6095, %v6757
        %v8047 = vsel %vm3675, %v6096, %v6759
        %v8048 = vsel %vm3675, %v6098, %v6761
        %v8049 = vsel %vm3675, %v6099, %v6763
        %v8050 = vsel %vm3675, %v6101, %v6765
        %v8051 = vsel %vm3675, %v6102, %v6767
        %v8052 = vsel %vm3675, %v6104, %v6769
        %v8053 = vsel %vm3675, %v6105, %v6771
        %v8054 = vsel %vm3675, %v6107, %v6773
        %v8055 = vsel %vm3675, %v6108, %v6775
        %v8056 = vsel %vm3784, %v7992, %v6841
        %v8057 = vsel %vm3784, %v7993, %v6843
        %v8058 = vsel %vm3784, %v7994, %v6845
        %v8059 = vsel %vm3784, %v7995, %v6847
        %v8060 = vsel %vm3784, %v7996, %v6849
        %v8061 = vsel %vm3784, %v7997, %v6851
        %v8062 = vsel %vm3784, %v7998, %v6853
        %v8063 = vsel %vm3784, %v7999, %v6855
        %v8064 = vsel %vm3784, %v8000, %v6857
        %v8065 = vsel %vm3784, %v8001, %v6859
        %v8066 = vsel %vm3784, %v8002, %v6861
        %v8067 = vsel %vm3784, %v8003, %v6863
        %v8068 = vsel %vm3784, %v8004, %v6865
        %v8069 = vsel %vm3784, %v8005, %v6867
        %v8070 = vsel %vm3784, %v8006, %v6869
        %v8071 = vsel %vm3784, %v8007, %v6871
        %v8072 = vsel %vm3784, %v8008, %v6873
        %v8073 = vsel %vm3784, %v8009, %v6875
        %v8074 = vsel %vm3784, %v8010, %v6877
        %v8075 = vsel %vm3784, %v8011, %v6879
        %v8076 = vsel %vm3784, %v8012, %v6881
        %v8077 = vsel %vm3784, %v8013, %v6883
        %v8078 = vsel %vm3784, %v8014, %v6885
        %v8079 = vsel %vm3784, %v8015, %v6887
        %v8080 = vsel %vm3784, %v8016, %v6889
        %v8081 = vsel %vm3784, %v8017, %v6891
        %v8082 = vsel %vm3784, %v8018, %v6893
        %v8083 = vsel %vm3784, %v8019, %v6895
        %v8084 = vsel %vm3784, %v8020, %v6897
        %v8085 = vsel %vm3784, %v8021, %v6899
        %v8086 = vsel %vm3784, %v8022, %v6901
        %v8087 = vsel %vm3784, %v8023, %v6903
        %v8088 = vsel %vm3784, %v8024, %v6905
        %v8089 = vsel %vm3784, %v8025, %v6907
        %v8090 = vsel %vm3784, %v8026, %v6909
        %v8091 = vsel %vm3784, %v8027, %v6911
        %v8092 = vsel %vm3784, %v8028, %v6913
        %v8093 = vsel %vm3784, %v8029, %v6915
        %v8094 = vsel %vm3784, %v8030, %v6917
        %v8095 = vsel %vm3784, %v8031, %v6919
        %v8096 = vsel %vm3784, %v8032, %v6921
        %v8097 = vsel %vm3784, %v8033, %v6923
        %v8098 = vsel %vm3784, %v8034, %v6925
        %v8099 = vsel %vm3784, %v8035, %v6927
        %v8100 = vsel %vm3784, %v8036, %v6929
        %v8101 = vsel %vm3784, %v8037, %v6931
        %v8102 = vsel %vm3784, %v8038, %v6933
        %v8103 = vsel %vm3784, %v8039, %v6935
        %v8104 = vsel %vm3784, %v8040, %v6937
        %v8105 = vsel %vm3784, %v8041, %v6939
        %v8106 = vsel %vm3784, %v8042, %v6941
        %v8107 = vsel %vm3784, %v8043, %v6943
        %v8108 = vsel %vm3784, %v8044, %v6945
        %v8109 = vsel %vm3784, %v8045, %v6947
        %v8110 = vsel %vm3784, %v8046, %v6949
        %v8111 = vsel %vm3784, %v8047, %v6951
        %v8112 = vsel %vm3784, %v8048, %v6953
        %v8113 = vsel %vm3784, %v8049, %v6955
        %v8114 = vsel %vm3784, %v8050, %v6957
        %v8115 = vsel %vm3784, %v8051, %v6959
        %v8116 = vsel %vm3784, %v8052, %v6961
        %v8117 = vsel %vm3784, %v8053, %v6963
        %v8118 = vsel %vm3784, %v8054, %v6965
        %v8119 = vsel %vm3784, %v8055, %v6967
        %v8120 = vsel %vm3893, %v8056, %v7033
        %v8121 = vsel %vm3893, %v8057, %v7035
        %v8122 = vsel %vm3893, %v8058, %v7037
        %v8123 = vsel %vm3893, %v8059, %v7039
        %v8124 = vsel %vm3893, %v8060, %v7041
        %v8125 = vsel %vm3893, %v8061, %v7043
        %v8126 = vsel %vm3893, %v8062, %v7045
        %v8127 = vsel %vm3893, %v8063, %v7047
        %v8128 = vsel %vm3893, %v8064, %v7049
        %v8129 = vsel %vm3893, %v8065, %v7051
        %v8130 = vsel %vm3893, %v8066, %v7053
        %v8131 = vsel %vm3893, %v8067, %v7055
        %v8132 = vsel %vm3893, %v8068, %v7057
        %v8133 = vsel %vm3893, %v8069, %v7059
        %v8134 = vsel %vm3893, %v8070, %v7061
        %v8135 = vsel %vm3893, %v8071, %v7063
        %v8136 = vsel %vm3893, %v8072, %v7065
        %v8137 = vsel %vm3893, %v8073, %v7067
        %v8138 = vsel %vm3893, %v8074, %v7069
        %v8139 = vsel %vm3893, %v8075, %v7071
        %v8140 = vsel %vm3893, %v8076, %v7073
        %v8141 = vsel %vm3893, %v8077, %v7075
        %v8142 = vsel %vm3893, %v8078, %v7077
        %v8143 = vsel %vm3893, %v8079, %v7079
        %v8144 = vsel %vm3893, %v8080, %v7081
        %v8145 = vsel %vm3893, %v8081, %v7083
        %v8146 = vsel %vm3893, %v8082, %v7085
        %v8147 = vsel %vm3893, %v8083, %v7087
        %v8148 = vsel %vm3893, %v8084, %v7089
        %v8149 = vsel %vm3893, %v8085, %v7091
        %v8150 = vsel %vm3893, %v8086, %v7093
        %v8151 = vsel %vm3893, %v8087, %v7095
        %v8152 = vsel %vm3893, %v8088, %v7097
        %v8153 = vsel %vm3893, %v8089, %v7099
        %v8154 = vsel %vm3893, %v8090, %v7101
        %v8155 = vsel %vm3893, %v8091, %v7103
        %v8156 = vsel %vm3893, %v8092, %v7105
        %v8157 = vsel %vm3893, %v8093, %v7107
        %v8158 = vsel %vm3893, %v8094, %v7109
        %v8159 = vsel %vm3893, %v8095, %v7111
        %v8160 = vsel %vm3893, %v8096, %v7113
        %v8161 = vsel %vm3893, %v8097, %v7115
        %v8162 = vsel %vm3893, %v8098, %v7117
        %v8163 = vsel %vm3893, %v8099, %v7119
        %v8164 = vsel %vm3893, %v8100, %v7121
        %v8165 = vsel %vm3893, %v8101, %v7123
        %v8166 = vsel %vm3893, %v8102, %v7125
        %v8167 = vsel %vm3893, %v8103, %v7127
        %v8168 = vsel %vm3893, %v8104, %v7129
        %v8169 = vsel %vm3893, %v8105, %v7131
        %v8170 = vsel %vm3893, %v8106, %v7133
        %v8171 = vsel %vm3893, %v8107, %v7135
        %v8172 = vsel %vm3893, %v8108, %v7137
        %v8173 = vsel %vm3893, %v8109, %v7139
        %v8174 = vsel %vm3893, %v8110, %v7141
        %v8175 = vsel %vm3893, %v8111, %v7143
        %v8176 = vsel %vm3893, %v8112, %v7145
        %v8177 = vsel %vm3893, %v8113, %v7147
        %v8178 = vsel %vm3893, %v8114, %v7149
        %v8179 = vsel %vm3893, %v8115, %v7151
        %v8180 = vsel %vm3893, %v8116, %v7153
        %v8181 = vsel %vm3893, %v8117, %v7155
        %v8182 = vsel %vm3893, %v8118, %v7157
        %v8183 = vsel %vm3893, %v8119, %v7159
        %v8184 = vsel %vm4002, %v8120, %v7225
        %v8185 = vsel %vm4002, %v8121, %v7227
        %v8186 = vsel %vm4002, %v8122, %v7229
        %v8187 = vsel %vm4002, %v8123, %v7231
        %v8188 = vsel %vm4002, %v8124, %v7233
        %v8189 = vsel %vm4002, %v8125, %v7235
        %v8190 = vsel %vm4002, %v8126, %v7237
        %v8191 = vsel %vm4002, %v8127, %v7239
        %v8192 = vsel %vm4002, %v8128, %v7241
        %v8193 = vsel %vm4002, %v8129, %v7243
        %v8194 = vsel %vm4002, %v8130, %v7245
        %v8195 = vsel %vm4002, %v8131, %v7247
        %v8196 = vsel %vm4002, %v8132, %v7249
        %v8197 = vsel %vm4002, %v8133, %v7251
        %v8198 = vsel %vm4002, %v8134, %v7253
        %v8199 = vsel %vm4002, %v8135, %v7255
        %v8200 = vsel %vm4002, %v8136, %v7257
        %v8201 = vsel %vm4002, %v8137, %v7259
        %v8202 = vsel %vm4002, %v8138, %v7261
        %v8203 = vsel %vm4002, %v8139, %v7263
        %v8204 = vsel %vm4002, %v8140, %v7265
        %v8205 = vsel %vm4002, %v8141, %v7267
        %v8206 = vsel %vm4002, %v8142, %v7269
        %v8207 = vsel %vm4002, %v8143, %v7271
        %v8208 = vsel %vm4002, %v8144, %v7273
        %v8209 = vsel %vm4002, %v8145, %v7275
        %v8210 = vsel %vm4002, %v8146, %v7277
        %v8211 = vsel %vm4002, %v8147, %v7279
        %v8212 = vsel %vm4002, %v8148, %v7281
        %v8213 = vsel %vm4002, %v8149, %v7283
        %v8214 = vsel %vm4002, %v8150, %v7285
        %v8215 = vsel %vm4002, %v8151, %v7287
        %v8216 = vsel %vm4002, %v8152, %v7289
        %v8217 = vsel %vm4002, %v8153, %v7291
        %v8218 = vsel %vm4002, %v8154, %v7293
        %v8219 = vsel %vm4002, %v8155, %v7295
        %v8220 = vsel %vm4002, %v8156, %v7297
        %v8221 = vsel %vm4002, %v8157, %v7299
        %v8222 = vsel %vm4002, %v8158, %v7301
        %v8223 = vsel %vm4002, %v8159, %v7303
        %v8224 = vsel %vm4002, %v8160, %v7305
        %v8225 = vsel %vm4002, %v8161, %v7307
        %v8226 = vsel %vm4002, %v8162, %v7309
        %v8227 = vsel %vm4002, %v8163, %v7311
        %v8228 = vsel %vm4002, %v8164, %v7313
        %v8229 = vsel %vm4002, %v8165, %v7315
        %v8230 = vsel %vm4002, %v8166, %v7317
        %v8231 = vsel %vm4002, %v8167, %v7319
        %v8232 = vsel %vm4002, %v8168, %v7321
        %v8233 = vsel %vm4002, %v8169, %v7323
        %v8234 = vsel %vm4002, %v8170, %v7325
        %v8235 = vsel %vm4002, %v8171, %v7327
        %v8236 = vsel %vm4002, %v8172, %v7329
        %v8237 = vsel %vm4002, %v8173, %v7331
        %v8238 = vsel %vm4002, %v8174, %v7333
        %v8239 = vsel %vm4002, %v8175, %v7335
        %v8240 = vsel %vm4002, %v8176, %v7337
        %v8241 = vsel %vm4002, %v8177, %v7339
        %v8242 = vsel %vm4002, %v8178, %v7341
        %v8243 = vsel %vm4002, %v8179, %v7343
        %v8244 = vsel %vm4002, %v8180, %v7345
        %v8245 = vsel %vm4002, %v8181, %v7347
        %v8246 = vsel %vm4002, %v8182, %v7349
        %v8247 = vsel %vm4002, %v8183, %v7351
        %v8248 = vsel %vm4111, %v8184, %v7417
        %v8249 = vsel %vm4111, %v8185, %v7419
        %v8250 = vsel %vm4111, %v8186, %v7421
        %v8251 = vsel %vm4111, %v8187, %v7423
        %v8252 = vsel %vm4111, %v8188, %v7425
        %v8253 = vsel %vm4111, %v8189, %v7427
        %v8254 = vsel %vm4111, %v8190, %v7429
        %v8255 = vsel %vm4111, %v8191, %v7431
        %v8256 = vsel %vm4111, %v8192, %v7433
        %v8257 = vsel %vm4111, %v8193, %v7435
        %v8258 = vsel %vm4111, %v8194, %v7437
        %v8259 = vsel %vm4111, %v8195, %v7439
        %v8260 = vsel %vm4111, %v8196, %v7441
        %v8261 = vsel %vm4111, %v8197, %v7443
        %v8262 = vsel %vm4111, %v8198, %v7445
        %v8263 = vsel %vm4111, %v8199, %v7447
        %v8264 = vsel %vm4111, %v8200, %v7449
        %v8265 = vsel %vm4111, %v8201, %v7451
        %v8266 = vsel %vm4111, %v8202, %v7453
        %v8267 = vsel %vm4111, %v8203, %v7455
        %v8268 = vsel %vm4111, %v8204, %v7457
        %v8269 = vsel %vm4111, %v8205, %v7459
        %v8270 = vsel %vm4111, %v8206, %v7461
        %v8271 = vsel %vm4111, %v8207, %v7463
        %v8272 = vsel %vm4111, %v8208, %v7465
        %v8273 = vsel %vm4111, %v8209, %v7467
        %v8274 = vsel %vm4111, %v8210, %v7469
        %v8275 = vsel %vm4111, %v8211, %v7471
        %v8276 = vsel %vm4111, %v8212, %v7473
        %v8277 = vsel %vm4111, %v8213, %v7475
        %v8278 = vsel %vm4111, %v8214, %v7477
        %v8279 = vsel %vm4111, %v8215, %v7479
        %v8280 = vsel %vm4111, %v8216, %v7481
        %v8281 = vsel %vm4111, %v8217, %v7483
        %v8282 = vsel %vm4111, %v8218, %v7485
        %v8283 = vsel %vm4111, %v8219, %v7487
        %v8284 = vsel %vm4111, %v8220, %v7489
        %v8285 = vsel %vm4111, %v8221, %v7491
        %v8286 = vsel %vm4111, %v8222, %v7493
        %v8287 = vsel %vm4111, %v8223, %v7495
        %v8288 = vsel %vm4111, %v8224, %v7497
        %v8289 = vsel %vm4111, %v8225, %v7499
        %v8290 = vsel %vm4111, %v8226, %v7501
        %v8291 = vsel %vm4111, %v8227, %v7503
        %v8292 = vsel %vm4111, %v8228, %v7505
        %v8293 = vsel %vm4111, %v8229, %v7507
        %v8294 = vsel %vm4111, %v8230, %v7509
        %v8295 = vsel %vm4111, %v8231, %v7511
        %v8296 = vsel %vm4111, %v8232, %v7513
        %v8297 = vsel %vm4111, %v8233, %v7515
        %v8298 = vsel %vm4111, %v8234, %v7517
        %v8299 = vsel %vm4111, %v8235, %v7519
        %v8300 = vsel %vm4111, %v8236, %v7521
        %v8301 = vsel %vm4111, %v8237, %v7523
        %v8302 = vsel %vm4111, %v8238, %v7525
        %v8303 = vsel %vm4111, %v8239, %v7527
        %v8304 = vsel %vm4111, %v8240, %v7529
        %v8305 = vsel %vm4111, %v8241, %v7531
        %v8306 = vsel %vm4111, %v8242, %v7533
        %v8307 = vsel %vm4111, %v8243, %v7535
        %v8308 = vsel %vm4111, %v8244, %v7537
        %v8309 = vsel %vm4111, %v8245, %v7539
        %v8310 = vsel %vm4111, %v8246, %v7541
        %v8311 = vsel %vm4111, %v8247, %v7543
        %v8312 = vsel %vm4220, %v8248, %v7609
        %v8313 = vsel %vm4220, %v8249, %v7611
        %v8314 = vsel %vm4220, %v8250, %v7613
        %v8315 = vsel %vm4220, %v8251, %v7615
        %v8316 = vsel %vm4220, %v8252, %v7617
        %v8317 = vsel %vm4220, %v8253, %v7619
        %v8318 = vsel %vm4220, %v8254, %v7621
        %v8319 = vsel %vm4220, %v8255, %v7623
        %v8320 = vsel %vm4220, %v8256, %v7625
        %v8321 = vsel %vm4220, %v8257, %v7627
        %v8322 = vsel %vm4220, %v8258, %v7629
        %v8323 = vsel %vm4220, %v8259, %v7631
        %v8324 = vsel %vm4220, %v8260, %v7633
        %v8325 = vsel %vm4220, %v8261, %v7635
        %v8326 = vsel %vm4220, %v8262, %v7637
        %v8327 = vsel %vm4220, %v8263, %v7639
        %v8328 = vsel %vm4220, %v8264, %v7641
        %v8329 = vsel %vm4220, %v8265, %v7643
        %v8330 = vsel %vm4220, %v8266, %v7645
        %v8331 = vsel %vm4220, %v8267, %v7647
        %v8332 = vsel %vm4220, %v8268, %v7649
        %v8333 = vsel %vm4220, %v8269, %v7651
        %v8334 = vsel %vm4220, %v8270, %v7653
        %v8335 = vsel %vm4220, %v8271, %v7655
        %v8336 = vsel %vm4220, %v8272, %v7657
        %v8337 = vsel %vm4220, %v8273, %v7659
        %v8338 = vsel %vm4220, %v8274, %v7661
        %v8339 = vsel %vm4220, %v8275, %v7663
        %v8340 = vsel %vm4220, %v8276, %v7665
        %v8341 = vsel %vm4220, %v8277, %v7667
        %v8342 = vsel %vm4220, %v8278, %v7669
        %v8343 = vsel %vm4220, %v8279, %v7671
        %v8344 = vsel %vm4220, %v8280, %v7673
        %v8345 = vsel %vm4220, %v8281, %v7675
        %v8346 = vsel %vm4220, %v8282, %v7677
        %v8347 = vsel %vm4220, %v8283, %v7679
        %v8348 = vsel %vm4220, %v8284, %v7681
        %v8349 = vsel %vm4220, %v8285, %v7683
        %v8350 = vsel %vm4220, %v8286, %v7685
        %v8351 = vsel %vm4220, %v8287, %v7687
        %v8352 = vsel %vm4220, %v8288, %v7689
        %v8353 = vsel %vm4220, %v8289, %v7691
        %v8354 = vsel %vm4220, %v8290, %v7693
        %v8355 = vsel %vm4220, %v8291, %v7695
        %v8356 = vsel %vm4220, %v8292, %v7697
        %v8357 = vsel %vm4220, %v8293, %v7699
        %v8358 = vsel %vm4220, %v8294, %v7701
        %v8359 = vsel %vm4220, %v8295, %v7703
        %v8360 = vsel %vm4220, %v8296, %v7705
        %v8361 = vsel %vm4220, %v8297, %v7707
        %v8362 = vsel %vm4220, %v8298, %v7709
        %v8363 = vsel %vm4220, %v8299, %v7711
        %v8364 = vsel %vm4220, %v8300, %v7713
        %v8365 = vsel %vm4220, %v8301, %v7715
        %v8366 = vsel %vm4220, %v8302, %v7717
        %v8367 = vsel %vm4220, %v8303, %v7719
        %v8368 = vsel %vm4220, %v8304, %v7721
        %v8369 = vsel %vm4220, %v8305, %v7723
        %v8370 = vsel %vm4220, %v8306, %v7725
        %v8371 = vsel %vm4220, %v8307, %v7727
        %v8372 = vsel %vm4220, %v8308, %v7729
        %v8373 = vsel %vm4220, %v8309, %v7731
        %v8374 = vsel %vm4220, %v8310, %v7733
        %v8375 = vsel %vm4220, %v8311, %v7735
        %v8376 = vsel %vm4329, %v8312, %v7801
        %v8377 = vsel %vm4329, %v8313, %v7803
        %v8378 = vsel %vm4329, %v8314, %v7805
        %v8379 = vsel %vm4329, %v8315, %v7807
        %v8380 = vsel %vm4329, %v8316, %v7809
        %v8381 = vsel %vm4329, %v8317, %v7811
        %v8382 = vsel %vm4329, %v8318, %v7813
        %v8383 = vsel %vm4329, %v8319, %v7815
        %v8384 = vsel %vm4329, %v8320, %v7817
        %v8385 = vsel %vm4329, %v8321, %v7819
        %v8386 = vsel %vm4329, %v8322, %v7821
        %v8387 = vsel %vm4329, %v8323, %v7823
        %v8388 = vsel %vm4329, %v8324, %v7825
        %v8389 = vsel %vm4329, %v8325, %v7827
        %v8390 = vsel %vm4329, %v8326, %v7829
        %v8391 = vsel %vm4329, %v8327, %v7831
        %v8392 = vsel %vm4329, %v8328, %v7833
        %v8393 = vsel %vm4329, %v8329, %v7835
        %v8394 = vsel %vm4329, %v8330, %v7837
        %v8395 = vsel %vm4329, %v8331, %v7839
        %v8396 = vsel %vm4329, %v8332, %v7841
        %v8397 = vsel %vm4329, %v8333, %v7843
        %v8398 = vsel %vm4329, %v8334, %v7845
        %v8399 = vsel %vm4329, %v8335, %v7847
        %v8400 = vsel %vm4329, %v8336, %v7849
        %v8401 = vsel %vm4329, %v8337, %v7851
        %v8402 = vsel %vm4329, %v8338, %v7853
        %v8403 = vsel %vm4329, %v8339, %v7855
        %v8404 = vsel %vm4329, %v8340, %v7857
        %v8405 = vsel %vm4329, %v8341, %v7859
        %v8406 = vsel %vm4329, %v8342, %v7861
        %v8407 = vsel %vm4329, %v8343, %v7863
        %v8408 = vsel %vm4329, %v8344, %v7865
        %v8409 = vsel %vm4329, %v8345, %v7867
        %v8410 = vsel %vm4329, %v8346, %v7869
        %v8411 = vsel %vm4329, %v8347, %v7871
        %v8412 = vsel %vm4329, %v8348, %v7873
        %v8413 = vsel %vm4329, %v8349, %v7875
        %v8414 = vsel %vm4329, %v8350, %v7877
        %v8415 = vsel %vm4329, %v8351, %v7879
        %v8416 = vsel %vm4329, %v8352, %v7881
        %v8417 = vsel %vm4329, %v8353, %v7883
        %v8418 = vsel %vm4329, %v8354, %v7885
        %v8419 = vsel %vm4329, %v8355, %v7887
        %v8420 = vsel %vm4329, %v8356, %v7889
        %v8421 = vsel %vm4329, %v8357, %v7891
        %v8422 = vsel %vm4329, %v8358, %v7893
        %v8423 = vsel %vm4329, %v8359, %v7895
        %v8424 = vsel %vm4329, %v8360, %v7897
        %v8425 = vsel %vm4329, %v8361, %v7899
        %v8426 = vsel %vm4329, %v8362, %v7901
        %v8427 = vsel %vm4329, %v8363, %v7903
        %v8428 = vsel %vm4329, %v8364, %v7905
        %v8429 = vsel %vm4329, %v8365, %v7907
        %v8430 = vsel %vm4329, %v8366, %v7909
        %v8431 = vsel %vm4329, %v8367, %v7911
        %v8432 = vsel %vm4329, %v8368, %v7913
        %v8433 = vsel %vm4329, %v8369, %v7915
        %v8434 = vsel %vm4329, %v8370, %v7917
        %v8435 = vsel %vm4329, %v8371, %v7919
        %v8436 = vsel %vm4329, %v8372, %v7921
        %v8437 = vsel %vm4329, %v8373, %v7923
        %v8438 = vsel %vm4329, %v8374, %v7925
        %v8439 = vsel %vm4329, %v8375, %v7927
        %v8440 = vpack.c.bf16 %v8377, %v8376
        %v8441 = vpack.c.bf16 %v6386, %v6384
        %v8442 = vpack.c.bf16 %v8379, %v8378
        %v8443 = vpack.c.bf16 %v6391, %v6389
        %v8444 = vpack.c.bf16 %v8381, %v8380
        %v8445 = vpack.c.bf16 %v6396, %v6394
        %v8446 = vpack.c.bf16 %v8383, %v8382
        %v8447 = vpack.c.bf16 %v6401, %v6399
        %v8448 = vpack.c.bf16 %v8385, %v8384
        %v8449 = vpack.c.bf16 %v6406, %v6404
        %v8450 = vpack.c.bf16 %v8387, %v8386
        %v8451 = vpack.c.bf16 %v6411, %v6409
        %v8452 = vpack.c.bf16 %v8389, %v8388
        %v8453 = vpack.c.bf16 %v6416, %v6414
        %v8454 = vpack.c.bf16 %v8391, %v8390
        %v8455 = vpack.c.bf16 %v6421, %v6419
        %v8456 = vpack.c.bf16 %v8393, %v8392
        %v8457 = vpack.c.bf16 %v6426, %v6424
        %v8458 = vpack.c.bf16 %v8395, %v8394
        %v8459 = vpack.c.bf16 %v6431, %v6429
        %v8460 = vpack.c.bf16 %v8397, %v8396
        %v8461 = vpack.c.bf16 %v6436, %v6434
        %v8462 = vpack.c.bf16 %v8399, %v8398
        %v8463 = vpack.c.bf16 %v6441, %v6439
        %v8464 = vpack.c.bf16 %v8401, %v8400
        %v8465 = vpack.c.bf16 %v6446, %v6444
        %v8466 = vpack.c.bf16 %v8403, %v8402
        %v8467 = vpack.c.bf16 %v6451, %v6449
        %v8468 = vpack.c.bf16 %v8405, %v8404
        %v8469 = vpack.c.bf16 %v6552, %v6550
        %v8470 = vpack.c.bf16 %v8407, %v8406
        %v8471 = vpack.c.bf16 %v6578, %v6576
        %v8472 = vpack.c.bf16 %v8409, %v8408
        %v8473 = vpack.c.bf16 %v6466, %v6464
        %v8474 = vpack.c.bf16 %v8411, %v8410
        %v8475 = vpack.c.bf16 %v6471, %v6469
        %v8476 = vpack.c.bf16 %v8413, %v8412
        %v8477 = vpack.c.bf16 %v6476, %v6474
        %v8478 = vpack.c.bf16 %v8415, %v8414
        %v8479 = vpack.c.bf16 %v6481, %v6479
        %v8480 = vpack.c.bf16 %v8417, %v8416
        %v8481 = vpack.c.bf16 %v6486, %v6484
        %v8482 = vpack.c.bf16 %v8419, %v8418
        %v8483 = vpack.c.bf16 %v6491, %v6489
        %v8484 = vpack.c.bf16 %v8421, %v8420
        %v8485 = vpack.c.bf16 %v6496, %v6494
        %v8486 = vpack.c.bf16 %v8423, %v8422
        %v8487 = vpack.c.bf16 %v6501, %v6499
        %v8488 = vpack.c.bf16 %v8425, %v8424
        %v8489 = vpack.c.bf16 %v6506, %v6504
        %v8490 = vpack.c.bf16 %v8427, %v8426
        %v8491 = vpack.c.bf16 %v6511, %v6509
        %v8492 = vpack.c.bf16 %v8429, %v8428
        %v8493 = vpack.c.bf16 %v6516, %v6514
        %v8494 = vpack.c.bf16 %v8431, %v8430
        %v8495 = vpack.c.bf16 %v6521, %v6519
        %v8496 = vpack.c.bf16 %v8433, %v8432
        %v8497 = vpack.c.bf16 %v6526, %v6524
        %v8498 = vpack.c.bf16 %v8435, %v8434
        %v8499 = vpack.c.bf16 %v6531, %v6529
        %v8500 = vpack.c.bf16 %v8437, %v8436
        %v8501 = vpack.c.bf16 %v6557, %v6555
        %v8502 = vpack.c.bf16 %v8439, %v8438
        %v8503 = vpack.c.bf16 %v6583, %v6581
        %v8504 = vld [vmem:[%s5] sm:$0xff]
        %v8505 = vld [vmem:[%s5 + $0x8] sm:$0xff]
        %v8506 = vld [vmem:[%s6] sm:$0xff]
        %v8507 = vld [vmem:[%s6 + $0x8] sm:$0xff]
        %8509 = vset.pattern.permute.xlu0 0
        %8510 = vperm.xlu0 %8509, %v8506
        %v8511 = vpop.permute.xlu0 %8510
        %8514 = vset.pattern.permute.xlu0 0
        %8515 = vperm.xlu0 %8514, %v8507
        %v8516 = vpop.permute.xlu0 %8515
        %v8520 = vunpack.c.l.b16 %v8504
        %v8521 = vunpack.c.h.b16 %v8504
        %v8522 = vunpack.c.l.b16 %v8505
        %v8523 = vunpack.c.h.b16 %v8505
        %v8524 = vpack.c.b16 %v8522, %v8520
        %v8525 = vpack.c.b16 %v8523, %v8521
        %v8528 = vsel %vm3675, %v8525, 0
        %v8531 = vsel %vm3675, %v8441, 0
        %v8534 = vsel %vm3675, %v8443, 0
        %v8537 = vsel %vm3675, %v8445, 0
        %v8540 = vsel %vm3675, %v8447, 0
        %v8543 = vsel %vm3675, %v8449, 0
        %v8546 = vsel %vm3675, %v8451, 0
        %v8549 = vsel %vm3675, %v8453, 0
        %v8552 = vsel %vm3675, %v8455, 0
        %v8555 = vsel %vm3675, %v8457, 0
        %v8558 = vsel %vm3675, %v8459, 0
        %v8561 = vsel %vm3675, %v8461, 0
        %v8564 = vsel %vm3675, %v8463, 0
        %v8567 = vsel %vm3675, %v8465, 0
        %v8570 = vsel %vm3675, %v8467, 0
        %v8573 = vsel %vm3675, %v8469, 0
        %v8576 = vsel %vm3675, %v8471, 0
        %v8579 = vsel %vm3675, %v8473, 0
        %v8582 = vsel %vm3675, %v8475, 0
        %v8585 = vsel %vm3675, %v8477, 0
        %v8588 = vsel %vm3675, %v8479, 0
        %v8591 = vsel %vm3675, %v8481, 0
        %v8594 = vsel %vm3675, %v8483, 0
        %v8597 = vsel %vm3675, %v8485, 0
        %v8600 = vsel %vm3675, %v8487, 0
        %v8603 = vsel %vm3675, %v8489, 0
        %v8606 = vsel %vm3675, %v8491, 0
        %v8609 = vsel %vm3675, %v8493, 0
        %v8612 = vsel %vm3675, %v8495, 0
        %v8615 = vsel %vm3675, %v8497, 0
        %v8618 = vsel %vm3675, %v8499, 0
        %v8621 = vsel %vm3675, %v8501, 0
        %v8624 = vsel %vm3675, %v8503, 0
        %8626 = vmatprep.subr.bf16.mxu0 %v8531
        %8627 = vmatpush1.bf16.xpose.msra.mxu0 %v8440
        %8628 = vmatprep.subr.bf16.mxu0 %v8534
        %8629 = vmatpush1.bf16.xpose.msra.mxu0 %v8442
        %8630 = vmatprep.subr.bf16.mxu0 %v8537
        %8631 = vmatpush1.bf16.xpose.msra.mxu0 %v8444
        %8632 = vmatprep.subr.bf16.mxu0 %v8540
        %8633 = vmatpush1.bf16.xpose.msra.mxu0 %v8446
        %8634 = vmatprep.subr.bf16.mxu0 %v8543
        %8635 = vmatpush1.bf16.xpose.msra.mxu0 %v8448
        %8636 = vmatprep.subr.bf16.mxu0 %v8546
        %8637 = vmatpush1.bf16.xpose.msra.mxu0 %v8450
        %8638 = vmatprep.subr.bf16.mxu0 %v8549
        %8639 = vmatpush1.bf16.xpose.msra.mxu0 %v8452
        %8640 = vmatprep.subr.bf16.mxu0 %v8552
        %8641 = vmatpush1.bf16.xpose.msra.mxu0 %v8454
        %8642 = vmatprep.subr.bf16.mxu0 %v8555
        %8643 = vmatpush1.bf16.xpose.msra.mxu0 %v8456
        %8644 = vmatprep.subr.bf16.mxu0 %v8558
        %8645 = vmatpush1.bf16.xpose.msra.mxu0 %v8458
        %8646 = vmatprep.subr.bf16.mxu0 %v8561
        %8647 = vmatpush1.bf16.xpose.msra.mxu0 %v8460
        %8648 = vmatprep.subr.bf16.mxu0 %v8564
        %8649 = vmatpush1.bf16.xpose.msra.mxu0 %v8462
        %8650 = vmatprep.subr.bf16.mxu0 %v8567
        %8651 = vmatpush1.bf16.xpose.msra.mxu0 %v8464
        %8652 = vmatprep.subr.bf16.mxu0 %v8570
        %8653 = vmatpush1.bf16.xpose.msra.mxu0 %v8466
        %8654 = vmatprep.subr.bf16.mxu0 %v8573
        %8655 = vmatpush1.bf16.xpose.msra.mxu0 %v8468
        %8656 = vmatprep.subr.bf16.mxu0 %v8576
        %8657 = vmatpush1.bf16.xpose.msra.mxu0 %v8470
        %8658 = vmatprep.mubr.bf16.mxu0 %v8528
        %8659 = vmatmul.mubr.bf16.gmra.mrb[0].mxu0 %v8524
        %v8660 = vpop.f32.mrb[0].mxu0
        %v8661 = vadd.f32 %v8511, %v8660
        %v8662 = vpop.f32.mrb[0].mxu0
        %v8663 = vadd.f32 %v8511, %v8662
        %v8664 = vpop.f32.mrb[0].mxu0
        %v8665 = vadd.f32 %v8516, %v8664
        %v8666 = vpop.f32.mrb[0].mxu0
        %v8667 = vadd.f32 %v8516, %v8666
        %8668 = vdwg.mxu0
        %8669 = vmatprep.subr.bf16.mxu0 %v8579
        %8670 = vmatpush1.bf16.xpose.msra.mxu0 %v8472
        %8671 = vmatprep.subr.bf16.mxu0 %v8582
        %8672 = vmatpush1.bf16.xpose.msra.mxu0 %v8474
        %8673 = vmatprep.subr.bf16.mxu0 %v8585
        %8674 = vmatpush1.bf16.xpose.msra.mxu0 %v8476
        %8675 = vmatprep.subr.bf16.mxu0 %v8588
        %8676 = vmatpush1.bf16.xpose.msra.mxu0 %v8478
        %8677 = vmatprep.subr.bf16.mxu0 %v8591
        %8678 = vmatpush1.bf16.xpose.msra.mxu0 %v8480
        %8679 = vmatprep.subr.bf16.mxu0 %v8594
        %8680 = vmatpush1.bf16.xpose.msra.mxu0 %v8482
        %8681 = vmatprep.subr.bf16.mxu0 %v8597
        %8682 = vmatpush1.bf16.xpose.msra.mxu0 %v8484
        %8683 = vmatprep.subr.bf16.mxu0 %v8600
        %8684 = vmatpush1.bf16.xpose.msra.mxu0 %v8486
        %8685 = vmatprep.subr.bf16.mxu0 %v8603
        %8686 = vmatpush1.bf16.xpose.msra.mxu0 %v8488
        %8687 = vmatprep.subr.bf16.mxu0 %v8606
        %8688 = vmatpush1.bf16.xpose.msra.mxu0 %v8490
        %8689 = vmatprep.subr.bf16.mxu0 %v8609
        %8690 = vmatpush1.bf16.xpose.msra.mxu0 %v8492
        %8691 = vmatprep.subr.bf16.mxu0 %v8612
        %8692 = vmatpush1.bf16.xpose.msra.mxu0 %v8494
        %8693 = vmatprep.subr.bf16.mxu0 %v8615
        %8694 = vmatpush1.bf16.xpose.msra.mxu0 %v8496
        %8695 = vmatprep.subr.bf16.mxu0 %v8618
        %8696 = vmatpush1.bf16.xpose.msra.mxu0 %v8498
        %8697 = vmatprep.subr.bf16.mxu0 %v8621
        %8698 = vmatpush1.bf16.xpose.msra.mxu0 %v8500
        %8699 = vmatprep.subr.bf16.mxu0 %v8624
        %8700 = vmatpush1.bf16.xpose.msra.mxu0 %v8502
        %8701 = vmatprep.mubr.bf16.mxu0 %v8528
        %8702 = vmatmul.mubr.bf16.gmra.mrb[0].mxu0 %v8524
        %v8703 = vpop.f32.mrb[0].mxu0
        %v8704 = vadd.f32 %v8511, %v8703
        %v8705 = vpop.f32.mrb[0].mxu0
        %v8706 = vadd.f32 %v8511, %v8705
        %v8707 = vpop.f32.mrb[0].mxu0
        %v8708 = vadd.f32 %v8516, %v8707
        %v8709 = vpop.f32.mrb[0].mxu0
        %v8710 = vadd.f32 %v8516, %v8709
        %8711 = vdwg.mxu0
        %v8712 = vadd.f32 %v8661, %v8663
        %8713 = vadd.xlane.f32.xlu0 %v8712
        %v8714 = vpop.xlane.xlu0 %8713
        %v8715 = vadd.f32 %v8665, %v8667
        %8716 = vadd.xlane.f32.xlu0 %v8715
        %v8717 = vpop.xlane.xlu0 %8716
        %v8718 = vrcp.pop 256.0
        %v8719 = vmul.f32 %v8714, %v8718
        %v8720 = vmul.f32 %v8717, %v8718
        %v8721 = vld [vmem:[%s7] sm:$0xf]
        %v8722 = vld [vmem:[%s8] sm:$0xf]
        %v8724 = vsel %vm3675, %v8721, 0
        %8726 = vmatprep.subr.mxu0 0.0
        %8727 = vmatpush1.msra.mxu0 %v8719
        %8728 = vmatprep.subr.mxu0 0.0
        %8729 = vmatpush1.msra.mxu0 %v8720
        %8730 = vmatprep.subr.mxu0 0.0
        %8731 = vmatpush1.msra.mxu0 0.0
        %8732 = vmatprep.subr.mxu0 0.0
        %8733 = vmatpush1.msra.mxu0 0.0
        %8734 = vmatprep.subr.mxu0 0.0
        %8735 = vmatpush1.msra.mxu0 0.0
        %8736 = vmatprep.subr.mxu0 0.0
        %8737 = vmatpush1.msra.mxu0 0.0
        %8738 = vmatprep.subr.mxu0 0.0
        %8739 = vmatpush1.msra.mxu0 0.0
        %8740 = vmatprep.subr.mxu0 0.0
        %8741 = vmatpush1.msra.mxu0 0.0
        %8742 = vmatprep.subr.mxu0 0.0
        %8743 = vmatpush1.msra.mxu0 0.0
        %8744 = vmatprep.subr.mxu0 0.0
        %8745 = vmatpush1.msra.mxu0 0.0
        %8746 = vmatprep.subr.mxu0 0.0
        %8747 = vmatpush1.msra.mxu0 0.0
        %8748 = vmatprep.subr.mxu0 0.0
        %8749 = vmatpush1.msra.mxu0 0.0
        %8750 = vmatprep.subr.mxu0 0.0
        %8751 = vmatpush1.msra.mxu0 0.0
        %8752 = vmatprep.subr.mxu0 0.0
        %8753 = vmatpush1.msra.mxu0 0.0
        %8754 = vmatprep.subr.mxu0 0.0
        %8755 = vmatpush1.msra.mxu0 0.0
        %8756 = vmatprep.subr.mxu0 0.0
        %8757 = vmatpush1.msra.mxu0 0.0
        %8758 = vmatprep.subr.mxu0 0.0
        %8759 = vmatpush1.msra.mxu0 0.0
        %8760 = vmatprep.subr.mxu0 0.0
        %8761 = vmatpush1.msra.mxu0 0.0
        %8762 = vmatprep.subr.mxu0 0.0
        %8763 = vmatpush1.msra.mxu0 0.0
        %8764 = vmatprep.subr.mxu0 0.0
        %8765 = vmatpush1.msra.mxu0 0.0
        %8766 = vmatprep.subr.mxu0 0.0
        %8767 = vmatpush1.msra.mxu0 0.0
        %8768 = vmatprep.subr.mxu0 0.0
        %8769 = vmatpush1.msra.mxu0 0.0
        %8770 = vmatprep.subr.mxu0 0.0
        %8771 = vmatpush1.msra.mxu0 0.0
        %8772 = vmatprep.subr.mxu0 0.0
        %8773 = vmatpush1.msra.mxu0 0.0
        %8774 = vmatprep.subr.mxu0 0.0
        %8775 = vmatpush1.msra.mxu0 0.0
        %8776 = vmatprep.subr.mxu0 0.0
        %8777 = vmatpush1.msra.mxu0 0.0
        %8778 = vmatprep.subr.mxu0 0.0
        %8779 = vmatpush1.msra.mxu0 0.0
        %8780 = vmatprep.subr.mxu0 0.0
        %8781 = vmatpush1.msra.mxu0 0.0
        %8782 = vmatprep.subr.mxu0 0.0
        %8783 = vmatpush1.msra.mxu0 0.0
        %8784 = vmatprep.subr.mxu0 0.0
        %8785 = vmatpush1.msra.mxu0 0.0
        %8786 = vmatprep.subr.mxu0 0.0
        %8787 = vmatpush1.msra.mxu0 0.0
        %8788 = vmatprep.subr.mxu0 0.0
        %8789 = vmatpush1.msra.mxu0 0.0
        %8790 = vmatprep.mubr.f32.mxu0 0.0
        %8791 = vmatmul.mubr.f32.gmra.mrb[0].mxu0 %v8724
        %v8792 = vpop.f32.mrb[0].mxu0
        %v8793 = vadd.f32 %v8722, %v8792
        %v8794 = vpop.f32.mrb[0].mxu0
        %8795 = vdwg.mxu0
        %v8796 = vmax.f32 %v8793, 0.0
        %v8797 = vld [vmem:[%s9] sm:$0xff]
        %v8798 = vld [vmem:[%s9 + $0x8] sm:$0xff]
        %v8799 = vld [vmem:[%s10] sm:$0xff]
        %v8800 = vld [vmem:[%s10 + $0x8] sm:$0xff]
        %vm8801 = vcmask 31744
        %v8803 = vsel %vm8801, %v8797, 0
        %v8806 = vsel %vm8801, %v8798, 0
        %vm8808 = vcmask 1043456
        %v8810 = vsel %vm8808, %v8796, 0
        %8812 = vmatprep.subr.mxu0 0.0
        %8813 = vmatpush1.msra.mxu0 %v8810
        %8814 = vmatprep.subr.mxu0 0.0
        %8815 = vmatpush1.msra.mxu0 0.0
        %8816 = vmatprep.subr.mxu0 0.0
        %8817 = vmatpush1.msra.mxu0 0.0
        %8818 = vmatprep.subr.mxu0 0.0
        %8819 = vmatpush1.msra.mxu0 0.0
        %8820 = vmatprep.subr.mxu0 0.0
        %8821 = vmatpush1.msra.mxu0 0.0
        %8822 = vmatprep.subr.mxu0 0.0
        %8823 = vmatpush1.msra.mxu0 0.0
        %8824 = vmatprep.subr.mxu0 0.0
        %8825 = vmatpush1.msra.mxu0 0.0
        %8826 = vmatprep.subr.mxu0 0.0
        %8827 = vmatpush1.msra.mxu0 0.0
        %8828 = vmatprep.subr.mxu0 0.0
        %8829 = vmatpush1.msra.mxu0 0.0
        %8830 = vmatprep.subr.mxu0 0.0
        %8831 = vmatpush1.msra.mxu0 0.0
        %8832 = vmatprep.subr.mxu0 0.0
        %8833 = vmatpush1.msra.mxu0 0.0
        %8834 = vmatprep.subr.mxu0 0.0
        %8835 = vmatpush1.msra.mxu0 0.0
        %8836 = vmatprep.subr.mxu0 0.0
        %8837 = vmatpush1.msra.mxu0 0.0
        %8838 = vmatprep.subr.mxu0 0.0
        %8839 = vmatpush1.msra.mxu0 0.0
        %8840 = vmatprep.subr.mxu0 0.0
        %8841 = vmatpush1.msra.mxu0 0.0
        %8842 = vmatprep.subr.mxu0 0.0
        %8843 = vmatpush1.msra.mxu0 0.0
        %8844 = vmatprep.subr.mxu0 0.0
        %8845 = vmatpush1.msra.mxu0 0.0
        %8846 = vmatprep.subr.mxu0 0.0
        %8847 = vmatpush1.msra.mxu0 0.0
        %8848 = vmatprep.subr.mxu0 0.0
        %8849 = vmatpush1.msra.mxu0 0.0
        %8850 = vmatprep.subr.mxu0 0.0
        %8851 = vmatpush1.msra.mxu0 0.0
        %8852 = vmatprep.subr.mxu0 0.0
        %8853 = vmatpush1.msra.mxu0 0.0
        %8854 = vmatprep.subr.mxu0 0.0
        %8855 = vmatpush1.msra.mxu0 0.0
        %8856 = vmatprep.subr.mxu0 0.0
        %8857 = vmatpush1.msra.mxu0 0.0
        %8858 = vmatprep.subr.mxu0 0.0
        %8859 = vmatpush1.msra.mxu0 0.0
        %8860 = vmatprep.subr.mxu0 0.0
        %8861 = vmatpush1.msra.mxu0 0.0
        %8862 = vmatprep.subr.mxu0 0.0
        %8863 = vmatpush1.msra.mxu0 0.0
        %8864 = vmatprep.subr.mxu0 0.0
        %8865 = vmatpush1.msra.mxu0 0.0
        %8866 = vmatprep.subr.mxu0 0.0
        %8867 = vmatpush1.msra.mxu0 0.0
        %8868 = vmatprep.subr.mxu0 0.0
        %8869 = vmatpush1.msra.mxu0 0.0
        %8870 = vmatprep.subr.mxu0 0.0
        %8871 = vmatpush1.msra.mxu0 0.0
        %8872 = vmatprep.subr.mxu0 0.0
        %8873 = vmatpush1.msra.mxu0 0.0
        %8874 = vmatprep.subr.mxu0 0.0
        %8875 = vmatpush1.msra.mxu0 0.0
        %8876 = vmatprep.mubr.f32.mxu0 0.0
        %8877 = vmatmul.mubr.f32.gmra.mrb[0].mxu0 %v8803
        %v8878 = vpop.f32.mrb[0].mxu0
        %v8879 = vadd.f32 %v8799, %v8878
        %v8880 = vpop.f32.mrb[0].mxu0
        %8881 = vmatprep.mubr.f32.mxu0 0.0
        %8882 = vmatmul.mubr.f32.gmra.mrb[0].mxu0 %v8806
        %v8883 = vpop.f32.mrb[0].mxu0
        %v8884 = vadd.f32 %v8800, %v8883
        %v8885 = vpop.f32.mrb[0].mxu0
        %8886 = vdwg.mxu0
        %v8887 = vxor.u32 %v8879, 2147483648
        %v8888 = vxor.u32 %v8884, 2147483648
        %v8889 = vmul.f32 %v8887, 1.442695
        %v8890 = vpow.pop %v8889
        %v8891 = vmul.f32 %v8888, 1.442695
        %v8892 = vpow.pop %v8891
        %v8893 = vadd.f32 %v8890, 1.0
        %v8894 = vadd.f32 %v8892, 1.0
        %v8895 = vrcp.pop %v8893
        %v8896 = vmul.f32 1.0, %v8895
        %v8897 = vrcp.pop %v8894
        %v8898 = vmul.f32 1.0, %v8897
        %8900 = vset.pattern.permute.xlu0 0
        %8901 = vperm.xlu0 %8900, %v8896
        %v8902 = vpop.permute.xlu0 %8901
        %8905 = vset.pattern.permute.xlu0 0
        %8906 = vperm.xlu0 %8905, %v8898
        %v8907 = vpop.permute.xlu0 %8906
        %v8909 = vmul.f32 %v8661, %v8902
        %v8910 = vmul.f32 %v8663, %v8902
        %v8911 = vmul.f32 %v8665, %v8907
        %v8912 = vmul.f32 %v8667, %v8907
        %v8913 = vld [vmem:[%s413] sm:$0xff]
        %v8914 = vld [vmem:[%s413 + $0x8] sm:$0xff]
        %v8915 = vld [vmem:[%s413 + $0x10] sm:$0xff]
        %v8916 = vld [vmem:[%s413 + $0x18] sm:$0xff]
        %v8917 = vadd.f32 %v8909, %v8913
        %v8918 = vadd.f32 %v8910, %v8914
        %v8919 = vadd.f32 %v8911, %v8915
        %v8920 = vadd.f32 %v8912, %v8916
        %8921 = vst [vmem:[%s400] sm:$0xff] %v8917
        %8922 = vst [vmem:[%s400 + $0x8] sm:$0xff] %v8918
        %8923 = vst [vmem:[%s400 + $0x10] sm:$0xff] %v8919
        %8924 = vst [vmem:[%s400 + $0x18] sm:$0xff] %v8920
        %v8925 = vadd.f32 %v8704, %v8706
        %8926 = vadd.xlane.f32.xlu0 %v8925
        %v8927 = vpop.xlane.xlu0 %8926
        %v8928 = vadd.f32 %v8708, %v8710
        %8929 = vadd.xlane.f32.xlu0 %v8928
        %v8930 = vpop.xlane.xlu0 %8929
        %v8931 = vmul.f32 %v8927, %v8718
        %v8932 = vmul.f32 %v8930, %v8718
        %v8933 = vld [vmem:[%s7] sm:$0xf]
        %v8934 = vld [vmem:[%s8] sm:$0xf]
        %v8936 = vsel %vm3675, %v8933, 0
        %8938 = vmatprep.subr.mxu0 0.0
        %8939 = vmatpush1.msra.mxu0 %v8931
        %8940 = vmatprep.subr.mxu0 0.0
        %8941 = vmatpush1.msra.mxu0 %v8932
        %8942 = vmatprep.subr.mxu0 0.0
        %8943 = vmatpush1.msra.mxu0 0.0
        %8944 = vmatprep.subr.mxu0 0.0
        %8945 = vmatpush1.msra.mxu0 0.0
        %8946 = vmatprep.subr.mxu0 0.0
        %8947 = vmatpush1.msra.mxu0 0.0
        %8948 = vmatprep.subr.mxu0 0.0
        %8949 = vmatpush1.msra.mxu0 0.0
        %8950 = vmatprep.subr.mxu0 0.0
        %8951 = vmatpush1.msra.mxu0 0.0
        %8952 = vmatprep.subr.mxu0 0.0
        %8953 = vmatpush1.msra.mxu0 0.0
        %8954 = vmatprep.subr.mxu0 0.0
        %8955 = vmatpush1.msra.mxu0 0.0
        %8956 = vmatprep.subr.mxu0 0.0
        %8957 = vmatpush1.msra.mxu0 0.0
        %8958 = vmatprep.subr.mxu0 0.0
        %8959 = vmatpush1.msra.mxu0 0.0
        %8960 = vmatprep.subr.mxu0 0.0
        %8961 = vmatpush1.msra.mxu0 0.0
        %8962 = vmatprep.subr.mxu0 0.0
        %8963 = vmatpush1.msra.mxu0 0.0
        %8964 = vmatprep.subr.mxu0 0.0
        %8965 = vmatpush1.msra.mxu0 0.0
        %8966 = vmatprep.subr.mxu0 0.0
        %8967 = vmatpush1.msra.mxu0 0.0
        %8968 = vmatprep.subr.mxu0 0.0
        %8969 = vmatpush1.msra.mxu0 0.0
        %8970 = vmatprep.subr.mxu0 0.0
        %8971 = vmatpush1.msra.mxu0 0.0
        %8972 = vmatprep.subr.mxu0 0.0
        %8973 = vmatpush1.msra.mxu0 0.0
        %8974 = vmatprep.subr.mxu0 0.0
        %8975 = vmatpush1.msra.mxu0 0.0
        %8976 = vmatprep.subr.mxu0 0.0
        %8977 = vmatpush1.msra.mxu0 0.0
        %8978 = vmatprep.subr.mxu0 0.0
        %8979 = vmatpush1.msra.mxu0 0.0
        %8980 = vmatprep.subr.mxu0 0.0
        %8981 = vmatpush1.msra.mxu0 0.0
        %8982 = vmatprep.subr.mxu0 0.0
        %8983 = vmatpush1.msra.mxu0 0.0
        %8984 = vmatprep.subr.mxu0 0.0
        %8985 = vmatpush1.msra.mxu0 0.0
        %8986 = vmatprep.subr.mxu0 0.0
        %8987 = vmatpush1.msra.mxu0 0.0
        %8988 = vmatprep.subr.mxu0 0.0
        %8989 = vmatpush1.msra.mxu0 0.0
        %8990 = vmatprep.subr.mxu0 0.0
        %8991 = vmatpush1.msra.mxu0 0.0
        %8992 = vmatprep.subr.mxu0 0.0
        %8993 = vmatpush1.msra.mxu0 0.0
        %8994 = vmatprep.subr.mxu0 0.0
        %8995 = vmatpush1.msra.mxu0 0.0
        %8996 = vmatprep.subr.mxu0 0.0
        %8997 = vmatpush1.msra.mxu0 0.0
        %8998 = vmatprep.subr.mxu0 0.0
        %8999 = vmatpush1.msra.mxu0 0.0
        %9000 = vmatprep.subr.mxu0 0.0
        %9001 = vmatpush1.msra.mxu0 0.0
        %9002 = vmatprep.mubr.f32.mxu0 0.0
        %9003 = vmatmul.mubr.f32.gmra.mrb[0].mxu0 %v8936
        %v9004 = vpop.f32.mrb[0].mxu0
        %v9005 = vadd.f32 %v8934, %v9004
        %v9006 = vpop.f32.mrb[0].mxu0
        %9007 = vdwg.mxu0
        %v9008 = vmax.f32 %v9005, 0.0
        %v9009 = vld [vmem:[%s9] sm:$0xff]
        %v9010 = vld [vmem:[%s9 + $0x8] sm:$0xff]
        %v9011 = vld [vmem:[%s10] sm:$0xff]
        %v9012 = vld [vmem:[%s10 + $0x8] sm:$0xff]
        %v9014 = vsel %vm8801, %v9009, 0
        %v9017 = vsel %vm8801, %v9010, 0
        %v9020 = vsel %vm8808, %v9008, 0
        %9022 = vmatprep.subr.mxu0 0.0
        %9023 = vmatpush1.msra.mxu0 %v9020
        %9024 = vmatprep.subr.mxu0 0.0
        %9025 = vmatpush1.msra.mxu0 0.0
        %9026 = vmatprep.subr.mxu0 0.0
        %9027 = vmatpush1.msra.mxu0 0.0
        %9028 = vmatprep.subr.mxu0 0.0
        %9029 = vmatpush1.msra.mxu0 0.0
        %9030 = vmatprep.subr.mxu0 0.0
        %9031 = vmatpush1.msra.mxu0 0.0
        %9032 = vmatprep.subr.mxu0 0.0
        %9033 = vmatpush1.msra.mxu0 0.0
        %9034 = vmatprep.subr.mxu0 0.0
        %9035 = vmatpush1.msra.mxu0 0.0
        %9036 = vmatprep.subr.mxu0 0.0
        %9037 = vmatpush1.msra.mxu0 0.0
        %9038 = vmatprep.subr.mxu0 0.0
        %9039 = vmatpush1.msra.mxu0 0.0
        %9040 = vmatprep.subr.mxu0 0.0
        %9041 = vmatpush1.msra.mxu0 0.0
        %9042 = vmatprep.subr.mxu0 0.0
        %9043 = vmatpush1.msra.mxu0 0.0
        %9044 = vmatprep.subr.mxu0 0.0
        %9045 = vmatpush1.msra.mxu0 0.0
        %9046 = vmatprep.subr.mxu0 0.0
        %9047 = vmatpush1.msra.mxu0 0.0
        %9048 = vmatprep.subr.mxu0 0.0
        %9049 = vmatpush1.msra.mxu0 0.0
        %9050 = vmatprep.subr.mxu0 0.0
        %9051 = vmatpush1.msra.mxu0 0.0
        %9052 = vmatprep.subr.mxu0 0.0
        %9053 = vmatpush1.msra.mxu0 0.0
        %9054 = vmatprep.subr.mxu0 0.0
        %9055 = vmatpush1.msra.mxu0 0.0
        %9056 = vmatprep.subr.mxu0 0.0
        %9057 = vmatpush1.msra.mxu0 0.0
        %9058 = vmatprep.subr.mxu0 0.0
        %9059 = vmatpush1.msra.mxu0 0.0
        %9060 = vmatprep.subr.mxu0 0.0
        %9061 = vmatpush1.msra.mxu0 0.0
        %9062 = vmatprep.subr.mxu0 0.0
        %9063 = vmatpush1.msra.mxu0 0.0
        %9064 = vmatprep.subr.mxu0 0.0
        %9065 = vmatpush1.msra.mxu0 0.0
        %9066 = vmatprep.subr.mxu0 0.0
        %9067 = vmatpush1.msra.mxu0 0.0
        %9068 = vmatprep.subr.mxu0 0.0
        %9069 = vmatpush1.msra.mxu0 0.0
        %9070 = vmatprep.subr.mxu0 0.0
        %9071 = vmatpush1.msra.mxu0 0.0
        %9072 = vmatprep.subr.mxu0 0.0
        %9073 = vmatpush1.msra.mxu0 0.0
        %9074 = vmatprep.subr.mxu0 0.0
        %9075 = vmatpush1.msra.mxu0 0.0
        %9076 = vmatprep.subr.mxu0 0.0
        %9077 = vmatpush1.msra.mxu0 0.0
        %9078 = vmatprep.subr.mxu0 0.0
        %9079 = vmatpush1.msra.mxu0 0.0
        %9080 = vmatprep.subr.mxu0 0.0
        %9081 = vmatpush1.msra.mxu0 0.0
        %9082 = vmatprep.subr.mxu0 0.0
        %9083 = vmatpush1.msra.mxu0 0.0
        %9084 = vmatprep.subr.mxu0 0.0
        %9085 = vmatpush1.msra.mxu0 0.0
        %9086 = vmatprep.mubr.f32.mxu0 0.0
        %9087 = vmatmul.mubr.f32.gmra.mrb[0].mxu0 %v9014
        %v9088 = vpop.f32.mrb[0].mxu0
        %v9089 = vadd.f32 %v9011, %v9088
        %v9090 = vpop.f32.mrb[0].mxu0
        %9091 = vmatprep.mubr.f32.mxu0 0.0
        %9092 = vmatmul.mubr.f32.gmra.mrb[0].mxu0 %v9017
        %v9093 = vpop.f32.mrb[0].mxu0
        %v9094 = vadd.f32 %v9012, %v9093
        %v9095 = vpop.f32.mrb[0].mxu0
        %9096 = vdwg.mxu0
        %v9097 = vxor.u32 %v9089, 2147483648
        %v9098 = vxor.u32 %v9094, 2147483648
        %v9099 = vmul.f32 %v9097, 1.442695
        %v9100 = vpow.pop %v9099
        %v9101 = vmul.f32 %v9098, 1.442695
        %v9102 = vpow.pop %v9101
        %v9103 = vadd.f32 %v9100, 1.0
        %v9104 = vadd.f32 %v9102, 1.0
        %v9105 = vrcp.pop %v9103
        %v9106 = vmul.f32 1.0, %v9105
        %v9107 = vrcp.pop %v9104
        %v9108 = vmul.f32 1.0, %v9107
        %9110 = vset.pattern.permute.xlu0 0
        %9111 = vperm.xlu0 %9110, %v9106
        %v9112 = vpop.permute.xlu0 %9111
        %9115 = vset.pattern.permute.xlu0 0
        %9116 = vperm.xlu0 %9115, %v9108
        %v9117 = vpop.permute.xlu0 %9116
        %v9119 = vmul.f32 %v8704, %v9112
        %v9120 = vmul.f32 %v8706, %v9112
        %v9121 = vmul.f32 %v8708, %v9117
        %v9122 = vmul.f32 %v8710, %v9117
        %s9123 = scalar_lea.vmem %s413, 32
        %v9124 = vld [vmem:[%s9123] sm:$0xff]
        %v9125 = vld [vmem:[%s9123 + $0x8] sm:$0xff]
        %v9126 = vld [vmem:[%s9123 + $0x10] sm:$0xff]
        %v9127 = vld [vmem:[%s9123 + $0x18] sm:$0xff]
        %v9128 = vadd.f32 %v9119, %v9124
        %v9129 = vadd.f32 %v9120, %v9125
        %v9130 = vadd.f32 %v9121, %v9126
        %v9131 = vadd.f32 %v9122, %v9127
        %s9132 = scalar_lea.vmem %s400, 32 [#allocation2]
        %9133 = vst [vmem:[%s9132] sm:$0xff] %v9128
        %9134 = vst [vmem:[%s9132 + $0x8] sm:$0xff] %v9129
        %9135 = vst [vmem:[%s9132 + $0x10] sm:$0xff] %v9130
        %9136 = vst [vmem:[%s9132 + $0x18] sm:$0xff] %v9131
        %s9137 = sand.u32 %s274, 1
        %s9138 = scalar_lea.sflag [#allocation3], %s9137
        %s9139 = sand.u32 %s274, 1
        %s9140 = smul.addr %s9139, 64
        %s9141 = scalar_lea.vmem [#allocation2], %s9140
        // Predicated region
        $region65: #{tpu_custom_call.1} parent=63 // pred_check
          %p9142 = pneg %p284
        $region66: #{tpu_custom_call.1} parent=63 // pred_check_branch
          %9144 = sbr.rel (%p9142) target = $region68
        $region67: #{tpu_custom_call.1} parent=63 // pred_region
          %s9145 = smul.u32 2, %s25
          %s9147 = ssub.s32 1024, 1024
          %9148 = vsyncadd %s9138, %s9147
          %s9149 = smul.addr %s9145, 4
          %s9150 = smul.addr %s9149, 128
          %s9151 = scalar_lea.hbm %s11, %s9150
          %s9152 = sshll.u32 %s9141, 4
          %s9153 = int_to_ptr.vmem [resolvable:$true] %s9152
          %9158 = dma.vmem_to_hbm [thread:$0]  %s9153, 1024, %s9151, %s9138, 256, 256, 16
        $region68: #{tpu_custom_call.1} parent=63 // pred_fallthru
          _
      $region64: #{tpu_custom_call.1} parent=5 // pred_fallthru
        _
      %p9159 = scmp.le.s32.totalorder 2, %s20
      // Predicated region
      $region69: #{tpu_custom_call.1} parent=5 // pred_check
        %p9160 = pneg %p9159
      $region70: #{tpu_custom_call.1} parent=5 // pred_check_branch
        %9162 = sbr.rel (%p9160) target = $region72
      $region71: #{tpu_custom_call.1} parent=5 // pred_region
        %s9163 = ssub.s32 %s20, 2
        // Predicated region
        $region73: #{tpu_custom_call.1} parent=71 // pred_check
          %p9164 = pneg %p290
        $region74: #{tpu_custom_call.1} parent=71 // pred_check_branch
          %9166 = sbr.rel (%p9164) target = $region76
        $region75: #{tpu_custom_call.1} parent=71 // pred_region
          %s9167 = sand.u32 %s275, 1
          %s9168 = scalar_lea.sflag [#allocation3], %s9167
          %s9169 = sand.u32 %s275, 1
          %s9170 = smul.addr %s9169, 64
          %s9171 = scalar_lea.vmem [#allocation2], %s9170
          %9172 = dma.done %s9168, 1024
        $region76: #{tpu_custom_call.1} parent=71 // pred_fallthru
          _
      $region72: #{tpu_custom_call.1} parent=5 // pred_fallthru
        _
    $region6: #{tpu_custom_call.1} parent=1 // loop_footer
      %s24 = sadd.s32 1, %s20
    $region7: #{tpu_custom_call.1} parent=1 // loop_footer_branch
      %19 = sbr.rel target = $region3
    $region8: #{tpu_custom_call.1} parent=1 // loop_exit
      _
    %9173 = vsyncpa [#allocation3], 1
    %s9174 = scalar_lea.sflag [#allocation3], 1
    %9175 = vsyncpa %s9174, 1

</llo_original>
